<compile_context>
chip_gen: v7x
topology: tpu7x:2x2x1
jax: 0.10.0
libtpu: 0.0.40
codegen_flags: <defaults>
</compile_context>

<pallas_src>
import math

import jax
import jax.numpy as jnp
from jax.experimental import pallas as pl
from jax.experimental.pallas import tpu as pltpu

NUM_ACTION = 32
NUM_STATE = 14 + 5 + 1 + 1          # 21
NUM_STATE_PAD = 32                  # zero-padded contraction dim (glue only)
L = 128                             # conv "sequence" length (maps onto lanes)
OUT_PAD = 128                       # lane-dense padded output width
NEG_SLOPE = 0.01                    # torch LeakyReLU default


def net_kernel(x_ref, w1t_ref, b1_ref,
               cw1_ref, cb1_ref, cw2_ref, cb2_ref,
               mask_m1_ref, mask_p1_ref,
               w2at_ref, b2a_ref, w2bt_ref, b2b_ref, w2ct_ref, b2c_ref,
               o_ref):
    f32 = jnp.float32
    bf16 = jnp.bfloat16

    def leaky(v):
        return jnp.maximum(v, NEG_SLOPE * v)

    # ---- linear1 + LeakyReLU :  (tb, 32) @ (32, 128) -> (tb, 128) ----
    h = jnp.dot(x_ref[...], w1t_ref[...], preferred_element_type=f32) + b1_ref[...]
    h = leaky(h)

    # ---- 3-tap neighbours via XLU rolls; masks zero the wrapped boundary lane
    # so the semantics match Conv1d zero padding.  pltpu.roll needs a
    # non-negative axis; use only non-negative shifts (L-1 == -1 mod L). ----
    m_m1 = mask_m1_ref[...]          # (1, L), 0 at lane 0
    m_p1 = mask_p1_ref[...]          # (1, L), 0 at lane L-1

    def taps(v):
        vm = pltpu.roll(v, shift=1, axis=1) * m_m1       # v[l-1], 0 at l=0
        vp = pltpu.roll(v, shift=L - 1, axis=1) * m_p1   # v[l+1], 0 at l=L-1
        return vm, v, vp

    # ---- conv1: Conv1d(1, 4, 3, 1, 1) + LeakyReLU ----
    hm, hc, hp = taps(h)
    c1 = []
    for co in range(4):
        acc = (cw1_ref[co * 3 + 0] * hm
               + cw1_ref[co * 3 + 1] * hc
               + cw1_ref[co * 3 + 2] * hp
               + cb1_ref[co])
        c1.append(leaky(acc))

    # ---- conv2: Conv1d(4, 8, 3, 1, 1) + LeakyReLU ----
    c1_taps = [taps(v) for v in c1]
    c2 = []
    for co in range(8):
        acc = None
        for ci in range(4):
            tm_, tc_, tp_ = c1_taps[ci]
            base = co * 12 + ci * 3
            term = (cw2_ref[base + 0] * tm_
                    + cw2_ref[base + 1] * tc_
                    + cw2_ref[base + 2] * tp_)
            acc = term if acc is None else acc + term
        c2.append(leaky(acc + cb2_ref[co]))

    # ---- flatten (tb, 8, 128) -> (tb, 1024), channel-major like torch .view ----
    flat = jnp.concatenate(c2, axis=-1)

    # ---- linear2: 1024 -> 1024 -> 1024 -> 32(pad 128), bf16 MXU, f32 accum ----
    z = jnp.dot(flat.astype(bf16), w2at_ref[...], preferred_element_type=f32)
    z = jnp.maximum(z + b2a_ref[...], 0.0)
    z = jnp.dot(z.astype(bf16), w2bt_ref[...], preferred_element_type=f32)
    z = jnp.maximum(z + b2b_ref[...], 0.0)
    o_ref[...] = (jnp.dot(z.astype(bf16), w2ct_ref[...], preferred_element_type=f32)
                  + b2c_ref[...])


def _round_up(n, m):
    return ((n + m - 1) // m) * m


def init_params(key):
    """Deterministic PyTorch-default-style init (uniform +/- 1/sqrt(fan_in))."""
    def linear(k, out_f, in_f):
        k1, k2 = jax.random.split(k)
        bound = 1.0 / math.sqrt(in_f)
        w = jax.random.uniform(k1, (out_f, in_f), jnp.float32, -bound, bound)
        b = jax.random.uniform(k2, (out_f,), jnp.float32, -bound, bound)
        return w, b

    def conv(k, out_c, in_c, ks):
        k1, k2 = jax.random.split(k)
        bound = 1.0 / math.sqrt(in_c * ks)
        w = jax.random.uniform(k1, (out_c, in_c, ks), jnp.float32, -bound, bound)
        b = jax.random.uniform(k2, (out_c,), jnp.float32, -bound, bound)
        return w, b

    ks = jax.random.split(key, 6)
    p = {}
    p['w1'], p['b1'] = linear(ks[0], 128, NUM_STATE)
    p['cw1'], p['cb1'] = conv(ks[1], 4, 1, 3)
    p['cw2'], p['cb2'] = conv(ks[2], 8, 4, 3)
    p['w2a'], p['b2a'] = linear(ks[3], 1024, 8 * 128)
    p['w2b'], p['b2b'] = linear(ks[4], 1024, 1024)
    p['w2c'], p['b2c'] = linear(ks[5], NUM_ACTION, 1024)
    return p


def net_forward(x, p, *, batch_tile=128):
    B = x.shape[0]
    tb = min(batch_tile, _round_up(B, 8))     # batch tile (multiple of 8 sublanes)
    Bp = _round_up(B, tb)
    grid = (Bp // tb,)

    # --- glue: pad / transpose / cast parameters for the kernel ---
    x_pad = jnp.zeros((Bp, NUM_STATE_PAD), jnp.float32).at[:B, :NUM_STATE].set(x)
    w1t = jnp.zeros((NUM_STATE_PAD, 128), jnp.float32).at[:NUM_STATE, :].set(p['w1'].T)
    w2at = p['w2a'].T.astype(jnp.bfloat16)                     # (1024, 1024) bf16
    w2bt = p['w2b'].T.astype(jnp.bfloat16)                     # (1024, 1024) bf16
    w2ct = (jnp.zeros((1024, OUT_PAD), jnp.float32)
            .at[:, :NUM_ACTION].set(p['w2c'].T).astype(jnp.bfloat16))
    b2c_pad = jnp.zeros((1, OUT_PAD), jnp.float32).at[0, :NUM_ACTION].set(p['b2c'])

    mask_m1 = jnp.ones((1, L), jnp.float32).at[0, 0].set(0.0)
    mask_p1 = jnp.ones((1, L), jnp.float32).at[0, L - 1].set(0.0)

    args = (
        x_pad, w1t, p['b1'][None, :],
        p['cw1'].reshape(-1), p['cb1'],          # (12,), (4,)  -> SMEM scalars
        p['cw2'].reshape(-1), p['cb2'],          # (96,), (8,)  -> SMEM scalars
        mask_m1, mask_p1,
        w2at, p['b2a'][None, :],
        w2bt, p['b2b'][None, :],
        w2ct, b2c_pad,
    )

    smem = pl.BlockSpec(memory_space=pltpu.MemorySpace.SMEM)

    def resident(shape):
        # Same block index every grid step -> loaded once, stays VMEM-resident.
        n = len(shape)
        return pl.BlockSpec(shape, lambda i, n=n: (0,) * n)

    in_specs = [
        pl.BlockSpec((tb, NUM_STATE_PAD), lambda i: (i, 0)),   # x (pipelined)
        resident((NUM_STATE_PAD, 128)),                        # w1t
        resident((1, 128)),                                    # b1
        smem, smem, smem, smem,                                # conv weights/biases
        resident((1, L)), resident((1, L)),                    # boundary masks
        resident((1024, 1024)),                                # w2at (bf16)
        resident((1, 1024)),                                   # b2a
        resident((1024, 1024)),                                # w2bt (bf16)
        resident((1, 1024)),                                   # b2b
        resident((1024, OUT_PAD)),                             # w2ct (bf16)
        resident((1, OUT_PAD)),                                # b2c (padded)
    ]

    out = pl.pallas_call(
        net_kernel,
        out_shape=jax.ShapeDtypeStruct((Bp, OUT_PAD), jnp.float32),
        grid=grid,
        in_specs=in_specs,
        out_specs=pl.BlockSpec((tb, OUT_PAD), lambda i: (i, 0)),
        compiler_params=pltpu.CompilerParams(
            dimension_semantics=("parallel",),
            vmem_limit_bytes=32 * 1024 * 1024,
        ),
    )(*args)

    return out[:B, :NUM_ACTION]


def reference_forward(x, p):
    """Plain-JAX f32 reference mirroring the PyTorch forward."""
    h = x @ p['w1'].T + p['b1']
    h = jnp.where(h >= 0, h, NEG_SLOPE * h)
    z = h[:, None, :]                                            # (B, 1, 128) NCH
    z = jax.lax.conv_general_dilated(z, p['cw1'], (1,), ((1, 1),),
                                     dimension_numbers=('NCH', 'OIH', 'NCH'))
    z = z + p['cb1'][None, :, None]
    z = jnp.where(z >= 0, z, NEG_SLOPE * z)
    z = jax.lax.conv_general_dilated(z, p['cw2'], (1,), ((1, 1),),
                                     dimension_numbers=('NCH', 'OIH', 'NCH'))
    z = z + p['cb2'][None, :, None]
    z = jnp.where(z >= 0, z, NEG_SLOPE * z)
    f = z.reshape(z.shape[0], -1)
    f = jnp.maximum(f @ p['w2a'].T + p['b2a'], 0.0)
    f = jnp.maximum(f @ p['w2b'].T + p['b2b'], 0.0)
    return f @ p['w2c'].T + p['b2c']


if __name__ == "__main__":
    key = jax.random.PRNGKey(0)
    k_param, k_x = jax.random.split(key)
    params = init_params(k_param)

    B = 8
    x = jax.random.uniform(k_x, (B, NUM_STATE), jnp.float32, 0.0, 6.0)

    out = jax.block_until_ready(net_forward(x, params))
    assert out.shape == (B, NUM_ACTION) and out.dtype == jnp.float32

    ref = jax.block_until_ready(reference_forward(x, params))
    assert jnp.allclose(out, ref, rtol=5e-2, atol=5e-2), (
        f"max abs diff {jnp.max(jnp.abs(out - ref))}")

    print("KERNEL_OK")
</pallas_src>

<mosaic_0001>
module attributes {stable_mosaic.version = 11 : i64} {
  func.func @net_kernel(%arg0: i32, %arg1: memref<8x32xf32, #tpu.memory_space<vmem>>, %arg2: memref<32x128xf32, #tpu.memory_space<vmem>>, %arg3: memref<1x128xf32, #tpu.memory_space<vmem>>, %arg4: memref<12xf32, #tpu.memory_space<smem>>, %arg5: memref<4xf32, #tpu.memory_space<smem>>, %arg6: memref<96xf32, #tpu.memory_space<smem>>, %arg7: memref<8xf32, #tpu.memory_space<smem>>, %arg8: memref<1x128xf32, #tpu.memory_space<vmem>>, %arg9: memref<1x128xf32, #tpu.memory_space<vmem>>, %arg10: memref<1024x1024xbf16, #tpu.memory_space<vmem>>, %arg11: memref<1x1024xf32, #tpu.memory_space<vmem>>, %arg12: memref<1024x1024xbf16, #tpu.memory_space<vmem>>, %arg13: memref<1x1024xf32, #tpu.memory_space<vmem>>, %arg14: memref<1024x128xbf16, #tpu.memory_space<vmem>>, %arg15: memref<1x128xf32, #tpu.memory_space<vmem>>, %arg16: memref<8x128xf32, #tpu.memory_space<vmem>>) attributes {dimension_semantics = [#tpu.dimension_semantics<parallel>], iteration_bounds = array<i64: 1>, scalar_prefetch = 0 : i64, scratch_operands = 0 : i64, tpu.core_type = #tpu.core_type<tc>, window_params = [{transform_indices = @transform_0, window_bounds = array<i64: 8, 32>}, {pipeline_mode = #tpu.pipeline_mode<synchronous>, transform_indices = @transform_1, window_bounds = array<i64: 32, 128>}, {pipeline_mode = #tpu.pipeline_mode<synchronous>, transform_indices = @transform_2, window_bounds = array<i64: 1, 128>}, {transform_indices = @transform_3, window_bounds = array<i64: 12>}, {transform_indices = @transform_4, window_bounds = array<i64: 4>}, {transform_indices = @transform_5, window_bounds = array<i64: 96>}, {transform_indices = @transform_6, window_bounds = array<i64: 8>}, {pipeline_mode = #tpu.pipeline_mode<synchronous>, transform_indices = @transform_7, window_bounds = array<i64: 1, 128>}, {pipeline_mode = #tpu.pipeline_mode<synchronous>, transform_indices = @transform_8, window_bounds = array<i64: 1, 128>}, {pipeline_mode = #tpu.pipeline_mode<synchronous>, transform_indices = @transform_9, window_bounds = array<i64: 1024, 1024>}, {pipeline_mode = #tpu.pipeline_mode<synchronous>, transform_indices = @transform_10, window_bounds = array<i64: 1, 1024>}, {pipeline_mode = #tpu.pipeline_mode<synchronous>, transform_indices = @transform_11, window_bounds = array<i64: 1024, 1024>}, {pipeline_mode = #tpu.pipeline_mode<synchronous>, transform_indices = @transform_12, window_bounds = array<i64: 1, 1024>}, {pipeline_mode = #tpu.pipeline_mode<synchronous>, transform_indices = @transform_13, window_bounds = array<i64: 1024, 128>}, {pipeline_mode = #tpu.pipeline_mode<synchronous>, transform_indices = @transform_14, window_bounds = array<i64: 1, 128>}, {transform_indices = @transform_15, window_bounds = array<i64: 8, 128>}]} {
    %c0 = arith.constant 0 : index
    %c0_0 = arith.constant 0 : index
    %0 = vector.load %arg1[%c0, %c0_0] : memref<8x32xf32, #tpu.memory_space<vmem>>, vector<8x32xf32>
    %c0_1 = arith.constant 0 : index
    %c0_2 = arith.constant 0 : index
    %1 = vector.load %arg2[%c0_1, %c0_2] : memref<32x128xf32, #tpu.memory_space<vmem>>, vector<32x128xf32>
    %cst = arith.constant dense<0.000000e+00> : vector<8x128xf32>
    %2 = tpu.matmul %0, %1, %cst {dimension_numbers = #tpu.dot_dimension_numbers<[1], [0], [0], [1], [0, 0, 1, 1], [], []>} : vector<8x32xf32>, vector<32x128xf32>, vector<8x128xf32> -> vector<8x128xf32>
    %c0_3 = arith.constant 0 : index
    %c0_4 = arith.constant 0 : index
    %3 = vector.load %arg3[%c0_3, %c0_4] : memref<1x128xf32, #tpu.memory_space<vmem>>, vector<1x128xf32>
    %4 = vector.broadcast %3 : vector<1x128xf32> to vector<8x128xf32>
    %5 = arith.addf %2, %4 : vector<8x128xf32>
    %cst_5 = arith.constant 0.00999999977 : f32
    %6 = vector.broadcast %cst_5 : f32 to vector<8x128xf32>
    %7 = arith.mulf %6, %5 : vector<8x128xf32>
    %8 = arith.maximumf %5, %7 : vector<8x128xf32>
    %c0_6 = arith.constant 0 : index
    %c0_7 = arith.constant 0 : index
    %9 = vector.load %arg8[%c0_6, %c0_7] : memref<1x128xf32, #tpu.memory_space<vmem>>, vector<1x128xf32>
    %c0_8 = arith.constant 0 : index
    %c0_9 = arith.constant 0 : index
    %10 = vector.load %arg9[%c0_8, %c0_9] : memref<1x128xf32, #tpu.memory_space<vmem>>, vector<1x128xf32>
    %c1_i32 = arith.constant 1 : i32
    %11 = tpu.dynamic_rotate %8 by %c1_i32 dim 1 : vector<8x128xf32>, i32 -> vector<8x128xf32>
    %12 = vector.broadcast %9 : vector<1x128xf32> to vector<8x128xf32>
    %13 = arith.mulf %11, %12 : vector<8x128xf32>
    %c127_i32 = arith.constant 127 : i32
    %14 = tpu.dynamic_rotate %8 by %c127_i32 dim 1 : vector<8x128xf32>, i32 -> vector<8x128xf32>
    %15 = vector.broadcast %10 : vector<1x128xf32> to vector<8x128xf32>
    %16 = arith.mulf %14, %15 : vector<8x128xf32>
    %c0_10 = arith.constant 0 : index
    %17 = memref.load %arg4[%c0_10] : memref<12xf32, #tpu.memory_space<smem>>
    %18 = vector.broadcast %17 : f32 to vector<8x128xf32>
    %19 = arith.mulf %18, %13 : vector<8x128xf32>
    %c1 = arith.constant 1 : index
    %20 = memref.load %arg4[%c1] : memref<12xf32, #tpu.memory_space<smem>>
    %21 = vector.broadcast %20 : f32 to vector<8x128xf32>
    %22 = arith.mulf %21, %8 : vector<8x128xf32>
    %23 = arith.addf %19, %22 : vector<8x128xf32>
    %c2 = arith.constant 2 : index
    %24 = memref.load %arg4[%c2] : memref<12xf32, #tpu.memory_space<smem>>
    %25 = vector.broadcast %24 : f32 to vector<8x128xf32>
    %26 = arith.mulf %25, %16 : vector<8x128xf32>
    %27 = arith.addf %23, %26 : vector<8x128xf32>
    %c0_11 = arith.constant 0 : index
    %28 = memref.load %arg5[%c0_11] : memref<4xf32, #tpu.memory_space<smem>>
    %29 = vector.broadcast %28 : f32 to vector<8x128xf32>
    %30 = arith.addf %27, %29 : vector<8x128xf32>
    %cst_12 = arith.constant 0.00999999977 : f32
    %31 = vector.broadcast %cst_12 : f32 to vector<8x128xf32>
    %32 = arith.mulf %31, %30 : vector<8x128xf32>
    %33 = arith.maximumf %30, %32 : vector<8x128xf32>
    %c3 = arith.constant 3 : index
    %34 = memref.load %arg4[%c3] : memref<12xf32, #tpu.memory_space<smem>>
    %35 = vector.broadcast %34 : f32 to vector<8x128xf32>
    %36 = arith.mulf %35, %13 : vector<8x128xf32>
    %c4 = arith.constant 4 : index
    %37 = memref.load %arg4[%c4] : memref<12xf32, #tpu.memory_space<smem>>
    %38 = vector.broadcast %37 : f32 to vector<8x128xf32>
    %39 = arith.mulf %38, %8 : vector<8x128xf32>
    %40 = arith.addf %36, %39 : vector<8x128xf32>
    %c5 = arith.constant 5 : index
    %41 = memref.load %arg4[%c5] : memref<12xf32, #tpu.memory_space<smem>>
    %42 = vector.broadcast %41 : f32 to vector<8x128xf32>
    %43 = arith.mulf %42, %16 : vector<8x128xf32>
    %44 = arith.addf %40, %43 : vector<8x128xf32>
    %c1_13 = arith.constant 1 : index
    %45 = memref.load %arg5[%c1_13] : memref<4xf32, #tpu.memory_space<smem>>
    %46 = vector.broadcast %45 : f32 to vector<8x128xf32>
    %47 = arith.addf %44, %46 : vector<8x128xf32>
    %cst_14 = arith.constant 0.00999999977 : f32
    %48 = vector.broadcast %cst_14 : f32 to vector<8x128xf32>
    %49 = arith.mulf %48, %47 : vector<8x128xf32>
    %50 = arith.maximumf %47, %49 : vector<8x128xf32>
    %c6 = arith.constant 6 : index
    %51 = memref.load %arg4[%c6] : memref<12xf32, #tpu.memory_space<smem>>
    %52 = vector.broadcast %51 : f32 to vector<8x128xf32>
    %53 = arith.mulf %52, %13 : vector<8x128xf32>
    %c7 = arith.constant 7 : index
    %54 = memref.load %arg4[%c7] : memref<12xf32, #tpu.memory_space<smem>>
    %55 = vector.broadcast %54 : f32 to vector<8x128xf32>
    %56 = arith.mulf %55, %8 : vector<8x128xf32>
    %57 = arith.addf %53, %56 : vector<8x128xf32>
    %c8 = arith.constant 8 : index
    %58 = memref.load %arg4[%c8] : memref<12xf32, #tpu.memory_space<smem>>
    %59 = vector.broadcast %58 : f32 to vector<8x128xf32>
    %60 = arith.mulf %59, %16 : vector<8x128xf32>
    %61 = arith.addf %57, %60 : vector<8x128xf32>
    %c2_15 = arith.constant 2 : index
    %62 = memref.load %arg5[%c2_15] : memref<4xf32, #tpu.memory_space<smem>>
    %63 = vector.broadcast %62 : f32 to vector<8x128xf32>
    %64 = arith.addf %61, %63 : vector<8x128xf32>
    %cst_16 = arith.constant 0.00999999977 : f32
    %65 = vector.broadcast %cst_16 : f32 to vector<8x128xf32>
    %66 = arith.mulf %65, %64 : vector<8x128xf32>
    %67 = arith.maximumf %64, %66 : vector<8x128xf32>
    %c9 = arith.constant 9 : index
    %68 = memref.load %arg4[%c9] : memref<12xf32, #tpu.memory_space<smem>>
    %69 = vector.broadcast %68 : f32 to vector<8x128xf32>
    %70 = arith.mulf %69, %13 : vector<8x128xf32>
    %c10 = arith.constant 10 : index
    %71 = memref.load %arg4[%c10] : memref<12xf32, #tpu.memory_space<smem>>
    %72 = vector.broadcast %71 : f32 to vector<8x128xf32>
    %73 = arith.mulf %72, %8 : vector<8x128xf32>
    %74 = arith.addf %70, %73 : vector<8x128xf32>
    %c11 = arith.constant 11 : index
    %75 = memref.load %arg4[%c11] : memref<12xf32, #tpu.memory_space<smem>>
    %76 = vector.broadcast %75 : f32 to vector<8x128xf32>
    %77 = arith.mulf %76, %16 : vector<8x128xf32>
    %78 = arith.addf %74, %77 : vector<8x128xf32>
    %c3_17 = arith.constant 3 : index
    %79 = memref.load %arg5[%c3_17] : memref<4xf32, #tpu.memory_space<smem>>
    %80 = vector.broadcast %79 : f32 to vector<8x128xf32>
    %81 = arith.addf %78, %80 : vector<8x128xf32>
    %cst_18 = arith.constant 0.00999999977 : f32
    %82 = vector.broadcast %cst_18 : f32 to vector<8x128xf32>
    %83 = arith.mulf %82, %81 : vector<8x128xf32>
    %84 = arith.maximumf %81, %83 : vector<8x128xf32>
    %c1_i32_19 = arith.constant 1 : i32
    %85 = tpu.dynamic_rotate %33 by %c1_i32_19 dim 1 : vector<8x128xf32>, i32 -> vector<8x128xf32>
    %86 = vector.broadcast %9 : vector<1x128xf32> to vector<8x128xf32>
    %87 = arith.mulf %85, %86 : vector<8x128xf32>
    %c127_i32_20 = arith.constant 127 : i32
    %88 = tpu.dynamic_rotate %33 by %c127_i32_20 dim 1 : vector<8x128xf32>, i32 -> vector<8x128xf32>
    %89 = vector.broadcast %10 : vector<1x128xf32> to vector<8x128xf32>
    %90 = arith.mulf %88, %89 : vector<8x128xf32>
    %c1_i32_21 = arith.constant 1 : i32
    %91 = tpu.dynamic_rotate %50 by %c1_i32_21 dim 1 : vector<8x128xf32>, i32 -> vector<8x128xf32>
    %92 = vector.broadcast %9 : vector<1x128xf32> to vector<8x128xf32>
    %93 = arith.mulf %91, %92 : vector<8x128xf32>
    %c127_i32_22 = arith.constant 127 : i32
    %94 = tpu.dynamic_rotate %50 by %c127_i32_22 dim 1 : vector<8x128xf32>, i32 -> vector<8x128xf32>
    %95 = vector.broadcast %10 : vector<1x128xf32> to vector<8x128xf32>
    %96 = arith.mulf %94, %95 : vector<8x128xf32>
    %c1_i32_23 = arith.constant 1 : i32
    %97 = tpu.dynamic_rotate %67 by %c1_i32_23 dim 1 : vector<8x128xf32>, i32 -> vector<8x128xf32>
    %98 = vector.broadcast %9 : vector<1x128xf32> to vector<8x128xf32>
    %99 = arith.mulf %97, %98 : vector<8x128xf32>
    %c127_i32_24 = arith.constant 127 : i32
    %100 = tpu.dynamic_rotate %67 by %c127_i32_24 dim 1 : vector<8x128xf32>, i32 -> vector<8x128xf32>
    %101 = vector.broadcast %10 : vector<1x128xf32> to vector<8x128xf32>
    %102 = arith.mulf %100, %101 : vector<8x128xf32>
    %c1_i32_25 = arith.constant 1 : i32
    %103 = tpu.dynamic_rotate %84 by %c1_i32_25 dim 1 : vector<8x128xf32>, i32 -> vector<8x128xf32>
    %104 = vector.broadcast %9 : vector<1x128xf32> to vector<8x128xf32>
    %105 = arith.mulf %103, %104 : vector<8x128xf32>
    %c127_i32_26 = arith.constant 127 : i32
    %106 = tpu.dynamic_rotate %84 by %c127_i32_26 dim 1 : vector<8x128xf32>, i32 -> vector<8x128xf32>
    %107 = vector.broadcast %10 : vector<1x128xf32> to vector<8x128xf32>
    %108 = arith.mulf %106, %107 : vector<8x128xf32>
    %c0_27 = arith.constant 0 : index
    %109 = memref.load %arg6[%c0_27] : memref<96xf32, #tpu.memory_space<smem>>
    %110 = vector.broadcast %109 : f32 to vector<8x128xf32>
    %111 = arith.mulf %110, %87 : vector<8x128xf32>
    %c1_28 = arith.constant 1 : index
    %112 = memref.load %arg6[%c1_28] : memref<96xf32, #tpu.memory_space<smem>>
    %113 = vector.broadcast %112 : f32 to vector<8x128xf32>
    %114 = arith.mulf %113, %33 : vector<8x128xf32>
    %115 = arith.addf %111, %114 : vector<8x128xf32>
    %c2_29 = arith.constant 2 : index
    %116 = memref.load %arg6[%c2_29] : memref<96xf32, #tpu.memory_space<smem>>
    %117 = vector.broadcast %116 : f32 to vector<8x128xf32>
    %118 = arith.mulf %117, %90 : vector<8x128xf32>
    %119 = arith.addf %115, %118 : vector<8x128xf32>
    %c3_30 = arith.constant 3 : index
    %120 = memref.load %arg6[%c3_30] : memref<96xf32, #tpu.memory_space<smem>>
    %121 = vector.broadcast %120 : f32 to vector<8x128xf32>
    %122 = arith.mulf %121, %93 : vector<8x128xf32>
    %c4_31 = arith.constant 4 : index
    %123 = memref.load %arg6[%c4_31] : memref<96xf32, #tpu.memory_space<smem>>
    %124 = vector.broadcast %123 : f32 to vector<8x128xf32>
    %125 = arith.mulf %124, %50 : vector<8x128xf32>
    %126 = arith.addf %122, %125 : vector<8x128xf32>
    %c5_32 = arith.constant 5 : index
    %127 = memref.load %arg6[%c5_32] : memref<96xf32, #tpu.memory_space<smem>>
    %128 = vector.broadcast %127 : f32 to vector<8x128xf32>
    %129 = arith.mulf %128, %96 : vector<8x128xf32>
    %130 = arith.addf %126, %129 : vector<8x128xf32>
    %131 = arith.addf %119, %130 : vector<8x128xf32>
    %c6_33 = arith.constant 6 : index
    %132 = memref.load %arg6[%c6_33] : memref<96xf32, #tpu.memory_space<smem>>
    %133 = vector.broadcast %132 : f32 to vector<8x128xf32>
    %134 = arith.mulf %133, %99 : vector<8x128xf32>
    %c7_34 = arith.constant 7 : index
    %135 = memref.load %arg6[%c7_34] : memref<96xf32, #tpu.memory_space<smem>>
    %136 = vector.broadcast %135 : f32 to vector<8x128xf32>
    %137 = arith.mulf %136, %67 : vector<8x128xf32>
    %138 = arith.addf %134, %137 : vector<8x128xf32>
    %c8_35 = arith.constant 8 : index
    %139 = memref.load %arg6[%c8_35] : memref<96xf32, #tpu.memory_space<smem>>
    %140 = vector.broadcast %139 : f32 to vector<8x128xf32>
    %141 = arith.mulf %140, %102 : vector<8x128xf32>
    %142 = arith.addf %138, %141 : vector<8x128xf32>
    %143 = arith.addf %131, %142 : vector<8x128xf32>
    %c9_36 = arith.constant 9 : index
    %144 = memref.load %arg6[%c9_36] : memref<96xf32, #tpu.memory_space<smem>>
    %145 = vector.broadcast %144 : f32 to vector<8x128xf32>
    %146 = arith.mulf %145, %105 : vector<8x128xf32>
    %c10_37 = arith.constant 10 : index
    %147 = memref.load %arg6[%c10_37] : memref<96xf32, #tpu.memory_space<smem>>
    %148 = vector.broadcast %147 : f32 to vector<8x128xf32>
    %149 = arith.mulf %148, %84 : vector<8x128xf32>
    %150 = arith.addf %146, %149 : vector<8x128xf32>
    %c11_38 = arith.constant 11 : index
    %151 = memref.load %arg6[%c11_38] : memref<96xf32, #tpu.memory_space<smem>>
    %152 = vector.broadcast %151 : f32 to vector<8x128xf32>
    %153 = arith.mulf %152, %108 : vector<8x128xf32>
    %154 = arith.addf %150, %153 : vector<8x128xf32>
    %155 = arith.addf %143, %154 : vector<8x128xf32>
    %c0_39 = arith.constant 0 : index
    %156 = memref.load %arg7[%c0_39] : memref<8xf32, #tpu.memory_space<smem>>
    %157 = vector.broadcast %156 : f32 to vector<8x128xf32>
    %158 = arith.addf %155, %157 : vector<8x128xf32>
    %cst_40 = arith.constant 0.00999999977 : f32
    %159 = vector.broadcast %cst_40 : f32 to vector<8x128xf32>
    %160 = arith.mulf %159, %158 : vector<8x128xf32>
    %161 = arith.maximumf %158, %160 : vector<8x128xf32>
    %c12 = arith.constant 12 : index
    %162 = memref.load %arg6[%c12] : memref<96xf32, #tpu.memory_space<smem>>
    %163 = vector.broadcast %162 : f32 to vector<8x128xf32>
    %164 = arith.mulf %163, %87 : vector<8x128xf32>
    %c13 = arith.constant 13 : index
    %165 = memref.load %arg6[%c13] : memref<96xf32, #tpu.memory_space<smem>>
    %166 = vector.broadcast %165 : f32 to vector<8x128xf32>
    %167 = arith.mulf %166, %33 : vector<8x128xf32>
    %168 = arith.addf %164, %167 : vector<8x128xf32>
    %c14 = arith.constant 14 : index
    %169 = memref.load %arg6[%c14] : memref<96xf32, #tpu.memory_space<smem>>
    %170 = vector.broadcast %169 : f32 to vector<8x128xf32>
    %171 = arith.mulf %170, %90 : vector<8x128xf32>
    %172 = arith.addf %168, %171 : vector<8x128xf32>
    %c15 = arith.constant 15 : index
    %173 = memref.load %arg6[%c15] : memref<96xf32, #tpu.memory_space<smem>>
    %174 = vector.broadcast %173 : f32 to vector<8x128xf32>
    %175 = arith.mulf %174, %93 : vector<8x128xf32>
    %c16 = arith.constant 16 : index
    %176 = memref.load %arg6[%c16] : memref<96xf32, #tpu.memory_space<smem>>
    %177 = vector.broadcast %176 : f32 to vector<8x128xf32>
    %178 = arith.mulf %177, %50 : vector<8x128xf32>
    %179 = arith.addf %175, %178 : vector<8x128xf32>
    %c17 = arith.constant 17 : index
    %180 = memref.load %arg6[%c17] : memref<96xf32, #tpu.memory_space<smem>>
    %181 = vector.broadcast %180 : f32 to vector<8x128xf32>
    %182 = arith.mulf %181, %96 : vector<8x128xf32>
    %183 = arith.addf %179, %182 : vector<8x128xf32>
    %184 = arith.addf %172, %183 : vector<8x128xf32>
    %c18 = arith.constant 18 : index
    %185 = memref.load %arg6[%c18] : memref<96xf32, #tpu.memory_space<smem>>
    %186 = vector.broadcast %185 : f32 to vector<8x128xf32>
    %187 = arith.mulf %186, %99 : vector<8x128xf32>
    %c19 = arith.constant 19 : index
    %188 = memref.load %arg6[%c19] : memref<96xf32, #tpu.memory_space<smem>>
    %189 = vector.broadcast %188 : f32 to vector<8x128xf32>
    %190 = arith.mulf %189, %67 : vector<8x128xf32>
    %191 = arith.addf %187, %190 : vector<8x128xf32>
    %c20 = arith.constant 20 : index
    %192 = memref.load %arg6[%c20] : memref<96xf32, #tpu.memory_space<smem>>
    %193 = vector.broadcast %192 : f32 to vector<8x128xf32>
    %194 = arith.mulf %193, %102 : vector<8x128xf32>
    %195 = arith.addf %191, %194 : vector<8x128xf32>
    %196 = arith.addf %184, %195 : vector<8x128xf32>
    %c21 = arith.constant 21 : index
    %197 = memref.load %arg6[%c21] : memref<96xf32, #tpu.memory_space<smem>>
    %198 = vector.broadcast %197 : f32 to vector<8x128xf32>
    %199 = arith.mulf %198, %105 : vector<8x128xf32>
    %c22 = arith.constant 22 : index
    %200 = memref.load %arg6[%c22] : memref<96xf32, #tpu.memory_space<smem>>
    %201 = vector.broadcast %200 : f32 to vector<8x128xf32>
    %202 = arith.mulf %201, %84 : vector<8x128xf32>
    %203 = arith.addf %199, %202 : vector<8x128xf32>
    %c23 = arith.constant 23 : index
    %204 = memref.load %arg6[%c23] : memref<96xf32, #tpu.memory_space<smem>>
    %205 = vector.broadcast %204 : f32 to vector<8x128xf32>
    %206 = arith.mulf %205, %108 : vector<8x128xf32>
    %207 = arith.addf %203, %206 : vector<8x128xf32>
    %208 = arith.addf %196, %207 : vector<8x128xf32>
    %c1_41 = arith.constant 1 : index
    %209 = memref.load %arg7[%c1_41] : memref<8xf32, #tpu.memory_space<smem>>
    %210 = vector.broadcast %209 : f32 to vector<8x128xf32>
    %211 = arith.addf %208, %210 : vector<8x128xf32>
    %cst_42 = arith.constant 0.00999999977 : f32
    %212 = vector.broadcast %cst_42 : f32 to vector<8x128xf32>
    %213 = arith.mulf %212, %211 : vector<8x128xf32>
    %214 = arith.maximumf %211, %213 : vector<8x128xf32>
    %c24 = arith.constant 24 : index
    %215 = memref.load %arg6[%c24] : memref<96xf32, #tpu.memory_space<smem>>
    %216 = vector.broadcast %215 : f32 to vector<8x128xf32>
    %217 = arith.mulf %216, %87 : vector<8x128xf32>
    %c25 = arith.constant 25 : index
    %218 = memref.load %arg6[%c25] : memref<96xf32, #tpu.memory_space<smem>>
    %219 = vector.broadcast %218 : f32 to vector<8x128xf32>
    %220 = arith.mulf %219, %33 : vector<8x128xf32>
    %221 = arith.addf %217, %220 : vector<8x128xf32>
    %c26 = arith.constant 26 : index
    %222 = memref.load %arg6[%c26] : memref<96xf32, #tpu.memory_space<smem>>
    %223 = vector.broadcast %222 : f32 to vector<8x128xf32>
    %224 = arith.mulf %223, %90 : vector<8x128xf32>
    %225 = arith.addf %221, %224 : vector<8x128xf32>
    %c27 = arith.constant 27 : index
    %226 = memref.load %arg6[%c27] : memref<96xf32, #tpu.memory_space<smem>>
    %227 = vector.broadcast %226 : f32 to vector<8x128xf32>
    %228 = arith.mulf %227, %93 : vector<8x128xf32>
    %c28 = arith.constant 28 : index
    %229 = memref.load %arg6[%c28] : memref<96xf32, #tpu.memory_space<smem>>
    %230 = vector.broadcast %229 : f32 to vector<8x128xf32>
    %231 = arith.mulf %230, %50 : vector<8x128xf32>
    %232 = arith.addf %228, %231 : vector<8x128xf32>
    %c29 = arith.constant 29 : index
    %233 = memref.load %arg6[%c29] : memref<96xf32, #tpu.memory_space<smem>>
    %234 = vector.broadcast %233 : f32 to vector<8x128xf32>
    %235 = arith.mulf %234, %96 : vector<8x128xf32>
    %236 = arith.addf %232, %235 : vector<8x128xf32>
    %237 = arith.addf %225, %236 : vector<8x128xf32>
    %c30 = arith.constant 30 : index
    %238 = memref.load %arg6[%c30] : memref<96xf32, #tpu.memory_space<smem>>
    %239 = vector.broadcast %238 : f32 to vector<8x128xf32>
    %240 = arith.mulf %239, %99 : vector<8x128xf32>
    %c31 = arith.constant 31 : index
    %241 = memref.load %arg6[%c31] : memref<96xf32, #tpu.memory_space<smem>>
    %242 = vector.broadcast %241 : f32 to vector<8x128xf32>
    %243 = arith.mulf %242, %67 : vector<8x128xf32>
    %244 = arith.addf %240, %243 : vector<8x128xf32>
    %c32 = arith.constant 32 : index
    %245 = memref.load %arg6[%c32] : memref<96xf32, #tpu.memory_space<smem>>
    %246 = vector.broadcast %245 : f32 to vector<8x128xf32>
    %247 = arith.mulf %246, %102 : vector<8x128xf32>
    %248 = arith.addf %244, %247 : vector<8x128xf32>
    %249 = arith.addf %237, %248 : vector<8x128xf32>
    %c33 = arith.constant 33 : index
    %250 = memref.load %arg6[%c33] : memref<96xf32, #tpu.memory_space<smem>>
    %251 = vector.broadcast %250 : f32 to vector<8x128xf32>
    %252 = arith.mulf %251, %105 : vector<8x128xf32>
    %c34 = arith.constant 34 : index
    %253 = memref.load %arg6[%c34] : memref<96xf32, #tpu.memory_space<smem>>
    %254 = vector.broadcast %253 : f32 to vector<8x128xf32>
    %255 = arith.mulf %254, %84 : vector<8x128xf32>
    %256 = arith.addf %252, %255 : vector<8x128xf32>
    %c35 = arith.constant 35 : index
    %257 = memref.load %arg6[%c35] : memref<96xf32, #tpu.memory_space<smem>>
    %258 = vector.broadcast %257 : f32 to vector<8x128xf32>
    %259 = arith.mulf %258, %108 : vector<8x128xf32>
    %260 = arith.addf %256, %259 : vector<8x128xf32>
    %261 = arith.addf %249, %260 : vector<8x128xf32>
    %c2_43 = arith.constant 2 : index
    %262 = memref.load %arg7[%c2_43] : memref<8xf32, #tpu.memory_space<smem>>
    %263 = vector.broadcast %262 : f32 to vector<8x128xf32>
    %264 = arith.addf %261, %263 : vector<8x128xf32>
    %cst_44 = arith.constant 0.00999999977 : f32
    %265 = vector.broadcast %cst_44 : f32 to vector<8x128xf32>
    %266 = arith.mulf %265, %264 : vector<8x128xf32>
    %267 = arith.maximumf %264, %266 : vector<8x128xf32>
    %c36 = arith.constant 36 : index
    %268 = memref.load %arg6[%c36] : memref<96xf32, #tpu.memory_space<smem>>
    %269 = vector.broadcast %268 : f32 to vector<8x128xf32>
    %270 = arith.mulf %269, %87 : vector<8x128xf32>
    %c37 = arith.constant 37 : index
    %271 = memref.load %arg6[%c37] : memref<96xf32, #tpu.memory_space<smem>>
    %272 = vector.broadcast %271 : f32 to vector<8x128xf32>
    %273 = arith.mulf %272, %33 : vector<8x128xf32>
    %274 = arith.addf %270, %273 : vector<8x128xf32>
    %c38 = arith.constant 38 : index
    %275 = memref.load %arg6[%c38] : memref<96xf32, #tpu.memory_space<smem>>
    %276 = vector.broadcast %275 : f32 to vector<8x128xf32>
    %277 = arith.mulf %276, %90 : vector<8x128xf32>
    %278 = arith.addf %274, %277 : vector<8x128xf32>
    %c39 = arith.constant 39 : index
    %279 = memref.load %arg6[%c39] : memref<96xf32, #tpu.memory_space<smem>>
    %280 = vector.broadcast %279 : f32 to vector<8x128xf32>
    %281 = arith.mulf %280, %93 : vector<8x128xf32>
    %c40 = arith.constant 40 : index
    %282 = memref.load %arg6[%c40] : memref<96xf32, #tpu.memory_space<smem>>
    %283 = vector.broadcast %282 : f32 to vector<8x128xf32>
    %284 = arith.mulf %283, %50 : vector<8x128xf32>
    %285 = arith.addf %281, %284 : vector<8x128xf32>
    %c41 = arith.constant 41 : index
    %286 = memref.load %arg6[%c41] : memref<96xf32, #tpu.memory_space<smem>>
    %287 = vector.broadcast %286 : f32 to vector<8x128xf32>
    %288 = arith.mulf %287, %96 : vector<8x128xf32>
    %289 = arith.addf %285, %288 : vector<8x128xf32>
    %290 = arith.addf %278, %289 : vector<8x128xf32>
    %c42 = arith.constant 42 : index
    %291 = memref.load %arg6[%c42] : memref<96xf32, #tpu.memory_space<smem>>
    %292 = vector.broadcast %291 : f32 to vector<8x128xf32>
    %293 = arith.mulf %292, %99 : vector<8x128xf32>
    %c43 = arith.constant 43 : index
    %294 = memref.load %arg6[%c43] : memref<96xf32, #tpu.memory_space<smem>>
    %295 = vector.broadcast %294 : f32 to vector<8x128xf32>
    %296 = arith.mulf %295, %67 : vector<8x128xf32>
    %297 = arith.addf %293, %296 : vector<8x128xf32>
    %c44 = arith.constant 44 : index
    %298 = memref.load %arg6[%c44] : memref<96xf32, #tpu.memory_space<smem>>
    %299 = vector.broadcast %298 : f32 to vector<8x128xf32>
    %300 = arith.mulf %299, %102 : vector<8x128xf32>
    %301 = arith.addf %297, %300 : vector<8x128xf32>
    %302 = arith.addf %290, %301 : vector<8x128xf32>
    %c45 = arith.constant 45 : index
    %303 = memref.load %arg6[%c45] : memref<96xf32, #tpu.memory_space<smem>>
    %304 = vector.broadcast %303 : f32 to vector<8x128xf32>
    %305 = arith.mulf %304, %105 : vector<8x128xf32>
    %c46 = arith.constant 46 : index
    %306 = memref.load %arg6[%c46] : memref<96xf32, #tpu.memory_space<smem>>
    %307 = vector.broadcast %306 : f32 to vector<8x128xf32>
    %308 = arith.mulf %307, %84 : vector<8x128xf32>
    %309 = arith.addf %305, %308 : vector<8x128xf32>
    %c47 = arith.constant 47 : index
    %310 = memref.load %arg6[%c47] : memref<96xf32, #tpu.memory_space<smem>>
    %311 = vector.broadcast %310 : f32 to vector<8x128xf32>
    %312 = arith.mulf %311, %108 : vector<8x128xf32>
    %313 = arith.addf %309, %312 : vector<8x128xf32>
    %314 = arith.addf %302, %313 : vector<8x128xf32>
    %c3_45 = arith.constant 3 : index
    %315 = memref.load %arg7[%c3_45] : memref<8xf32, #tpu.memory_space<smem>>
    %316 = vector.broadcast %315 : f32 to vector<8x128xf32>
    %317 = arith.addf %314, %316 : vector<8x128xf32>
    %cst_46 = arith.constant 0.00999999977 : f32
    %318 = vector.broadcast %cst_46 : f32 to vector<8x128xf32>
    %319 = arith.mulf %318, %317 : vector<8x128xf32>
    %320 = arith.maximumf %317, %319 : vector<8x128xf32>
    %c48 = arith.constant 48 : index
    %321 = memref.load %arg6[%c48] : memref<96xf32, #tpu.memory_space<smem>>
    %322 = vector.broadcast %321 : f32 to vector<8x128xf32>
    %323 = arith.mulf %322, %87 : vector<8x128xf32>
    %c49 = arith.constant 49 : index
    %324 = memref.load %arg6[%c49] : memref<96xf32, #tpu.memory_space<smem>>
    %325 = vector.broadcast %324 : f32 to vector<8x128xf32>
    %326 = arith.mulf %325, %33 : vector<8x128xf32>
    %327 = arith.addf %323, %326 : vector<8x128xf32>
    %c50 = arith.constant 50 : index
    %328 = memref.load %arg6[%c50] : memref<96xf32, #tpu.memory_space<smem>>
    %329 = vector.broadcast %328 : f32 to vector<8x128xf32>
    %330 = arith.mulf %329, %90 : vector<8x128xf32>
    %331 = arith.addf %327, %330 : vector<8x128xf32>
    %c51 = arith.constant 51 : index
    %332 = memref.load %arg6[%c51] : memref<96xf32, #tpu.memory_space<smem>>
    %333 = vector.broadcast %332 : f32 to vector<8x128xf32>
    %334 = arith.mulf %333, %93 : vector<8x128xf32>
    %c52 = arith.constant 52 : index
    %335 = memref.load %arg6[%c52] : memref<96xf32, #tpu.memory_space<smem>>
    %336 = vector.broadcast %335 : f32 to vector<8x128xf32>
    %337 = arith.mulf %336, %50 : vector<8x128xf32>
    %338 = arith.addf %334, %337 : vector<8x128xf32>
    %c53 = arith.constant 53 : index
    %339 = memref.load %arg6[%c53] : memref<96xf32, #tpu.memory_space<smem>>
    %340 = vector.broadcast %339 : f32 to vector<8x128xf32>
    %341 = arith.mulf %340, %96 : vector<8x128xf32>
    %342 = arith.addf %338, %341 : vector<8x128xf32>
    %343 = arith.addf %331, %342 : vector<8x128xf32>
    %c54 = arith.constant 54 : index
    %344 = memref.load %arg6[%c54] : memref<96xf32, #tpu.memory_space<smem>>
    %345 = vector.broadcast %344 : f32 to vector<8x128xf32>
    %346 = arith.mulf %345, %99 : vector<8x128xf32>
    %c55 = arith.constant 55 : index
    %347 = memref.load %arg6[%c55] : memref<96xf32, #tpu.memory_space<smem>>
    %348 = vector.broadcast %347 : f32 to vector<8x128xf32>
    %349 = arith.mulf %348, %67 : vector<8x128xf32>
    %350 = arith.addf %346, %349 : vector<8x128xf32>
    %c56 = arith.constant 56 : index
    %351 = memref.load %arg6[%c56] : memref<96xf32, #tpu.memory_space<smem>>
    %352 = vector.broadcast %351 : f32 to vector<8x128xf32>
    %353 = arith.mulf %352, %102 : vector<8x128xf32>
    %354 = arith.addf %350, %353 : vector<8x128xf32>
    %355 = arith.addf %343, %354 : vector<8x128xf32>
    %c57 = arith.constant 57 : index
    %356 = memref.load %arg6[%c57] : memref<96xf32, #tpu.memory_space<smem>>
    %357 = vector.broadcast %356 : f32 to vector<8x128xf32>
    %358 = arith.mulf %357, %105 : vector<8x128xf32>
    %c58 = arith.constant 58 : index
    %359 = memref.load %arg6[%c58] : memref<96xf32, #tpu.memory_space<smem>>
    %360 = vector.broadcast %359 : f32 to vector<8x128xf32>
    %361 = arith.mulf %360, %84 : vector<8x128xf32>
    %362 = arith.addf %358, %361 : vector<8x128xf32>
    %c59 = arith.constant 59 : index
    %363 = memref.load %arg6[%c59] : memref<96xf32, #tpu.memory_space<smem>>
    %364 = vector.broadcast %363 : f32 to vector<8x128xf32>
    %365 = arith.mulf %364, %108 : vector<8x128xf32>
    %366 = arith.addf %362, %365 : vector<8x128xf32>
    %367 = arith.addf %355, %366 : vector<8x128xf32>
    %c4_47 = arith.constant 4 : index
    %368 = memref.load %arg7[%c4_47] : memref<8xf32, #tpu.memory_space<smem>>
    %369 = vector.broadcast %368 : f32 to vector<8x128xf32>
    %370 = arith.addf %367, %369 : vector<8x128xf32>
    %cst_48 = arith.constant 0.00999999977 : f32
    %371 = vector.broadcast %cst_48 : f32 to vector<8x128xf32>
    %372 = arith.mulf %371, %370 : vector<8x128xf32>
    %373 = arith.maximumf %370, %372 : vector<8x128xf32>
    %c60 = arith.constant 60 : index
    %374 = memref.load %arg6[%c60] : memref<96xf32, #tpu.memory_space<smem>>
    %375 = vector.broadcast %374 : f32 to vector<8x128xf32>
    %376 = arith.mulf %375, %87 : vector<8x128xf32>
    %c61 = arith.constant 61 : index
    %377 = memref.load %arg6[%c61] : memref<96xf32, #tpu.memory_space<smem>>
    %378 = vector.broadcast %377 : f32 to vector<8x128xf32>
    %379 = arith.mulf %378, %33 : vector<8x128xf32>
    %380 = arith.addf %376, %379 : vector<8x128xf32>
    %c62 = arith.constant 62 : index
    %381 = memref.load %arg6[%c62] : memref<96xf32, #tpu.memory_space<smem>>
    %382 = vector.broadcast %381 : f32 to vector<8x128xf32>
    %383 = arith.mulf %382, %90 : vector<8x128xf32>
    %384 = arith.addf %380, %383 : vector<8x128xf32>
    %c63 = arith.constant 63 : index
    %385 = memref.load %arg6[%c63] : memref<96xf32, #tpu.memory_space<smem>>
    %386 = vector.broadcast %385 : f32 to vector<8x128xf32>
    %387 = arith.mulf %386, %93 : vector<8x128xf32>
    %c64 = arith.constant 64 : index
    %388 = memref.load %arg6[%c64] : memref<96xf32, #tpu.memory_space<smem>>
    %389 = vector.broadcast %388 : f32 to vector<8x128xf32>
    %390 = arith.mulf %389, %50 : vector<8x128xf32>
    %391 = arith.addf %387, %390 : vector<8x128xf32>
    %c65 = arith.constant 65 : index
    %392 = memref.load %arg6[%c65] : memref<96xf32, #tpu.memory_space<smem>>
    %393 = vector.broadcast %392 : f32 to vector<8x128xf32>
    %394 = arith.mulf %393, %96 : vector<8x128xf32>
    %395 = arith.addf %391, %394 : vector<8x128xf32>
    %396 = arith.addf %384, %395 : vector<8x128xf32>
    %c66 = arith.constant 66 : index
    %397 = memref.load %arg6[%c66] : memref<96xf32, #tpu.memory_space<smem>>
    %398 = vector.broadcast %397 : f32 to vector<8x128xf32>
    %399 = arith.mulf %398, %99 : vector<8x128xf32>
    %c67 = arith.constant 67 : index
    %400 = memref.load %arg6[%c67] : memref<96xf32, #tpu.memory_space<smem>>
    %401 = vector.broadcast %400 : f32 to vector<8x128xf32>
    %402 = arith.mulf %401, %67 : vector<8x128xf32>
    %403 = arith.addf %399, %402 : vector<8x128xf32>
    %c68 = arith.constant 68 : index
    %404 = memref.load %arg6[%c68] : memref<96xf32, #tpu.memory_space<smem>>
    %405 = vector.broadcast %404 : f32 to vector<8x128xf32>
    %406 = arith.mulf %405, %102 : vector<8x128xf32>
    %407 = arith.addf %403, %406 : vector<8x128xf32>
    %408 = arith.addf %396, %407 : vector<8x128xf32>
    %c69 = arith.constant 69 : index
    %409 = memref.load %arg6[%c69] : memref<96xf32, #tpu.memory_space<smem>>
    %410 = vector.broadcast %409 : f32 to vector<8x128xf32>
    %411 = arith.mulf %410, %105 : vector<8x128xf32>
    %c70 = arith.constant 70 : index
    %412 = memref.load %arg6[%c70] : memref<96xf32, #tpu.memory_space<smem>>
    %413 = vector.broadcast %412 : f32 to vector<8x128xf32>
    %414 = arith.mulf %413, %84 : vector<8x128xf32>
    %415 = arith.addf %411, %414 : vector<8x128xf32>
    %c71 = arith.constant 71 : index
    %416 = memref.load %arg6[%c71] : memref<96xf32, #tpu.memory_space<smem>>
    %417 = vector.broadcast %416 : f32 to vector<8x128xf32>
    %418 = arith.mulf %417, %108 : vector<8x128xf32>
    %419 = arith.addf %415, %418 : vector<8x128xf32>
    %420 = arith.addf %408, %419 : vector<8x128xf32>
    %c5_49 = arith.constant 5 : index
    %421 = memref.load %arg7[%c5_49] : memref<8xf32, #tpu.memory_space<smem>>
    %422 = vector.broadcast %421 : f32 to vector<8x128xf32>
    %423 = arith.addf %420, %422 : vector<8x128xf32>
    %cst_50 = arith.constant 0.00999999977 : f32
    %424 = vector.broadcast %cst_50 : f32 to vector<8x128xf32>
    %425 = arith.mulf %424, %423 : vector<8x128xf32>
    %426 = arith.maximumf %423, %425 : vector<8x128xf32>
    %c72 = arith.constant 72 : index
    %427 = memref.load %arg6[%c72] : memref<96xf32, #tpu.memory_space<smem>>
    %428 = vector.broadcast %427 : f32 to vector<8x128xf32>
    %429 = arith.mulf %428, %87 : vector<8x128xf32>
    %c73 = arith.constant 73 : index
    %430 = memref.load %arg6[%c73] : memref<96xf32, #tpu.memory_space<smem>>
    %431 = vector.broadcast %430 : f32 to vector<8x128xf32>
    %432 = arith.mulf %431, %33 : vector<8x128xf32>
    %433 = arith.addf %429, %432 : vector<8x128xf32>
    %c74 = arith.constant 74 : index
    %434 = memref.load %arg6[%c74] : memref<96xf32, #tpu.memory_space<smem>>
    %435 = vector.broadcast %434 : f32 to vector<8x128xf32>
    %436 = arith.mulf %435, %90 : vector<8x128xf32>
    %437 = arith.addf %433, %436 : vector<8x128xf32>
    %c75 = arith.constant 75 : index
    %438 = memref.load %arg6[%c75] : memref<96xf32, #tpu.memory_space<smem>>
    %439 = vector.broadcast %438 : f32 to vector<8x128xf32>
    %440 = arith.mulf %439, %93 : vector<8x128xf32>
    %c76 = arith.constant 76 : index
    %441 = memref.load %arg6[%c76] : memref<96xf32, #tpu.memory_space<smem>>
    %442 = vector.broadcast %441 : f32 to vector<8x128xf32>
    %443 = arith.mulf %442, %50 : vector<8x128xf32>
    %444 = arith.addf %440, %443 : vector<8x128xf32>
    %c77 = arith.constant 77 : index
    %445 = memref.load %arg6[%c77] : memref<96xf32, #tpu.memory_space<smem>>
    %446 = vector.broadcast %445 : f32 to vector<8x128xf32>
    %447 = arith.mulf %446, %96 : vector<8x128xf32>
    %448 = arith.addf %444, %447 : vector<8x128xf32>
    %449 = arith.addf %437, %448 : vector<8x128xf32>
    %c78 = arith.constant 78 : index
    %450 = memref.load %arg6[%c78] : memref<96xf32, #tpu.memory_space<smem>>
    %451 = vector.broadcast %450 : f32 to vector<8x128xf32>
    %452 = arith.mulf %451, %99 : vector<8x128xf32>
    %c79 = arith.constant 79 : index
    %453 = memref.load %arg6[%c79] : memref<96xf32, #tpu.memory_space<smem>>
    %454 = vector.broadcast %453 : f32 to vector<8x128xf32>
    %455 = arith.mulf %454, %67 : vector<8x128xf32>
    %456 = arith.addf %452, %455 : vector<8x128xf32>
    %c80 = arith.constant 80 : index
    %457 = memref.load %arg6[%c80] : memref<96xf32, #tpu.memory_space<smem>>
    %458 = vector.broadcast %457 : f32 to vector<8x128xf32>
    %459 = arith.mulf %458, %102 : vector<8x128xf32>
    %460 = arith.addf %456, %459 : vector<8x128xf32>
    %461 = arith.addf %449, %460 : vector<8x128xf32>
    %c81 = arith.constant 81 : index
    %462 = memref.load %arg6[%c81] : memref<96xf32, #tpu.memory_space<smem>>
    %463 = vector.broadcast %462 : f32 to vector<8x128xf32>
    %464 = arith.mulf %463, %105 : vector<8x128xf32>
    %c82 = arith.constant 82 : index
    %465 = memref.load %arg6[%c82] : memref<96xf32, #tpu.memory_space<smem>>
    %466 = vector.broadcast %465 : f32 to vector<8x128xf32>
    %467 = arith.mulf %466, %84 : vector<8x128xf32>
    %468 = arith.addf %464, %467 : vector<8x128xf32>
    %c83 = arith.constant 83 : index
    %469 = memref.load %arg6[%c83] : memref<96xf32, #tpu.memory_space<smem>>
    %470 = vector.broadcast %469 : f32 to vector<8x128xf32>
    %471 = arith.mulf %470, %108 : vector<8x128xf32>
    %472 = arith.addf %468, %471 : vector<8x128xf32>
    %473 = arith.addf %461, %472 : vector<8x128xf32>
    %c6_51 = arith.constant 6 : index
    %474 = memref.load %arg7[%c6_51] : memref<8xf32, #tpu.memory_space<smem>>
    %475 = vector.broadcast %474 : f32 to vector<8x128xf32>
    %476 = arith.addf %473, %475 : vector<8x128xf32>
    %cst_52 = arith.constant 0.00999999977 : f32
    %477 = vector.broadcast %cst_52 : f32 to vector<8x128xf32>
    %478 = arith.mulf %477, %476 : vector<8x128xf32>
    %479 = arith.maximumf %476, %478 : vector<8x128xf32>
    %c84 = arith.constant 84 : index
    %480 = memref.load %arg6[%c84] : memref<96xf32, #tpu.memory_space<smem>>
    %481 = vector.broadcast %480 : f32 to vector<8x128xf32>
    %482 = arith.mulf %481, %87 : vector<8x128xf32>
    %c85 = arith.constant 85 : index
    %483 = memref.load %arg6[%c85] : memref<96xf32, #tpu.memory_space<smem>>
    %484 = vector.broadcast %483 : f32 to vector<8x128xf32>
    %485 = arith.mulf %484, %33 : vector<8x128xf32>
    %486 = arith.addf %482, %485 : vector<8x128xf32>
    %c86 = arith.constant 86 : index
    %487 = memref.load %arg6[%c86] : memref<96xf32, #tpu.memory_space<smem>>
    %488 = vector.broadcast %487 : f32 to vector<8x128xf32>
    %489 = arith.mulf %488, %90 : vector<8x128xf32>
    %490 = arith.addf %486, %489 : vector<8x128xf32>
    %c87 = arith.constant 87 : index
    %491 = memref.load %arg6[%c87] : memref<96xf32, #tpu.memory_space<smem>>
    %492 = vector.broadcast %491 : f32 to vector<8x128xf32>
    %493 = arith.mulf %492, %93 : vector<8x128xf32>
    %c88 = arith.constant 88 : index
    %494 = memref.load %arg6[%c88] : memref<96xf32, #tpu.memory_space<smem>>
    %495 = vector.broadcast %494 : f32 to vector<8x128xf32>
    %496 = arith.mulf %495, %50 : vector<8x128xf32>
    %497 = arith.addf %493, %496 : vector<8x128xf32>
    %c89 = arith.constant 89 : index
    %498 = memref.load %arg6[%c89] : memref<96xf32, #tpu.memory_space<smem>>
    %499 = vector.broadcast %498 : f32 to vector<8x128xf32>
    %500 = arith.mulf %499, %96 : vector<8x128xf32>
    %501 = arith.addf %497, %500 : vector<8x128xf32>
    %502 = arith.addf %490, %501 : vector<8x128xf32>
    %c90 = arith.constant 90 : index
    %503 = memref.load %arg6[%c90] : memref<96xf32, #tpu.memory_space<smem>>
    %504 = vector.broadcast %503 : f32 to vector<8x128xf32>
    %505 = arith.mulf %504, %99 : vector<8x128xf32>
    %c91 = arith.constant 91 : index
    %506 = memref.load %arg6[%c91] : memref<96xf32, #tpu.memory_space<smem>>
    %507 = vector.broadcast %506 : f32 to vector<8x128xf32>
    %508 = arith.mulf %507, %67 : vector<8x128xf32>
    %509 = arith.addf %505, %508 : vector<8x128xf32>
    %c92 = arith.constant 92 : index
    %510 = memref.load %arg6[%c92] : memref<96xf32, #tpu.memory_space<smem>>
    %511 = vector.broadcast %510 : f32 to vector<8x128xf32>
    %512 = arith.mulf %511, %102 : vector<8x128xf32>
    %513 = arith.addf %509, %512 : vector<8x128xf32>
    %514 = arith.addf %502, %513 : vector<8x128xf32>
    %c93 = arith.constant 93 : index
    %515 = memref.load %arg6[%c93] : memref<96xf32, #tpu.memory_space<smem>>
    %516 = vector.broadcast %515 : f32 to vector<8x128xf32>
    %517 = arith.mulf %516, %105 : vector<8x128xf32>
    %c94 = arith.constant 94 : index
    %518 = memref.load %arg6[%c94] : memref<96xf32, #tpu.memory_space<smem>>
    %519 = vector.broadcast %518 : f32 to vector<8x128xf32>
    %520 = arith.mulf %519, %84 : vector<8x128xf32>
    %521 = arith.addf %517, %520 : vector<8x128xf32>
    %c95 = arith.constant 95 : index
    %522 = memref.load %arg6[%c95] : memref<96xf32, #tpu.memory_space<smem>>
    %523 = vector.broadcast %522 : f32 to vector<8x128xf32>
    %524 = arith.mulf %523, %108 : vector<8x128xf32>
    %525 = arith.addf %521, %524 : vector<8x128xf32>
    %526 = arith.addf %514, %525 : vector<8x128xf32>
    %c7_53 = arith.constant 7 : index
    %527 = memref.load %arg7[%c7_53] : memref<8xf32, #tpu.memory_space<smem>>
    %528 = vector.broadcast %527 : f32 to vector<8x128xf32>
    %529 = arith.addf %526, %528 : vector<8x128xf32>
    %cst_54 = arith.constant 0.00999999977 : f32
    %530 = vector.broadcast %cst_54 : f32 to vector<8x128xf32>
    %531 = arith.mulf %530, %529 : vector<8x128xf32>
    %532 = arith.maximumf %529, %531 : vector<8x128xf32>
    %533 = tpu.concatenate %161, %214, %267, %320, %373, %426, %479, %532 in 1 : vector<8x128xf32>, vector<8x128xf32>, vector<8x128xf32>, vector<8x128xf32>, vector<8x128xf32>, vector<8x128xf32>, vector<8x128xf32>, vector<8x128xf32> -> vector<8x1024xf32>
    %534 = arith.truncf %533 : vector<8x1024xf32> to vector<8x1024xbf16>
    %c0_55 = arith.constant 0 : index
    %c0_56 = arith.constant 0 : index
    %535 = vector.load %arg10[%c0_55, %c0_56] : memref<1024x1024xbf16, #tpu.memory_space<vmem>>, vector<1024x1024xbf16>
    %cst_57 = arith.constant dense<0.000000e+00> : vector<8x1024xf32>
    %536 = tpu.matmul %534, %535, %cst_57 {dimension_numbers = #tpu.dot_dimension_numbers<[1], [0], [0], [1], [0, 0, 1, 1], [], []>} : vector<8x1024xbf16>, vector<1024x1024xbf16>, vector<8x1024xf32> -> vector<8x1024xf32>
    %c0_58 = arith.constant 0 : index
    %c0_59 = arith.constant 0 : index
    %537 = vector.load %arg11[%c0_58, %c0_59] : memref<1x1024xf32, #tpu.memory_space<vmem>>, vector<1x1024xf32>
    %538 = vector.broadcast %537 : vector<1x1024xf32> to vector<8x1024xf32>
    %539 = arith.addf %536, %538 : vector<8x1024xf32>
    %cst_60 = arith.constant 0.000000e+00 : f32
    %540 = vector.broadcast %cst_60 : f32 to vector<8x1024xf32>
    %541 = arith.maximumf %539, %540 : vector<8x1024xf32>
    %542 = arith.truncf %541 : vector<8x1024xf32> to vector<8x1024xbf16>
    %c0_61 = arith.constant 0 : index
    %c0_62 = arith.constant 0 : index
    %543 = vector.load %arg12[%c0_61, %c0_62] : memref<1024x1024xbf16, #tpu.memory_space<vmem>>, vector<1024x1024xbf16>
    %cst_63 = arith.constant dense<0.000000e+00> : vector<8x1024xf32>
    %544 = tpu.matmul %542, %543, %cst_63 {dimension_numbers = #tpu.dot_dimension_numbers<[1], [0], [0], [1], [0, 0, 1, 1], [], []>} : vector<8x1024xbf16>, vector<1024x1024xbf16>, vector<8x1024xf32> -> vector<8x1024xf32>
    %c0_64 = arith.constant 0 : index
    %c0_65 = arith.constant 0 : index
    %545 = vector.load %arg13[%c0_64, %c0_65] : memref<1x1024xf32, #tpu.memory_space<vmem>>, vector<1x1024xf32>
    %546 = vector.broadcast %545 : vector<1x1024xf32> to vector<8x1024xf32>
    %547 = arith.addf %544, %546 : vector<8x1024xf32>
    %cst_66 = arith.constant 0.000000e+00 : f32
    %548 = vector.broadcast %cst_66 : f32 to vector<8x1024xf32>
    %549 = arith.maximumf %547, %548 : vector<8x1024xf32>
    %550 = arith.truncf %549 : vector<8x1024xf32> to vector<8x1024xbf16>
    %c0_67 = arith.constant 0 : index
    %c0_68 = arith.constant 0 : index
    %551 = vector.load %arg14[%c0_67, %c0_68] : memref<1024x128xbf16, #tpu.memory_space<vmem>>, vector<1024x128xbf16>
    %cst_69 = arith.constant dense<0.000000e+00> : vector<8x128xf32>
    %552 = tpu.matmul %550, %551, %cst_69 {dimension_numbers = #tpu.dot_dimension_numbers<[1], [0], [0], [1], [0, 0, 1, 1], [], []>} : vector<8x1024xbf16>, vector<1024x128xbf16>, vector<8x128xf32> -> vector<8x128xf32>
    %c0_70 = arith.constant 0 : index
    %c0_71 = arith.constant 0 : index
    %553 = vector.load %arg15[%c0_70, %c0_71] : memref<1x128xf32, #tpu.memory_space<vmem>>, vector<1x128xf32>
    %554 = vector.broadcast %553 : vector<1x128xf32> to vector<8x128xf32>
    %555 = arith.addf %552, %554 : vector<8x128xf32>
    %c0_72 = arith.constant 0 : index
    %c0_73 = arith.constant 0 : index
    %556 = vector.load %arg16[%c0_72, %c0_73] : memref<8x128xf32, #tpu.memory_space<vmem>>, vector<8x128xf32>
    tpu.vector_store %arg16[%c0_72, %c0_73], %555 {strides = array<i32>} : memref<8x128xf32, #tpu.memory_space<vmem>>, vector<8x128xf32>,
    return
  }
  func.func @transform_0(%arg0: i32) -> (i32, i32) {
    %c0_i32 = arith.constant 0 : i32
    %c0_i32_0 = arith.constant 0 : i32
    return %arg0, %c0_i32 : i32, i32
  }
  func.func @transform_1(%arg0: i32) -> (i32, i32) {
    %c0_i32 = arith.constant 0 : i32
    %c0_i32_0 = arith.constant 0 : i32
    %c0_i32_1 = arith.constant 0 : i32
    return %c0_i32, %c0_i32_0 : i32, i32
  }
  func.func @transform_2(%arg0: i32) -> (i32, i32) {
    %c0_i32 = arith.constant 0 : i32
    %c0_i32_0 = arith.constant 0 : i32
    %c0_i32_1 = arith.constant 0 : i32
    return %c0_i32, %c0_i32_0 : i32, i32
  }
  func.func @transform_3(%arg0: i32) -> i32 {
    %c0_i32 = arith.constant 0 : i32
    %c0_i32_0 = arith.constant 0 : i32
    return %c0_i32 : i32
  }
  func.func @transform_4(%arg0: i32) -> i32 {
    %c0_i32 = arith.constant 0 : i32
    %c0_i32_0 = arith.constant 0 : i32
    return %c0_i32 : i32
  }
  func.func @transform_5(%arg0: i32) -> i32 {
    %c0_i32 = arith.constant 0 : i32
    %c0_i32_0 = arith.constant 0 : i32
    return %c0_i32 : i32
  }
  func.func @transform_6(%arg0: i32) -> i32 {
    %c0_i32 = arith.constant 0 : i32
    %c0_i32_0 = arith.constant 0 : i32
    return %c0_i32 : i32
  }
  func.func @transform_7(%arg0: i32) -> (i32, i32) {
    %c0_i32 = arith.constant 0 : i32
    %c0_i32_0 = arith.constant 0 : i32
    %c0_i32_1 = arith.constant 0 : i32
    return %c0_i32, %c0_i32_0 : i32, i32
  }
  func.func @transform_8(%arg0: i32) -> (i32, i32) {
    %c0_i32 = arith.constant 0 : i32
    %c0_i32_0 = arith.constant 0 : i32
    %c0_i32_1 = arith.constant 0 : i32
    return %c0_i32, %c0_i32_0 : i32, i32
  }
  func.func @transform_9(%arg0: i32) -> (i32, i32) {
    %c0_i32 = arith.constant 0 : i32
    %c0_i32_0 = arith.constant 0 : i32
    %c0_i32_1 = arith.constant 0 : i32
    return %c0_i32, %c0_i32_0 : i32, i32
  }
  func.func @transform_10(%arg0: i32) -> (i32, i32) {
    %c0_i32 = arith.constant 0 : i32
    %c0_i32_0 = arith.constant 0 : i32
    %c0_i32_1 = arith.constant 0 : i32
    return %c0_i32, %c0_i32_0 : i32, i32
  }
  func.func @transform_11(%arg0: i32) -> (i32, i32) {
    %c0_i32 = arith.constant 0 : i32
    %c0_i32_0 = arith.constant 0 : i32
    %c0_i32_1 = arith.constant 0 : i32
    return %c0_i32, %c0_i32_0 : i32, i32
  }
  func.func @transform_12(%arg0: i32) -> (i32, i32) {
    %c0_i32 = arith.constant 0 : i32
    %c0_i32_0 = arith.constant 0 : i32
    %c0_i32_1 = arith.constant 0 : i32
    return %c0_i32, %c0_i32_0 : i32, i32
  }
  func.func @transform_13(%arg0: i32) -> (i32, i32) {
    %c0_i32 = arith.constant 0 : i32
    %c0_i32_0 = arith.constant 0 : i32
    %c0_i32_1 = arith.constant 0 : i32
    return %c0_i32, %c0_i32_0 : i32, i32
  }
  func.func @transform_14(%arg0: i32) -> (i32, i32) {
    %c0_i32 = arith.constant 0 : i32
    %c0_i32_0 = arith.constant 0 : i32
    %c0_i32_1 = arith.constant 0 : i32
    return %c0_i32, %c0_i32_0 : i32, i32
  }
  func.func @transform_15(%arg0: i32) -> (i32, i32) {
    %c0_i32 = arith.constant 0 : i32
    %c0_i32_0 = arith.constant 0 : i32
    return %arg0, %c0_i32 : i32, i32
  }
}

</mosaic_0001>

<llo_original>
// kernel: tpu_custom_call.1
$region0: #{tpu_custom_call.1}
  #allocation0 [shape = 'u32[]', space=smem, size = 0x4, offset = 0x4, fixed_abs, tag = 'smem constant byte address 0x4 - core index']
  #allocation1 [shape = 'u32[144,128]{1,0:T(1,128)}', space=vmem, size = 0x12000, scoped, tag = 'internal scratch']
  %s0 = inlined_call_operand.hbm [shape: f32[8,32], index: 0, kind: input, shape index: {}]
  %s1 = inlined_call_operand.hbm [shape: f32[32,128], index: 1, kind: input, shape index: {}]
  %s2 = inlined_call_operand.hbm [shape: f32[1,128], index: 2, kind: input, shape index: {}]
  %s3 = inlined_call_operand.hbm [shape: f32[12], index: 3, kind: input, shape index: {}]
  %s4 = inlined_call_operand.hbm [shape: f32[4], index: 4, kind: input, shape index: {}]
  %s5 = inlined_call_operand.hbm [shape: f32[96], index: 5, kind: input, shape index: {}]
  %s6 = inlined_call_operand.hbm [shape: f32[8], index: 6, kind: input, shape index: {}]
  %s7 = inlined_call_operand.hbm [shape: f32[1,128], index: 7, kind: input, shape index: {}]
  %s8 = inlined_call_operand.hbm [shape: f32[1,128], index: 8, kind: input, shape index: {}]
  %s9 = inlined_call_operand.hbm [shape: bf16[1024,1024], index: 9, kind: input, shape index: {}]
  %s10 = inlined_call_operand.hbm [shape: f32[1,1024], index: 10, kind: input, shape index: {}]
  %s11 = inlined_call_operand.hbm [shape: bf16[1024,1024], index: 11, kind: input, shape index: {}]
  %s12 = inlined_call_operand.hbm [shape: f32[1,1024], index: 12, kind: input, shape index: {}]
  %s13 = inlined_call_operand.hbm [shape: bf16[1024,128], index: 13, kind: input, shape index: {}]
  %s14 = inlined_call_operand.hbm [shape: f32[1,128], index: 14, kind: input, shape index: {}]
  %s15 = inlined_call_operand.hbm [shape: f32[8,128], index: 15, kind: output, shape index: {}]
  %s16 = sld [smem:[#allocation0]]
  $region130: #{tpu_custom_call.1} parent=0
    _
  %s18 = ssub.s32 1, %s16
  %s19 = scalar_select 0, %s18, %s16
  $region1: #{tpu_custom_call.1} parent=0
    #allocation2 [shape = 'u8[4096]{0}', space=vmem, size = 0x1000, scoped, tag = 'input window, operand 0, single buffered']
    #allocation3 [shape = 's32[1]{0}', space=sflag, size = 0x4, scoped, tag = 'scoped memory for tpu_custom_call.1']
    #allocation4 [shape = 's32[1]{0}', space=sflag, size = 0x4, scoped, tag = 'scoped memory for tpu_custom_call.1']
    #allocation5 [shape = 's32[1]{0}', space=sflag, size = 0x4, scoped, tag = 'scoped memory for tpu_custom_call.1']
    #allocation6 [shape = 'u8[16384]{0}', space=vmem, size = 0x4000, scoped, tag = 'input window, operand 1, single buffered']
    #allocation7 [shape = 's32[1]{0}', space=sflag, size = 0x4, scoped, tag = 'scoped memory for tpu_custom_call.1']
    #allocation8 [shape = 'u8[512]{0}', space=vmem, size = 0x400, scoped, tag = 'input window, operand 2, single buffered']
    #allocation9 [shape = 'u8[512]{0}', space=smem, size = 0x200, scoped, tag = 'input window, operand 3, single buffered']
    #allocation10 [shape = 'u8[512]{0}', space=smem, size = 0x200, scoped, tag = 'input window, operand 4, single buffered']
    #allocation11 [shape = 's32[1]{0}', space=sflag, size = 0x4, scoped, tag = 'scoped memory for tpu_custom_call.1']
    #allocation12 [shape = 'u8[512]{0}', space=smem, size = 0x200, scoped, tag = 'input window, operand 5, single buffered']
    #allocation13 [shape = 'u8[512]{0}', space=smem, size = 0x200, scoped, tag = 'input window, operand 6, single buffered']
    #allocation14 [shape = 's32[1]{0}', space=sflag, size = 0x4, scoped, tag = 'scoped memory for tpu_custom_call.1']
    #allocation15 [shape = 'u8[512]{0}', space=vmem, size = 0x400, scoped, tag = 'input window, operand 7, single buffered']
    #allocation16 [shape = 's32[1]{0}', space=sflag, size = 0x4, scoped, tag = 'scoped memory for tpu_custom_call.1']
    #allocation17 [shape = 'u8[512]{0}', space=vmem, size = 0x400, scoped, tag = 'input window, operand 8, single buffered']
    #allocation18 [shape = 'u8[2097152]{0}', space=vmem, size = 0x200000, scoped, tag = 'input window, operand 9, single buffered']
    #allocation19 [shape = 's32[1]{0}', space=sflag, size = 0x4, scoped, tag = 'scoped memory for tpu_custom_call.1']
    #allocation20 [shape = 'u8[4096]{0}', space=vmem, size = 0x1000, scoped, tag = 'input window, operand 10, single buffered']
    #allocation21 [shape = 'u8[2097152]{0}', space=vmem, size = 0x200000, scoped, tag = 'input window, operand 11, single buffered']
    #allocation22 [shape = 's32[1]{0}', space=sflag, size = 0x4, scoped, tag = 'scoped memory for tpu_custom_call.1']
    #allocation23 [shape = 'u8[4096]{0}', space=vmem, size = 0x1000, scoped, tag = 'input window, operand 12, single buffered']
    #allocation24 [shape = 'u8[262144]{0}', space=vmem, size = 0x40000, scoped, tag = 'input window, operand 13, single buffered']
    #allocation25 [shape = 's32[1]{0}', space=sflag, size = 0x4, scoped, tag = 'scoped memory for tpu_custom_call.1']
    #allocation26 [shape = 'u8[512]{0}', space=vmem, size = 0x400, scoped, tag = 'input window, operand 14, single buffered']
    #allocation27 [shape = 'u8[4096]{0}', space=vmem, size = 0x1000, scoped, tag = 'output window, operand 0, single buffered']
    %20 = vsyncpa [#allocation3], 0
    %21 = vsyncpa [#allocation7], 0
    %22 = vsyncpa [#allocation5], 0
    %23 = vsyncpa [#allocation11], 0
    %24 = vsyncpa [#allocation14], 0
    %25 = vsyncpa [#allocation16], 0
    %26 = vsyncpa [#allocation19], 0
    %27 = vsyncpa [#allocation22], 0
    %28 = vsyncpa [#allocation25], 0
    %29 = vsyncpa [#allocation4], 0
    // Predicated region
    $region2: #{tpu_custom_call.1} parent=1 // pred_check
      _
    $region3: #{tpu_custom_call.1} parent=1 // pred_check_branch
      %31 = sbr.rel (0) target = $region5
    $region4: #{tpu_custom_call.1} parent=1 // pred_region
      %s33 = ssub.s32 128, 128
      %34 = vsyncadd [#allocation3], %s33
      %s36 = sshll.u32 [#allocation2], 4
      %s37 = int_to_ptr.vmem [resolvable:$true] %s36
      %39 = dma.hbm_to_vmem [thread:$0]  %s0, 128, %s37, [#allocation3]
    $region5: #{tpu_custom_call.1} parent=1 // pred_fallthru
      _
    // Predicated region
    $region6: #{tpu_custom_call.1} parent=1 // pred_check
      _
    $region7: #{tpu_custom_call.1} parent=1 // pred_check_branch
      %41 = sbr.rel (0) target = $region9
    $region8: #{tpu_custom_call.1} parent=1 // pred_region
      %s43 = ssub.s32 512, 512
      %44 = vsyncadd [#allocation7], %s43
      %s45 = sshll.u32 [#allocation6], 4
      %s46 = int_to_ptr.vmem [resolvable:$true] %s45
      %51 = dma.hbm_to_vmem [thread:$0]  %s1, 512, %s46, [#allocation7], 128, 128, 8
    $region9: #{tpu_custom_call.1} parent=1 // pred_fallthru
      _
    // Predicated region
    $region10: #{tpu_custom_call.1} parent=1 // pred_check
      _
    $region11: #{tpu_custom_call.1} parent=1 // pred_check_branch
      %53 = sbr.rel (0) target = $region13
    $region12: #{tpu_custom_call.1} parent=1 // pred_region
      %s55 = ssub.s32 16, 16
      %56 = vsyncadd [#allocation7], %s55
      %s58 = sshll.u32 [#allocation8], 4
      %s59 = int_to_ptr.vmem [resolvable:$true] %s58
      %61 = dma.hbm_to_vmem [thread:$0]  %s2, 16, %s59, [#allocation7]
    $region13: #{tpu_custom_call.1} parent=1 // pred_fallthru
      _
    // Predicated region
    $region14: #{tpu_custom_call.1} parent=1 // pred_check
      _
    $region15: #{tpu_custom_call.1} parent=1 // pred_check_branch
      %63 = sbr.rel (0) target = $region17
    $region16: #{tpu_custom_call.1} parent=1 // pred_region
      %s65 = ssub.s32 16, 16
      %66 = vsyncadd [#allocation5], %s65
      %69 = dma.hbm_to_smem %s3, 16, [#allocation9], [#allocation5]
    $region17: #{tpu_custom_call.1} parent=1 // pred_fallthru
      _
    // Predicated region
    $region18: #{tpu_custom_call.1} parent=1 // pred_check
      _
    $region19: #{tpu_custom_call.1} parent=1 // pred_check_branch
      %71 = sbr.rel (0) target = $region21
    $region20: #{tpu_custom_call.1} parent=1 // pred_region
      %s73 = ssub.s32 16, 16
      %74 = vsyncadd [#allocation11], %s73
      %77 = dma.hbm_to_smem %s4, 16, [#allocation10], [#allocation11]
    $region21: #{tpu_custom_call.1} parent=1 // pred_fallthru
      _
    // Predicated region
    $region22: #{tpu_custom_call.1} parent=1 // pred_check
      _
    $region23: #{tpu_custom_call.1} parent=1 // pred_check_branch
      %79 = sbr.rel (0) target = $region25
    $region24: #{tpu_custom_call.1} parent=1 // pred_region
      %s81 = ssub.s32 16, 16
      %82 = vsyncadd [#allocation11], %s81
      %85 = dma.hbm_to_smem %s5, 16, [#allocation12], [#allocation11]
    $region25: #{tpu_custom_call.1} parent=1 // pred_fallthru
      _
    // Predicated region
    $region26: #{tpu_custom_call.1} parent=1 // pred_check
      _
    $region27: #{tpu_custom_call.1} parent=1 // pred_check_branch
      %87 = sbr.rel (0) target = $region29
    $region28: #{tpu_custom_call.1} parent=1 // pred_region
      %s89 = ssub.s32 16, 16
      %90 = vsyncadd [#allocation14], %s89
      %93 = dma.hbm_to_smem %s6, 16, [#allocation13], [#allocation14]
    $region29: #{tpu_custom_call.1} parent=1 // pred_fallthru
      _
    // Predicated region
    $region30: #{tpu_custom_call.1} parent=1 // pred_check
      _
    $region31: #{tpu_custom_call.1} parent=1 // pred_check_branch
      %95 = sbr.rel (0) target = $region33
    $region32: #{tpu_custom_call.1} parent=1 // pred_region
      %s97 = ssub.s32 16, 16
      %98 = vsyncadd [#allocation16], %s97
      %s100 = sshll.u32 [#allocation15], 4
      %s101 = int_to_ptr.vmem [resolvable:$true] %s100
      %103 = dma.hbm_to_vmem [thread:$0]  %s7, 16, %s101, [#allocation16]
    $region33: #{tpu_custom_call.1} parent=1 // pred_fallthru
      _
    // Predicated region
    $region34: #{tpu_custom_call.1} parent=1 // pred_check
      _
    $region35: #{tpu_custom_call.1} parent=1 // pred_check_branch
      %105 = sbr.rel (0) target = $region37
    $region36: #{tpu_custom_call.1} parent=1 // pred_region
      %s107 = ssub.s32 16, 16
      %108 = vsyncadd [#allocation16], %s107
      %s110 = sshll.u32 [#allocation17], 4
      %s111 = int_to_ptr.vmem [resolvable:$true] %s110
      %113 = dma.hbm_to_vmem [thread:$0]  %s8, 16, %s111, [#allocation16]
    $region37: #{tpu_custom_call.1} parent=1 // pred_fallthru
      _
    // Predicated region
    $region38: #{tpu_custom_call.1} parent=1 // pred_check
      _
    $region39: #{tpu_custom_call.1} parent=1 // pred_check_branch
      %115 = sbr.rel (0) target = $region41
    $region40: #{tpu_custom_call.1} parent=1 // pred_region
      %s117 = ssub.s32 65536, 65536
      %118 = vsyncadd [#allocation19], %s117
      %s119 = sshll.u32 [#allocation18], 4
      %s120 = int_to_ptr.vmem [resolvable:$true] %s119
      %125 = dma.hbm_to_vmem [thread:$0]  %s9, 65536, %s120, [#allocation19], 512, 512, 32
    $region41: #{tpu_custom_call.1} parent=1 // pred_fallthru
      _
    // Predicated region
    $region42: #{tpu_custom_call.1} parent=1 // pred_check
      _
    $region43: #{tpu_custom_call.1} parent=1 // pred_check_branch
      %127 = sbr.rel (0) target = $region45
    $region44: #{tpu_custom_call.1} parent=1 // pred_region
      %s129 = ssub.s32 128, 128
      %130 = vsyncadd [#allocation19], %s129
      %s132 = sshll.u32 [#allocation20], 4
      %s133 = int_to_ptr.vmem [resolvable:$true] %s132
      %135 = dma.hbm_to_vmem [thread:$0]  %s10, 128, %s133, [#allocation19]
    $region45: #{tpu_custom_call.1} parent=1 // pred_fallthru
      _
    // Predicated region
    $region46: #{tpu_custom_call.1} parent=1 // pred_check
      _
    $region47: #{tpu_custom_call.1} parent=1 // pred_check_branch
      %137 = sbr.rel (0) target = $region49
    $region48: #{tpu_custom_call.1} parent=1 // pred_region
      %s139 = ssub.s32 65536, 65536
      %140 = vsyncadd [#allocation22], %s139
      %s141 = sshll.u32 [#allocation21], 4
      %s142 = int_to_ptr.vmem [resolvable:$true] %s141
      %147 = dma.hbm_to_vmem [thread:$0]  %s11, 65536, %s142, [#allocation22], 512, 512, 32
    $region49: #{tpu_custom_call.1} parent=1 // pred_fallthru
      _
    // Predicated region
    $region50: #{tpu_custom_call.1} parent=1 // pred_check
      _
    $region51: #{tpu_custom_call.1} parent=1 // pred_check_branch
      %149 = sbr.rel (0) target = $region53
    $region52: #{tpu_custom_call.1} parent=1 // pred_region
      %s151 = ssub.s32 128, 128
      %152 = vsyncadd [#allocation22], %s151
      %s154 = sshll.u32 [#allocation23], 4
      %s155 = int_to_ptr.vmem [resolvable:$true] %s154
      %157 = dma.hbm_to_vmem [thread:$0]  %s12, 128, %s155, [#allocation22]
    $region53: #{tpu_custom_call.1} parent=1 // pred_fallthru
      _
    // Predicated region
    $region54: #{tpu_custom_call.1} parent=1 // pred_check
      _
    $region55: #{tpu_custom_call.1} parent=1 // pred_check_branch
      %159 = sbr.rel (0) target = $region57
    $region56: #{tpu_custom_call.1} parent=1 // pred_region
      %s161 = ssub.s32 8192, 8192
      %162 = vsyncadd [#allocation25], %s161
      %s163 = sshll.u32 [#allocation24], 4
      %s164 = int_to_ptr.vmem [resolvable:$true] %s163
      %169 = dma.hbm_to_vmem [thread:$0]  %s13, 8192, %s164, [#allocation25], 64, 64, 4
    $region57: #{tpu_custom_call.1} parent=1 // pred_fallthru
      _
    // Predicated region
    $region58: #{tpu_custom_call.1} parent=1 // pred_check
      _
    $region59: #{tpu_custom_call.1} parent=1 // pred_check_branch
      %171 = sbr.rel (0) target = $region61
    $region60: #{tpu_custom_call.1} parent=1 // pred_region
      %s173 = ssub.s32 16, 16
      %174 = vsyncadd [#allocation25], %s173
      %s176 = sshll.u32 [#allocation26], 4
      %s177 = int_to_ptr.vmem [resolvable:$true] %s176
      %179 = dma.hbm_to_vmem [thread:$0]  %s14, 16, %s177, [#allocation25]
    $region61: #{tpu_custom_call.1} parent=1 // pred_fallthru
      _
    // Predicated region
    $region62: #{tpu_custom_call.1} parent=1 // pred_check
      _
    $region63: #{tpu_custom_call.1} parent=1 // pred_check_branch
      %181 = sbr.rel (0) target = $region65
    $region64: #{tpu_custom_call.1} parent=1 // pred_region
      %182 = dma.done [#allocation3], 128
    $region65: #{tpu_custom_call.1} parent=1 // pred_fallthru
      _
    // Predicated region
    $region66: #{tpu_custom_call.1} parent=1 // pred_check
      _
    $region67: #{tpu_custom_call.1} parent=1 // pred_check_branch
      %184 = sbr.rel (0) target = $region69
    $region68: #{tpu_custom_call.1} parent=1 // pred_region
      %185 = dma.done [#allocation7], 512
    $region69: #{tpu_custom_call.1} parent=1 // pred_fallthru
      _
    // Predicated region
    $region70: #{tpu_custom_call.1} parent=1 // pred_check
      _
    $region71: #{tpu_custom_call.1} parent=1 // pred_check_branch
      %187 = sbr.rel (0) target = $region73
    $region72: #{tpu_custom_call.1} parent=1 // pred_region
      %188 = dma.done [#allocation7], 16
    $region73: #{tpu_custom_call.1} parent=1 // pred_fallthru
      _
    // Predicated region
    $region74: #{tpu_custom_call.1} parent=1 // pred_check
      _
    $region75: #{tpu_custom_call.1} parent=1 // pred_check_branch
      %190 = sbr.rel (0) target = $region77
    $region76: #{tpu_custom_call.1} parent=1 // pred_region
      %191 = dma.done [#allocation5], 16
    $region77: #{tpu_custom_call.1} parent=1 // pred_fallthru
      _
    // Predicated region
    $region78: #{tpu_custom_call.1} parent=1 // pred_check
      _
    $region79: #{tpu_custom_call.1} parent=1 // pred_check_branch
      %193 = sbr.rel (0) target = $region81
    $region80: #{tpu_custom_call.1} parent=1 // pred_region
      %194 = dma.done [#allocation11], 16
    $region81: #{tpu_custom_call.1} parent=1 // pred_fallthru
      _
    // Predicated region
    $region82: #{tpu_custom_call.1} parent=1 // pred_check
      _
    $region83: #{tpu_custom_call.1} parent=1 // pred_check_branch
      %196 = sbr.rel (0) target = $region85
    $region84: #{tpu_custom_call.1} parent=1 // pred_region
      %197 = dma.done [#allocation11], 16
    $region85: #{tpu_custom_call.1} parent=1 // pred_fallthru
      _
    // Predicated region
    $region86: #{tpu_custom_call.1} parent=1 // pred_check
      _
    $region87: #{tpu_custom_call.1} parent=1 // pred_check_branch
      %199 = sbr.rel (0) target = $region89
    $region88: #{tpu_custom_call.1} parent=1 // pred_region
      %200 = dma.done [#allocation14], 16
    $region89: #{tpu_custom_call.1} parent=1 // pred_fallthru
      _
    // Predicated region
    $region90: #{tpu_custom_call.1} parent=1 // pred_check
      _
    $region91: #{tpu_custom_call.1} parent=1 // pred_check_branch
      %202 = sbr.rel (0) target = $region93
    $region92: #{tpu_custom_call.1} parent=1 // pred_region
      %203 = dma.done [#allocation16], 16
    $region93: #{tpu_custom_call.1} parent=1 // pred_fallthru
      _
    // Predicated region
    $region94: #{tpu_custom_call.1} parent=1 // pred_check
      _
    $region95: #{tpu_custom_call.1} parent=1 // pred_check_branch
      %205 = sbr.rel (0) target = $region97
    $region96: #{tpu_custom_call.1} parent=1 // pred_region
      %206 = dma.done [#allocation16], 16
    $region97: #{tpu_custom_call.1} parent=1 // pred_fallthru
      _
    // Predicated region
    $region98: #{tpu_custom_call.1} parent=1 // pred_check
      _
    $region99: #{tpu_custom_call.1} parent=1 // pred_check_branch
      %208 = sbr.rel (0) target = $region101
    $region100: #{tpu_custom_call.1} parent=1 // pred_region
      %209 = dma.done [#allocation19], 65536
    $region101: #{tpu_custom_call.1} parent=1 // pred_fallthru
      _
    // Predicated region
    $region102: #{tpu_custom_call.1} parent=1 // pred_check
      _
    $region103: #{tpu_custom_call.1} parent=1 // pred_check_branch
      %211 = sbr.rel (0) target = $region105
    $region104: #{tpu_custom_call.1} parent=1 // pred_region
      %212 = dma.done [#allocation19], 128
    $region105: #{tpu_custom_call.1} parent=1 // pred_fallthru
      _
    // Predicated region
    $region106: #{tpu_custom_call.1} parent=1 // pred_check
      _
    $region107: #{tpu_custom_call.1} parent=1 // pred_check_branch
      %214 = sbr.rel (0) target = $region109
    $region108: #{tpu_custom_call.1} parent=1 // pred_region
      %215 = dma.done [#allocation22], 65536
    $region109: #{tpu_custom_call.1} parent=1 // pred_fallthru
      _
    // Predicated region
    $region110: #{tpu_custom_call.1} parent=1 // pred_check
      _
    $region111: #{tpu_custom_call.1} parent=1 // pred_check_branch
      %217 = sbr.rel (0) target = $region113
    $region112: #{tpu_custom_call.1} parent=1 // pred_region
      %218 = dma.done [#allocation22], 128
    $region113: #{tpu_custom_call.1} parent=1 // pred_fallthru
      _
    // Predicated region
    $region114: #{tpu_custom_call.1} parent=1 // pred_check
      _
    $region115: #{tpu_custom_call.1} parent=1 // pred_check_branch
      %220 = sbr.rel (0) target = $region117
    $region116: #{tpu_custom_call.1} parent=1 // pred_region
      %221 = dma.done [#allocation25], 8192
    $region117: #{tpu_custom_call.1} parent=1 // pred_fallthru
      _
    // Predicated region
    $region118: #{tpu_custom_call.1} parent=1 // pred_check
      _
    $region119: #{tpu_custom_call.1} parent=1 // pred_check_branch
      %223 = sbr.rel (0) target = $region121
    $region120: #{tpu_custom_call.1} parent=1 // pred_region
      %224 = dma.done [#allocation25], 16
    $region121: #{tpu_custom_call.1} parent=1 // pred_fallthru
      _
    %225 = sfence
    %v227 = vld [vmem:[#allocation2] sm:$0xff]
    %v228 = vld [vmem:[#allocation6] sm:$0xff]
    %v229 = vld [vmem:[#allocation6 + $0x8] sm:$0xff]
    %v230 = vld [vmem:[#allocation6 + $0x10] sm:$0xff]
    %v231 = vld [vmem:[#allocation6 + $0x18] sm:$0xff]
    %v232 = vld [vmem:[#allocation8] sm:$0x1]
    %v234 = vlaneseq
    %v235 = vshrl.u32 %v234, 7
    %v236 = vsub.s32 0, %v235
    %v237 = vrot.slane %v232, %v236
    %vm239 = vcmask 261120
    %v241 = vsel %vm239, %v227, 0
    %243 = vmatprep.subr.mxu0 0.0
    %244 = vmatpush1.msra.mxu0 %v228
    %245 = vmatprep.subr.mxu0 0.0
    %246 = vmatpush1.msra.mxu0 %v229
    %247 = vmatprep.subr.mxu0 0.0
    %248 = vmatpush1.msra.mxu0 %v230
    %249 = vmatprep.subr.mxu0 0.0
    %250 = vmatpush1.msra.mxu0 %v231
    %251 = vmatprep.subr.mxu0 0.0
    %252 = vmatpush1.msra.mxu0 0.0
    %253 = vmatprep.subr.mxu0 0.0
    %254 = vmatpush1.msra.mxu0 0.0
    %255 = vmatprep.subr.mxu0 0.0
    %256 = vmatpush1.msra.mxu0 0.0
    %257 = vmatprep.subr.mxu0 0.0
    %258 = vmatpush1.msra.mxu0 0.0
    %259 = vmatprep.subr.mxu0 0.0
    %260 = vmatpush1.msra.mxu0 0.0
    %261 = vmatprep.subr.mxu0 0.0
    %262 = vmatpush1.msra.mxu0 0.0
    %263 = vmatprep.subr.mxu0 0.0
    %264 = vmatpush1.msra.mxu0 0.0
    %265 = vmatprep.subr.mxu0 0.0
    %266 = vmatpush1.msra.mxu0 0.0
    %267 = vmatprep.subr.mxu0 0.0
    %268 = vmatpush1.msra.mxu0 0.0
    %269 = vmatprep.subr.mxu0 0.0
    %270 = vmatpush1.msra.mxu0 0.0
    %271 = vmatprep.subr.mxu0 0.0
    %272 = vmatpush1.msra.mxu0 0.0
    %273 = vmatprep.subr.mxu0 0.0
    %274 = vmatpush1.msra.mxu0 0.0
    %275 = vmatprep.subr.mxu0 0.0
    %276 = vmatpush1.msra.mxu0 0.0
    %277 = vmatprep.subr.mxu0 0.0
    %278 = vmatpush1.msra.mxu0 0.0
    %279 = vmatprep.subr.mxu0 0.0
    %280 = vmatpush1.msra.mxu0 0.0
    %281 = vmatprep.subr.mxu0 0.0
    %282 = vmatpush1.msra.mxu0 0.0
    %283 = vmatprep.subr.mxu0 0.0
    %284 = vmatpush1.msra.mxu0 0.0
    %285 = vmatprep.subr.mxu0 0.0
    %286 = vmatpush1.msra.mxu0 0.0
    %287 = vmatprep.subr.mxu0 0.0
    %288 = vmatpush1.msra.mxu0 0.0
    %289 = vmatprep.subr.mxu0 0.0
    %290 = vmatpush1.msra.mxu0 0.0
    %291 = vmatprep.subr.mxu0 0.0
    %292 = vmatpush1.msra.mxu0 0.0
    %293 = vmatprep.subr.mxu0 0.0
    %294 = vmatpush1.msra.mxu0 0.0
    %295 = vmatprep.subr.mxu0 0.0
    %296 = vmatpush1.msra.mxu0 0.0
    %297 = vmatprep.subr.mxu0 0.0
    %298 = vmatpush1.msra.mxu0 0.0
    %299 = vmatprep.subr.mxu0 0.0
    %300 = vmatpush1.msra.mxu0 0.0
    %301 = vmatprep.subr.mxu0 0.0
    %302 = vmatpush1.msra.mxu0 0.0
    %303 = vmatprep.subr.mxu0 0.0
    %304 = vmatpush1.msra.mxu0 0.0
    %305 = vmatprep.subr.mxu0 0.0
    %306 = vmatpush1.msra.mxu0 0.0
    %307 = vmatprep.mubr.f32.mxu0 0.0
    %308 = vmatmul.mubr.f32.gmra.mrb[0].mxu0 %v241
    %v309 = vpop.f32.mrb[0].mxu0
    %v310 = vadd.f32 %v237, %v309
    %v311 = vpop.f32.mrb[0].mxu0
    %312 = vdwg.mxu0
    %v313 = vmul.f32 %v310, 0.01
    %v314 = vmax.f32 %v310, %v313
    %v315 = vld [vmem:[#allocation15] sm:$0x1]
    %v316 = vld [vmem:[#allocation17] sm:$0x1]
    %317 = vrot.lane.b32.xlu0 %v314, 1
    %v318 = vpop.permute.xlu0 %317
    %v320 = vlaneseq
    %v321 = vshrl.u32 %v320, 7
    %v322 = vsub.s32 0, %v321
    %v323 = vrot.slane %v315, %v322
    %v325 = vmul.f32 %v318, %v323
    %326 = vrot.lane.b32.xlu0 %v314, 127
    %v327 = vpop.permute.xlu0 %326
    %v329 = vlaneseq
    %v330 = vshrl.u32 %v329, 7
    %v331 = vsub.s32 0, %v330
    %v332 = vrot.slane %v316, %v331
    %v334 = vmul.f32 %v327, %v332
    %s335 = sld [smem:[#allocation9]]
    %v336 = vstv %s335
    %v337 = vmul.f32 %v336, %v325
    %s338 = sld [smem:[#allocation9 + $0x1]]
    %v339 = vstv %s338
    %v340 = vmul.f32 %v339, %v314
    %v341 = vadd.f32 %v337, %v340
    %s342 = sld [smem:[#allocation9 + $0x2]]
    %v343 = vstv %s342
    %v344 = vmul.f32 %v343, %v334
    %v345 = vadd.f32 %v341, %v344
    %s346 = sld [smem:[#allocation10]]
    %v347 = vstv %s346
    %v348 = vadd.f32 %v345, %v347
    %v349 = vmul.f32 %v348, 0.01
    %v350 = vmax.f32 %v348, %v349
    %s351 = sld [smem:[#allocation9 + $0x3]]
    %v352 = vstv %s351
    %v353 = vmul.f32 %v352, %v325
    %s354 = sld [smem:[#allocation9 + $0x4]]
    %v355 = vstv %s354
    %v356 = vmul.f32 %v355, %v314
    %v357 = vadd.f32 %v353, %v356
    %s358 = sld [smem:[#allocation9 + $0x5]]
    %v359 = vstv %s358
    %v360 = vmul.f32 %v359, %v334
    %v361 = vadd.f32 %v357, %v360
    %s362 = sld [smem:[#allocation10 + $0x1]]
    %v363 = vstv %s362
    %v364 = vadd.f32 %v361, %v363
    %v365 = vmul.f32 %v364, 0.01
    %v366 = vmax.f32 %v364, %v365
    %s367 = sld [smem:[#allocation9 + $0x6]]
    %v368 = vstv %s367
    %v369 = vmul.f32 %v368, %v325
    %s370 = sld [smem:[#allocation9 + $0x7]]
    %v371 = vstv %s370
    %v372 = vmul.f32 %v371, %v314
    %v373 = vadd.f32 %v369, %v372
    %s374 = sld [smem:[#allocation9 + $0x8]]
    %v375 = vstv %s374
    %v376 = vmul.f32 %v375, %v334
    %v377 = vadd.f32 %v373, %v376
    %s378 = sld [smem:[#allocation10 + $0x2]]
    %v379 = vstv %s378
    %v380 = vadd.f32 %v377, %v379
    %v381 = vmul.f32 %v380, 0.01
    %v382 = vmax.f32 %v380, %v381
    %s383 = sld [smem:[#allocation9 + $0x9]]
    %v384 = vstv %s383
    %v385 = vmul.f32 %v384, %v325
    %s386 = sld [smem:[#allocation9 + $0xa]]
    %v387 = vstv %s386
    %v388 = vmul.f32 %v387, %v314
    %v389 = vadd.f32 %v385, %v388
    %s390 = sld [smem:[#allocation9 + $0xb]]
    %v391 = vstv %s390
    %v392 = vmul.f32 %v391, %v334
    %v393 = vadd.f32 %v389, %v392
    %s394 = sld [smem:[#allocation10 + $0x3]]
    %v395 = vstv %s394
    %v396 = vadd.f32 %v393, %v395
    %v397 = vmul.f32 %v396, 0.01
    %v398 = vmax.f32 %v396, %v397
    %399 = vrot.lane.b32.xlu0 %v350, 1
    %v400 = vpop.permute.xlu0 %399
    %v401 = vmul.f32 %v400, %v323
    %402 = vrot.lane.b32.xlu0 %v350, 127
    %v403 = vpop.permute.xlu0 %402
    %v404 = vmul.f32 %v403, %v332
    %405 = vrot.lane.b32.xlu0 %v366, 1
    %v406 = vpop.permute.xlu0 %405
    %v407 = vmul.f32 %v406, %v323
    %408 = vrot.lane.b32.xlu0 %v366, 127
    %v409 = vpop.permute.xlu0 %408
    %v410 = vmul.f32 %v409, %v332
    %411 = vrot.lane.b32.xlu0 %v382, 1
    %v412 = vpop.permute.xlu0 %411
    %v413 = vmul.f32 %v412, %v323
    %414 = vrot.lane.b32.xlu0 %v382, 127
    %v415 = vpop.permute.xlu0 %414
    %v416 = vmul.f32 %v415, %v332
    %417 = vrot.lane.b32.xlu0 %v398, 1
    %v418 = vpop.permute.xlu0 %417
    %v419 = vmul.f32 %v418, %v323
    %420 = vrot.lane.b32.xlu0 %v398, 127
    %v421 = vpop.permute.xlu0 %420
    %v422 = vmul.f32 %v421, %v332
    %s423 = sld [smem:[#allocation12]]
    %v424 = vstv %s423
    %v425 = vmul.f32 %v424, %v401
    %s426 = sld [smem:[#allocation12 + $0x1]]
    %v427 = vstv %s426
    %v428 = vmul.f32 %v427, %v350
    %v429 = vadd.f32 %v425, %v428
    %s430 = sld [smem:[#allocation12 + $0x2]]
    %v431 = vstv %s430
    %v432 = vmul.f32 %v431, %v404
    %v433 = vadd.f32 %v429, %v432
    %s434 = sld [smem:[#allocation12 + $0x3]]
    %v435 = vstv %s434
    %v436 = vmul.f32 %v435, %v407
    %s437 = sld [smem:[#allocation12 + $0x4]]
    %v438 = vstv %s437
    %v439 = vmul.f32 %v438, %v366
    %v440 = vadd.f32 %v436, %v439
    %s441 = sld [smem:[#allocation12 + $0x5]]
    %v442 = vstv %s441
    %v443 = vmul.f32 %v442, %v410
    %v444 = vadd.f32 %v440, %v443
    %v445 = vadd.f32 %v433, %v444
    %s446 = sld [smem:[#allocation12 + $0x6]]
    %v447 = vstv %s446
    %v448 = vmul.f32 %v447, %v413
    %s449 = sld [smem:[#allocation12 + $0x7]]
    %v450 = vstv %s449
    %v451 = vmul.f32 %v450, %v382
    %v452 = vadd.f32 %v448, %v451
    %s453 = sld [smem:[#allocation12 + $0x8]]
    %v454 = vstv %s453
    %v455 = vmul.f32 %v454, %v416
    %v456 = vadd.f32 %v452, %v455
    %v457 = vadd.f32 %v445, %v456
    %s458 = sld [smem:[#allocation12 + $0x9]]
    %v459 = vstv %s458
    %v460 = vmul.f32 %v459, %v419
    %s461 = sld [smem:[#allocation12 + $0xa]]
    %v462 = vstv %s461
    %v463 = vmul.f32 %v462, %v398
    %v464 = vadd.f32 %v460, %v463
    %s465 = sld [smem:[#allocation12 + $0xb]]
    %v466 = vstv %s465
    %v467 = vmul.f32 %v466, %v422
    %v468 = vadd.f32 %v464, %v467
    %v469 = vadd.f32 %v457, %v468
    %s470 = sld [smem:[#allocation13]]
    %v471 = vstv %s470
    %v472 = vadd.f32 %v469, %v471
    %v473 = vmul.f32 %v472, 0.01
    %v474 = vmax.f32 %v472, %v473
    %s475 = sld [smem:[#allocation12 + $0xc]]
    %v476 = vstv %s475
    %v477 = vmul.f32 %v476, %v401
    %s478 = sld [smem:[#allocation12 + $0xd]]
    %v479 = vstv %s478
    %v480 = vmul.f32 %v479, %v350
    %v481 = vadd.f32 %v477, %v480
    %s482 = sld [smem:[#allocation12 + $0xe]]
    %v483 = vstv %s482
    %v484 = vmul.f32 %v483, %v404
    %v485 = vadd.f32 %v481, %v484
    %s486 = sld [smem:[#allocation12 + $0xf]]
    %v487 = vstv %s486
    %v488 = vmul.f32 %v487, %v407
    %s489 = sld [smem:[#allocation12 + $0x10]]
    %v490 = vstv %s489
    %v491 = vmul.f32 %v490, %v366
    %v492 = vadd.f32 %v488, %v491
    %s493 = sld [smem:[#allocation12 + $0x11]]
    %v494 = vstv %s493
    %v495 = vmul.f32 %v494, %v410
    %v496 = vadd.f32 %v492, %v495
    %v497 = vadd.f32 %v485, %v496
    %s498 = sld [smem:[#allocation12 + $0x12]]
    %v499 = vstv %s498
    %v500 = vmul.f32 %v499, %v413
    %s501 = sld [smem:[#allocation12 + $0x13]]
    %v502 = vstv %s501
    %v503 = vmul.f32 %v502, %v382
    %v504 = vadd.f32 %v500, %v503
    %s505 = sld [smem:[#allocation12 + $0x14]]
    %v506 = vstv %s505
    %v507 = vmul.f32 %v506, %v416
    %v508 = vadd.f32 %v504, %v507
    %v509 = vadd.f32 %v497, %v508
    %s510 = sld [smem:[#allocation12 + $0x15]]
    %v511 = vstv %s510
    %v512 = vmul.f32 %v511, %v419
    %s513 = sld [smem:[#allocation12 + $0x16]]
    %v514 = vstv %s513
    %v515 = vmul.f32 %v514, %v398
    %v516 = vadd.f32 %v512, %v515
    %s517 = sld [smem:[#allocation12 + $0x17]]
    %v518 = vstv %s517
    %v519 = vmul.f32 %v518, %v422
    %v520 = vadd.f32 %v516, %v519
    %v521 = vadd.f32 %v509, %v520
    %s522 = sld [smem:[#allocation13 + $0x1]]
    %v523 = vstv %s522
    %v524 = vadd.f32 %v521, %v523
    %v525 = vmul.f32 %v524, 0.01
    %v526 = vmax.f32 %v524, %v525
    %s527 = sld [smem:[#allocation12 + $0x18]]
    %v528 = vstv %s527
    %v529 = vmul.f32 %v528, %v401
    %s530 = sld [smem:[#allocation12 + $0x19]]
    %v531 = vstv %s530
    %v532 = vmul.f32 %v531, %v350
    %v533 = vadd.f32 %v529, %v532
    %s534 = sld [smem:[#allocation12 + $0x1a]]
    %v535 = vstv %s534
    %v536 = vmul.f32 %v535, %v404
    %v537 = vadd.f32 %v533, %v536
    %s538 = sld [smem:[#allocation12 + $0x1b]]
    %v539 = vstv %s538
    %v540 = vmul.f32 %v539, %v407
    %s541 = sld [smem:[#allocation12 + $0x1c]]
    %v542 = vstv %s541
    %v543 = vmul.f32 %v542, %v366
    %v544 = vadd.f32 %v540, %v543
    %s545 = sld [smem:[#allocation12 + $0x1d]]
    %v546 = vstv %s545
    %v547 = vmul.f32 %v546, %v410
    %v548 = vadd.f32 %v544, %v547
    %v549 = vadd.f32 %v537, %v548
    %s550 = sld [smem:[#allocation12 + $0x1e]]
    %v551 = vstv %s550
    %v552 = vmul.f32 %v551, %v413
    %s553 = sld [smem:[#allocation12 + $0x1f]]
    %v554 = vstv %s553
    %v555 = vmul.f32 %v554, %v382
    %v556 = vadd.f32 %v552, %v555
    %s557 = sld [smem:[#allocation12 + $0x20]]
    %v558 = vstv %s557
    %v559 = vmul.f32 %v558, %v416
    %v560 = vadd.f32 %v556, %v559
    %v561 = vadd.f32 %v549, %v560
    %s562 = sld [smem:[#allocation12 + $0x21]]
    %v563 = vstv %s562
    %v564 = vmul.f32 %v563, %v419
    %s565 = sld [smem:[#allocation12 + $0x22]]
    %v566 = vstv %s565
    %v567 = vmul.f32 %v566, %v398
    %v568 = vadd.f32 %v564, %v567
    %s569 = sld [smem:[#allocation12 + $0x23]]
    %v570 = vstv %s569
    %v571 = vmul.f32 %v570, %v422
    %v572 = vadd.f32 %v568, %v571
    %v573 = vadd.f32 %v561, %v572
    %s574 = sld [smem:[#allocation13 + $0x2]]
    %v575 = vstv %s574
    %v576 = vadd.f32 %v573, %v575
    %v577 = vmul.f32 %v576, 0.01
    %v578 = vmax.f32 %v576, %v577
    %s579 = sld [smem:[#allocation12 + $0x24]]
    %v580 = vstv %s579
    %v581 = vmul.f32 %v580, %v401
    %s582 = sld [smem:[#allocation12 + $0x25]]
    %v583 = vstv %s582
    %v584 = vmul.f32 %v583, %v350
    %v585 = vadd.f32 %v581, %v584
    %s586 = sld [smem:[#allocation12 + $0x26]]
    %v587 = vstv %s586
    %v588 = vmul.f32 %v587, %v404
    %v589 = vadd.f32 %v585, %v588
    %s590 = sld [smem:[#allocation12 + $0x27]]
    %v591 = vstv %s590
    %v592 = vmul.f32 %v591, %v407
    %s593 = sld [smem:[#allocation12 + $0x28]]
    %v594 = vstv %s593
    %v595 = vmul.f32 %v594, %v366
    %v596 = vadd.f32 %v592, %v595
    %s597 = sld [smem:[#allocation12 + $0x29]]
    %v598 = vstv %s597
    %v599 = vmul.f32 %v598, %v410
    %v600 = vadd.f32 %v596, %v599
    %v601 = vadd.f32 %v589, %v600
    %s602 = sld [smem:[#allocation12 + $0x2a]]
    %v603 = vstv %s602
    %v604 = vmul.f32 %v603, %v413
    %s605 = sld [smem:[#allocation12 + $0x2b]]
    %v606 = vstv %s605
    %v607 = vmul.f32 %v606, %v382
    %v608 = vadd.f32 %v604, %v607
    %s609 = sld [smem:[#allocation12 + $0x2c]]
    %v610 = vstv %s609
    %v611 = vmul.f32 %v610, %v416
    %v612 = vadd.f32 %v608, %v611
    %v613 = vadd.f32 %v601, %v612
    %s614 = sld [smem:[#allocation12 + $0x2d]]
    %v615 = vstv %s614
    %v616 = vmul.f32 %v615, %v419
    %s617 = sld [smem:[#allocation12 + $0x2e]]
    %v618 = vstv %s617
    %v619 = vmul.f32 %v618, %v398
    %v620 = vadd.f32 %v616, %v619
    %s621 = sld [smem:[#allocation12 + $0x2f]]
    %v622 = vstv %s621
    %v623 = vmul.f32 %v622, %v422
    %v624 = vadd.f32 %v620, %v623
    %v625 = vadd.f32 %v613, %v624
    %s626 = sld [smem:[#allocation13 + $0x3]]
    %v627 = vstv %s626
    %v628 = vadd.f32 %v625, %v627
    %v629 = vmul.f32 %v628, 0.01
    %v630 = vmax.f32 %v628, %v629
    %s631 = sld [smem:[#allocation12 + $0x30]]
    %v632 = vstv %s631
    %v633 = vmul.f32 %v632, %v401
    %s634 = sld [smem:[#allocation12 + $0x31]]
    %v635 = vstv %s634
    %v636 = vmul.f32 %v635, %v350
    %v637 = vadd.f32 %v633, %v636
    %s638 = sld [smem:[#allocation12 + $0x32]]
    %v639 = vstv %s638
    %v640 = vmul.f32 %v639, %v404
    %v641 = vadd.f32 %v637, %v640
    %s642 = sld [smem:[#allocation12 + $0x33]]
    %v643 = vstv %s642
    %v644 = vmul.f32 %v643, %v407
    %s645 = sld [smem:[#allocation12 + $0x34]]
    %v646 = vstv %s645
    %v647 = vmul.f32 %v646, %v366
    %v648 = vadd.f32 %v644, %v647
    %s649 = sld [smem:[#allocation12 + $0x35]]
    %v650 = vstv %s649
    %v651 = vmul.f32 %v650, %v410
    %v652 = vadd.f32 %v648, %v651
    %v653 = vadd.f32 %v641, %v652
    %s654 = sld [smem:[#allocation12 + $0x36]]
    %v655 = vstv %s654
    %v656 = vmul.f32 %v655, %v413
    %s657 = sld [smem:[#allocation12 + $0x37]]
    %v658 = vstv %s657
    %v659 = vmul.f32 %v658, %v382
    %v660 = vadd.f32 %v656, %v659
    %s661 = sld [smem:[#allocation12 + $0x38]]
    %v662 = vstv %s661
    %v663 = vmul.f32 %v662, %v416
    %v664 = vadd.f32 %v660, %v663
    %v665 = vadd.f32 %v653, %v664
    %s666 = sld [smem:[#allocation12 + $0x39]]
    %v667 = vstv %s666
    %v668 = vmul.f32 %v667, %v419
    %s669 = sld [smem:[#allocation12 + $0x3a]]
    %v670 = vstv %s669
    %v671 = vmul.f32 %v670, %v398
    %v672 = vadd.f32 %v668, %v671
    %s673 = sld [smem:[#allocation12 + $0x3b]]
    %v674 = vstv %s673
    %v675 = vmul.f32 %v674, %v422
    %v676 = vadd.f32 %v672, %v675
    %v677 = vadd.f32 %v665, %v676
    %s678 = sld [smem:[#allocation13 + $0x4]]
    %v679 = vstv %s678
    %v680 = vadd.f32 %v677, %v679
    %v681 = vmul.f32 %v680, 0.01
    %v682 = vmax.f32 %v680, %v681
    %s683 = sld [smem:[#allocation12 + $0x3c]]
    %v684 = vstv %s683
    %v685 = vmul.f32 %v684, %v401
    %s686 = sld [smem:[#allocation12 + $0x3d]]
    %v687 = vstv %s686
    %v688 = vmul.f32 %v687, %v350
    %v689 = vadd.f32 %v685, %v688
    %s690 = sld [smem:[#allocation12 + $0x3e]]
    %v691 = vstv %s690
    %v692 = vmul.f32 %v691, %v404
    %v693 = vadd.f32 %v689, %v692
    %s694 = sld [smem:[#allocation12 + $0x3f]]
    %v695 = vstv %s694
    %v696 = vmul.f32 %v695, %v407
    %s697 = sld [smem:[#allocation12 + $0x40]]
    %v698 = vstv %s697
    %v699 = vmul.f32 %v698, %v366
    %v700 = vadd.f32 %v696, %v699
    %s701 = sld [smem:[#allocation12 + $0x41]]
    %v702 = vstv %s701
    %v703 = vmul.f32 %v702, %v410
    %v704 = vadd.f32 %v700, %v703
    %v705 = vadd.f32 %v693, %v704
    %s706 = sld [smem:[#allocation12 + $0x42]]
    %v707 = vstv %s706
    %v708 = vmul.f32 %v707, %v413
    %s709 = sld [smem:[#allocation12 + $0x43]]
    %v710 = vstv %s709
    %v711 = vmul.f32 %v710, %v382
    %v712 = vadd.f32 %v708, %v711
    %s713 = sld [smem:[#allocation12 + $0x44]]
    %v714 = vstv %s713
    %v715 = vmul.f32 %v714, %v416
    %v716 = vadd.f32 %v712, %v715
    %v717 = vadd.f32 %v705, %v716
    %s718 = sld [smem:[#allocation12 + $0x45]]
    %v719 = vstv %s718
    %v720 = vmul.f32 %v719, %v419
    %s721 = sld [smem:[#allocation12 + $0x46]]
    %v722 = vstv %s721
    %v723 = vmul.f32 %v722, %v398
    %v724 = vadd.f32 %v720, %v723
    %s725 = sld [smem:[#allocation12 + $0x47]]
    %v726 = vstv %s725
    %v727 = vmul.f32 %v726, %v422
    %v728 = vadd.f32 %v724, %v727
    %v729 = vadd.f32 %v717, %v728
    %s730 = sld [smem:[#allocation13 + $0x5]]
    %v731 = vstv %s730
    %v732 = vadd.f32 %v729, %v731
    %v733 = vmul.f32 %v732, 0.01
    %v734 = vmax.f32 %v732, %v733
    %s735 = sld [smem:[#allocation12 + $0x48]]
    %v736 = vstv %s735
    %v737 = vmul.f32 %v736, %v401
    %s738 = sld [smem:[#allocation12 + $0x49]]
    %v739 = vstv %s738
    %v740 = vmul.f32 %v739, %v350
    %v741 = vadd.f32 %v737, %v740
    %s742 = sld [smem:[#allocation12 + $0x4a]]
    %v743 = vstv %s742
    %v744 = vmul.f32 %v743, %v404
    %v745 = vadd.f32 %v741, %v744
    %s746 = sld [smem:[#allocation12 + $0x4b]]
    %v747 = vstv %s746
    %v748 = vmul.f32 %v747, %v407
    %s749 = sld [smem:[#allocation12 + $0x4c]]
    %v750 = vstv %s749
    %v751 = vmul.f32 %v750, %v366
    %v752 = vadd.f32 %v748, %v751
    %s753 = sld [smem:[#allocation12 + $0x4d]]
    %v754 = vstv %s753
    %v755 = vmul.f32 %v754, %v410
    %v756 = vadd.f32 %v752, %v755
    %v757 = vadd.f32 %v745, %v756
    %s758 = sld [smem:[#allocation12 + $0x4e]]
    %v759 = vstv %s758
    %v760 = vmul.f32 %v759, %v413
    %s761 = sld [smem:[#allocation12 + $0x4f]]
    %v762 = vstv %s761
    %v763 = vmul.f32 %v762, %v382
    %v764 = vadd.f32 %v760, %v763
    %s765 = sld [smem:[#allocation12 + $0x50]]
    %v766 = vstv %s765
    %v767 = vmul.f32 %v766, %v416
    %v768 = vadd.f32 %v764, %v767
    %v769 = vadd.f32 %v757, %v768
    %s770 = sld [smem:[#allocation12 + $0x51]]
    %v771 = vstv %s770
    %v772 = vmul.f32 %v771, %v419
    %s773 = sld [smem:[#allocation12 + $0x52]]
    %v774 = vstv %s773
    %v775 = vmul.f32 %v774, %v398
    %v776 = vadd.f32 %v772, %v775
    %s777 = sld [smem:[#allocation12 + $0x53]]
    %v778 = vstv %s777
    %v779 = vmul.f32 %v778, %v422
    %v780 = vadd.f32 %v776, %v779
    %v781 = vadd.f32 %v769, %v780
    %s782 = sld [smem:[#allocation13 + $0x6]]
    %v783 = vstv %s782
    %v784 = vadd.f32 %v781, %v783
    %v785 = vmul.f32 %v784, 0.01
    %v786 = vmax.f32 %v784, %v785
    %s787 = sld [smem:[#allocation12 + $0x54]]
    %v788 = vstv %s787
    %v789 = vmul.f32 %v788, %v401
    %s790 = sld [smem:[#allocation12 + $0x55]]
    %v791 = vstv %s790
    %v792 = vmul.f32 %v791, %v350
    %v793 = vadd.f32 %v789, %v792
    %s794 = sld [smem:[#allocation12 + $0x56]]
    %v795 = vstv %s794
    %v796 = vmul.f32 %v795, %v404
    %v797 = vadd.f32 %v793, %v796
    %s798 = sld [smem:[#allocation12 + $0x57]]
    %v799 = vstv %s798
    %v800 = vmul.f32 %v799, %v407
    %s801 = sld [smem:[#allocation12 + $0x58]]
    %v802 = vstv %s801
    %v803 = vmul.f32 %v802, %v366
    %v804 = vadd.f32 %v800, %v803
    %s805 = sld [smem:[#allocation12 + $0x59]]
    %v806 = vstv %s805
    %v807 = vmul.f32 %v806, %v410
    %v808 = vadd.f32 %v804, %v807
    %v809 = vadd.f32 %v797, %v808
    %s810 = sld [smem:[#allocation12 + $0x5a]]
    %v811 = vstv %s810
    %v812 = vmul.f32 %v811, %v413
    %s813 = sld [smem:[#allocation12 + $0x5b]]
    %v814 = vstv %s813
    %v815 = vmul.f32 %v814, %v382
    %v816 = vadd.f32 %v812, %v815
    %s817 = sld [smem:[#allocation12 + $0x5c]]
    %v818 = vstv %s817
    %v819 = vmul.f32 %v818, %v416
    %v820 = vadd.f32 %v816, %v819
    %v821 = vadd.f32 %v809, %v820
    %s822 = sld [smem:[#allocation12 + $0x5d]]
    %v823 = vstv %s822
    %v824 = vmul.f32 %v823, %v419
    %s825 = sld [smem:[#allocation12 + $0x5e]]
    %v826 = vstv %s825
    %v827 = vmul.f32 %v826, %v398
    %v828 = vadd.f32 %v824, %v827
    %s829 = sld [smem:[#allocation12 + $0x5f]]
    %v830 = vstv %s829
    %v831 = vmul.f32 %v830, %v422
    %v832 = vadd.f32 %v828, %v831
    %v833 = vadd.f32 %v821, %v832
    %s834 = sld [smem:[#allocation13 + $0x7]]
    %v835 = vstv %s834
    %v836 = vadd.f32 %v833, %v835
    %v837 = vmul.f32 %v836, 0.01
    %v838 = vmax.f32 %v836, %v837
    %v839 = vpack.c.bf16 %v474, %v474
    %v840 = vpack.c.bf16 %v526, %v526
    %v841 = vpack.c.bf16 %v578, %v578
    %v842 = vpack.c.bf16 %v630, %v630
    %v843 = vpack.c.bf16 %v682, %v682
    %v844 = vpack.c.bf16 %v734, %v734
    %v845 = vpack.c.bf16 %v786, %v786
    %v846 = vpack.c.bf16 %v838, %v838
    %v847 = vld [vmem:[#allocation18] sm:$0xff]
    %v848 = vld [vmem:[#allocation18 + $0x8] sm:$0xff]
    %v849 = vld [vmem:[#allocation18 + $0x10] sm:$0xff]
    %v850 = vld [vmem:[#allocation18 + $0x18] sm:$0xff]
    %v851 = vld [vmem:[#allocation18 + $0x20] sm:$0xff]
    %v852 = vld [vmem:[#allocation18 + $0x28] sm:$0xff]
    %v853 = vld [vmem:[#allocation18 + $0x30] sm:$0xff]
    %v854 = vld [vmem:[#allocation18 + $0x38] sm:$0xff]
    %v855 = vld [vmem:[#allocation18 + $0x40] sm:$0xff]
    %v856 = vld [vmem:[#allocation18 + $0x48] sm:$0xff]
    %v857 = vld [vmem:[#allocation18 + $0x50] sm:$0xff]
    %v858 = vld [vmem:[#allocation18 + $0x58] sm:$0xff]
    %v859 = vld [vmem:[#allocation18 + $0x60] sm:$0xff]
    %v860 = vld [vmem:[#allocation18 + $0x68] sm:$0xff]
    %v861 = vld [vmem:[#allocation18 + $0x70] sm:$0xff]
    %v862 = vld [vmem:[#allocation18 + $0x78] sm:$0xff]
    %v863 = vld [vmem:[#allocation18 + $0x80] sm:$0xff]
    %v864 = vld [vmem:[#allocation18 + $0x88] sm:$0xff]
    %v865 = vld [vmem:[#allocation18 + $0x90] sm:$0xff]
    %v866 = vld [vmem:[#allocation18 + $0x98] sm:$0xff]
    %v867 = vld [vmem:[#allocation18 + $0xa0] sm:$0xff]
    %v868 = vld [vmem:[#allocation18 + $0xa8] sm:$0xff]
    %v869 = vld [vmem:[#allocation18 + $0xb0] sm:$0xff]
    %v870 = vld [vmem:[#allocation18 + $0xb8] sm:$0xff]
    %v871 = vld [vmem:[#allocation18 + $0xc0] sm:$0xff]
    %v872 = vld [vmem:[#allocation18 + $0xc8] sm:$0xff]
    %v873 = vld [vmem:[#allocation18 + $0xd0] sm:$0xff]
    %v874 = vld [vmem:[#allocation18 + $0xd8] sm:$0xff]
    %v875 = vld [vmem:[#allocation18 + $0xe0] sm:$0xff]
    %v876 = vld [vmem:[#allocation18 + $0xe8] sm:$0xff]
    %v877 = vld [vmem:[#allocation18 + $0xf0] sm:$0xff]
    %v878 = vld [vmem:[#allocation18 + $0xf8] sm:$0xff]
    %v879 = vld [vmem:[#allocation18 + $0x100] sm:$0xff]
    %v880 = vld [vmem:[#allocation18 + $0x108] sm:$0xff]
    %v881 = vld [vmem:[#allocation18 + $0x110] sm:$0xff]
    %v882 = vld [vmem:[#allocation18 + $0x118] sm:$0xff]
    %v883 = vld [vmem:[#allocation18 + $0x120] sm:$0xff]
    %v884 = vld [vmem:[#allocation18 + $0x128] sm:$0xff]
    %v885 = vld [vmem:[#allocation18 + $0x130] sm:$0xff]
    %v886 = vld [vmem:[#allocation18 + $0x138] sm:$0xff]
    %v887 = vld [vmem:[#allocation18 + $0x140] sm:$0xff]
    %v888 = vld [vmem:[#allocation18 + $0x148] sm:$0xff]
    %v889 = vld [vmem:[#allocation18 + $0x150] sm:$0xff]
    %v890 = vld [vmem:[#allocation18 + $0x158] sm:$0xff]
    %v891 = vld [vmem:[#allocation18 + $0x160] sm:$0xff]
    %v892 = vld [vmem:[#allocation18 + $0x168] sm:$0xff]
    %v893 = vld [vmem:[#allocation18 + $0x170] sm:$0xff]
    %v894 = vld [vmem:[#allocation18 + $0x178] sm:$0xff]
    %v895 = vld [vmem:[#allocation18 + $0x180] sm:$0xff]
    %v896 = vld [vmem:[#allocation18 + $0x188] sm:$0xff]
    %v897 = vld [vmem:[#allocation18 + $0x190] sm:$0xff]
    %v898 = vld [vmem:[#allocation18 + $0x198] sm:$0xff]
    %v899 = vld [vmem:[#allocation18 + $0x1a0] sm:$0xff]
    %v900 = vld [vmem:[#allocation18 + $0x1a8] sm:$0xff]
    %v901 = vld [vmem:[#allocation18 + $0x1b0] sm:$0xff]
    %v902 = vld [vmem:[#allocation18 + $0x1b8] sm:$0xff]
    %v903 = vld [vmem:[#allocation18 + $0x1c0] sm:$0xff]
    %v904 = vld [vmem:[#allocation18 + $0x1c8] sm:$0xff]
    %v905 = vld [vmem:[#allocation18 + $0x1d0] sm:$0xff]
    %v906 = vld [vmem:[#allocation18 + $0x1d8] sm:$0xff]
    %v907 = vld [vmem:[#allocation18 + $0x1e0] sm:$0xff]
    %v908 = vld [vmem:[#allocation18 + $0x1e8] sm:$0xff]
    %v909 = vld [vmem:[#allocation18 + $0x1f0] sm:$0xff]
    %v910 = vld [vmem:[#allocation18 + $0x1f8] sm:$0xff]
    %v911 = vld [vmem:[#allocation18 + $0x200] sm:$0xff]
    %v912 = vld [vmem:[#allocation18 + $0x208] sm:$0xff]
    %v913 = vld [vmem:[#allocation18 + $0x210] sm:$0xff]
    %v914 = vld [vmem:[#allocation18 + $0x218] sm:$0xff]
    %v915 = vld [vmem:[#allocation18 + $0x220] sm:$0xff]
    %v916 = vld [vmem:[#allocation18 + $0x228] sm:$0xff]
    %v917 = vld [vmem:[#allocation18 + $0x230] sm:$0xff]
    %v918 = vld [vmem:[#allocation18 + $0x238] sm:$0xff]
    %v919 = vld [vmem:[#allocation18 + $0x240] sm:$0xff]
    %v920 = vld [vmem:[#allocation18 + $0x248] sm:$0xff]
    %v921 = vld [vmem:[#allocation18 + $0x250] sm:$0xff]
    %v922 = vld [vmem:[#allocation18 + $0x258] sm:$0xff]
    %v923 = vld [vmem:[#allocation18 + $0x260] sm:$0xff]
    %v924 = vld [vmem:[#allocation18 + $0x268] sm:$0xff]
    %v925 = vld [vmem:[#allocation18 + $0x270] sm:$0xff]
    %v926 = vld [vmem:[#allocation18 + $0x278] sm:$0xff]
    %v927 = vld [vmem:[#allocation18 + $0x280] sm:$0xff]
    %v928 = vld [vmem:[#allocation18 + $0x288] sm:$0xff]
    %v929 = vld [vmem:[#allocation18 + $0x290] sm:$0xff]
    %v930 = vld [vmem:[#allocation18 + $0x298] sm:$0xff]
    %v931 = vld [vmem:[#allocation18 + $0x2a0] sm:$0xff]
    %v932 = vld [vmem:[#allocation18 + $0x2a8] sm:$0xff]
    %v933 = vld [vmem:[#allocation18 + $0x2b0] sm:$0xff]
    %v934 = vld [vmem:[#allocation18 + $0x2b8] sm:$0xff]
    %v935 = vld [vmem:[#allocation18 + $0x2c0] sm:$0xff]
    %v936 = vld [vmem:[#allocation18 + $0x2c8] sm:$0xff]
    %v937 = vld [vmem:[#allocation18 + $0x2d0] sm:$0xff]
    %v938 = vld [vmem:[#allocation18 + $0x2d8] sm:$0xff]
    %v939 = vld [vmem:[#allocation18 + $0x2e0] sm:$0xff]
    %v940 = vld [vmem:[#allocation18 + $0x2e8] sm:$0xff]
    %v941 = vld [vmem:[#allocation18 + $0x2f0] sm:$0xff]
    %v942 = vld [vmem:[#allocation18 + $0x2f8] sm:$0xff]
    %v943 = vld [vmem:[#allocation18 + $0x300] sm:$0xff]
    %v944 = vld [vmem:[#allocation18 + $0x308] sm:$0xff]
    %v945 = vld [vmem:[#allocation18 + $0x310] sm:$0xff]
    %v946 = vld [vmem:[#allocation18 + $0x318] sm:$0xff]
    %v947 = vld [vmem:[#allocation18 + $0x320] sm:$0xff]
    %v948 = vld [vmem:[#allocation18 + $0x328] sm:$0xff]
    %v949 = vld [vmem:[#allocation18 + $0x330] sm:$0xff]
    %v950 = vld [vmem:[#allocation18 + $0x338] sm:$0xff]
    %v951 = vld [vmem:[#allocation18 + $0x340] sm:$0xff]
    %v952 = vld [vmem:[#allocation18 + $0x348] sm:$0xff]
    %v953 = vld [vmem:[#allocation18 + $0x350] sm:$0xff]
    %v954 = vld [vmem:[#allocation18 + $0x358] sm:$0xff]
    %v955 = vld [vmem:[#allocation18 + $0x360] sm:$0xff]
    %v956 = vld [vmem:[#allocation18 + $0x368] sm:$0xff]
    %v957 = vld [vmem:[#allocation18 + $0x370] sm:$0xff]
    %v958 = vld [vmem:[#allocation18 + $0x378] sm:$0xff]
    %v959 = vld [vmem:[#allocation18 + $0x380] sm:$0xff]
    %v960 = vld [vmem:[#allocation18 + $0x388] sm:$0xff]
    %v961 = vld [vmem:[#allocation18 + $0x390] sm:$0xff]
    %v962 = vld [vmem:[#allocation18 + $0x398] sm:$0xff]
    %v963 = vld [vmem:[#allocation18 + $0x3a0] sm:$0xff]
    %v964 = vld [vmem:[#allocation18 + $0x3a8] sm:$0xff]
    %v965 = vld [vmem:[#allocation18 + $0x3b0] sm:$0xff]
    %v966 = vld [vmem:[#allocation18 + $0x3b8] sm:$0xff]
    %v967 = vld [vmem:[#allocation18 + $0x3c0] sm:$0xff]
    %v968 = vld [vmem:[#allocation18 + $0x3c8] sm:$0xff]
    %v969 = vld [vmem:[#allocation18 + $0x3d0] sm:$0xff]
    %v970 = vld [vmem:[#allocation18 + $0x3d8] sm:$0xff]
    %v971 = vld [vmem:[#allocation18 + $0x3e0] sm:$0xff]
    %v972 = vld [vmem:[#allocation18 + $0x3e8] sm:$0xff]
    %v973 = vld [vmem:[#allocation18 + $0x3f0] sm:$0xff]
    %v974 = vld [vmem:[#allocation18 + $0x3f8] sm:$0xff]
    %v975 = vld [vmem:[#allocation18 + $0x400] sm:$0xff]
    %v976 = vld [vmem:[#allocation18 + $0x408] sm:$0xff]
    %v977 = vld [vmem:[#allocation18 + $0x410] sm:$0xff]
    %v978 = vld [vmem:[#allocation18 + $0x418] sm:$0xff]
    %v979 = vld [vmem:[#allocation18 + $0x420] sm:$0xff]
    %v980 = vld [vmem:[#allocation18 + $0x428] sm:$0xff]
    %v981 = vld [vmem:[#allocation18 + $0x430] sm:$0xff]
    %v982 = vld [vmem:[#allocation18 + $0x438] sm:$0xff]
    %v983 = vld [vmem:[#allocation18 + $0x440] sm:$0xff]
    %v984 = vld [vmem:[#allocation18 + $0x448] sm:$0xff]
    %v985 = vld [vmem:[#allocation18 + $0x450] sm:$0xff]
    %v986 = vld [vmem:[#allocation18 + $0x458] sm:$0xff]
    %v987 = vld [vmem:[#allocation18 + $0x460] sm:$0xff]
    %v988 = vld [vmem:[#allocation18 + $0x468] sm:$0xff]
    %v989 = vld [vmem:[#allocation18 + $0x470] sm:$0xff]
    %v990 = vld [vmem:[#allocation18 + $0x478] sm:$0xff]
    %v991 = vld [vmem:[#allocation18 + $0x480] sm:$0xff]
    %v992 = vld [vmem:[#allocation18 + $0x488] sm:$0xff]
    %v993 = vld [vmem:[#allocation18 + $0x490] sm:$0xff]
    %v994 = vld [vmem:[#allocation18 + $0x498] sm:$0xff]
    %v995 = vld [vmem:[#allocation18 + $0x4a0] sm:$0xff]
    %v996 = vld [vmem:[#allocation18 + $0x4a8] sm:$0xff]
    %v997 = vld [vmem:[#allocation18 + $0x4b0] sm:$0xff]
    %v998 = vld [vmem:[#allocation18 + $0x4b8] sm:$0xff]
    %v999 = vld [vmem:[#allocation18 + $0x4c0] sm:$0xff]
    %v1000 = vld [vmem:[#allocation18 + $0x4c8] sm:$0xff]
    %v1001 = vld [vmem:[#allocation18 + $0x4d0] sm:$0xff]
    %v1002 = vld [vmem:[#allocation18 + $0x4d8] sm:$0xff]
    %v1003 = vld [vmem:[#allocation18 + $0x4e0] sm:$0xff]
    %v1004 = vld [vmem:[#allocation18 + $0x4e8] sm:$0xff]
    %v1005 = vld [vmem:[#allocation18 + $0x4f0] sm:$0xff]
    %v1006 = vld [vmem:[#allocation18 + $0x4f8] sm:$0xff]
    %v1007 = vld [vmem:[#allocation18 + $0x500] sm:$0xff]
    %v1008 = vld [vmem:[#allocation18 + $0x508] sm:$0xff]
    %v1009 = vld [vmem:[#allocation18 + $0x510] sm:$0xff]
    %v1010 = vld [vmem:[#allocation18 + $0x518] sm:$0xff]
    %v1011 = vld [vmem:[#allocation18 + $0x520] sm:$0xff]
    %v1012 = vld [vmem:[#allocation18 + $0x528] sm:$0xff]
    %v1013 = vld [vmem:[#allocation18 + $0x530] sm:$0xff]
    %v1014 = vld [vmem:[#allocation18 + $0x538] sm:$0xff]
    %v1015 = vld [vmem:[#allocation18 + $0x540] sm:$0xff]
    %v1016 = vld [vmem:[#allocation18 + $0x548] sm:$0xff]
    %v1017 = vld [vmem:[#allocation18 + $0x550] sm:$0xff]
    %v1018 = vld [vmem:[#allocation18 + $0x558] sm:$0xff]
    %v1019 = vld [vmem:[#allocation18 + $0x560] sm:$0xff]
    %v1020 = vld [vmem:[#allocation18 + $0x568] sm:$0xff]
    %v1021 = vld [vmem:[#allocation18 + $0x570] sm:$0xff]
    %v1022 = vld [vmem:[#allocation18 + $0x578] sm:$0xff]
    %v1023 = vld [vmem:[#allocation18 + $0x580] sm:$0xff]
    %v1024 = vld [vmem:[#allocation18 + $0x588] sm:$0xff]
    %v1025 = vld [vmem:[#allocation18 + $0x590] sm:$0xff]
    %v1026 = vld [vmem:[#allocation18 + $0x598] sm:$0xff]
    %v1027 = vld [vmem:[#allocation18 + $0x5a0] sm:$0xff]
    %v1028 = vld [vmem:[#allocation18 + $0x5a8] sm:$0xff]
    %v1029 = vld [vmem:[#allocation18 + $0x5b0] sm:$0xff]
    %v1030 = vld [vmem:[#allocation18 + $0x5b8] sm:$0xff]
    %v1031 = vld [vmem:[#allocation18 + $0x5c0] sm:$0xff]
    %v1032 = vld [vmem:[#allocation18 + $0x5c8] sm:$0xff]
    %v1033 = vld [vmem:[#allocation18 + $0x5d0] sm:$0xff]
    %v1034 = vld [vmem:[#allocation18 + $0x5d8] sm:$0xff]
    %v1035 = vld [vmem:[#allocation18 + $0x5e0] sm:$0xff]
    %v1036 = vld [vmem:[#allocation18 + $0x5e8] sm:$0xff]
    %v1037 = vld [vmem:[#allocation18 + $0x5f0] sm:$0xff]
    %v1038 = vld [vmem:[#allocation18 + $0x5f8] sm:$0xff]
    %v1039 = vld [vmem:[#allocation18 + $0x600] sm:$0xff]
    %v1040 = vld [vmem:[#allocation18 + $0x608] sm:$0xff]
    %v1041 = vld [vmem:[#allocation18 + $0x610] sm:$0xff]
    %v1042 = vld [vmem:[#allocation18 + $0x618] sm:$0xff]
    %v1043 = vld [vmem:[#allocation18 + $0x620] sm:$0xff]
    %v1044 = vld [vmem:[#allocation18 + $0x628] sm:$0xff]
    %v1045 = vld [vmem:[#allocation18 + $0x630] sm:$0xff]
    %v1046 = vld [vmem:[#allocation18 + $0x638] sm:$0xff]
    %v1047 = vld [vmem:[#allocation18 + $0x640] sm:$0xff]
    %v1048 = vld [vmem:[#allocation18 + $0x648] sm:$0xff]
    %v1049 = vld [vmem:[#allocation18 + $0x650] sm:$0xff]
    %v1050 = vld [vmem:[#allocation18 + $0x658] sm:$0xff]
    %v1051 = vld [vmem:[#allocation18 + $0x660] sm:$0xff]
    %v1052 = vld [vmem:[#allocation18 + $0x668] sm:$0xff]
    %v1053 = vld [vmem:[#allocation18 + $0x670] sm:$0xff]
    %v1054 = vld [vmem:[#allocation18 + $0x678] sm:$0xff]
    %v1055 = vld [vmem:[#allocation18 + $0x680] sm:$0xff]
    %v1056 = vld [vmem:[#allocation18 + $0x688] sm:$0xff]
    %v1057 = vld [vmem:[#allocation18 + $0x690] sm:$0xff]
    %v1058 = vld [vmem:[#allocation18 + $0x698] sm:$0xff]
    %v1059 = vld [vmem:[#allocation18 + $0x6a0] sm:$0xff]
    %v1060 = vld [vmem:[#allocation18 + $0x6a8] sm:$0xff]
    %v1061 = vld [vmem:[#allocation18 + $0x6b0] sm:$0xff]
    %v1062 = vld [vmem:[#allocation18 + $0x6b8] sm:$0xff]
    %v1063 = vld [vmem:[#allocation18 + $0x6c0] sm:$0xff]
    %v1064 = vld [vmem:[#allocation18 + $0x6c8] sm:$0xff]
    %v1065 = vld [vmem:[#allocation18 + $0x6d0] sm:$0xff]
    %v1066 = vld [vmem:[#allocation18 + $0x6d8] sm:$0xff]
    %v1067 = vld [vmem:[#allocation18 + $0x6e0] sm:$0xff]
    %v1068 = vld [vmem:[#allocation18 + $0x6e8] sm:$0xff]
    %v1069 = vld [vmem:[#allocation18 + $0x6f0] sm:$0xff]
    %v1070 = vld [vmem:[#allocation18 + $0x6f8] sm:$0xff]
    %v1071 = vld [vmem:[#allocation18 + $0x700] sm:$0xff]
    %v1072 = vld [vmem:[#allocation18 + $0x708] sm:$0xff]
    %v1073 = vld [vmem:[#allocation18 + $0x710] sm:$0xff]
    %v1074 = vld [vmem:[#allocation18 + $0x718] sm:$0xff]
    %v1075 = vld [vmem:[#allocation18 + $0x720] sm:$0xff]
    %v1076 = vld [vmem:[#allocation18 + $0x728] sm:$0xff]
    %v1077 = vld [vmem:[#allocation18 + $0x730] sm:$0xff]
    %v1078 = vld [vmem:[#allocation18 + $0x738] sm:$0xff]
    %v1079 = vld [vmem:[#allocation18 + $0x740] sm:$0xff]
    %v1080 = vld [vmem:[#allocation18 + $0x748] sm:$0xff]
    %v1081 = vld [vmem:[#allocation18 + $0x750] sm:$0xff]
    %v1082 = vld [vmem:[#allocation18 + $0x758] sm:$0xff]
    %v1083 = vld [vmem:[#allocation18 + $0x760] sm:$0xff]
    %v1084 = vld [vmem:[#allocation18 + $0x768] sm:$0xff]
    %v1085 = vld [vmem:[#allocation18 + $0x770] sm:$0xff]
    %v1086 = vld [vmem:[#allocation18 + $0x778] sm:$0xff]
    %v1087 = vld [vmem:[#allocation18 + $0x780] sm:$0xff]
    %v1088 = vld [vmem:[#allocation18 + $0x788] sm:$0xff]
    %v1089 = vld [vmem:[#allocation18 + $0x790] sm:$0xff]
    %v1090 = vld [vmem:[#allocation18 + $0x798] sm:$0xff]
    %v1091 = vld [vmem:[#allocation18 + $0x7a0] sm:$0xff]
    %v1092 = vld [vmem:[#allocation18 + $0x7a8] sm:$0xff]
    %v1093 = vld [vmem:[#allocation18 + $0x7b0] sm:$0xff]
    %v1094 = vld [vmem:[#allocation18 + $0x7b8] sm:$0xff]
    %v1095 = vld [vmem:[#allocation18 + $0x7c0] sm:$0xff]
    %v1096 = vld [vmem:[#allocation18 + $0x7c8] sm:$0xff]
    %v1097 = vld [vmem:[#allocation18 + $0x7d0] sm:$0xff]
    %v1098 = vld [vmem:[#allocation18 + $0x7d8] sm:$0xff]
    %v1099 = vld [vmem:[#allocation18 + $0x7e0] sm:$0xff]
    %v1100 = vld [vmem:[#allocation18 + $0x7e8] sm:$0xff]
    %v1101 = vld [vmem:[#allocation18 + $0x7f0] sm:$0xff]
    %v1102 = vld [vmem:[#allocation18 + $0x7f8] sm:$0xff]
    %v1103 = vld [vmem:[#allocation18 + $0x800] sm:$0xff]
    %v1104 = vld [vmem:[#allocation18 + $0x808] sm:$0xff]
    %v1105 = vld [vmem:[#allocation18 + $0x810] sm:$0xff]
    %v1106 = vld [vmem:[#allocation18 + $0x818] sm:$0xff]
    %v1107 = vld [vmem:[#allocation18 + $0x820] sm:$0xff]
    %v1108 = vld [vmem:[#allocation18 + $0x828] sm:$0xff]
    %v1109 = vld [vmem:[#allocation18 + $0x830] sm:$0xff]
    %v1110 = vld [vmem:[#allocation18 + $0x838] sm:$0xff]
    %v1111 = vld [vmem:[#allocation18 + $0x840] sm:$0xff]
    %v1112 = vld [vmem:[#allocation18 + $0x848] sm:$0xff]
    %v1113 = vld [vmem:[#allocation18 + $0x850] sm:$0xff]
    %v1114 = vld [vmem:[#allocation18 + $0x858] sm:$0xff]
    %v1115 = vld [vmem:[#allocation18 + $0x860] sm:$0xff]
    %v1116 = vld [vmem:[#allocation18 + $0x868] sm:$0xff]
    %v1117 = vld [vmem:[#allocation18 + $0x870] sm:$0xff]
    %v1118 = vld [vmem:[#allocation18 + $0x878] sm:$0xff]
    %v1119 = vld [vmem:[#allocation18 + $0x880] sm:$0xff]
    %v1120 = vld [vmem:[#allocation18 + $0x888] sm:$0xff]
    %v1121 = vld [vmem:[#allocation18 + $0x890] sm:$0xff]
    %v1122 = vld [vmem:[#allocation18 + $0x898] sm:$0xff]
    %v1123 = vld [vmem:[#allocation18 + $0x8a0] sm:$0xff]
    %v1124 = vld [vmem:[#allocation18 + $0x8a8] sm:$0xff]
    %v1125 = vld [vmem:[#allocation18 + $0x8b0] sm:$0xff]
    %v1126 = vld [vmem:[#allocation18 + $0x8b8] sm:$0xff]
    %v1127 = vld [vmem:[#allocation18 + $0x8c0] sm:$0xff]
    %v1128 = vld [vmem:[#allocation18 + $0x8c8] sm:$0xff]
    %v1129 = vld [vmem:[#allocation18 + $0x8d0] sm:$0xff]
    %v1130 = vld [vmem:[#allocation18 + $0x8d8] sm:$0xff]
    %v1131 = vld [vmem:[#allocation18 + $0x8e0] sm:$0xff]
    %v1132 = vld [vmem:[#allocation18 + $0x8e8] sm:$0xff]
    %v1133 = vld [vmem:[#allocation18 + $0x8f0] sm:$0xff]
    %v1134 = vld [vmem:[#allocation18 + $0x8f8] sm:$0xff]
    %v1135 = vld [vmem:[#allocation18 + $0x900] sm:$0xff]
    %v1136 = vld [vmem:[#allocation18 + $0x908] sm:$0xff]
    %v1137 = vld [vmem:[#allocation18 + $0x910] sm:$0xff]
    %v1138 = vld [vmem:[#allocation18 + $0x918] sm:$0xff]
    %v1139 = vld [vmem:[#allocation18 + $0x920] sm:$0xff]
    %v1140 = vld [vmem:[#allocation18 + $0x928] sm:$0xff]
    %v1141 = vld [vmem:[#allocation18 + $0x930] sm:$0xff]
    %v1142 = vld [vmem:[#allocation18 + $0x938] sm:$0xff]
    %v1143 = vld [vmem:[#allocation18 + $0x940] sm:$0xff]
    %v1144 = vld [vmem:[#allocation18 + $0x948] sm:$0xff]
    %v1145 = vld [vmem:[#allocation18 + $0x950] sm:$0xff]
    %v1146 = vld [vmem:[#allocation18 + $0x958] sm:$0xff]
    %v1147 = vld [vmem:[#allocation18 + $0x960] sm:$0xff]
    %v1148 = vld [vmem:[#allocation18 + $0x968] sm:$0xff]
    %v1149 = vld [vmem:[#allocation18 + $0x970] sm:$0xff]
    %v1150 = vld [vmem:[#allocation18 + $0x978] sm:$0xff]
    %v1151 = vld [vmem:[#allocation18 + $0x980] sm:$0xff]
    %v1152 = vld [vmem:[#allocation18 + $0x988] sm:$0xff]
    %v1153 = vld [vmem:[#allocation18 + $0x990] sm:$0xff]
    %v1154 = vld [vmem:[#allocation18 + $0x998] sm:$0xff]
    %v1155 = vld [vmem:[#allocation18 + $0x9a0] sm:$0xff]
    %v1156 = vld [vmem:[#allocation18 + $0x9a8] sm:$0xff]
    %v1157 = vld [vmem:[#allocation18 + $0x9b0] sm:$0xff]
    %v1158 = vld [vmem:[#allocation18 + $0x9b8] sm:$0xff]
    %v1159 = vld [vmem:[#allocation18 + $0x9c0] sm:$0xff]
    %v1160 = vld [vmem:[#allocation18 + $0x9c8] sm:$0xff]
    %v1161 = vld [vmem:[#allocation18 + $0x9d0] sm:$0xff]
    %v1162 = vld [vmem:[#allocation18 + $0x9d8] sm:$0xff]
    %v1163 = vld [vmem:[#allocation18 + $0x9e0] sm:$0xff]
    %v1164 = vld [vmem:[#allocation18 + $0x9e8] sm:$0xff]
    %v1165 = vld [vmem:[#allocation18 + $0x9f0] sm:$0xff]
    %v1166 = vld [vmem:[#allocation18 + $0x9f8] sm:$0xff]
    %v1167 = vld [vmem:[#allocation18 + $0xa00] sm:$0xff]
    %v1168 = vld [vmem:[#allocation18 + $0xa08] sm:$0xff]
    %v1169 = vld [vmem:[#allocation18 + $0xa10] sm:$0xff]
    %v1170 = vld [vmem:[#allocation18 + $0xa18] sm:$0xff]
    %v1171 = vld [vmem:[#allocation18 + $0xa20] sm:$0xff]
    %v1172 = vld [vmem:[#allocation18 + $0xa28] sm:$0xff]
    %v1173 = vld [vmem:[#allocation18 + $0xa30] sm:$0xff]
    %v1174 = vld [vmem:[#allocation18 + $0xa38] sm:$0xff]
    %v1175 = vld [vmem:[#allocation18 + $0xa40] sm:$0xff]
    %v1176 = vld [vmem:[#allocation18 + $0xa48] sm:$0xff]
    %v1177 = vld [vmem:[#allocation18 + $0xa50] sm:$0xff]
    %v1178 = vld [vmem:[#allocation18 + $0xa58] sm:$0xff]
    %v1179 = vld [vmem:[#allocation18 + $0xa60] sm:$0xff]
    %v1180 = vld [vmem:[#allocation18 + $0xa68] sm:$0xff]
    %v1181 = vld [vmem:[#allocation18 + $0xa70] sm:$0xff]
    %v1182 = vld [vmem:[#allocation18 + $0xa78] sm:$0xff]
    %v1183 = vld [vmem:[#allocation18 + $0xa80] sm:$0xff]
    %v1184 = vld [vmem:[#allocation18 + $0xa88] sm:$0xff]
    %v1185 = vld [vmem:[#allocation18 + $0xa90] sm:$0xff]
    %v1186 = vld [vmem:[#allocation18 + $0xa98] sm:$0xff]
    %v1187 = vld [vmem:[#allocation18 + $0xaa0] sm:$0xff]
    %v1188 = vld [vmem:[#allocation18 + $0xaa8] sm:$0xff]
    %v1189 = vld [vmem:[#allocation18 + $0xab0] sm:$0xff]
    %v1190 = vld [vmem:[#allocation18 + $0xab8] sm:$0xff]
    %v1191 = vld [vmem:[#allocation18 + $0xac0] sm:$0xff]
    %v1192 = vld [vmem:[#allocation18 + $0xac8] sm:$0xff]
    %v1193 = vld [vmem:[#allocation18 + $0xad0] sm:$0xff]
    %v1194 = vld [vmem:[#allocation18 + $0xad8] sm:$0xff]
    %v1195 = vld [vmem:[#allocation18 + $0xae0] sm:$0xff]
    %v1196 = vld [vmem:[#allocation18 + $0xae8] sm:$0xff]
    %v1197 = vld [vmem:[#allocation18 + $0xaf0] sm:$0xff]
    %v1198 = vld [vmem:[#allocation18 + $0xaf8] sm:$0xff]
    %v1199 = vld [vmem:[#allocation18 + $0xb00] sm:$0xff]
    %v1200 = vld [vmem:[#allocation18 + $0xb08] sm:$0xff]
    %v1201 = vld [vmem:[#allocation18 + $0xb10] sm:$0xff]
    %v1202 = vld [vmem:[#allocation18 + $0xb18] sm:$0xff]
    %v1203 = vld [vmem:[#allocation18 + $0xb20] sm:$0xff]
    %v1204 = vld [vmem:[#allocation18 + $0xb28] sm:$0xff]
    %v1205 = vld [vmem:[#allocation18 + $0xb30] sm:$0xff]
    %v1206 = vld [vmem:[#allocation18 + $0xb38] sm:$0xff]
    %v1207 = vld [vmem:[#allocation18 + $0xb40] sm:$0xff]
    %v1208 = vld [vmem:[#allocation18 + $0xb48] sm:$0xff]
    %v1209 = vld [vmem:[#allocation18 + $0xb50] sm:$0xff]
    %v1210 = vld [vmem:[#allocation18 + $0xb58] sm:$0xff]
    %v1211 = vld [vmem:[#allocation18 + $0xb60] sm:$0xff]
    %v1212 = vld [vmem:[#allocation18 + $0xb68] sm:$0xff]
    %v1213 = vld [vmem:[#allocation18 + $0xb70] sm:$0xff]
    %v1214 = vld [vmem:[#allocation18 + $0xb78] sm:$0xff]
    %v1215 = vld [vmem:[#allocation18 + $0xb80] sm:$0xff]
    %v1216 = vld [vmem:[#allocation18 + $0xb88] sm:$0xff]
    %v1217 = vld [vmem:[#allocation18 + $0xb90] sm:$0xff]
    %v1218 = vld [vmem:[#allocation18 + $0xb98] sm:$0xff]
    %v1219 = vld [vmem:[#allocation18 + $0xba0] sm:$0xff]
    %v1220 = vld [vmem:[#allocation18 + $0xba8] sm:$0xff]
    %v1221 = vld [vmem:[#allocation18 + $0xbb0] sm:$0xff]
    %v1222 = vld [vmem:[#allocation18 + $0xbb8] sm:$0xff]
    %v1223 = vld [vmem:[#allocation18 + $0xbc0] sm:$0xff]
    %v1224 = vld [vmem:[#allocation18 + $0xbc8] sm:$0xff]
    %v1225 = vld [vmem:[#allocation18 + $0xbd0] sm:$0xff]
    %v1226 = vld [vmem:[#allocation18 + $0xbd8] sm:$0xff]
    %v1227 = vld [vmem:[#allocation18 + $0xbe0] sm:$0xff]
    %v1228 = vld [vmem:[#allocation18 + $0xbe8] sm:$0xff]
    %v1229 = vld [vmem:[#allocation18 + $0xbf0] sm:$0xff]
    %v1230 = vld [vmem:[#allocation18 + $0xbf8] sm:$0xff]
    %v1231 = vld [vmem:[#allocation18 + $0xc00] sm:$0xff]
    %v1232 = vld [vmem:[#allocation18 + $0xc08] sm:$0xff]
    %v1233 = vld [vmem:[#allocation18 + $0xc10] sm:$0xff]
    %v1234 = vld [vmem:[#allocation18 + $0xc18] sm:$0xff]
    %v1235 = vld [vmem:[#allocation18 + $0xc20] sm:$0xff]
    %v1236 = vld [vmem:[#allocation18 + $0xc28] sm:$0xff]
    %v1237 = vld [vmem:[#allocation18 + $0xc30] sm:$0xff]
    %v1238 = vld [vmem:[#allocation18 + $0xc38] sm:$0xff]
    %v1239 = vld [vmem:[#allocation18 + $0xc40] sm:$0xff]
    %v1240 = vld [vmem:[#allocation18 + $0xc48] sm:$0xff]
    %v1241 = vld [vmem:[#allocation18 + $0xc50] sm:$0xff]
    %v1242 = vld [vmem:[#allocation18 + $0xc58] sm:$0xff]
    %v1243 = vld [vmem:[#allocation18 + $0xc60] sm:$0xff]
    %v1244 = vld [vmem:[#allocation18 + $0xc68] sm:$0xff]
    %v1245 = vld [vmem:[#allocation18 + $0xc70] sm:$0xff]
    %v1246 = vld [vmem:[#allocation18 + $0xc78] sm:$0xff]
    %v1247 = vld [vmem:[#allocation18 + $0xc80] sm:$0xff]
    %v1248 = vld [vmem:[#allocation18 + $0xc88] sm:$0xff]
    %v1249 = vld [vmem:[#allocation18 + $0xc90] sm:$0xff]
    %v1250 = vld [vmem:[#allocation18 + $0xc98] sm:$0xff]
    %v1251 = vld [vmem:[#allocation18 + $0xca0] sm:$0xff]
    %v1252 = vld [vmem:[#allocation18 + $0xca8] sm:$0xff]
    %v1253 = vld [vmem:[#allocation18 + $0xcb0] sm:$0xff]
    %v1254 = vld [vmem:[#allocation18 + $0xcb8] sm:$0xff]
    %v1255 = vld [vmem:[#allocation18 + $0xcc0] sm:$0xff]
    %v1256 = vld [vmem:[#allocation18 + $0xcc8] sm:$0xff]
    %v1257 = vld [vmem:[#allocation18 + $0xcd0] sm:$0xff]
    %v1258 = vld [vmem:[#allocation18 + $0xcd8] sm:$0xff]
    %v1259 = vld [vmem:[#allocation18 + $0xce0] sm:$0xff]
    %v1260 = vld [vmem:[#allocation18 + $0xce8] sm:$0xff]
    %v1261 = vld [vmem:[#allocation18 + $0xcf0] sm:$0xff]
    %v1262 = vld [vmem:[#allocation18 + $0xcf8] sm:$0xff]
    %v1263 = vld [vmem:[#allocation18 + $0xd00] sm:$0xff]
    %v1264 = vld [vmem:[#allocation18 + $0xd08] sm:$0xff]
    %v1265 = vld [vmem:[#allocation18 + $0xd10] sm:$0xff]
    %v1266 = vld [vmem:[#allocation18 + $0xd18] sm:$0xff]
    %v1267 = vld [vmem:[#allocation18 + $0xd20] sm:$0xff]
    %v1268 = vld [vmem:[#allocation18 + $0xd28] sm:$0xff]
    %v1269 = vld [vmem:[#allocation18 + $0xd30] sm:$0xff]
    %v1270 = vld [vmem:[#allocation18 + $0xd38] sm:$0xff]
    %v1271 = vld [vmem:[#allocation18 + $0xd40] sm:$0xff]
    %v1272 = vld [vmem:[#allocation18 + $0xd48] sm:$0xff]
    %v1273 = vld [vmem:[#allocation18 + $0xd50] sm:$0xff]
    %v1274 = vld [vmem:[#allocation18 + $0xd58] sm:$0xff]
    %v1275 = vld [vmem:[#allocation18 + $0xd60] sm:$0xff]
    %v1276 = vld [vmem:[#allocation18 + $0xd68] sm:$0xff]
    %v1277 = vld [vmem:[#allocation18 + $0xd70] sm:$0xff]
    %v1278 = vld [vmem:[#allocation18 + $0xd78] sm:$0xff]
    %v1279 = vld [vmem:[#allocation18 + $0xd80] sm:$0xff]
    %v1280 = vld [vmem:[#allocation18 + $0xd88] sm:$0xff]
    %v1281 = vld [vmem:[#allocation18 + $0xd90] sm:$0xff]
    %v1282 = vld [vmem:[#allocation18 + $0xd98] sm:$0xff]
    %v1283 = vld [vmem:[#allocation18 + $0xda0] sm:$0xff]
    %v1284 = vld [vmem:[#allocation18 + $0xda8] sm:$0xff]
    %v1285 = vld [vmem:[#allocation18 + $0xdb0] sm:$0xff]
    %v1286 = vld [vmem:[#allocation18 + $0xdb8] sm:$0xff]
    %v1287 = vld [vmem:[#allocation18 + $0xdc0] sm:$0xff]
    %v1288 = vld [vmem:[#allocation18 + $0xdc8] sm:$0xff]
    %v1289 = vld [vmem:[#allocation18 + $0xdd0] sm:$0xff]
    %v1290 = vld [vmem:[#allocation18 + $0xdd8] sm:$0xff]
    %v1291 = vld [vmem:[#allocation18 + $0xde0] sm:$0xff]
    %v1292 = vld [vmem:[#allocation18 + $0xde8] sm:$0xff]
    %v1293 = vld [vmem:[#allocation18 + $0xdf0] sm:$0xff]
    %v1294 = vld [vmem:[#allocation18 + $0xdf8] sm:$0xff]
    %v1295 = vld [vmem:[#allocation18 + $0xe00] sm:$0xff]
    %v1296 = vld [vmem:[#allocation18 + $0xe08] sm:$0xff]
    %v1297 = vld [vmem:[#allocation18 + $0xe10] sm:$0xff]
    %v1298 = vld [vmem:[#allocation18 + $0xe18] sm:$0xff]
    %v1299 = vld [vmem:[#allocation18 + $0xe20] sm:$0xff]
    %v1300 = vld [vmem:[#allocation18 + $0xe28] sm:$0xff]
    %v1301 = vld [vmem:[#allocation18 + $0xe30] sm:$0xff]
    %v1302 = vld [vmem:[#allocation18 + $0xe38] sm:$0xff]
    %v1303 = vld [vmem:[#allocation18 + $0xe40] sm:$0xff]
    %v1304 = vld [vmem:[#allocation18 + $0xe48] sm:$0xff]
    %v1305 = vld [vmem:[#allocation18 + $0xe50] sm:$0xff]
    %v1306 = vld [vmem:[#allocation18 + $0xe58] sm:$0xff]
    %v1307 = vld [vmem:[#allocation18 + $0xe60] sm:$0xff]
    %v1308 = vld [vmem:[#allocation18 + $0xe68] sm:$0xff]
    %v1309 = vld [vmem:[#allocation18 + $0xe70] sm:$0xff]
    %v1310 = vld [vmem:[#allocation18 + $0xe78] sm:$0xff]
    %v1311 = vld [vmem:[#allocation18 + $0xe80] sm:$0xff]
    %v1312 = vld [vmem:[#allocation18 + $0xe88] sm:$0xff]
    %v1313 = vld [vmem:[#allocation18 + $0xe90] sm:$0xff]
    %v1314 = vld [vmem:[#allocation18 + $0xe98] sm:$0xff]
    %v1315 = vld [vmem:[#allocation18 + $0xea0] sm:$0xff]
    %v1316 = vld [vmem:[#allocation18 + $0xea8] sm:$0xff]
    %v1317 = vld [vmem:[#allocation18 + $0xeb0] sm:$0xff]
    %v1318 = vld [vmem:[#allocation18 + $0xeb8] sm:$0xff]
    %v1319 = vld [vmem:[#allocation18 + $0xec0] sm:$0xff]
    %v1320 = vld [vmem:[#allocation18 + $0xec8] sm:$0xff]
    %v1321 = vld [vmem:[#allocation18 + $0xed0] sm:$0xff]
    %v1322 = vld [vmem:[#allocation18 + $0xed8] sm:$0xff]
    %v1323 = vld [vmem:[#allocation18 + $0xee0] sm:$0xff]
    %v1324 = vld [vmem:[#allocation18 + $0xee8] sm:$0xff]
    %v1325 = vld [vmem:[#allocation18 + $0xef0] sm:$0xff]
    %v1326 = vld [vmem:[#allocation18 + $0xef8] sm:$0xff]
    %v1327 = vld [vmem:[#allocation18 + $0xf00] sm:$0xff]
    %v1328 = vld [vmem:[#allocation18 + $0xf08] sm:$0xff]
    %v1329 = vld [vmem:[#allocation18 + $0xf10] sm:$0xff]
    %v1330 = vld [vmem:[#allocation18 + $0xf18] sm:$0xff]
    %v1331 = vld [vmem:[#allocation18 + $0xf20] sm:$0xff]
    %v1332 = vld [vmem:[#allocation18 + $0xf28] sm:$0xff]
    %v1333 = vld [vmem:[#allocation18 + $0xf30] sm:$0xff]
    %v1334 = vld [vmem:[#allocation18 + $0xf38] sm:$0xff]
    %v1335 = vld [vmem:[#allocation18 + $0xf40] sm:$0xff]
    %v1336 = vld [vmem:[#allocation18 + $0xf48] sm:$0xff]
    %v1337 = vld [vmem:[#allocation18 + $0xf50] sm:$0xff]
    %v1338 = vld [vmem:[#allocation18 + $0xf58] sm:$0xff]
    %v1339 = vld [vmem:[#allocation18 + $0xf60] sm:$0xff]
    %v1340 = vld [vmem:[#allocation18 + $0xf68] sm:$0xff]
    %v1341 = vld [vmem:[#allocation18 + $0xf70] sm:$0xff]
    %v1342 = vld [vmem:[#allocation18 + $0xf78] sm:$0xff]
    %v1343 = vld [vmem:[#allocation18 + $0xf80] sm:$0xff]
    %v1344 = vld [vmem:[#allocation18 + $0xf88] sm:$0xff]
    %v1345 = vld [vmem:[#allocation18 + $0xf90] sm:$0xff]
    %v1346 = vld [vmem:[#allocation18 + $0xf98] sm:$0xff]
    %v1347 = vld [vmem:[#allocation18 + $0xfa0] sm:$0xff]
    %v1348 = vld [vmem:[#allocation18 + $0xfa8] sm:$0xff]
    %v1349 = vld [vmem:[#allocation18 + $0xfb0] sm:$0xff]
    %v1350 = vld [vmem:[#allocation18 + $0xfb8] sm:$0xff]
    %v1351 = vld [vmem:[#allocation18 + $0xfc0] sm:$0xff]
    %v1352 = vld [vmem:[#allocation18 + $0xfc8] sm:$0xff]
    %v1353 = vld [vmem:[#allocation18 + $0xfd0] sm:$0xff]
    %v1354 = vld [vmem:[#allocation18 + $0xfd8] sm:$0xff]
    %v1355 = vld [vmem:[#allocation18 + $0xfe0] sm:$0xff]
    %v1356 = vld [vmem:[#allocation18 + $0xfe8] sm:$0xff]
    %v1357 = vld [vmem:[#allocation18 + $0xff0] sm:$0xff]
    %v1358 = vld [vmem:[#allocation18 + $0xff8] sm:$0xff]
    %v1359 = vld [vmem:[#allocation20] sm:$0xff]
    %v1361 = vlaneseq
    %v1362 = vshrl.u32 %v1361, 7
    %v1363 = vsub.s32 0, %v1362
    %v1364 = vrot.slane %v1359, %v1363
    %v1365 = vlaneseq
    %v1366 = vshrl.u32 %v1365, 7
    %v1367 = vsub.s32 1, %v1366
    %v1368 = vrot.slane %v1359, %v1367
    %v1369 = vlaneseq
    %v1370 = vshrl.u32 %v1369, 7
    %v1371 = vsub.s32 2, %v1370
    %v1372 = vrot.slane %v1359, %v1371
    %v1373 = vlaneseq
    %v1374 = vshrl.u32 %v1373, 7
    %v1375 = vsub.s32 3, %v1374
    %v1376 = vrot.slane %v1359, %v1375
    %v1377 = vlaneseq
    %v1378 = vshrl.u32 %v1377, 7
    %v1379 = vsub.s32 4, %v1378
    %v1380 = vrot.slane %v1359, %v1379
    %v1381 = vlaneseq
    %v1382 = vshrl.u32 %v1381, 7
    %v1383 = vsub.s32 5, %v1382
    %v1384 = vrot.slane %v1359, %v1383
    %v1385 = vlaneseq
    %v1386 = vshrl.u32 %v1385, 7
    %v1387 = vsub.s32 6, %v1386
    %v1388 = vrot.slane %v1359, %v1387
    %v1389 = vlaneseq
    %v1390 = vshrl.u32 %v1389, 7
    %v1391 = vsub.s32 7, %v1390
    %v1392 = vrot.slane %v1359, %v1391
    %v1913 = vunpack.c.l.b16 %v847
    %v1914 = vunpack.c.h.b16 %v847
    %v1915 = vunpack.c.l.b16 %v848
    %v1916 = vunpack.c.h.b16 %v848
    %v1917 = vunpack.c.l.b16 %v849
    %v1918 = vunpack.c.h.b16 %v849
    %v1919 = vunpack.c.l.b16 %v850
    %v1920 = vunpack.c.h.b16 %v850
    %v1921 = vunpack.c.l.b16 %v851
    %v1922 = vunpack.c.h.b16 %v851
    %v1923 = vunpack.c.l.b16 %v852
    %v1924 = vunpack.c.h.b16 %v852
    %v1925 = vunpack.c.l.b16 %v853
    %v1926 = vunpack.c.h.b16 %v853
    %v1927 = vunpack.c.l.b16 %v854
    %v1928 = vunpack.c.h.b16 %v854
    %v1929 = vunpack.c.l.b16 %v855
    %v1930 = vunpack.c.h.b16 %v855
    %v1931 = vunpack.c.l.b16 %v856
    %v1932 = vunpack.c.h.b16 %v856
    %v1933 = vunpack.c.l.b16 %v857
    %v1934 = vunpack.c.h.b16 %v857
    %v1935 = vunpack.c.l.b16 %v858
    %v1936 = vunpack.c.h.b16 %v858
    %v1937 = vunpack.c.l.b16 %v859
    %v1938 = vunpack.c.h.b16 %v859
    %v1939 = vunpack.c.l.b16 %v860
    %v1940 = vunpack.c.h.b16 %v860
    %v1941 = vunpack.c.l.b16 %v861
    %v1942 = vunpack.c.h.b16 %v861
    %v1943 = vunpack.c.l.b16 %v862
    %v1944 = vunpack.c.h.b16 %v862
    %v1945 = vunpack.c.l.b16 %v863
    %v1946 = vunpack.c.h.b16 %v863
    %v1947 = vunpack.c.l.b16 %v864
    %v1948 = vunpack.c.h.b16 %v864
    %v1949 = vunpack.c.l.b16 %v865
    %v1950 = vunpack.c.h.b16 %v865
    %v1951 = vunpack.c.l.b16 %v866
    %v1952 = vunpack.c.h.b16 %v866
    %v1953 = vunpack.c.l.b16 %v867
    %v1954 = vunpack.c.h.b16 %v867
    %v1955 = vunpack.c.l.b16 %v868
    %v1956 = vunpack.c.h.b16 %v868
    %v1957 = vunpack.c.l.b16 %v869
    %v1958 = vunpack.c.h.b16 %v869
    %v1959 = vunpack.c.l.b16 %v870
    %v1960 = vunpack.c.h.b16 %v870
    %v1961 = vunpack.c.l.b16 %v871
    %v1962 = vunpack.c.h.b16 %v871
    %v1963 = vunpack.c.l.b16 %v872
    %v1964 = vunpack.c.h.b16 %v872
    %v1965 = vunpack.c.l.b16 %v873
    %v1966 = vunpack.c.h.b16 %v873
    %v1967 = vunpack.c.l.b16 %v874
    %v1968 = vunpack.c.h.b16 %v874
    %v1969 = vunpack.c.l.b16 %v875
    %v1970 = vunpack.c.h.b16 %v875
    %v1971 = vunpack.c.l.b16 %v876
    %v1972 = vunpack.c.h.b16 %v876
    %v1973 = vunpack.c.l.b16 %v877
    %v1974 = vunpack.c.h.b16 %v877
    %v1975 = vunpack.c.l.b16 %v878
    %v1976 = vunpack.c.h.b16 %v878
    %v1977 = vunpack.c.l.b16 %v879
    %v1978 = vunpack.c.h.b16 %v879
    %v1979 = vunpack.c.l.b16 %v880
    %v1980 = vunpack.c.h.b16 %v880
    %v1981 = vunpack.c.l.b16 %v881
    %v1982 = vunpack.c.h.b16 %v881
    %v1983 = vunpack.c.l.b16 %v882
    %v1984 = vunpack.c.h.b16 %v882
    %v1985 = vunpack.c.l.b16 %v883
    %v1986 = vunpack.c.h.b16 %v883
    %v1987 = vunpack.c.l.b16 %v884
    %v1988 = vunpack.c.h.b16 %v884
    %v1989 = vunpack.c.l.b16 %v885
    %v1990 = vunpack.c.h.b16 %v885
    %v1991 = vunpack.c.l.b16 %v886
    %v1992 = vunpack.c.h.b16 %v886
    %v1993 = vunpack.c.l.b16 %v887
    %v1994 = vunpack.c.h.b16 %v887
    %v1995 = vunpack.c.l.b16 %v888
    %v1996 = vunpack.c.h.b16 %v888
    %v1997 = vunpack.c.l.b16 %v889
    %v1998 = vunpack.c.h.b16 %v889
    %v1999 = vunpack.c.l.b16 %v890
    %v2000 = vunpack.c.h.b16 %v890
    %v2001 = vunpack.c.l.b16 %v891
    %v2002 = vunpack.c.h.b16 %v891
    %v2003 = vunpack.c.l.b16 %v892
    %v2004 = vunpack.c.h.b16 %v892
    %v2005 = vunpack.c.l.b16 %v893
    %v2006 = vunpack.c.h.b16 %v893
    %v2007 = vunpack.c.l.b16 %v894
    %v2008 = vunpack.c.h.b16 %v894
    %v2009 = vunpack.c.l.b16 %v895
    %v2010 = vunpack.c.h.b16 %v895
    %v2011 = vunpack.c.l.b16 %v896
    %v2012 = vunpack.c.h.b16 %v896
    %v2013 = vunpack.c.l.b16 %v897
    %v2014 = vunpack.c.h.b16 %v897
    %v2015 = vunpack.c.l.b16 %v898
    %v2016 = vunpack.c.h.b16 %v898
    %v2017 = vunpack.c.l.b16 %v899
    %v2018 = vunpack.c.h.b16 %v899
    %v2019 = vunpack.c.l.b16 %v900
    %v2020 = vunpack.c.h.b16 %v900
    %v2021 = vunpack.c.l.b16 %v901
    %v2022 = vunpack.c.h.b16 %v901
    %v2023 = vunpack.c.l.b16 %v902
    %v2024 = vunpack.c.h.b16 %v902
    %v2025 = vunpack.c.l.b16 %v903
    %v2026 = vunpack.c.h.b16 %v903
    %v2027 = vunpack.c.l.b16 %v904
    %v2028 = vunpack.c.h.b16 %v904
    %v2029 = vunpack.c.l.b16 %v905
    %v2030 = vunpack.c.h.b16 %v905
    %v2031 = vunpack.c.l.b16 %v906
    %v2032 = vunpack.c.h.b16 %v906
    %v2033 = vunpack.c.l.b16 %v907
    %v2034 = vunpack.c.h.b16 %v907
    %v2035 = vunpack.c.l.b16 %v908
    %v2036 = vunpack.c.h.b16 %v908
    %v2037 = vunpack.c.l.b16 %v909
    %v2038 = vunpack.c.h.b16 %v909
    %v2039 = vunpack.c.l.b16 %v910
    %v2040 = vunpack.c.h.b16 %v910
    %v2041 = vunpack.c.l.b16 %v911
    %v2042 = vunpack.c.h.b16 %v911
    %v2043 = vunpack.c.l.b16 %v912
    %v2044 = vunpack.c.h.b16 %v912
    %v2045 = vunpack.c.l.b16 %v913
    %v2046 = vunpack.c.h.b16 %v913
    %v2047 = vunpack.c.l.b16 %v914
    %v2048 = vunpack.c.h.b16 %v914
    %v2049 = vunpack.c.l.b16 %v915
    %v2050 = vunpack.c.h.b16 %v915
    %v2051 = vunpack.c.l.b16 %v916
    %v2052 = vunpack.c.h.b16 %v916
    %v2053 = vunpack.c.l.b16 %v917
    %v2054 = vunpack.c.h.b16 %v917
    %v2055 = vunpack.c.l.b16 %v918
    %v2056 = vunpack.c.h.b16 %v918
    %v2057 = vunpack.c.l.b16 %v919
    %v2058 = vunpack.c.h.b16 %v919
    %v2059 = vunpack.c.l.b16 %v920
    %v2060 = vunpack.c.h.b16 %v920
    %v2061 = vunpack.c.l.b16 %v921
    %v2062 = vunpack.c.h.b16 %v921
    %v2063 = vunpack.c.l.b16 %v922
    %v2064 = vunpack.c.h.b16 %v922
    %v2065 = vunpack.c.l.b16 %v923
    %v2066 = vunpack.c.h.b16 %v923
    %v2067 = vunpack.c.l.b16 %v924
    %v2068 = vunpack.c.h.b16 %v924
    %v2069 = vunpack.c.l.b16 %v925
    %v2070 = vunpack.c.h.b16 %v925
    %v2071 = vunpack.c.l.b16 %v926
    %v2072 = vunpack.c.h.b16 %v926
    %v2073 = vunpack.c.l.b16 %v927
    %v2074 = vunpack.c.h.b16 %v927
    %v2075 = vunpack.c.l.b16 %v928
    %v2076 = vunpack.c.h.b16 %v928
    %v2077 = vunpack.c.l.b16 %v929
    %v2078 = vunpack.c.h.b16 %v929
    %v2079 = vunpack.c.l.b16 %v930
    %v2080 = vunpack.c.h.b16 %v930
    %v2081 = vunpack.c.l.b16 %v931
    %v2082 = vunpack.c.h.b16 %v931
    %v2083 = vunpack.c.l.b16 %v932
    %v2084 = vunpack.c.h.b16 %v932
    %v2085 = vunpack.c.l.b16 %v933
    %v2086 = vunpack.c.h.b16 %v933
    %v2087 = vunpack.c.l.b16 %v934
    %v2088 = vunpack.c.h.b16 %v934
    %v2089 = vunpack.c.l.b16 %v935
    %v2090 = vunpack.c.h.b16 %v935
    %v2091 = vunpack.c.l.b16 %v936
    %v2092 = vunpack.c.h.b16 %v936
    %v2093 = vunpack.c.l.b16 %v937
    %v2094 = vunpack.c.h.b16 %v937
    %v2095 = vunpack.c.l.b16 %v938
    %v2096 = vunpack.c.h.b16 %v938
    %v2097 = vunpack.c.l.b16 %v939
    %v2098 = vunpack.c.h.b16 %v939
    %v2099 = vunpack.c.l.b16 %v940
    %v2100 = vunpack.c.h.b16 %v940
    %v2101 = vunpack.c.l.b16 %v941
    %v2102 = vunpack.c.h.b16 %v941
    %v2103 = vunpack.c.l.b16 %v942
    %v2104 = vunpack.c.h.b16 %v942
    %v2105 = vunpack.c.l.b16 %v943
    %v2106 = vunpack.c.h.b16 %v943
    %v2107 = vunpack.c.l.b16 %v944
    %v2108 = vunpack.c.h.b16 %v944
    %v2109 = vunpack.c.l.b16 %v945
    %v2110 = vunpack.c.h.b16 %v945
    %v2111 = vunpack.c.l.b16 %v946
    %v2112 = vunpack.c.h.b16 %v946
    %v2113 = vunpack.c.l.b16 %v947
    %v2114 = vunpack.c.h.b16 %v947
    %v2115 = vunpack.c.l.b16 %v948
    %v2116 = vunpack.c.h.b16 %v948
    %v2117 = vunpack.c.l.b16 %v949
    %v2118 = vunpack.c.h.b16 %v949
    %v2119 = vunpack.c.l.b16 %v950
    %v2120 = vunpack.c.h.b16 %v950
    %v2121 = vunpack.c.l.b16 %v951
    %v2122 = vunpack.c.h.b16 %v951
    %v2123 = vunpack.c.l.b16 %v952
    %v2124 = vunpack.c.h.b16 %v952
    %v2125 = vunpack.c.l.b16 %v953
    %v2126 = vunpack.c.h.b16 %v953
    %v2127 = vunpack.c.l.b16 %v954
    %v2128 = vunpack.c.h.b16 %v954
    %v2129 = vunpack.c.l.b16 %v955
    %v2130 = vunpack.c.h.b16 %v955
    %v2131 = vunpack.c.l.b16 %v956
    %v2132 = vunpack.c.h.b16 %v956
    %v2133 = vunpack.c.l.b16 %v957
    %v2134 = vunpack.c.h.b16 %v957
    %v2135 = vunpack.c.l.b16 %v958
    %v2136 = vunpack.c.h.b16 %v958
    %v2137 = vunpack.c.l.b16 %v959
    %v2138 = vunpack.c.h.b16 %v959
    %v2139 = vunpack.c.l.b16 %v960
    %v2140 = vunpack.c.h.b16 %v960
    %v2141 = vunpack.c.l.b16 %v961
    %v2142 = vunpack.c.h.b16 %v961
    %v2143 = vunpack.c.l.b16 %v962
    %v2144 = vunpack.c.h.b16 %v962
    %v2145 = vunpack.c.l.b16 %v963
    %v2146 = vunpack.c.h.b16 %v963
    %v2147 = vunpack.c.l.b16 %v964
    %v2148 = vunpack.c.h.b16 %v964
    %v2149 = vunpack.c.l.b16 %v965
    %v2150 = vunpack.c.h.b16 %v965
    %v2151 = vunpack.c.l.b16 %v966
    %v2152 = vunpack.c.h.b16 %v966
    %v2153 = vunpack.c.l.b16 %v967
    %v2154 = vunpack.c.h.b16 %v967
    %v2155 = vunpack.c.l.b16 %v968
    %v2156 = vunpack.c.h.b16 %v968
    %v2157 = vunpack.c.l.b16 %v969
    %v2158 = vunpack.c.h.b16 %v969
    %v2159 = vunpack.c.l.b16 %v970
    %v2160 = vunpack.c.h.b16 %v970
    %v2161 = vunpack.c.l.b16 %v971
    %v2162 = vunpack.c.h.b16 %v971
    %v2163 = vunpack.c.l.b16 %v972
    %v2164 = vunpack.c.h.b16 %v972
    %v2165 = vunpack.c.l.b16 %v973
    %v2166 = vunpack.c.h.b16 %v973
    %v2167 = vunpack.c.l.b16 %v974
    %v2168 = vunpack.c.h.b16 %v974
    %v2169 = vunpack.c.l.b16 %v975
    %v2170 = vunpack.c.h.b16 %v975
    %v2171 = vunpack.c.l.b16 %v976
    %v2172 = vunpack.c.h.b16 %v976
    %v2173 = vunpack.c.l.b16 %v977
    %v2174 = vunpack.c.h.b16 %v977
    %v2175 = vunpack.c.l.b16 %v978
    %v2176 = vunpack.c.h.b16 %v978
    %v2177 = vunpack.c.l.b16 %v979
    %v2178 = vunpack.c.h.b16 %v979
    %v2179 = vunpack.c.l.b16 %v980
    %v2180 = vunpack.c.h.b16 %v980
    %v2181 = vunpack.c.l.b16 %v981
    %v2182 = vunpack.c.h.b16 %v981
    %v2183 = vunpack.c.l.b16 %v982
    %v2184 = vunpack.c.h.b16 %v982
    %v2185 = vunpack.c.l.b16 %v983
    %v2186 = vunpack.c.h.b16 %v983
    %v2187 = vunpack.c.l.b16 %v984
    %v2188 = vunpack.c.h.b16 %v984
    %v2189 = vunpack.c.l.b16 %v985
    %v2190 = vunpack.c.h.b16 %v985
    %v2191 = vunpack.c.l.b16 %v986
    %v2192 = vunpack.c.h.b16 %v986
    %v2193 = vunpack.c.l.b16 %v987
    %v2194 = vunpack.c.h.b16 %v987
    %v2195 = vunpack.c.l.b16 %v988
    %v2196 = vunpack.c.h.b16 %v988
    %v2197 = vunpack.c.l.b16 %v989
    %v2198 = vunpack.c.h.b16 %v989
    %v2199 = vunpack.c.l.b16 %v990
    %v2200 = vunpack.c.h.b16 %v990
    %v2201 = vunpack.c.l.b16 %v991
    %v2202 = vunpack.c.h.b16 %v991
    %v2203 = vunpack.c.l.b16 %v992
    %v2204 = vunpack.c.h.b16 %v992
    %v2205 = vunpack.c.l.b16 %v993
    %v2206 = vunpack.c.h.b16 %v993
    %v2207 = vunpack.c.l.b16 %v994
    %v2208 = vunpack.c.h.b16 %v994
    %v2209 = vunpack.c.l.b16 %v995
    %v2210 = vunpack.c.h.b16 %v995
    %v2211 = vunpack.c.l.b16 %v996
    %v2212 = vunpack.c.h.b16 %v996
    %v2213 = vunpack.c.l.b16 %v997
    %v2214 = vunpack.c.h.b16 %v997
    %v2215 = vunpack.c.l.b16 %v998
    %v2216 = vunpack.c.h.b16 %v998
    %v2217 = vunpack.c.l.b16 %v999
    %v2218 = vunpack.c.h.b16 %v999
    %v2219 = vunpack.c.l.b16 %v1000
    %v2220 = vunpack.c.h.b16 %v1000
    %v2221 = vunpack.c.l.b16 %v1001
    %v2222 = vunpack.c.h.b16 %v1001
    %v2223 = vunpack.c.l.b16 %v1002
    %v2224 = vunpack.c.h.b16 %v1002
    %v2225 = vunpack.c.l.b16 %v1003
    %v2226 = vunpack.c.h.b16 %v1003
    %v2227 = vunpack.c.l.b16 %v1004
    %v2228 = vunpack.c.h.b16 %v1004
    %v2229 = vunpack.c.l.b16 %v1005
    %v2230 = vunpack.c.h.b16 %v1005
    %v2231 = vunpack.c.l.b16 %v1006
    %v2232 = vunpack.c.h.b16 %v1006
    %v2233 = vunpack.c.l.b16 %v1007
    %v2234 = vunpack.c.h.b16 %v1007
    %v2235 = vunpack.c.l.b16 %v1008
    %v2236 = vunpack.c.h.b16 %v1008
    %v2237 = vunpack.c.l.b16 %v1009
    %v2238 = vunpack.c.h.b16 %v1009
    %v2239 = vunpack.c.l.b16 %v1010
    %v2240 = vunpack.c.h.b16 %v1010
    %v2241 = vunpack.c.l.b16 %v1011
    %v2242 = vunpack.c.h.b16 %v1011
    %v2243 = vunpack.c.l.b16 %v1012
    %v2244 = vunpack.c.h.b16 %v1012
    %v2245 = vunpack.c.l.b16 %v1013
    %v2246 = vunpack.c.h.b16 %v1013
    %v2247 = vunpack.c.l.b16 %v1014
    %v2248 = vunpack.c.h.b16 %v1014
    %v2249 = vunpack.c.l.b16 %v1015
    %v2250 = vunpack.c.h.b16 %v1015
    %v2251 = vunpack.c.l.b16 %v1016
    %v2252 = vunpack.c.h.b16 %v1016
    %v2253 = vunpack.c.l.b16 %v1017
    %v2254 = vunpack.c.h.b16 %v1017
    %v2255 = vunpack.c.l.b16 %v1018
    %v2256 = vunpack.c.h.b16 %v1018
    %v2257 = vunpack.c.l.b16 %v1019
    %v2258 = vunpack.c.h.b16 %v1019
    %v2259 = vunpack.c.l.b16 %v1020
    %v2260 = vunpack.c.h.b16 %v1020
    %v2261 = vunpack.c.l.b16 %v1021
    %v2262 = vunpack.c.h.b16 %v1021
    %v2263 = vunpack.c.l.b16 %v1022
    %v2264 = vunpack.c.h.b16 %v1022
    %v2265 = vunpack.c.l.b16 %v1023
    %v2266 = vunpack.c.h.b16 %v1023
    %v2267 = vunpack.c.l.b16 %v1024
    %v2268 = vunpack.c.h.b16 %v1024
    %v2269 = vunpack.c.l.b16 %v1025
    %v2270 = vunpack.c.h.b16 %v1025
    %v2271 = vunpack.c.l.b16 %v1026
    %v2272 = vunpack.c.h.b16 %v1026
    %v2273 = vunpack.c.l.b16 %v1027
    %v2274 = vunpack.c.h.b16 %v1027
    %v2275 = vunpack.c.l.b16 %v1028
    %v2276 = vunpack.c.h.b16 %v1028
    %v2277 = vunpack.c.l.b16 %v1029
    %v2278 = vunpack.c.h.b16 %v1029
    %v2279 = vunpack.c.l.b16 %v1030
    %v2280 = vunpack.c.h.b16 %v1030
    %v2281 = vunpack.c.l.b16 %v1031
    %v2282 = vunpack.c.h.b16 %v1031
    %v2283 = vunpack.c.l.b16 %v1032
    %v2284 = vunpack.c.h.b16 %v1032
    %v2285 = vunpack.c.l.b16 %v1033
    %v2286 = vunpack.c.h.b16 %v1033
    %v2287 = vunpack.c.l.b16 %v1034
    %v2288 = vunpack.c.h.b16 %v1034
    %v2289 = vunpack.c.l.b16 %v1035
    %v2290 = vunpack.c.h.b16 %v1035
    %v2291 = vunpack.c.l.b16 %v1036
    %v2292 = vunpack.c.h.b16 %v1036
    %v2293 = vunpack.c.l.b16 %v1037
    %v2294 = vunpack.c.h.b16 %v1037
    %v2295 = vunpack.c.l.b16 %v1038
    %v2296 = vunpack.c.h.b16 %v1038
    %v2297 = vunpack.c.l.b16 %v1039
    %v2298 = vunpack.c.h.b16 %v1039
    %v2299 = vunpack.c.l.b16 %v1040
    %v2300 = vunpack.c.h.b16 %v1040
    %v2301 = vunpack.c.l.b16 %v1041
    %v2302 = vunpack.c.h.b16 %v1041
    %v2303 = vunpack.c.l.b16 %v1042
    %v2304 = vunpack.c.h.b16 %v1042
    %v2305 = vunpack.c.l.b16 %v1043
    %v2306 = vunpack.c.h.b16 %v1043
    %v2307 = vunpack.c.l.b16 %v1044
    %v2308 = vunpack.c.h.b16 %v1044
    %v2309 = vunpack.c.l.b16 %v1045
    %v2310 = vunpack.c.h.b16 %v1045
    %v2311 = vunpack.c.l.b16 %v1046
    %v2312 = vunpack.c.h.b16 %v1046
    %v2313 = vunpack.c.l.b16 %v1047
    %v2314 = vunpack.c.h.b16 %v1047
    %v2315 = vunpack.c.l.b16 %v1048
    %v2316 = vunpack.c.h.b16 %v1048
    %v2317 = vunpack.c.l.b16 %v1049
    %v2318 = vunpack.c.h.b16 %v1049
    %v2319 = vunpack.c.l.b16 %v1050
    %v2320 = vunpack.c.h.b16 %v1050
    %v2321 = vunpack.c.l.b16 %v1051
    %v2322 = vunpack.c.h.b16 %v1051
    %v2323 = vunpack.c.l.b16 %v1052
    %v2324 = vunpack.c.h.b16 %v1052
    %v2325 = vunpack.c.l.b16 %v1053
    %v2326 = vunpack.c.h.b16 %v1053
    %v2327 = vunpack.c.l.b16 %v1054
    %v2328 = vunpack.c.h.b16 %v1054
    %v2329 = vunpack.c.l.b16 %v1055
    %v2330 = vunpack.c.h.b16 %v1055
    %v2331 = vunpack.c.l.b16 %v1056
    %v2332 = vunpack.c.h.b16 %v1056
    %v2333 = vunpack.c.l.b16 %v1057
    %v2334 = vunpack.c.h.b16 %v1057
    %v2335 = vunpack.c.l.b16 %v1058
    %v2336 = vunpack.c.h.b16 %v1058
    %v2337 = vunpack.c.l.b16 %v1059
    %v2338 = vunpack.c.h.b16 %v1059
    %v2339 = vunpack.c.l.b16 %v1060
    %v2340 = vunpack.c.h.b16 %v1060
    %v2341 = vunpack.c.l.b16 %v1061
    %v2342 = vunpack.c.h.b16 %v1061
    %v2343 = vunpack.c.l.b16 %v1062
    %v2344 = vunpack.c.h.b16 %v1062
    %v2345 = vunpack.c.l.b16 %v1063
    %v2346 = vunpack.c.h.b16 %v1063
    %v2347 = vunpack.c.l.b16 %v1064
    %v2348 = vunpack.c.h.b16 %v1064
    %v2349 = vunpack.c.l.b16 %v1065
    %v2350 = vunpack.c.h.b16 %v1065
    %v2351 = vunpack.c.l.b16 %v1066
    %v2352 = vunpack.c.h.b16 %v1066
    %v2353 = vunpack.c.l.b16 %v1067
    %v2354 = vunpack.c.h.b16 %v1067
    %v2355 = vunpack.c.l.b16 %v1068
    %v2356 = vunpack.c.h.b16 %v1068
    %v2357 = vunpack.c.l.b16 %v1069
    %v2358 = vunpack.c.h.b16 %v1069
    %v2359 = vunpack.c.l.b16 %v1070
    %v2360 = vunpack.c.h.b16 %v1070
    %v2361 = vunpack.c.l.b16 %v1071
    %v2362 = vunpack.c.h.b16 %v1071
    %v2363 = vunpack.c.l.b16 %v1072
    %v2364 = vunpack.c.h.b16 %v1072
    %v2365 = vunpack.c.l.b16 %v1073
    %v2366 = vunpack.c.h.b16 %v1073
    %v2367 = vunpack.c.l.b16 %v1074
    %v2368 = vunpack.c.h.b16 %v1074
    %v2369 = vunpack.c.l.b16 %v1075
    %v2370 = vunpack.c.h.b16 %v1075
    %v2371 = vunpack.c.l.b16 %v1076
    %v2372 = vunpack.c.h.b16 %v1076
    %v2373 = vunpack.c.l.b16 %v1077
    %v2374 = vunpack.c.h.b16 %v1077
    %v2375 = vunpack.c.l.b16 %v1078
    %v2376 = vunpack.c.h.b16 %v1078
    %v2377 = vunpack.c.l.b16 %v1079
    %v2378 = vunpack.c.h.b16 %v1079
    %v2379 = vunpack.c.l.b16 %v1080
    %v2380 = vunpack.c.h.b16 %v1080
    %v2381 = vunpack.c.l.b16 %v1081
    %v2382 = vunpack.c.h.b16 %v1081
    %v2383 = vunpack.c.l.b16 %v1082
    %v2384 = vunpack.c.h.b16 %v1082
    %v2385 = vunpack.c.l.b16 %v1083
    %v2386 = vunpack.c.h.b16 %v1083
    %v2387 = vunpack.c.l.b16 %v1084
    %v2388 = vunpack.c.h.b16 %v1084
    %v2389 = vunpack.c.l.b16 %v1085
    %v2390 = vunpack.c.h.b16 %v1085
    %v2391 = vunpack.c.l.b16 %v1086
    %v2392 = vunpack.c.h.b16 %v1086
    %v2393 = vunpack.c.l.b16 %v1087
    %v2394 = vunpack.c.h.b16 %v1087
    %v2395 = vunpack.c.l.b16 %v1088
    %v2396 = vunpack.c.h.b16 %v1088
    %v2397 = vunpack.c.l.b16 %v1089
    %v2398 = vunpack.c.h.b16 %v1089
    %v2399 = vunpack.c.l.b16 %v1090
    %v2400 = vunpack.c.h.b16 %v1090
    %v2401 = vunpack.c.l.b16 %v1091
    %v2402 = vunpack.c.h.b16 %v1091
    %v2403 = vunpack.c.l.b16 %v1092
    %v2404 = vunpack.c.h.b16 %v1092
    %v2405 = vunpack.c.l.b16 %v1093
    %v2406 = vunpack.c.h.b16 %v1093
    %v2407 = vunpack.c.l.b16 %v1094
    %v2408 = vunpack.c.h.b16 %v1094
    %v2409 = vunpack.c.l.b16 %v1095
    %v2410 = vunpack.c.h.b16 %v1095
    %v2411 = vunpack.c.l.b16 %v1096
    %v2412 = vunpack.c.h.b16 %v1096
    %v2413 = vunpack.c.l.b16 %v1097
    %v2414 = vunpack.c.h.b16 %v1097
    %v2415 = vunpack.c.l.b16 %v1098
    %v2416 = vunpack.c.h.b16 %v1098
    %v2417 = vunpack.c.l.b16 %v1099
    %v2418 = vunpack.c.h.b16 %v1099
    %v2419 = vunpack.c.l.b16 %v1100
    %v2420 = vunpack.c.h.b16 %v1100
    %v2421 = vunpack.c.l.b16 %v1101
    %v2422 = vunpack.c.h.b16 %v1101
    %v2423 = vunpack.c.l.b16 %v1102
    %v2424 = vunpack.c.h.b16 %v1102
    %v2425 = vunpack.c.l.b16 %v1103
    %v2426 = vunpack.c.h.b16 %v1103
    %v2427 = vunpack.c.l.b16 %v1104
    %v2428 = vunpack.c.h.b16 %v1104
    %v2429 = vunpack.c.l.b16 %v1105
    %v2430 = vunpack.c.h.b16 %v1105
    %v2431 = vunpack.c.l.b16 %v1106
    %v2432 = vunpack.c.h.b16 %v1106
    %v2433 = vunpack.c.l.b16 %v1107
    %v2434 = vunpack.c.h.b16 %v1107
    %v2435 = vunpack.c.l.b16 %v1108
    %v2436 = vunpack.c.h.b16 %v1108
    %v2437 = vunpack.c.l.b16 %v1109
    %v2438 = vunpack.c.h.b16 %v1109
    %v2439 = vunpack.c.l.b16 %v1110
    %v2440 = vunpack.c.h.b16 %v1110
    %v2441 = vunpack.c.l.b16 %v1111
    %v2442 = vunpack.c.h.b16 %v1111
    %v2443 = vunpack.c.l.b16 %v1112
    %v2444 = vunpack.c.h.b16 %v1112
    %v2445 = vunpack.c.l.b16 %v1113
    %v2446 = vunpack.c.h.b16 %v1113
    %v2447 = vunpack.c.l.b16 %v1114
    %v2448 = vunpack.c.h.b16 %v1114
    %v2449 = vunpack.c.l.b16 %v1115
    %v2450 = vunpack.c.h.b16 %v1115
    %v2451 = vunpack.c.l.b16 %v1116
    %v2452 = vunpack.c.h.b16 %v1116
    %v2453 = vunpack.c.l.b16 %v1117
    %v2454 = vunpack.c.h.b16 %v1117
    %v2455 = vunpack.c.l.b16 %v1118
    %v2456 = vunpack.c.h.b16 %v1118
    %v2457 = vunpack.c.l.b16 %v1119
    %v2458 = vunpack.c.h.b16 %v1119
    %v2459 = vunpack.c.l.b16 %v1120
    %v2460 = vunpack.c.h.b16 %v1120
    %v2461 = vunpack.c.l.b16 %v1121
    %v2462 = vunpack.c.h.b16 %v1121
    %v2463 = vunpack.c.l.b16 %v1122
    %v2464 = vunpack.c.h.b16 %v1122
    %v2465 = vunpack.c.l.b16 %v1123
    %v2466 = vunpack.c.h.b16 %v1123
    %v2467 = vunpack.c.l.b16 %v1124
    %v2468 = vunpack.c.h.b16 %v1124
    %v2469 = vunpack.c.l.b16 %v1125
    %v2470 = vunpack.c.h.b16 %v1125
    %v2471 = vunpack.c.l.b16 %v1126
    %v2472 = vunpack.c.h.b16 %v1126
    %v2473 = vunpack.c.l.b16 %v1127
    %v2474 = vunpack.c.h.b16 %v1127
    %v2475 = vunpack.c.l.b16 %v1128
    %v2476 = vunpack.c.h.b16 %v1128
    %v2477 = vunpack.c.l.b16 %v1129
    %v2478 = vunpack.c.h.b16 %v1129
    %v2479 = vunpack.c.l.b16 %v1130
    %v2480 = vunpack.c.h.b16 %v1130
    %v2481 = vunpack.c.l.b16 %v1131
    %v2482 = vunpack.c.h.b16 %v1131
    %v2483 = vunpack.c.l.b16 %v1132
    %v2484 = vunpack.c.h.b16 %v1132
    %v2485 = vunpack.c.l.b16 %v1133
    %v2486 = vunpack.c.h.b16 %v1133
    %v2487 = vunpack.c.l.b16 %v1134
    %v2488 = vunpack.c.h.b16 %v1134
    %v2489 = vunpack.c.l.b16 %v1135
    %v2490 = vunpack.c.h.b16 %v1135
    %v2491 = vunpack.c.l.b16 %v1136
    %v2492 = vunpack.c.h.b16 %v1136
    %v2493 = vunpack.c.l.b16 %v1137
    %v2494 = vunpack.c.h.b16 %v1137
    %v2495 = vunpack.c.l.b16 %v1138
    %v2496 = vunpack.c.h.b16 %v1138
    %v2497 = vunpack.c.l.b16 %v1139
    %v2498 = vunpack.c.h.b16 %v1139
    %v2499 = vunpack.c.l.b16 %v1140
    %v2500 = vunpack.c.h.b16 %v1140
    %v2501 = vunpack.c.l.b16 %v1141
    %v2502 = vunpack.c.h.b16 %v1141
    %v2503 = vunpack.c.l.b16 %v1142
    %v2504 = vunpack.c.h.b16 %v1142
    %v2505 = vunpack.c.l.b16 %v1143
    %v2506 = vunpack.c.h.b16 %v1143
    %v2507 = vunpack.c.l.b16 %v1144
    %v2508 = vunpack.c.h.b16 %v1144
    %v2509 = vunpack.c.l.b16 %v1145
    %v2510 = vunpack.c.h.b16 %v1145
    %v2511 = vunpack.c.l.b16 %v1146
    %v2512 = vunpack.c.h.b16 %v1146
    %v2513 = vunpack.c.l.b16 %v1147
    %v2514 = vunpack.c.h.b16 %v1147
    %v2515 = vunpack.c.l.b16 %v1148
    %v2516 = vunpack.c.h.b16 %v1148
    %v2517 = vunpack.c.l.b16 %v1149
    %v2518 = vunpack.c.h.b16 %v1149
    %v2519 = vunpack.c.l.b16 %v1150
    %v2520 = vunpack.c.h.b16 %v1150
    %v2521 = vunpack.c.l.b16 %v1151
    %v2522 = vunpack.c.h.b16 %v1151
    %v2523 = vunpack.c.l.b16 %v1152
    %v2524 = vunpack.c.h.b16 %v1152
    %v2525 = vunpack.c.l.b16 %v1153
    %v2526 = vunpack.c.h.b16 %v1153
    %v2527 = vunpack.c.l.b16 %v1154
    %v2528 = vunpack.c.h.b16 %v1154
    %v2529 = vunpack.c.l.b16 %v1155
    %v2530 = vunpack.c.h.b16 %v1155
    %v2531 = vunpack.c.l.b16 %v1156
    %v2532 = vunpack.c.h.b16 %v1156
    %v2533 = vunpack.c.l.b16 %v1157
    %v2534 = vunpack.c.h.b16 %v1157
    %v2535 = vunpack.c.l.b16 %v1158
    %v2536 = vunpack.c.h.b16 %v1158
    %v2537 = vunpack.c.l.b16 %v1159
    %v2538 = vunpack.c.h.b16 %v1159
    %v2539 = vunpack.c.l.b16 %v1160
    %v2540 = vunpack.c.h.b16 %v1160
    %v2541 = vunpack.c.l.b16 %v1161
    %v2542 = vunpack.c.h.b16 %v1161
    %v2543 = vunpack.c.l.b16 %v1162
    %v2544 = vunpack.c.h.b16 %v1162
    %v2545 = vunpack.c.l.b16 %v1163
    %v2546 = vunpack.c.h.b16 %v1163
    %v2547 = vunpack.c.l.b16 %v1164
    %v2548 = vunpack.c.h.b16 %v1164
    %v2549 = vunpack.c.l.b16 %v1165
    %v2550 = vunpack.c.h.b16 %v1165
    %v2551 = vunpack.c.l.b16 %v1166
    %v2552 = vunpack.c.h.b16 %v1166
    %v2553 = vunpack.c.l.b16 %v1167
    %v2554 = vunpack.c.h.b16 %v1167
    %v2555 = vunpack.c.l.b16 %v1168
    %v2556 = vunpack.c.h.b16 %v1168
    %v2557 = vunpack.c.l.b16 %v1169
    %v2558 = vunpack.c.h.b16 %v1169
    %v2559 = vunpack.c.l.b16 %v1170
    %v2560 = vunpack.c.h.b16 %v1170
    %v2561 = vunpack.c.l.b16 %v1171
    %v2562 = vunpack.c.h.b16 %v1171
    %v2563 = vunpack.c.l.b16 %v1172
    %v2564 = vunpack.c.h.b16 %v1172
    %v2565 = vunpack.c.l.b16 %v1173
    %v2566 = vunpack.c.h.b16 %v1173
    %v2567 = vunpack.c.l.b16 %v1174
    %v2568 = vunpack.c.h.b16 %v1174
    %v2569 = vunpack.c.l.b16 %v1175
    %v2570 = vunpack.c.h.b16 %v1175
    %v2571 = vunpack.c.l.b16 %v1176
    %v2572 = vunpack.c.h.b16 %v1176
    %v2573 = vunpack.c.l.b16 %v1177
    %v2574 = vunpack.c.h.b16 %v1177
    %v2575 = vunpack.c.l.b16 %v1178
    %v2576 = vunpack.c.h.b16 %v1178
    %v2577 = vunpack.c.l.b16 %v1179
    %v2578 = vunpack.c.h.b16 %v1179
    %v2579 = vunpack.c.l.b16 %v1180
    %v2580 = vunpack.c.h.b16 %v1180
    %v2581 = vunpack.c.l.b16 %v1181
    %v2582 = vunpack.c.h.b16 %v1181
    %v2583 = vunpack.c.l.b16 %v1182
    %v2584 = vunpack.c.h.b16 %v1182
    %v2585 = vunpack.c.l.b16 %v1183
    %v2586 = vunpack.c.h.b16 %v1183
    %v2587 = vunpack.c.l.b16 %v1184
    %v2588 = vunpack.c.h.b16 %v1184
    %v2589 = vunpack.c.l.b16 %v1185
    %v2590 = vunpack.c.h.b16 %v1185
    %v2591 = vunpack.c.l.b16 %v1186
    %v2592 = vunpack.c.h.b16 %v1186
    %v2593 = vunpack.c.l.b16 %v1187
    %v2594 = vunpack.c.h.b16 %v1187
    %v2595 = vunpack.c.l.b16 %v1188
    %v2596 = vunpack.c.h.b16 %v1188
    %v2597 = vunpack.c.l.b16 %v1189
    %v2598 = vunpack.c.h.b16 %v1189
    %v2599 = vunpack.c.l.b16 %v1190
    %v2600 = vunpack.c.h.b16 %v1190
    %v2601 = vunpack.c.l.b16 %v1191
    %v2602 = vunpack.c.h.b16 %v1191
    %v2603 = vunpack.c.l.b16 %v1192
    %v2604 = vunpack.c.h.b16 %v1192
    %v2605 = vunpack.c.l.b16 %v1193
    %v2606 = vunpack.c.h.b16 %v1193
    %v2607 = vunpack.c.l.b16 %v1194
    %v2608 = vunpack.c.h.b16 %v1194
    %v2609 = vunpack.c.l.b16 %v1195
    %v2610 = vunpack.c.h.b16 %v1195
    %v2611 = vunpack.c.l.b16 %v1196
    %v2612 = vunpack.c.h.b16 %v1196
    %v2613 = vunpack.c.l.b16 %v1197
    %v2614 = vunpack.c.h.b16 %v1197
    %v2615 = vunpack.c.l.b16 %v1198
    %v2616 = vunpack.c.h.b16 %v1198
    %v2617 = vunpack.c.l.b16 %v1199
    %v2618 = vunpack.c.h.b16 %v1199
    %v2619 = vunpack.c.l.b16 %v1200
    %v2620 = vunpack.c.h.b16 %v1200
    %v2621 = vunpack.c.l.b16 %v1201
    %v2622 = vunpack.c.h.b16 %v1201
    %v2623 = vunpack.c.l.b16 %v1202
    %v2624 = vunpack.c.h.b16 %v1202
    %v2625 = vunpack.c.l.b16 %v1203
    %v2626 = vunpack.c.h.b16 %v1203
    %v2627 = vunpack.c.l.b16 %v1204
    %v2628 = vunpack.c.h.b16 %v1204
    %v2629 = vunpack.c.l.b16 %v1205
    %v2630 = vunpack.c.h.b16 %v1205
    %v2631 = vunpack.c.l.b16 %v1206
    %v2632 = vunpack.c.h.b16 %v1206
    %v2633 = vunpack.c.l.b16 %v1207
    %v2634 = vunpack.c.h.b16 %v1207
    %v2635 = vunpack.c.l.b16 %v1208
    %v2636 = vunpack.c.h.b16 %v1208
    %v2637 = vunpack.c.l.b16 %v1209
    %v2638 = vunpack.c.h.b16 %v1209
    %v2639 = vunpack.c.l.b16 %v1210
    %v2640 = vunpack.c.h.b16 %v1210
    %v2641 = vunpack.c.l.b16 %v1211
    %v2642 = vunpack.c.h.b16 %v1211
    %v2643 = vunpack.c.l.b16 %v1212
    %v2644 = vunpack.c.h.b16 %v1212
    %v2645 = vunpack.c.l.b16 %v1213
    %v2646 = vunpack.c.h.b16 %v1213
    %v2647 = vunpack.c.l.b16 %v1214
    %v2648 = vunpack.c.h.b16 %v1214
    %v2649 = vunpack.c.l.b16 %v1215
    %v2650 = vunpack.c.h.b16 %v1215
    %v2651 = vunpack.c.l.b16 %v1216
    %v2652 = vunpack.c.h.b16 %v1216
    %v2653 = vunpack.c.l.b16 %v1217
    %v2654 = vunpack.c.h.b16 %v1217
    %v2655 = vunpack.c.l.b16 %v1218
    %v2656 = vunpack.c.h.b16 %v1218
    %v2657 = vunpack.c.l.b16 %v1219
    %v2658 = vunpack.c.h.b16 %v1219
    %v2659 = vunpack.c.l.b16 %v1220
    %v2660 = vunpack.c.h.b16 %v1220
    %v2661 = vunpack.c.l.b16 %v1221
    %v2662 = vunpack.c.h.b16 %v1221
    %v2663 = vunpack.c.l.b16 %v1222
    %v2664 = vunpack.c.h.b16 %v1222
    %v2665 = vunpack.c.l.b16 %v1223
    %v2666 = vunpack.c.h.b16 %v1223
    %v2667 = vunpack.c.l.b16 %v1224
    %v2668 = vunpack.c.h.b16 %v1224
    %v2669 = vunpack.c.l.b16 %v1225
    %v2670 = vunpack.c.h.b16 %v1225
    %v2671 = vunpack.c.l.b16 %v1226
    %v2672 = vunpack.c.h.b16 %v1226
    %v2673 = vunpack.c.l.b16 %v1227
    %v2674 = vunpack.c.h.b16 %v1227
    %v2675 = vunpack.c.l.b16 %v1228
    %v2676 = vunpack.c.h.b16 %v1228
    %v2677 = vunpack.c.l.b16 %v1229
    %v2678 = vunpack.c.h.b16 %v1229
    %v2679 = vunpack.c.l.b16 %v1230
    %v2680 = vunpack.c.h.b16 %v1230
    %v2681 = vunpack.c.l.b16 %v1231
    %v2682 = vunpack.c.h.b16 %v1231
    %v2683 = vunpack.c.l.b16 %v1232
    %v2684 = vunpack.c.h.b16 %v1232
    %v2685 = vunpack.c.l.b16 %v1233
    %v2686 = vunpack.c.h.b16 %v1233
    %v2687 = vunpack.c.l.b16 %v1234
    %v2688 = vunpack.c.h.b16 %v1234
    %v2689 = vunpack.c.l.b16 %v1235
    %v2690 = vunpack.c.h.b16 %v1235
    %v2691 = vunpack.c.l.b16 %v1236
    %v2692 = vunpack.c.h.b16 %v1236
    %v2693 = vunpack.c.l.b16 %v1237
    %v2694 = vunpack.c.h.b16 %v1237
    %v2695 = vunpack.c.l.b16 %v1238
    %v2696 = vunpack.c.h.b16 %v1238
    %v2697 = vunpack.c.l.b16 %v1239
    %v2698 = vunpack.c.h.b16 %v1239
    %v2699 = vunpack.c.l.b16 %v1240
    %v2700 = vunpack.c.h.b16 %v1240
    %v2701 = vunpack.c.l.b16 %v1241
    %v2702 = vunpack.c.h.b16 %v1241
    %v2703 = vunpack.c.l.b16 %v1242
    %v2704 = vunpack.c.h.b16 %v1242
    %v2705 = vunpack.c.l.b16 %v1243
    %v2706 = vunpack.c.h.b16 %v1243
    %v2707 = vunpack.c.l.b16 %v1244
    %v2708 = vunpack.c.h.b16 %v1244
    %v2709 = vunpack.c.l.b16 %v1245
    %v2710 = vunpack.c.h.b16 %v1245
    %v2711 = vunpack.c.l.b16 %v1246
    %v2712 = vunpack.c.h.b16 %v1246
    %v2713 = vunpack.c.l.b16 %v1247
    %v2714 = vunpack.c.h.b16 %v1247
    %v2715 = vunpack.c.l.b16 %v1248
    %v2716 = vunpack.c.h.b16 %v1248
    %v2717 = vunpack.c.l.b16 %v1249
    %v2718 = vunpack.c.h.b16 %v1249
    %v2719 = vunpack.c.l.b16 %v1250
    %v2720 = vunpack.c.h.b16 %v1250
    %v2721 = vunpack.c.l.b16 %v1251
    %v2722 = vunpack.c.h.b16 %v1251
    %v2723 = vunpack.c.l.b16 %v1252
    %v2724 = vunpack.c.h.b16 %v1252
    %v2725 = vunpack.c.l.b16 %v1253
    %v2726 = vunpack.c.h.b16 %v1253
    %v2727 = vunpack.c.l.b16 %v1254
    %v2728 = vunpack.c.h.b16 %v1254
    %v2729 = vunpack.c.l.b16 %v1255
    %v2730 = vunpack.c.h.b16 %v1255
    %v2731 = vunpack.c.l.b16 %v1256
    %v2732 = vunpack.c.h.b16 %v1256
    %v2733 = vunpack.c.l.b16 %v1257
    %v2734 = vunpack.c.h.b16 %v1257
    %v2735 = vunpack.c.l.b16 %v1258
    %v2736 = vunpack.c.h.b16 %v1258
    %v2737 = vunpack.c.l.b16 %v1259
    %v2738 = vunpack.c.h.b16 %v1259
    %v2739 = vunpack.c.l.b16 %v1260
    %v2740 = vunpack.c.h.b16 %v1260
    %v2741 = vunpack.c.l.b16 %v1261
    %v2742 = vunpack.c.h.b16 %v1261
    %v2743 = vunpack.c.l.b16 %v1262
    %v2744 = vunpack.c.h.b16 %v1262
    %v2745 = vunpack.c.l.b16 %v1263
    %v2746 = vunpack.c.h.b16 %v1263
    %v2747 = vunpack.c.l.b16 %v1264
    %v2748 = vunpack.c.h.b16 %v1264
    %v2749 = vunpack.c.l.b16 %v1265
    %v2750 = vunpack.c.h.b16 %v1265
    %v2751 = vunpack.c.l.b16 %v1266
    %v2752 = vunpack.c.h.b16 %v1266
    %v2753 = vunpack.c.l.b16 %v1267
    %v2754 = vunpack.c.h.b16 %v1267
    %v2755 = vunpack.c.l.b16 %v1268
    %v2756 = vunpack.c.h.b16 %v1268
    %v2757 = vunpack.c.l.b16 %v1269
    %v2758 = vunpack.c.h.b16 %v1269
    %v2759 = vunpack.c.l.b16 %v1270
    %v2760 = vunpack.c.h.b16 %v1270
    %v2761 = vunpack.c.l.b16 %v1271
    %v2762 = vunpack.c.h.b16 %v1271
    %v2763 = vunpack.c.l.b16 %v1272
    %v2764 = vunpack.c.h.b16 %v1272
    %v2765 = vunpack.c.l.b16 %v1273
    %v2766 = vunpack.c.h.b16 %v1273
    %v2767 = vunpack.c.l.b16 %v1274
    %v2768 = vunpack.c.h.b16 %v1274
    %v2769 = vunpack.c.l.b16 %v1275
    %v2770 = vunpack.c.h.b16 %v1275
    %v2771 = vunpack.c.l.b16 %v1276
    %v2772 = vunpack.c.h.b16 %v1276
    %v2773 = vunpack.c.l.b16 %v1277
    %v2774 = vunpack.c.h.b16 %v1277
    %v2775 = vunpack.c.l.b16 %v1278
    %v2776 = vunpack.c.h.b16 %v1278
    %v2777 = vunpack.c.l.b16 %v1279
    %v2778 = vunpack.c.h.b16 %v1279
    %v2779 = vunpack.c.l.b16 %v1280
    %v2780 = vunpack.c.h.b16 %v1280
    %v2781 = vunpack.c.l.b16 %v1281
    %v2782 = vunpack.c.h.b16 %v1281
    %v2783 = vunpack.c.l.b16 %v1282
    %v2784 = vunpack.c.h.b16 %v1282
    %v2785 = vunpack.c.l.b16 %v1283
    %v2786 = vunpack.c.h.b16 %v1283
    %v2787 = vunpack.c.l.b16 %v1284
    %v2788 = vunpack.c.h.b16 %v1284
    %v2789 = vunpack.c.l.b16 %v1285
    %v2790 = vunpack.c.h.b16 %v1285
    %v2791 = vunpack.c.l.b16 %v1286
    %v2792 = vunpack.c.h.b16 %v1286
    %v2793 = vunpack.c.l.b16 %v1287
    %v2794 = vunpack.c.h.b16 %v1287
    %v2795 = vunpack.c.l.b16 %v1288
    %v2796 = vunpack.c.h.b16 %v1288
    %v2797 = vunpack.c.l.b16 %v1289
    %v2798 = vunpack.c.h.b16 %v1289
    %v2799 = vunpack.c.l.b16 %v1290
    %v2800 = vunpack.c.h.b16 %v1290
    %v2801 = vunpack.c.l.b16 %v1291
    %v2802 = vunpack.c.h.b16 %v1291
    %v2803 = vunpack.c.l.b16 %v1292
    %v2804 = vunpack.c.h.b16 %v1292
    %v2805 = vunpack.c.l.b16 %v1293
    %v2806 = vunpack.c.h.b16 %v1293
    %v2807 = vunpack.c.l.b16 %v1294
    %v2808 = vunpack.c.h.b16 %v1294
    %v2809 = vunpack.c.l.b16 %v1295
    %v2810 = vunpack.c.h.b16 %v1295
    %v2811 = vunpack.c.l.b16 %v1296
    %v2812 = vunpack.c.h.b16 %v1296
    %v2813 = vunpack.c.l.b16 %v1297
    %v2814 = vunpack.c.h.b16 %v1297
    %v2815 = vunpack.c.l.b16 %v1298
    %v2816 = vunpack.c.h.b16 %v1298
    %v2817 = vunpack.c.l.b16 %v1299
    %v2818 = vunpack.c.h.b16 %v1299
    %v2819 = vunpack.c.l.b16 %v1300
    %v2820 = vunpack.c.h.b16 %v1300
    %v2821 = vunpack.c.l.b16 %v1301
    %v2822 = vunpack.c.h.b16 %v1301
    %v2823 = vunpack.c.l.b16 %v1302
    %v2824 = vunpack.c.h.b16 %v1302
    %v2825 = vunpack.c.l.b16 %v1303
    %v2826 = vunpack.c.h.b16 %v1303
    %v2827 = vunpack.c.l.b16 %v1304
    %v2828 = vunpack.c.h.b16 %v1304
    %v2829 = vunpack.c.l.b16 %v1305
    %v2830 = vunpack.c.h.b16 %v1305
    %v2831 = vunpack.c.l.b16 %v1306
    %v2832 = vunpack.c.h.b16 %v1306
    %v2833 = vunpack.c.l.b16 %v1307
    %v2834 = vunpack.c.h.b16 %v1307
    %v2835 = vunpack.c.l.b16 %v1308
    %v2836 = vunpack.c.h.b16 %v1308
    %v2837 = vunpack.c.l.b16 %v1309
    %v2838 = vunpack.c.h.b16 %v1309
    %v2839 = vunpack.c.l.b16 %v1310
    %v2840 = vunpack.c.h.b16 %v1310
    %v2841 = vunpack.c.l.b16 %v1311
    %v2842 = vunpack.c.h.b16 %v1311
    %v2843 = vunpack.c.l.b16 %v1312
    %v2844 = vunpack.c.h.b16 %v1312
    %v2845 = vunpack.c.l.b16 %v1313
    %v2846 = vunpack.c.h.b16 %v1313
    %v2847 = vunpack.c.l.b16 %v1314
    %v2848 = vunpack.c.h.b16 %v1314
    %v2849 = vunpack.c.l.b16 %v1315
    %v2850 = vunpack.c.h.b16 %v1315
    %v2851 = vunpack.c.l.b16 %v1316
    %v2852 = vunpack.c.h.b16 %v1316
    %v2853 = vunpack.c.l.b16 %v1317
    %v2854 = vunpack.c.h.b16 %v1317
    %v2855 = vunpack.c.l.b16 %v1318
    %v2856 = vunpack.c.h.b16 %v1318
    %v2857 = vunpack.c.l.b16 %v1319
    %v2858 = vunpack.c.h.b16 %v1319
    %v2859 = vunpack.c.l.b16 %v1320
    %v2860 = vunpack.c.h.b16 %v1320
    %v2861 = vunpack.c.l.b16 %v1321
    %v2862 = vunpack.c.h.b16 %v1321
    %v2863 = vunpack.c.l.b16 %v1322
    %v2864 = vunpack.c.h.b16 %v1322
    %v2865 = vunpack.c.l.b16 %v1323
    %v2866 = vunpack.c.h.b16 %v1323
    %v2867 = vunpack.c.l.b16 %v1324
    %v2868 = vunpack.c.h.b16 %v1324
    %v2869 = vunpack.c.l.b16 %v1325
    %v2870 = vunpack.c.h.b16 %v1325
    %v2871 = vunpack.c.l.b16 %v1326
    %v2872 = vunpack.c.h.b16 %v1326
    %v2873 = vunpack.c.l.b16 %v1327
    %v2874 = vunpack.c.h.b16 %v1327
    %v2875 = vunpack.c.l.b16 %v1328
    %v2876 = vunpack.c.h.b16 %v1328
    %v2877 = vunpack.c.l.b16 %v1329
    %v2878 = vunpack.c.h.b16 %v1329
    %v2879 = vunpack.c.l.b16 %v1330
    %v2880 = vunpack.c.h.b16 %v1330
    %v2881 = vunpack.c.l.b16 %v1331
    %v2882 = vunpack.c.h.b16 %v1331
    %v2883 = vunpack.c.l.b16 %v1332
    %v2884 = vunpack.c.h.b16 %v1332
    %v2885 = vunpack.c.l.b16 %v1333
    %v2886 = vunpack.c.h.b16 %v1333
    %v2887 = vunpack.c.l.b16 %v1334
    %v2888 = vunpack.c.h.b16 %v1334
    %v2889 = vunpack.c.l.b16 %v1335
    %v2890 = vunpack.c.h.b16 %v1335
    %v2891 = vunpack.c.l.b16 %v1336
    %v2892 = vunpack.c.h.b16 %v1336
    %v2893 = vunpack.c.l.b16 %v1337
    %v2894 = vunpack.c.h.b16 %v1337
    %v2895 = vunpack.c.l.b16 %v1338
    %v2896 = vunpack.c.h.b16 %v1338
    %v2897 = vunpack.c.l.b16 %v1339
    %v2898 = vunpack.c.h.b16 %v1339
    %v2899 = vunpack.c.l.b16 %v1340
    %v2900 = vunpack.c.h.b16 %v1340
    %v2901 = vunpack.c.l.b16 %v1341
    %v2902 = vunpack.c.h.b16 %v1341
    %v2903 = vunpack.c.l.b16 %v1342
    %v2904 = vunpack.c.h.b16 %v1342
    %v2905 = vunpack.c.l.b16 %v1343
    %v2906 = vunpack.c.h.b16 %v1343
    %v2907 = vunpack.c.l.b16 %v1344
    %v2908 = vunpack.c.h.b16 %v1344
    %v2909 = vunpack.c.l.b16 %v1345
    %v2910 = vunpack.c.h.b16 %v1345
    %v2911 = vunpack.c.l.b16 %v1346
    %v2912 = vunpack.c.h.b16 %v1346
    %v2913 = vunpack.c.l.b16 %v1347
    %v2914 = vunpack.c.h.b16 %v1347
    %v2915 = vunpack.c.l.b16 %v1348
    %v2916 = vunpack.c.h.b16 %v1348
    %v2917 = vunpack.c.l.b16 %v1349
    %v2918 = vunpack.c.h.b16 %v1349
    %v2919 = vunpack.c.l.b16 %v1350
    %v2920 = vunpack.c.h.b16 %v1350
    %v2921 = vunpack.c.l.b16 %v1351
    %v2922 = vunpack.c.h.b16 %v1351
    %v2923 = vunpack.c.l.b16 %v1352
    %v2924 = vunpack.c.h.b16 %v1352
    %v2925 = vunpack.c.l.b16 %v1353
    %v2926 = vunpack.c.h.b16 %v1353
    %v2927 = vunpack.c.l.b16 %v1354
    %v2928 = vunpack.c.h.b16 %v1354
    %v2929 = vunpack.c.l.b16 %v1355
    %v2930 = vunpack.c.h.b16 %v1355
    %v2931 = vunpack.c.l.b16 %v1356
    %v2932 = vunpack.c.h.b16 %v1356
    %v2933 = vunpack.c.l.b16 %v1357
    %v2934 = vunpack.c.h.b16 %v1357
    %v2935 = vunpack.c.l.b16 %v1358
    %v2936 = vunpack.c.h.b16 %v1358
    %v2937 = vpack.c.b16 %v1921, %v1913
    %v2938 = vpack.c.b16 %v1922, %v1914
    %v2939 = vpack.c.b16 %v1923, %v1915
    %v2940 = vpack.c.b16 %v1924, %v1916
    %v2941 = vpack.c.b16 %v1925, %v1917
    %v2942 = vpack.c.b16 %v1926, %v1918
    %v2943 = vpack.c.b16 %v1927, %v1919
    %v2944 = vpack.c.b16 %v1928, %v1920
    %v2945 = vpack.c.b16 %v1937, %v1929
    %v2946 = vpack.c.b16 %v1938, %v1930
    %v2947 = vpack.c.b16 %v1939, %v1931
    %v2948 = vpack.c.b16 %v1940, %v1932
    %v2949 = vpack.c.b16 %v1941, %v1933
    %v2950 = vpack.c.b16 %v1942, %v1934
    %v2951 = vpack.c.b16 %v1943, %v1935
    %v2952 = vpack.c.b16 %v1944, %v1936
    %v2953 = vpack.c.b16 %v1953, %v1945
    %v2954 = vpack.c.b16 %v1954, %v1946
    %v2955 = vpack.c.b16 %v1955, %v1947
    %v2956 = vpack.c.b16 %v1956, %v1948
    %v2957 = vpack.c.b16 %v1957, %v1949
    %v2958 = vpack.c.b16 %v1958, %v1950
    %v2959 = vpack.c.b16 %v1959, %v1951
    %v2960 = vpack.c.b16 %v1960, %v1952
    %v2961 = vpack.c.b16 %v1969, %v1961
    %v2962 = vpack.c.b16 %v1970, %v1962
    %v2963 = vpack.c.b16 %v1971, %v1963
    %v2964 = vpack.c.b16 %v1972, %v1964
    %v2965 = vpack.c.b16 %v1973, %v1965
    %v2966 = vpack.c.b16 %v1974, %v1966
    %v2967 = vpack.c.b16 %v1975, %v1967
    %v2968 = vpack.c.b16 %v1976, %v1968
    %v2969 = vpack.c.b16 %v1985, %v1977
    %v2970 = vpack.c.b16 %v1986, %v1978
    %v2971 = vpack.c.b16 %v1987, %v1979
    %v2972 = vpack.c.b16 %v1988, %v1980
    %v2973 = vpack.c.b16 %v1989, %v1981
    %v2974 = vpack.c.b16 %v1990, %v1982
    %v2975 = vpack.c.b16 %v1991, %v1983
    %v2976 = vpack.c.b16 %v1992, %v1984
    %v2977 = vpack.c.b16 %v2001, %v1993
    %v2978 = vpack.c.b16 %v2002, %v1994
    %v2979 = vpack.c.b16 %v2003, %v1995
    %v2980 = vpack.c.b16 %v2004, %v1996
    %v2981 = vpack.c.b16 %v2005, %v1997
    %v2982 = vpack.c.b16 %v2006, %v1998
    %v2983 = vpack.c.b16 %v2007, %v1999
    %v2984 = vpack.c.b16 %v2008, %v2000
    %v2985 = vpack.c.b16 %v2017, %v2009
    %v2986 = vpack.c.b16 %v2018, %v2010
    %v2987 = vpack.c.b16 %v2019, %v2011
    %v2988 = vpack.c.b16 %v2020, %v2012
    %v2989 = vpack.c.b16 %v2021, %v2013
    %v2990 = vpack.c.b16 %v2022, %v2014
    %v2991 = vpack.c.b16 %v2023, %v2015
    %v2992 = vpack.c.b16 %v2024, %v2016
    %v2993 = vpack.c.b16 %v2033, %v2025
    %v2994 = vpack.c.b16 %v2034, %v2026
    %v2995 = vpack.c.b16 %v2035, %v2027
    %v2996 = vpack.c.b16 %v2036, %v2028
    %v2997 = vpack.c.b16 %v2037, %v2029
    %v2998 = vpack.c.b16 %v2038, %v2030
    %v2999 = vpack.c.b16 %v2039, %v2031
    %v3000 = vpack.c.b16 %v2040, %v2032
    %v3001 = vpack.c.b16 %v2049, %v2041
    %v3002 = vpack.c.b16 %v2050, %v2042
    %v3003 = vpack.c.b16 %v2051, %v2043
    %v3004 = vpack.c.b16 %v2052, %v2044
    %v3005 = vpack.c.b16 %v2053, %v2045
    %v3006 = vpack.c.b16 %v2054, %v2046
    %v3007 = vpack.c.b16 %v2055, %v2047
    %v3008 = vpack.c.b16 %v2056, %v2048
    %v3009 = vpack.c.b16 %v2065, %v2057
    %v3010 = vpack.c.b16 %v2066, %v2058
    %v3011 = vpack.c.b16 %v2067, %v2059
    %v3012 = vpack.c.b16 %v2068, %v2060
    %v3013 = vpack.c.b16 %v2069, %v2061
    %v3014 = vpack.c.b16 %v2070, %v2062
    %v3015 = vpack.c.b16 %v2071, %v2063
    %v3016 = vpack.c.b16 %v2072, %v2064
    %v3017 = vpack.c.b16 %v2081, %v2073
    %v3018 = vpack.c.b16 %v2082, %v2074
    %v3019 = vpack.c.b16 %v2083, %v2075
    %v3020 = vpack.c.b16 %v2084, %v2076
    %v3021 = vpack.c.b16 %v2085, %v2077
    %v3022 = vpack.c.b16 %v2086, %v2078
    %v3023 = vpack.c.b16 %v2087, %v2079
    %v3024 = vpack.c.b16 %v2088, %v2080
    %v3025 = vpack.c.b16 %v2097, %v2089
    %v3026 = vpack.c.b16 %v2098, %v2090
    %v3027 = vpack.c.b16 %v2099, %v2091
    %v3028 = vpack.c.b16 %v2100, %v2092
    %v3029 = vpack.c.b16 %v2101, %v2093
    %v3030 = vpack.c.b16 %v2102, %v2094
    %v3031 = vpack.c.b16 %v2103, %v2095
    %v3032 = vpack.c.b16 %v2104, %v2096
    %v3033 = vpack.c.b16 %v2113, %v2105
    %v3034 = vpack.c.b16 %v2114, %v2106
    %v3035 = vpack.c.b16 %v2115, %v2107
    %v3036 = vpack.c.b16 %v2116, %v2108
    %v3037 = vpack.c.b16 %v2117, %v2109
    %v3038 = vpack.c.b16 %v2118, %v2110
    %v3039 = vpack.c.b16 %v2119, %v2111
    %v3040 = vpack.c.b16 %v2120, %v2112
    %v3041 = vpack.c.b16 %v2129, %v2121
    %v3042 = vpack.c.b16 %v2130, %v2122
    %v3043 = vpack.c.b16 %v2131, %v2123
    %v3044 = vpack.c.b16 %v2132, %v2124
    %v3045 = vpack.c.b16 %v2133, %v2125
    %v3046 = vpack.c.b16 %v2134, %v2126
    %v3047 = vpack.c.b16 %v2135, %v2127
    %v3048 = vpack.c.b16 %v2136, %v2128
    %v3049 = vpack.c.b16 %v2145, %v2137
    %v3050 = vpack.c.b16 %v2146, %v2138
    %v3051 = vpack.c.b16 %v2147, %v2139
    %v3052 = vpack.c.b16 %v2148, %v2140
    %v3053 = vpack.c.b16 %v2149, %v2141
    %v3054 = vpack.c.b16 %v2150, %v2142
    %v3055 = vpack.c.b16 %v2151, %v2143
    %v3056 = vpack.c.b16 %v2152, %v2144
    %v3057 = vpack.c.b16 %v2161, %v2153
    %v3058 = vpack.c.b16 %v2162, %v2154
    %v3059 = vpack.c.b16 %v2163, %v2155
    %v3060 = vpack.c.b16 %v2164, %v2156
    %v3061 = vpack.c.b16 %v2165, %v2157
    %v3062 = vpack.c.b16 %v2166, %v2158
    %v3063 = vpack.c.b16 %v2167, %v2159
    %v3064 = vpack.c.b16 %v2168, %v2160
    %v3065 = vpack.c.b16 %v2177, %v2169
    %v3066 = vpack.c.b16 %v2178, %v2170
    %v3067 = vpack.c.b16 %v2179, %v2171
    %v3068 = vpack.c.b16 %v2180, %v2172
    %v3069 = vpack.c.b16 %v2181, %v2173
    %v3070 = vpack.c.b16 %v2182, %v2174
    %v3071 = vpack.c.b16 %v2183, %v2175
    %v3072 = vpack.c.b16 %v2184, %v2176
    %v3073 = vpack.c.b16 %v2193, %v2185
    %v3074 = vpack.c.b16 %v2194, %v2186
    %v3075 = vpack.c.b16 %v2195, %v2187
    %v3076 = vpack.c.b16 %v2196, %v2188
    %v3077 = vpack.c.b16 %v2197, %v2189
    %v3078 = vpack.c.b16 %v2198, %v2190
    %v3079 = vpack.c.b16 %v2199, %v2191
    %v3080 = vpack.c.b16 %v2200, %v2192
    %v3081 = vpack.c.b16 %v2209, %v2201
    %v3082 = vpack.c.b16 %v2210, %v2202
    %v3083 = vpack.c.b16 %v2211, %v2203
    %v3084 = vpack.c.b16 %v2212, %v2204
    %v3085 = vpack.c.b16 %v2213, %v2205
    %v3086 = vpack.c.b16 %v2214, %v2206
    %v3087 = vpack.c.b16 %v2215, %v2207
    %v3088 = vpack.c.b16 %v2216, %v2208
    %v3089 = vpack.c.b16 %v2225, %v2217
    %v3090 = vpack.c.b16 %v2226, %v2218
    %v3091 = vpack.c.b16 %v2227, %v2219
    %v3092 = vpack.c.b16 %v2228, %v2220
    %v3093 = vpack.c.b16 %v2229, %v2221
    %v3094 = vpack.c.b16 %v2230, %v2222
    %v3095 = vpack.c.b16 %v2231, %v2223
    %v3096 = vpack.c.b16 %v2232, %v2224
    %v3097 = vpack.c.b16 %v2241, %v2233
    %v3098 = vpack.c.b16 %v2242, %v2234
    %v3099 = vpack.c.b16 %v2243, %v2235
    %v3100 = vpack.c.b16 %v2244, %v2236
    %v3101 = vpack.c.b16 %v2245, %v2237
    %v3102 = vpack.c.b16 %v2246, %v2238
    %v3103 = vpack.c.b16 %v2247, %v2239
    %v3104 = vpack.c.b16 %v2248, %v2240
    %v3105 = vpack.c.b16 %v2257, %v2249
    %v3106 = vpack.c.b16 %v2258, %v2250
    %v3107 = vpack.c.b16 %v2259, %v2251
    %v3108 = vpack.c.b16 %v2260, %v2252
    %v3109 = vpack.c.b16 %v2261, %v2253
    %v3110 = vpack.c.b16 %v2262, %v2254
    %v3111 = vpack.c.b16 %v2263, %v2255
    %v3112 = vpack.c.b16 %v2264, %v2256
    %v3113 = vpack.c.b16 %v2273, %v2265
    %v3114 = vpack.c.b16 %v2274, %v2266
    %v3115 = vpack.c.b16 %v2275, %v2267
    %v3116 = vpack.c.b16 %v2276, %v2268
    %v3117 = vpack.c.b16 %v2277, %v2269
    %v3118 = vpack.c.b16 %v2278, %v2270
    %v3119 = vpack.c.b16 %v2279, %v2271
    %v3120 = vpack.c.b16 %v2280, %v2272
    %v3121 = vpack.c.b16 %v2289, %v2281
    %v3122 = vpack.c.b16 %v2290, %v2282
    %v3123 = vpack.c.b16 %v2291, %v2283
    %v3124 = vpack.c.b16 %v2292, %v2284
    %v3125 = vpack.c.b16 %v2293, %v2285
    %v3126 = vpack.c.b16 %v2294, %v2286
    %v3127 = vpack.c.b16 %v2295, %v2287
    %v3128 = vpack.c.b16 %v2296, %v2288
    %v3129 = vpack.c.b16 %v2305, %v2297
    %v3130 = vpack.c.b16 %v2306, %v2298
    %v3131 = vpack.c.b16 %v2307, %v2299
    %v3132 = vpack.c.b16 %v2308, %v2300
    %v3133 = vpack.c.b16 %v2309, %v2301
    %v3134 = vpack.c.b16 %v2310, %v2302
    %v3135 = vpack.c.b16 %v2311, %v2303
    %v3136 = vpack.c.b16 %v2312, %v2304
    %v3137 = vpack.c.b16 %v2321, %v2313
    %v3138 = vpack.c.b16 %v2322, %v2314
    %v3139 = vpack.c.b16 %v2323, %v2315
    %v3140 = vpack.c.b16 %v2324, %v2316
    %v3141 = vpack.c.b16 %v2325, %v2317
    %v3142 = vpack.c.b16 %v2326, %v2318
    %v3143 = vpack.c.b16 %v2327, %v2319
    %v3144 = vpack.c.b16 %v2328, %v2320
    %v3145 = vpack.c.b16 %v2337, %v2329
    %v3146 = vpack.c.b16 %v2338, %v2330
    %v3147 = vpack.c.b16 %v2339, %v2331
    %v3148 = vpack.c.b16 %v2340, %v2332
    %v3149 = vpack.c.b16 %v2341, %v2333
    %v3150 = vpack.c.b16 %v2342, %v2334
    %v3151 = vpack.c.b16 %v2343, %v2335
    %v3152 = vpack.c.b16 %v2344, %v2336
    %v3153 = vpack.c.b16 %v2353, %v2345
    %v3154 = vpack.c.b16 %v2354, %v2346
    %v3155 = vpack.c.b16 %v2355, %v2347
    %v3156 = vpack.c.b16 %v2356, %v2348
    %v3157 = vpack.c.b16 %v2357, %v2349
    %v3158 = vpack.c.b16 %v2358, %v2350
    %v3159 = vpack.c.b16 %v2359, %v2351
    %v3160 = vpack.c.b16 %v2360, %v2352
    %v3161 = vpack.c.b16 %v2369, %v2361
    %v3162 = vpack.c.b16 %v2370, %v2362
    %v3163 = vpack.c.b16 %v2371, %v2363
    %v3164 = vpack.c.b16 %v2372, %v2364
    %v3165 = vpack.c.b16 %v2373, %v2365
    %v3166 = vpack.c.b16 %v2374, %v2366
    %v3167 = vpack.c.b16 %v2375, %v2367
    %v3168 = vpack.c.b16 %v2376, %v2368
    %v3169 = vpack.c.b16 %v2385, %v2377
    %v3170 = vpack.c.b16 %v2386, %v2378
    %v3171 = vpack.c.b16 %v2387, %v2379
    %v3172 = vpack.c.b16 %v2388, %v2380
    %v3173 = vpack.c.b16 %v2389, %v2381
    %v3174 = vpack.c.b16 %v2390, %v2382
    %v3175 = vpack.c.b16 %v2391, %v2383
    %v3176 = vpack.c.b16 %v2392, %v2384
    %v3177 = vpack.c.b16 %v2401, %v2393
    %v3178 = vpack.c.b16 %v2402, %v2394
    %v3179 = vpack.c.b16 %v2403, %v2395
    %v3180 = vpack.c.b16 %v2404, %v2396
    %v3181 = vpack.c.b16 %v2405, %v2397
    %v3182 = vpack.c.b16 %v2406, %v2398
    %v3183 = vpack.c.b16 %v2407, %v2399
    %v3184 = vpack.c.b16 %v2408, %v2400
    %v3185 = vpack.c.b16 %v2417, %v2409
    %v3186 = vpack.c.b16 %v2418, %v2410
    %v3187 = vpack.c.b16 %v2419, %v2411
    %v3188 = vpack.c.b16 %v2420, %v2412
    %v3189 = vpack.c.b16 %v2421, %v2413
    %v3190 = vpack.c.b16 %v2422, %v2414
    %v3191 = vpack.c.b16 %v2423, %v2415
    %v3192 = vpack.c.b16 %v2424, %v2416
    %v3193 = vpack.c.b16 %v2433, %v2425
    %v3194 = vpack.c.b16 %v2434, %v2426
    %v3195 = vpack.c.b16 %v2435, %v2427
    %v3196 = vpack.c.b16 %v2436, %v2428
    %v3197 = vpack.c.b16 %v2437, %v2429
    %v3198 = vpack.c.b16 %v2438, %v2430
    %v3199 = vpack.c.b16 %v2439, %v2431
    %v3200 = vpack.c.b16 %v2440, %v2432
    %v3201 = vpack.c.b16 %v2449, %v2441
    %v3202 = vpack.c.b16 %v2450, %v2442
    %v3203 = vpack.c.b16 %v2451, %v2443
    %v3204 = vpack.c.b16 %v2452, %v2444
    %v3205 = vpack.c.b16 %v2453, %v2445
    %v3206 = vpack.c.b16 %v2454, %v2446
    %v3207 = vpack.c.b16 %v2455, %v2447
    %v3208 = vpack.c.b16 %v2456, %v2448
    %v3209 = vpack.c.b16 %v2465, %v2457
    %v3210 = vpack.c.b16 %v2466, %v2458
    %v3211 = vpack.c.b16 %v2467, %v2459
    %v3212 = vpack.c.b16 %v2468, %v2460
    %v3213 = vpack.c.b16 %v2469, %v2461
    %v3214 = vpack.c.b16 %v2470, %v2462
    %v3215 = vpack.c.b16 %v2471, %v2463
    %v3216 = vpack.c.b16 %v2472, %v2464
    %v3217 = vpack.c.b16 %v2481, %v2473
    %v3218 = vpack.c.b16 %v2482, %v2474
    %v3219 = vpack.c.b16 %v2483, %v2475
    %v3220 = vpack.c.b16 %v2484, %v2476
    %v3221 = vpack.c.b16 %v2485, %v2477
    %v3222 = vpack.c.b16 %v2486, %v2478
    %v3223 = vpack.c.b16 %v2487, %v2479
    %v3224 = vpack.c.b16 %v2488, %v2480
    %v3225 = vpack.c.b16 %v2497, %v2489
    %v3226 = vpack.c.b16 %v2498, %v2490
    %v3227 = vpack.c.b16 %v2499, %v2491
    %v3228 = vpack.c.b16 %v2500, %v2492
    %v3229 = vpack.c.b16 %v2501, %v2493
    %v3230 = vpack.c.b16 %v2502, %v2494
    %v3231 = vpack.c.b16 %v2503, %v2495
    %v3232 = vpack.c.b16 %v2504, %v2496
    %v3233 = vpack.c.b16 %v2513, %v2505
    %v3234 = vpack.c.b16 %v2514, %v2506
    %v3235 = vpack.c.b16 %v2515, %v2507
    %v3236 = vpack.c.b16 %v2516, %v2508
    %v3237 = vpack.c.b16 %v2517, %v2509
    %v3238 = vpack.c.b16 %v2518, %v2510
    %v3239 = vpack.c.b16 %v2519, %v2511
    %v3240 = vpack.c.b16 %v2520, %v2512
    %v3241 = vpack.c.b16 %v2529, %v2521
    %v3242 = vpack.c.b16 %v2530, %v2522
    %v3243 = vpack.c.b16 %v2531, %v2523
    %v3244 = vpack.c.b16 %v2532, %v2524
    %v3245 = vpack.c.b16 %v2533, %v2525
    %v3246 = vpack.c.b16 %v2534, %v2526
    %v3247 = vpack.c.b16 %v2535, %v2527
    %v3248 = vpack.c.b16 %v2536, %v2528
    %v3249 = vpack.c.b16 %v2545, %v2537
    %v3250 = vpack.c.b16 %v2546, %v2538
    %v3251 = vpack.c.b16 %v2547, %v2539
    %v3252 = vpack.c.b16 %v2548, %v2540
    %v3253 = vpack.c.b16 %v2549, %v2541
    %v3254 = vpack.c.b16 %v2550, %v2542
    %v3255 = vpack.c.b16 %v2551, %v2543
    %v3256 = vpack.c.b16 %v2552, %v2544
    %v3257 = vpack.c.b16 %v2561, %v2553
    %v3258 = vpack.c.b16 %v2562, %v2554
    %v3259 = vpack.c.b16 %v2563, %v2555
    %v3260 = vpack.c.b16 %v2564, %v2556
    %v3261 = vpack.c.b16 %v2565, %v2557
    %v3262 = vpack.c.b16 %v2566, %v2558
    %v3263 = vpack.c.b16 %v2567, %v2559
    %v3264 = vpack.c.b16 %v2568, %v2560
    %v3265 = vpack.c.b16 %v2577, %v2569
    %v3266 = vpack.c.b16 %v2578, %v2570
    %v3267 = vpack.c.b16 %v2579, %v2571
    %v3268 = vpack.c.b16 %v2580, %v2572
    %v3269 = vpack.c.b16 %v2581, %v2573
    %v3270 = vpack.c.b16 %v2582, %v2574
    %v3271 = vpack.c.b16 %v2583, %v2575
    %v3272 = vpack.c.b16 %v2584, %v2576
    %v3273 = vpack.c.b16 %v2593, %v2585
    %v3274 = vpack.c.b16 %v2594, %v2586
    %v3275 = vpack.c.b16 %v2595, %v2587
    %v3276 = vpack.c.b16 %v2596, %v2588
    %v3277 = vpack.c.b16 %v2597, %v2589
    %v3278 = vpack.c.b16 %v2598, %v2590
    %v3279 = vpack.c.b16 %v2599, %v2591
    %v3280 = vpack.c.b16 %v2600, %v2592
    %v3281 = vpack.c.b16 %v2609, %v2601
    %v3282 = vpack.c.b16 %v2610, %v2602
    %v3283 = vpack.c.b16 %v2611, %v2603
    %v3284 = vpack.c.b16 %v2612, %v2604
    %v3285 = vpack.c.b16 %v2613, %v2605
    %v3286 = vpack.c.b16 %v2614, %v2606
    %v3287 = vpack.c.b16 %v2615, %v2607
    %v3288 = vpack.c.b16 %v2616, %v2608
    %v3289 = vpack.c.b16 %v2625, %v2617
    %v3290 = vpack.c.b16 %v2626, %v2618
    %v3291 = vpack.c.b16 %v2627, %v2619
    %v3292 = vpack.c.b16 %v2628, %v2620
    %v3293 = vpack.c.b16 %v2629, %v2621
    %v3294 = vpack.c.b16 %v2630, %v2622
    %v3295 = vpack.c.b16 %v2631, %v2623
    %v3296 = vpack.c.b16 %v2632, %v2624
    %v3297 = vpack.c.b16 %v2641, %v2633
    %v3298 = vpack.c.b16 %v2642, %v2634
    %v3299 = vpack.c.b16 %v2643, %v2635
    %v3300 = vpack.c.b16 %v2644, %v2636
    %v3301 = vpack.c.b16 %v2645, %v2637
    %v3302 = vpack.c.b16 %v2646, %v2638
    %v3303 = vpack.c.b16 %v2647, %v2639
    %v3304 = vpack.c.b16 %v2648, %v2640
    %v3305 = vpack.c.b16 %v2657, %v2649
    %v3306 = vpack.c.b16 %v2658, %v2650
    %v3307 = vpack.c.b16 %v2659, %v2651
    %v3308 = vpack.c.b16 %v2660, %v2652
    %v3309 = vpack.c.b16 %v2661, %v2653
    %v3310 = vpack.c.b16 %v2662, %v2654
    %v3311 = vpack.c.b16 %v2663, %v2655
    %v3312 = vpack.c.b16 %v2664, %v2656
    %v3313 = vpack.c.b16 %v2673, %v2665
    %v3314 = vpack.c.b16 %v2674, %v2666
    %v3315 = vpack.c.b16 %v2675, %v2667
    %v3316 = vpack.c.b16 %v2676, %v2668
    %v3317 = vpack.c.b16 %v2677, %v2669
    %v3318 = vpack.c.b16 %v2678, %v2670
    %v3319 = vpack.c.b16 %v2679, %v2671
    %v3320 = vpack.c.b16 %v2680, %v2672
    %v3321 = vpack.c.b16 %v2689, %v2681
    %v3322 = vpack.c.b16 %v2690, %v2682
    %v3323 = vpack.c.b16 %v2691, %v2683
    %v3324 = vpack.c.b16 %v2692, %v2684
    %v3325 = vpack.c.b16 %v2693, %v2685
    %v3326 = vpack.c.b16 %v2694, %v2686
    %v3327 = vpack.c.b16 %v2695, %v2687
    %v3328 = vpack.c.b16 %v2696, %v2688
    %v3329 = vpack.c.b16 %v2705, %v2697
    %v3330 = vpack.c.b16 %v2706, %v2698
    %v3331 = vpack.c.b16 %v2707, %v2699
    %v3332 = vpack.c.b16 %v2708, %v2700
    %v3333 = vpack.c.b16 %v2709, %v2701
    %v3334 = vpack.c.b16 %v2710, %v2702
    %v3335 = vpack.c.b16 %v2711, %v2703
    %v3336 = vpack.c.b16 %v2712, %v2704
    %v3337 = vpack.c.b16 %v2721, %v2713
    %v3338 = vpack.c.b16 %v2722, %v2714
    %v3339 = vpack.c.b16 %v2723, %v2715
    %v3340 = vpack.c.b16 %v2724, %v2716
    %v3341 = vpack.c.b16 %v2725, %v2717
    %v3342 = vpack.c.b16 %v2726, %v2718
    %v3343 = vpack.c.b16 %v2727, %v2719
    %v3344 = vpack.c.b16 %v2728, %v2720
    %v3345 = vpack.c.b16 %v2737, %v2729
    %v3346 = vpack.c.b16 %v2738, %v2730
    %v3347 = vpack.c.b16 %v2739, %v2731
    %v3348 = vpack.c.b16 %v2740, %v2732
    %v3349 = vpack.c.b16 %v2741, %v2733
    %v3350 = vpack.c.b16 %v2742, %v2734
    %v3351 = vpack.c.b16 %v2743, %v2735
    %v3352 = vpack.c.b16 %v2744, %v2736
    %v3353 = vpack.c.b16 %v2753, %v2745
    %v3354 = vpack.c.b16 %v2754, %v2746
    %v3355 = vpack.c.b16 %v2755, %v2747
    %v3356 = vpack.c.b16 %v2756, %v2748
    %v3357 = vpack.c.b16 %v2757, %v2749
    %v3358 = vpack.c.b16 %v2758, %v2750
    %v3359 = vpack.c.b16 %v2759, %v2751
    %v3360 = vpack.c.b16 %v2760, %v2752
    %v3361 = vpack.c.b16 %v2769, %v2761
    %v3362 = vpack.c.b16 %v2770, %v2762
    %v3363 = vpack.c.b16 %v2771, %v2763
    %v3364 = vpack.c.b16 %v2772, %v2764
    %v3365 = vpack.c.b16 %v2773, %v2765
    %v3366 = vpack.c.b16 %v2774, %v2766
    %v3367 = vpack.c.b16 %v2775, %v2767
    %v3368 = vpack.c.b16 %v2776, %v2768
    %v3369 = vpack.c.b16 %v2785, %v2777
    %v3370 = vpack.c.b16 %v2786, %v2778
    %v3371 = vpack.c.b16 %v2787, %v2779
    %v3372 = vpack.c.b16 %v2788, %v2780
    %v3373 = vpack.c.b16 %v2789, %v2781
    %v3374 = vpack.c.b16 %v2790, %v2782
    %v3375 = vpack.c.b16 %v2791, %v2783
    %v3376 = vpack.c.b16 %v2792, %v2784
    %v3377 = vpack.c.b16 %v2801, %v2793
    %v3378 = vpack.c.b16 %v2802, %v2794
    %v3379 = vpack.c.b16 %v2803, %v2795
    %v3380 = vpack.c.b16 %v2804, %v2796
    %v3381 = vpack.c.b16 %v2805, %v2797
    %v3382 = vpack.c.b16 %v2806, %v2798
    %v3383 = vpack.c.b16 %v2807, %v2799
    %v3384 = vpack.c.b16 %v2808, %v2800
    %v3385 = vpack.c.b16 %v2817, %v2809
    %v3386 = vpack.c.b16 %v2818, %v2810
    %v3387 = vpack.c.b16 %v2819, %v2811
    %v3388 = vpack.c.b16 %v2820, %v2812
    %v3389 = vpack.c.b16 %v2821, %v2813
    %v3390 = vpack.c.b16 %v2822, %v2814
    %v3391 = vpack.c.b16 %v2823, %v2815
    %v3392 = vpack.c.b16 %v2824, %v2816
    %v3393 = vpack.c.b16 %v2833, %v2825
    %v3394 = vpack.c.b16 %v2834, %v2826
    %v3395 = vpack.c.b16 %v2835, %v2827
    %v3396 = vpack.c.b16 %v2836, %v2828
    %v3397 = vpack.c.b16 %v2837, %v2829
    %v3398 = vpack.c.b16 %v2838, %v2830
    %v3399 = vpack.c.b16 %v2839, %v2831
    %v3400 = vpack.c.b16 %v2840, %v2832
    %v3401 = vpack.c.b16 %v2849, %v2841
    %v3402 = vpack.c.b16 %v2850, %v2842
    %v3403 = vpack.c.b16 %v2851, %v2843
    %v3404 = vpack.c.b16 %v2852, %v2844
    %v3405 = vpack.c.b16 %v2853, %v2845
    %v3406 = vpack.c.b16 %v2854, %v2846
    %v3407 = vpack.c.b16 %v2855, %v2847
    %v3408 = vpack.c.b16 %v2856, %v2848
    %v3409 = vpack.c.b16 %v2865, %v2857
    %v3410 = vpack.c.b16 %v2866, %v2858
    %v3411 = vpack.c.b16 %v2867, %v2859
    %v3412 = vpack.c.b16 %v2868, %v2860
    %v3413 = vpack.c.b16 %v2869, %v2861
    %v3414 = vpack.c.b16 %v2870, %v2862
    %v3415 = vpack.c.b16 %v2871, %v2863
    %v3416 = vpack.c.b16 %v2872, %v2864
    %v3417 = vpack.c.b16 %v2881, %v2873
    %v3418 = vpack.c.b16 %v2882, %v2874
    %v3419 = vpack.c.b16 %v2883, %v2875
    %v3420 = vpack.c.b16 %v2884, %v2876
    %v3421 = vpack.c.b16 %v2885, %v2877
    %v3422 = vpack.c.b16 %v2886, %v2878
    %v3423 = vpack.c.b16 %v2887, %v2879
    %v3424 = vpack.c.b16 %v2888, %v2880
    %v3425 = vpack.c.b16 %v2897, %v2889
    %v3426 = vpack.c.b16 %v2898, %v2890
    %v3427 = vpack.c.b16 %v2899, %v2891
    %v3428 = vpack.c.b16 %v2900, %v2892
    %v3429 = vpack.c.b16 %v2901, %v2893
    %v3430 = vpack.c.b16 %v2902, %v2894
    %v3431 = vpack.c.b16 %v2903, %v2895
    %v3432 = vpack.c.b16 %v2904, %v2896
    %v3433 = vpack.c.b16 %v2913, %v2905
    %v3434 = vpack.c.b16 %v2914, %v2906
    %v3435 = vpack.c.b16 %v2915, %v2907
    %v3436 = vpack.c.b16 %v2916, %v2908
    %v3437 = vpack.c.b16 %v2917, %v2909
    %v3438 = vpack.c.b16 %v2918, %v2910
    %v3439 = vpack.c.b16 %v2919, %v2911
    %v3440 = vpack.c.b16 %v2920, %v2912
    %v3441 = vpack.c.b16 %v2929, %v2921
    %v3442 = vpack.c.b16 %v2930, %v2922
    %v3443 = vpack.c.b16 %v2931, %v2923
    %v3444 = vpack.c.b16 %v2932, %v2924
    %v3445 = vpack.c.b16 %v2933, %v2925
    %v3446 = vpack.c.b16 %v2934, %v2926
    %v3447 = vpack.c.b16 %v2935, %v2927
    %v3448 = vpack.c.b16 %v2936, %v2928
    %3961 = vmatprep.subr.bf16.mxu0 %v2938
    %3962 = vmatpush1.bf16.msra.mxu0 %v2937
    %3963 = vmatprep.subr.bf16.mxu0 %v2946
    %3964 = vmatpush1.bf16.msra.mxu0 %v2945
    %3965 = vmatprep.subr.bf16.mxu0 %v2954
    %3966 = vmatpush1.bf16.msra.mxu0 %v2953
    %3967 = vmatprep.subr.bf16.mxu0 %v2962
    %3968 = vmatpush1.bf16.msra.mxu0 %v2961
    %3969 = vmatprep.subr.bf16.mxu0 %v2970
    %3970 = vmatpush1.bf16.msra.mxu0 %v2969
    %3971 = vmatprep.subr.bf16.mxu0 %v2978
    %3972 = vmatpush1.bf16.msra.mxu0 %v2977
    %3973 = vmatprep.subr.bf16.mxu0 %v2986
    %3974 = vmatpush1.bf16.msra.mxu0 %v2985
    %3975 = vmatprep.subr.bf16.mxu0 %v2994
    %3976 = vmatpush1.bf16.msra.mxu0 %v2993
    %3977 = vmatprep.subr.bf16.mxu0 %v3002
    %3978 = vmatpush1.bf16.msra.mxu0 %v3001
    %3979 = vmatprep.subr.bf16.mxu0 %v3010
    %3980 = vmatpush1.bf16.msra.mxu0 %v3009
    %3981 = vmatprep.subr.bf16.mxu0 %v3018
    %3982 = vmatpush1.bf16.msra.mxu0 %v3017
    %3983 = vmatprep.subr.bf16.mxu0 %v3026
    %3984 = vmatpush1.bf16.msra.mxu0 %v3025
    %3985 = vmatprep.subr.bf16.mxu0 %v3034
    %3986 = vmatpush1.bf16.msra.mxu0 %v3033
    %3987 = vmatprep.subr.bf16.mxu0 %v3042
    %3988 = vmatpush1.bf16.msra.mxu0 %v3041
    %3989 = vmatprep.subr.bf16.mxu0 %v3050
    %3990 = vmatpush1.bf16.msra.mxu0 %v3049
    %3991 = vmatprep.subr.bf16.mxu0 %v3058
    %3992 = vmatpush1.bf16.msra.mxu0 %v3057
    %3993 = vmatprep.mubr.bf16.mxu0 %v840
    %3994 = vmatmul.mubr.bf16.gmra.mrb[0].mxu0 %v839
    %v3995 = vpop.f32.mrb[0].mxu0
    %v3996 = vadd.f32 %v1364, %v3995
    %v3997 = vpop.f32.mrb[0].mxu0
    %v3998 = vadd.f32 %v1368, %v3997
    %v3999 = vpop.f32.mrb[0].mxu0
    %v4000 = vpop.f32.mrb[0].mxu0
    %4001 = vdwg.mxu0
    %4002 = vmatprep.subr.bf16.mxu0 %v3066
    %4003 = vmatpush1.bf16.msra.mxu0 %v3065
    %4004 = vmatprep.subr.bf16.mxu0 %v3074
    %4005 = vmatpush1.bf16.msra.mxu0 %v3073
    %4006 = vmatprep.subr.bf16.mxu0 %v3082
    %4007 = vmatpush1.bf16.msra.mxu0 %v3081
    %4008 = vmatprep.subr.bf16.mxu0 %v3090
    %4009 = vmatpush1.bf16.msra.mxu0 %v3089
    %4010 = vmatprep.subr.bf16.mxu0 %v3098
    %4011 = vmatpush1.bf16.msra.mxu0 %v3097
    %4012 = vmatprep.subr.bf16.mxu0 %v3106
    %4013 = vmatpush1.bf16.msra.mxu0 %v3105
    %4014 = vmatprep.subr.bf16.mxu0 %v3114
    %4015 = vmatpush1.bf16.msra.mxu0 %v3113
    %4016 = vmatprep.subr.bf16.mxu0 %v3122
    %4017 = vmatpush1.bf16.msra.mxu0 %v3121
    %4018 = vmatprep.subr.bf16.mxu0 %v3130
    %4019 = vmatpush1.bf16.msra.mxu0 %v3129
    %4020 = vmatprep.subr.bf16.mxu0 %v3138
    %4021 = vmatpush1.bf16.msra.mxu0 %v3137
    %4022 = vmatprep.subr.bf16.mxu0 %v3146
    %4023 = vmatpush1.bf16.msra.mxu0 %v3145
    %4024 = vmatprep.subr.bf16.mxu0 %v3154
    %4025 = vmatpush1.bf16.msra.mxu0 %v3153
    %4026 = vmatprep.subr.bf16.mxu0 %v3162
    %4027 = vmatpush1.bf16.msra.mxu0 %v3161
    %4028 = vmatprep.subr.bf16.mxu0 %v3170
    %4029 = vmatpush1.bf16.msra.mxu0 %v3169
    %4030 = vmatprep.subr.bf16.mxu0 %v3178
    %4031 = vmatpush1.bf16.msra.mxu0 %v3177
    %4032 = vmatprep.subr.bf16.mxu0 %v3186
    %4033 = vmatpush1.bf16.msra.mxu0 %v3185
    %4034 = vmatprep.mubr.bf16.mxu0 %v842
    %4035 = vmatmul.mubr.bf16.gmra.mrb[0].mxu0 %v841
    %v4036 = vpop.f32.mrb[0].mxu0
    %v4037 = vadd.f32 %v3996, %v4036
    %v4038 = vpop.f32.mrb[0].mxu0
    %v4039 = vadd.f32 %v3998, %v4038
    %v4040 = vpop.f32.mrb[0].mxu0
    %v4041 = vpop.f32.mrb[0].mxu0
    %4042 = vdwg.mxu0
    %4043 = vmatprep.subr.bf16.mxu0 %v3194
    %4044 = vmatpush1.bf16.msra.mxu0 %v3193
    %4045 = vmatprep.subr.bf16.mxu0 %v3202
    %4046 = vmatpush1.bf16.msra.mxu0 %v3201
    %4047 = vmatprep.subr.bf16.mxu0 %v3210
    %4048 = vmatpush1.bf16.msra.mxu0 %v3209
    %4049 = vmatprep.subr.bf16.mxu0 %v3218
    %4050 = vmatpush1.bf16.msra.mxu0 %v3217
    %4051 = vmatprep.subr.bf16.mxu0 %v3226
    %4052 = vmatpush1.bf16.msra.mxu0 %v3225
    %4053 = vmatprep.subr.bf16.mxu0 %v3234
    %4054 = vmatpush1.bf16.msra.mxu0 %v3233
    %4055 = vmatprep.subr.bf16.mxu0 %v3242
    %4056 = vmatpush1.bf16.msra.mxu0 %v3241
    %4057 = vmatprep.subr.bf16.mxu0 %v3250
    %4058 = vmatpush1.bf16.msra.mxu0 %v3249
    %4059 = vmatprep.subr.bf16.mxu0 %v3258
    %4060 = vmatpush1.bf16.msra.mxu0 %v3257
    %4061 = vmatprep.subr.bf16.mxu0 %v3266
    %4062 = vmatpush1.bf16.msra.mxu0 %v3265
    %4063 = vmatprep.subr.bf16.mxu0 %v3274
    %4064 = vmatpush1.bf16.msra.mxu0 %v3273
    %4065 = vmatprep.subr.bf16.mxu0 %v3282
    %4066 = vmatpush1.bf16.msra.mxu0 %v3281
    %4067 = vmatprep.subr.bf16.mxu0 %v3290
    %4068 = vmatpush1.bf16.msra.mxu0 %v3289
    %4069 = vmatprep.subr.bf16.mxu0 %v3298
    %4070 = vmatpush1.bf16.msra.mxu0 %v3297
    %4071 = vmatprep.subr.bf16.mxu0 %v3306
    %4072 = vmatpush1.bf16.msra.mxu0 %v3305
    %4073 = vmatprep.subr.bf16.mxu0 %v3314
    %4074 = vmatpush1.bf16.msra.mxu0 %v3313
    %4075 = vmatprep.mubr.bf16.mxu0 %v844
    %4076 = vmatmul.mubr.bf16.gmra.mrb[0].mxu0 %v843
    %v4077 = vpop.f32.mrb[0].mxu0
    %v4078 = vadd.f32 %v4037, %v4077
    %v4079 = vpop.f32.mrb[0].mxu0
    %v4080 = vadd.f32 %v4039, %v4079
    %v4081 = vpop.f32.mrb[0].mxu0
    %v4082 = vpop.f32.mrb[0].mxu0
    %4083 = vdwg.mxu0
    %4084 = vmatprep.subr.bf16.mxu0 %v3322
    %4085 = vmatpush1.bf16.msra.mxu0 %v3321
    %4086 = vmatprep.subr.bf16.mxu0 %v3330
    %4087 = vmatpush1.bf16.msra.mxu0 %v3329
    %4088 = vmatprep.subr.bf16.mxu0 %v3338
    %4089 = vmatpush1.bf16.msra.mxu0 %v3337
    %4090 = vmatprep.subr.bf16.mxu0 %v3346
    %4091 = vmatpush1.bf16.msra.mxu0 %v3345
    %4092 = vmatprep.subr.bf16.mxu0 %v3354
    %4093 = vmatpush1.bf16.msra.mxu0 %v3353
    %4094 = vmatprep.subr.bf16.mxu0 %v3362
    %4095 = vmatpush1.bf16.msra.mxu0 %v3361
    %4096 = vmatprep.subr.bf16.mxu0 %v3370
    %4097 = vmatpush1.bf16.msra.mxu0 %v3369
    %4098 = vmatprep.subr.bf16.mxu0 %v3378
    %4099 = vmatpush1.bf16.msra.mxu0 %v3377
    %4100 = vmatprep.subr.bf16.mxu0 %v3386
    %4101 = vmatpush1.bf16.msra.mxu0 %v3385
    %4102 = vmatprep.subr.bf16.mxu0 %v3394
    %4103 = vmatpush1.bf16.msra.mxu0 %v3393
    %4104 = vmatprep.subr.bf16.mxu0 %v3402
    %4105 = vmatpush1.bf16.msra.mxu0 %v3401
    %4106 = vmatprep.subr.bf16.mxu0 %v3410
    %4107 = vmatpush1.bf16.msra.mxu0 %v3409
    %4108 = vmatprep.subr.bf16.mxu0 %v3418
    %4109 = vmatpush1.bf16.msra.mxu0 %v3417
    %4110 = vmatprep.subr.bf16.mxu0 %v3426
    %4111 = vmatpush1.bf16.msra.mxu0 %v3425
    %4112 = vmatprep.subr.bf16.mxu0 %v3434
    %4113 = vmatpush1.bf16.msra.mxu0 %v3433
    %4114 = vmatprep.subr.bf16.mxu0 %v3442
    %4115 = vmatpush1.bf16.msra.mxu0 %v3441
    %4116 = vmatprep.mubr.bf16.mxu0 %v846
    %4117 = vmatmul.mubr.bf16.gmra.mrb[0].mxu0 %v845
    %v4118 = vpop.f32.mrb[0].mxu0
    %v4119 = vadd.f32 %v4078, %v4118
    %v4120 = vpop.f32.mrb[0].mxu0
    %v4121 = vadd.f32 %v4080, %v4120
    %v4122 = vpop.f32.mrb[0].mxu0
    %v4123 = vpop.f32.mrb[0].mxu0
    %4124 = vdwg.mxu0
    %4125 = vmatprep.subr.bf16.mxu0 %v2940
    %4126 = vmatpush1.bf16.msra.mxu0 %v2939
    %4127 = vmatprep.subr.bf16.mxu0 %v2948
    %4128 = vmatpush1.bf16.msra.mxu0 %v2947
    %4129 = vmatprep.subr.bf16.mxu0 %v2956
    %4130 = vmatpush1.bf16.msra.mxu0 %v2955
    %4131 = vmatprep.subr.bf16.mxu0 %v2964
    %4132 = vmatpush1.bf16.msra.mxu0 %v2963
    %4133 = vmatprep.subr.bf16.mxu0 %v2972
    %4134 = vmatpush1.bf16.msra.mxu0 %v2971
    %4135 = vmatprep.subr.bf16.mxu0 %v2980
    %4136 = vmatpush1.bf16.msra.mxu0 %v2979
    %4137 = vmatprep.subr.bf16.mxu0 %v2988
    %4138 = vmatpush1.bf16.msra.mxu0 %v2987
    %4139 = vmatprep.subr.bf16.mxu0 %v2996
    %4140 = vmatpush1.bf16.msra.mxu0 %v2995
    %4141 = vmatprep.subr.bf16.mxu0 %v3004
    %4142 = vmatpush1.bf16.msra.mxu0 %v3003
    %4143 = vmatprep.subr.bf16.mxu0 %v3012
    %4144 = vmatpush1.bf16.msra.mxu0 %v3011
    %4145 = vmatprep.subr.bf16.mxu0 %v3020
    %4146 = vmatpush1.bf16.msra.mxu0 %v3019
    %4147 = vmatprep.subr.bf16.mxu0 %v3028
    %4148 = vmatpush1.bf16.msra.mxu0 %v3027
    %4149 = vmatprep.subr.bf16.mxu0 %v3036
    %4150 = vmatpush1.bf16.msra.mxu0 %v3035
    %4151 = vmatprep.subr.bf16.mxu0 %v3044
    %4152 = vmatpush1.bf16.msra.mxu0 %v3043
    %4153 = vmatprep.subr.bf16.mxu0 %v3052
    %4154 = vmatpush1.bf16.msra.mxu0 %v3051
    %4155 = vmatprep.subr.bf16.mxu0 %v3060
    %4156 = vmatpush1.bf16.msra.mxu0 %v3059
    %4157 = vmatprep.mubr.bf16.mxu0 %v840
    %4158 = vmatmul.mubr.bf16.gmra.mrb[0].mxu0 %v839
    %v4159 = vpop.f32.mrb[0].mxu0
    %v4160 = vadd.f32 %v1372, %v4159
    %v4161 = vpop.f32.mrb[0].mxu0
    %v4162 = vadd.f32 %v1376, %v4161
    %v4163 = vpop.f32.mrb[0].mxu0
    %v4164 = vpop.f32.mrb[0].mxu0
    %4165 = vdwg.mxu0
    %4166 = vmatprep.subr.bf16.mxu0 %v3068
    %4167 = vmatpush1.bf16.msra.mxu0 %v3067
    %4168 = vmatprep.subr.bf16.mxu0 %v3076
    %4169 = vmatpush1.bf16.msra.mxu0 %v3075
    %4170 = vmatprep.subr.bf16.mxu0 %v3084
    %4171 = vmatpush1.bf16.msra.mxu0 %v3083
    %4172 = vmatprep.subr.bf16.mxu0 %v3092
    %4173 = vmatpush1.bf16.msra.mxu0 %v3091
    %4174 = vmatprep.subr.bf16.mxu0 %v3100
    %4175 = vmatpush1.bf16.msra.mxu0 %v3099
    %4176 = vmatprep.subr.bf16.mxu0 %v3108
    %4177 = vmatpush1.bf16.msra.mxu0 %v3107
    %4178 = vmatprep.subr.bf16.mxu0 %v3116
    %4179 = vmatpush1.bf16.msra.mxu0 %v3115
    %4180 = vmatprep.subr.bf16.mxu0 %v3124
    %4181 = vmatpush1.bf16.msra.mxu0 %v3123
    %4182 = vmatprep.subr.bf16.mxu0 %v3132
    %4183 = vmatpush1.bf16.msra.mxu0 %v3131
    %4184 = vmatprep.subr.bf16.mxu0 %v3140
    %4185 = vmatpush1.bf16.msra.mxu0 %v3139
    %4186 = vmatprep.subr.bf16.mxu0 %v3148
    %4187 = vmatpush1.bf16.msra.mxu0 %v3147
    %4188 = vmatprep.subr.bf16.mxu0 %v3156
    %4189 = vmatpush1.bf16.msra.mxu0 %v3155
    %4190 = vmatprep.subr.bf16.mxu0 %v3164
    %4191 = vmatpush1.bf16.msra.mxu0 %v3163
    %4192 = vmatprep.subr.bf16.mxu0 %v3172
    %4193 = vmatpush1.bf16.msra.mxu0 %v3171
    %4194 = vmatprep.subr.bf16.mxu0 %v3180
    %4195 = vmatpush1.bf16.msra.mxu0 %v3179
    %4196 = vmatprep.subr.bf16.mxu0 %v3188
    %4197 = vmatpush1.bf16.msra.mxu0 %v3187
    %4198 = vmatprep.mubr.bf16.mxu0 %v842
    %4199 = vmatmul.mubr.bf16.gmra.mrb[0].mxu0 %v841
    %v4200 = vpop.f32.mrb[0].mxu0
    %v4201 = vadd.f32 %v4160, %v4200
    %v4202 = vpop.f32.mrb[0].mxu0
    %v4203 = vadd.f32 %v4162, %v4202
    %v4204 = vpop.f32.mrb[0].mxu0
    %v4205 = vpop.f32.mrb[0].mxu0
    %4206 = vdwg.mxu0
    %4207 = vmatprep.subr.bf16.mxu0 %v3196
    %4208 = vmatpush1.bf16.msra.mxu0 %v3195
    %4209 = vmatprep.subr.bf16.mxu0 %v3204
    %4210 = vmatpush1.bf16.msra.mxu0 %v3203
    %4211 = vmatprep.subr.bf16.mxu0 %v3212
    %4212 = vmatpush1.bf16.msra.mxu0 %v3211
    %4213 = vmatprep.subr.bf16.mxu0 %v3220
    %4214 = vmatpush1.bf16.msra.mxu0 %v3219
    %4215 = vmatprep.subr.bf16.mxu0 %v3228
    %4216 = vmatpush1.bf16.msra.mxu0 %v3227
    %4217 = vmatprep.subr.bf16.mxu0 %v3236
    %4218 = vmatpush1.bf16.msra.mxu0 %v3235
    %4219 = vmatprep.subr.bf16.mxu0 %v3244
    %4220 = vmatpush1.bf16.msra.mxu0 %v3243
    %4221 = vmatprep.subr.bf16.mxu0 %v3252
    %4222 = vmatpush1.bf16.msra.mxu0 %v3251
    %4223 = vmatprep.subr.bf16.mxu0 %v3260
    %4224 = vmatpush1.bf16.msra.mxu0 %v3259
    %4225 = vmatprep.subr.bf16.mxu0 %v3268
    %4226 = vmatpush1.bf16.msra.mxu0 %v3267
    %4227 = vmatprep.subr.bf16.mxu0 %v3276
    %4228 = vmatpush1.bf16.msra.mxu0 %v3275
    %4229 = vmatprep.subr.bf16.mxu0 %v3284
    %4230 = vmatpush1.bf16.msra.mxu0 %v3283
    %4231 = vmatprep.subr.bf16.mxu0 %v3292
    %4232 = vmatpush1.bf16.msra.mxu0 %v3291
    %4233 = vmatprep.subr.bf16.mxu0 %v3300
    %4234 = vmatpush1.bf16.msra.mxu0 %v3299
    %4235 = vmatprep.subr.bf16.mxu0 %v3308
    %4236 = vmatpush1.bf16.msra.mxu0 %v3307
    %4237 = vmatprep.subr.bf16.mxu0 %v3316
    %4238 = vmatpush1.bf16.msra.mxu0 %v3315
    %4239 = vmatprep.mubr.bf16.mxu0 %v844
    %4240 = vmatmul.mubr.bf16.gmra.mrb[0].mxu0 %v843
    %v4241 = vpop.f32.mrb[0].mxu0
    %v4242 = vadd.f32 %v4201, %v4241
    %v4243 = vpop.f32.mrb[0].mxu0
    %v4244 = vadd.f32 %v4203, %v4243
    %v4245 = vpop.f32.mrb[0].mxu0
    %v4246 = vpop.f32.mrb[0].mxu0
    %4247 = vdwg.mxu0
    %4248 = vmatprep.subr.bf16.mxu0 %v3324
    %4249 = vmatpush1.bf16.msra.mxu0 %v3323
    %4250 = vmatprep.subr.bf16.mxu0 %v3332
    %4251 = vmatpush1.bf16.msra.mxu0 %v3331
    %4252 = vmatprep.subr.bf16.mxu0 %v3340
    %4253 = vmatpush1.bf16.msra.mxu0 %v3339
    %4254 = vmatprep.subr.bf16.mxu0 %v3348
    %4255 = vmatpush1.bf16.msra.mxu0 %v3347
    %4256 = vmatprep.subr.bf16.mxu0 %v3356
    %4257 = vmatpush1.bf16.msra.mxu0 %v3355
    %4258 = vmatprep.subr.bf16.mxu0 %v3364
    %4259 = vmatpush1.bf16.msra.mxu0 %v3363
    %4260 = vmatprep.subr.bf16.mxu0 %v3372
    %4261 = vmatpush1.bf16.msra.mxu0 %v3371
    %4262 = vmatprep.subr.bf16.mxu0 %v3380
    %4263 = vmatpush1.bf16.msra.mxu0 %v3379
    %4264 = vmatprep.subr.bf16.mxu0 %v3388
    %4265 = vmatpush1.bf16.msra.mxu0 %v3387
    %4266 = vmatprep.subr.bf16.mxu0 %v3396
    %4267 = vmatpush1.bf16.msra.mxu0 %v3395
    %4268 = vmatprep.subr.bf16.mxu0 %v3404
    %4269 = vmatpush1.bf16.msra.mxu0 %v3403
    %4270 = vmatprep.subr.bf16.mxu0 %v3412
    %4271 = vmatpush1.bf16.msra.mxu0 %v3411
    %4272 = vmatprep.subr.bf16.mxu0 %v3420
    %4273 = vmatpush1.bf16.msra.mxu0 %v3419
    %4274 = vmatprep.subr.bf16.mxu0 %v3428
    %4275 = vmatpush1.bf16.msra.mxu0 %v3427
    %4276 = vmatprep.subr.bf16.mxu0 %v3436
    %4277 = vmatpush1.bf16.msra.mxu0 %v3435
    %4278 = vmatprep.subr.bf16.mxu0 %v3444
    %4279 = vmatpush1.bf16.msra.mxu0 %v3443
    %4280 = vmatprep.mubr.bf16.mxu0 %v846
    %4281 = vmatmul.mubr.bf16.gmra.mrb[0].mxu0 %v845
    %v4282 = vpop.f32.mrb[0].mxu0
    %v4283 = vadd.f32 %v4242, %v4282
    %v4284 = vpop.f32.mrb[0].mxu0
    %v4285 = vadd.f32 %v4244, %v4284
    %v4286 = vpop.f32.mrb[0].mxu0
    %v4287 = vpop.f32.mrb[0].mxu0
    %4288 = vdwg.mxu0
    %4289 = vmatprep.subr.bf16.mxu0 %v2942
    %4290 = vmatpush1.bf16.msra.mxu0 %v2941
    %4291 = vmatprep.subr.bf16.mxu0 %v2950
    %4292 = vmatpush1.bf16.msra.mxu0 %v2949
    %4293 = vmatprep.subr.bf16.mxu0 %v2958
    %4294 = vmatpush1.bf16.msra.mxu0 %v2957
    %4295 = vmatprep.subr.bf16.mxu0 %v2966
    %4296 = vmatpush1.bf16.msra.mxu0 %v2965
    %4297 = vmatprep.subr.bf16.mxu0 %v2974
    %4298 = vmatpush1.bf16.msra.mxu0 %v2973
    %4299 = vmatprep.subr.bf16.mxu0 %v2982
    %4300 = vmatpush1.bf16.msra.mxu0 %v2981
    %4301 = vmatprep.subr.bf16.mxu0 %v2990
    %4302 = vmatpush1.bf16.msra.mxu0 %v2989
    %4303 = vmatprep.subr.bf16.mxu0 %v2998
    %4304 = vmatpush1.bf16.msra.mxu0 %v2997
    %4305 = vmatprep.subr.bf16.mxu0 %v3006
    %4306 = vmatpush1.bf16.msra.mxu0 %v3005
    %4307 = vmatprep.subr.bf16.mxu0 %v3014
    %4308 = vmatpush1.bf16.msra.mxu0 %v3013
    %4309 = vmatprep.subr.bf16.mxu0 %v3022
    %4310 = vmatpush1.bf16.msra.mxu0 %v3021
    %4311 = vmatprep.subr.bf16.mxu0 %v3030
    %4312 = vmatpush1.bf16.msra.mxu0 %v3029
    %4313 = vmatprep.subr.bf16.mxu0 %v3038
    %4314 = vmatpush1.bf16.msra.mxu0 %v3037
    %4315 = vmatprep.subr.bf16.mxu0 %v3046
    %4316 = vmatpush1.bf16.msra.mxu0 %v3045
    %4317 = vmatprep.subr.bf16.mxu0 %v3054
    %4318 = vmatpush1.bf16.msra.mxu0 %v3053
    %4319 = vmatprep.subr.bf16.mxu0 %v3062
    %4320 = vmatpush1.bf16.msra.mxu0 %v3061
    %4321 = vmatprep.mubr.bf16.mxu0 %v840
    %4322 = vmatmul.mubr.bf16.gmra.mrb[0].mxu0 %v839
    %v4323 = vpop.f32.mrb[0].mxu0
    %v4324 = vadd.f32 %v1380, %v4323
    %v4325 = vpop.f32.mrb[0].mxu0
    %v4326 = vadd.f32 %v1384, %v4325
    %v4327 = vpop.f32.mrb[0].mxu0
    %v4328 = vpop.f32.mrb[0].mxu0
    %4329 = vdwg.mxu0
    %4330 = vmatprep.subr.bf16.mxu0 %v3070
    %4331 = vmatpush1.bf16.msra.mxu0 %v3069
    %4332 = vmatprep.subr.bf16.mxu0 %v3078
    %4333 = vmatpush1.bf16.msra.mxu0 %v3077
    %4334 = vmatprep.subr.bf16.mxu0 %v3086
    %4335 = vmatpush1.bf16.msra.mxu0 %v3085
    %4336 = vmatprep.subr.bf16.mxu0 %v3094
    %4337 = vmatpush1.bf16.msra.mxu0 %v3093
    %4338 = vmatprep.subr.bf16.mxu0 %v3102
    %4339 = vmatpush1.bf16.msra.mxu0 %v3101
    %4340 = vmatprep.subr.bf16.mxu0 %v3110
    %4341 = vmatpush1.bf16.msra.mxu0 %v3109
    %4342 = vmatprep.subr.bf16.mxu0 %v3118
    %4343 = vmatpush1.bf16.msra.mxu0 %v3117
    %4344 = vmatprep.subr.bf16.mxu0 %v3126
    %4345 = vmatpush1.bf16.msra.mxu0 %v3125
    %4346 = vmatprep.subr.bf16.mxu0 %v3134
    %4347 = vmatpush1.bf16.msra.mxu0 %v3133
    %4348 = vmatprep.subr.bf16.mxu0 %v3142
    %4349 = vmatpush1.bf16.msra.mxu0 %v3141
    %4350 = vmatprep.subr.bf16.mxu0 %v3150
    %4351 = vmatpush1.bf16.msra.mxu0 %v3149
    %4352 = vmatprep.subr.bf16.mxu0 %v3158
    %4353 = vmatpush1.bf16.msra.mxu0 %v3157
    %4354 = vmatprep.subr.bf16.mxu0 %v3166
    %4355 = vmatpush1.bf16.msra.mxu0 %v3165
    %4356 = vmatprep.subr.bf16.mxu0 %v3174
    %4357 = vmatpush1.bf16.msra.mxu0 %v3173
    %4358 = vmatprep.subr.bf16.mxu0 %v3182
    %4359 = vmatpush1.bf16.msra.mxu0 %v3181
    %4360 = vmatprep.subr.bf16.mxu0 %v3190
    %4361 = vmatpush1.bf16.msra.mxu0 %v3189
    %4362 = vmatprep.mubr.bf16.mxu0 %v842
    %4363 = vmatmul.mubr.bf16.gmra.mrb[0].mxu0 %v841
    %v4364 = vpop.f32.mrb[0].mxu0
    %v4365 = vadd.f32 %v4324, %v4364
    %v4366 = vpop.f32.mrb[0].mxu0
    %v4367 = vadd.f32 %v4326, %v4366
    %v4368 = vpop.f32.mrb[0].mxu0
    %v4369 = vpop.f32.mrb[0].mxu0
    %4370 = vdwg.mxu0
    %4371 = vmatprep.subr.bf16.mxu0 %v3198
    %4372 = vmatpush1.bf16.msra.mxu0 %v3197
    %4373 = vmatprep.subr.bf16.mxu0 %v3206
    %4374 = vmatpush1.bf16.msra.mxu0 %v3205
    %4375 = vmatprep.subr.bf16.mxu0 %v3214
    %4376 = vmatpush1.bf16.msra.mxu0 %v3213
    %4377 = vmatprep.subr.bf16.mxu0 %v3222
    %4378 = vmatpush1.bf16.msra.mxu0 %v3221
    %4379 = vmatprep.subr.bf16.mxu0 %v3230
    %4380 = vmatpush1.bf16.msra.mxu0 %v3229
    %4381 = vmatprep.subr.bf16.mxu0 %v3238
    %4382 = vmatpush1.bf16.msra.mxu0 %v3237
    %4383 = vmatprep.subr.bf16.mxu0 %v3246
    %4384 = vmatpush1.bf16.msra.mxu0 %v3245
    %4385 = vmatprep.subr.bf16.mxu0 %v3254
    %4386 = vmatpush1.bf16.msra.mxu0 %v3253
    %4387 = vmatprep.subr.bf16.mxu0 %v3262
    %4388 = vmatpush1.bf16.msra.mxu0 %v3261
    %4389 = vmatprep.subr.bf16.mxu0 %v3270
    %4390 = vmatpush1.bf16.msra.mxu0 %v3269
    %4391 = vmatprep.subr.bf16.mxu0 %v3278
    %4392 = vmatpush1.bf16.msra.mxu0 %v3277
    %4393 = vmatprep.subr.bf16.mxu0 %v3286
    %4394 = vmatpush1.bf16.msra.mxu0 %v3285
    %4395 = vmatprep.subr.bf16.mxu0 %v3294
    %4396 = vmatpush1.bf16.msra.mxu0 %v3293
    %4397 = vmatprep.subr.bf16.mxu0 %v3302
    %4398 = vmatpush1.bf16.msra.mxu0 %v3301
    %4399 = vmatprep.subr.bf16.mxu0 %v3310
    %4400 = vmatpush1.bf16.msra.mxu0 %v3309
    %4401 = vmatprep.subr.bf16.mxu0 %v3318
    %4402 = vmatpush1.bf16.msra.mxu0 %v3317
    %4403 = vmatprep.mubr.bf16.mxu0 %v844
    %4404 = vmatmul.mubr.bf16.gmra.mrb[0].mxu0 %v843
    %v4405 = vpop.f32.mrb[0].mxu0
    %v4406 = vadd.f32 %v4365, %v4405
    %v4407 = vpop.f32.mrb[0].mxu0
    %v4408 = vadd.f32 %v4367, %v4407
    %v4409 = vpop.f32.mrb[0].mxu0
    %v4410 = vpop.f32.mrb[0].mxu0
    %4411 = vdwg.mxu0
    %4412 = vmatprep.subr.bf16.mxu0 %v3326
    %4413 = vmatpush1.bf16.msra.mxu0 %v3325
    %4414 = vmatprep.subr.bf16.mxu0 %v3334
    %4415 = vmatpush1.bf16.msra.mxu0 %v3333
    %4416 = vmatprep.subr.bf16.mxu0 %v3342
    %4417 = vmatpush1.bf16.msra.mxu0 %v3341
    %4418 = vmatprep.subr.bf16.mxu0 %v3350
    %4419 = vmatpush1.bf16.msra.mxu0 %v3349
    %4420 = vmatprep.subr.bf16.mxu0 %v3358
    %4421 = vmatpush1.bf16.msra.mxu0 %v3357
    %4422 = vmatprep.subr.bf16.mxu0 %v3366
    %4423 = vmatpush1.bf16.msra.mxu0 %v3365
    %4424 = vmatprep.subr.bf16.mxu0 %v3374
    %4425 = vmatpush1.bf16.msra.mxu0 %v3373
    %4426 = vmatprep.subr.bf16.mxu0 %v3382
    %4427 = vmatpush1.bf16.msra.mxu0 %v3381
    %4428 = vmatprep.subr.bf16.mxu0 %v3390
    %4429 = vmatpush1.bf16.msra.mxu0 %v3389
    %4430 = vmatprep.subr.bf16.mxu0 %v3398
    %4431 = vmatpush1.bf16.msra.mxu0 %v3397
    %4432 = vmatprep.subr.bf16.mxu0 %v3406
    %4433 = vmatpush1.bf16.msra.mxu0 %v3405
    %4434 = vmatprep.subr.bf16.mxu0 %v3414
    %4435 = vmatpush1.bf16.msra.mxu0 %v3413
    %4436 = vmatprep.subr.bf16.mxu0 %v3422
    %4437 = vmatpush1.bf16.msra.mxu0 %v3421
    %4438 = vmatprep.subr.bf16.mxu0 %v3430
    %4439 = vmatpush1.bf16.msra.mxu0 %v3429
    %4440 = vmatprep.subr.bf16.mxu0 %v3438
    %4441 = vmatpush1.bf16.msra.mxu0 %v3437
    %4442 = vmatprep.subr.bf16.mxu0 %v3446
    %4443 = vmatpush1.bf16.msra.mxu0 %v3445
    %4444 = vmatprep.mubr.bf16.mxu0 %v846
    %4445 = vmatmul.mubr.bf16.gmra.mrb[0].mxu0 %v845
    %v4446 = vpop.f32.mrb[0].mxu0
    %v4447 = vadd.f32 %v4406, %v4446
    %v4448 = vpop.f32.mrb[0].mxu0
    %v4449 = vadd.f32 %v4408, %v4448
    %v4450 = vpop.f32.mrb[0].mxu0
    %v4451 = vpop.f32.mrb[0].mxu0
    %4452 = vdwg.mxu0
    %4453 = vmatprep.subr.bf16.mxu0 %v2944
    %4454 = vmatpush1.bf16.msra.mxu0 %v2943
    %4455 = vmatprep.subr.bf16.mxu0 %v2952
    %4456 = vmatpush1.bf16.msra.mxu0 %v2951
    %4457 = vmatprep.subr.bf16.mxu0 %v2960
    %4458 = vmatpush1.bf16.msra.mxu0 %v2959
    %4459 = vmatprep.subr.bf16.mxu0 %v2968
    %4460 = vmatpush1.bf16.msra.mxu0 %v2967
    %4461 = vmatprep.subr.bf16.mxu0 %v2976
    %4462 = vmatpush1.bf16.msra.mxu0 %v2975
    %4463 = vmatprep.subr.bf16.mxu0 %v2984
    %4464 = vmatpush1.bf16.msra.mxu0 %v2983
    %4465 = vmatprep.subr.bf16.mxu0 %v2992
    %4466 = vmatpush1.bf16.msra.mxu0 %v2991
    %4467 = vmatprep.subr.bf16.mxu0 %v3000
    %4468 = vmatpush1.bf16.msra.mxu0 %v2999
    %4469 = vmatprep.subr.bf16.mxu0 %v3008
    %4470 = vmatpush1.bf16.msra.mxu0 %v3007
    %4471 = vmatprep.subr.bf16.mxu0 %v3016
    %4472 = vmatpush1.bf16.msra.mxu0 %v3015
    %4473 = vmatprep.subr.bf16.mxu0 %v3024
    %4474 = vmatpush1.bf16.msra.mxu0 %v3023
    %4475 = vmatprep.subr.bf16.mxu0 %v3032
    %4476 = vmatpush1.bf16.msra.mxu0 %v3031
    %4477 = vmatprep.subr.bf16.mxu0 %v3040
    %4478 = vmatpush1.bf16.msra.mxu0 %v3039
    %4479 = vmatprep.subr.bf16.mxu0 %v3048
    %4480 = vmatpush1.bf16.msra.mxu0 %v3047
    %4481 = vmatprep.subr.bf16.mxu0 %v3056
    %4482 = vmatpush1.bf16.msra.mxu0 %v3055
    %4483 = vmatprep.subr.bf16.mxu0 %v3064
    %4484 = vmatpush1.bf16.msra.mxu0 %v3063
    %4485 = vmatprep.mubr.bf16.mxu0 %v840
    %4486 = vmatmul.mubr.bf16.gmra.mrb[0].mxu0 %v839
    %v4487 = vpop.f32.mrb[0].mxu0
    %v4488 = vadd.f32 %v1388, %v4487
    %v4489 = vpop.f32.mrb[0].mxu0
    %v4490 = vadd.f32 %v1392, %v4489
    %v4491 = vpop.f32.mrb[0].mxu0
    %v4492 = vpop.f32.mrb[0].mxu0
    %4493 = vdwg.mxu0
    %4494 = vmatprep.subr.bf16.mxu0 %v3072
    %4495 = vmatpush1.bf16.msra.mxu0 %v3071
    %4496 = vmatprep.subr.bf16.mxu0 %v3080
    %4497 = vmatpush1.bf16.msra.mxu0 %v3079
    %4498 = vmatprep.subr.bf16.mxu0 %v3088
    %4499 = vmatpush1.bf16.msra.mxu0 %v3087
    %4500 = vmatprep.subr.bf16.mxu0 %v3096
    %4501 = vmatpush1.bf16.msra.mxu0 %v3095
    %4502 = vmatprep.subr.bf16.mxu0 %v3104
    %4503 = vmatpush1.bf16.msra.mxu0 %v3103
    %4504 = vmatprep.subr.bf16.mxu0 %v3112
    %4505 = vmatpush1.bf16.msra.mxu0 %v3111
    %4506 = vmatprep.subr.bf16.mxu0 %v3120
    %4507 = vmatpush1.bf16.msra.mxu0 %v3119
    %4508 = vmatprep.subr.bf16.mxu0 %v3128
    %4509 = vmatpush1.bf16.msra.mxu0 %v3127
    %4510 = vmatprep.subr.bf16.mxu0 %v3136
    %4511 = vmatpush1.bf16.msra.mxu0 %v3135
    %4512 = vmatprep.subr.bf16.mxu0 %v3144
    %4513 = vmatpush1.bf16.msra.mxu0 %v3143
    %4514 = vmatprep.subr.bf16.mxu0 %v3152
    %4515 = vmatpush1.bf16.msra.mxu0 %v3151
    %4516 = vmatprep.subr.bf16.mxu0 %v3160
    %4517 = vmatpush1.bf16.msra.mxu0 %v3159
    %4518 = vmatprep.subr.bf16.mxu0 %v3168
    %4519 = vmatpush1.bf16.msra.mxu0 %v3167
    %4520 = vmatprep.subr.bf16.mxu0 %v3176
    %4521 = vmatpush1.bf16.msra.mxu0 %v3175
    %4522 = vmatprep.subr.bf16.mxu0 %v3184
    %4523 = vmatpush1.bf16.msra.mxu0 %v3183
    %4524 = vmatprep.subr.bf16.mxu0 %v3192
    %4525 = vmatpush1.bf16.msra.mxu0 %v3191
    %4526 = vmatprep.mubr.bf16.mxu0 %v842
    %4527 = vmatmul.mubr.bf16.gmra.mrb[0].mxu0 %v841
    %v4528 = vpop.f32.mrb[0].mxu0
    %v4529 = vadd.f32 %v4488, %v4528
    %v4530 = vpop.f32.mrb[0].mxu0
    %v4531 = vadd.f32 %v4490, %v4530
    %v4532 = vpop.f32.mrb[0].mxu0
    %v4533 = vpop.f32.mrb[0].mxu0
    %4534 = vdwg.mxu0
    %4535 = vmatprep.subr.bf16.mxu0 %v3200
    %4536 = vmatpush1.bf16.msra.mxu0 %v3199
    %4537 = vmatprep.subr.bf16.mxu0 %v3208
    %4538 = vmatpush1.bf16.msra.mxu0 %v3207
    %4539 = vmatprep.subr.bf16.mxu0 %v3216
    %4540 = vmatpush1.bf16.msra.mxu0 %v3215
    %4541 = vmatprep.subr.bf16.mxu0 %v3224
    %4542 = vmatpush1.bf16.msra.mxu0 %v3223
    %4543 = vmatprep.subr.bf16.mxu0 %v3232
    %4544 = vmatpush1.bf16.msra.mxu0 %v3231
    %4545 = vmatprep.subr.bf16.mxu0 %v3240
    %4546 = vmatpush1.bf16.msra.mxu0 %v3239
    %4547 = vmatprep.subr.bf16.mxu0 %v3248
    %4548 = vmatpush1.bf16.msra.mxu0 %v3247
    %4549 = vmatprep.subr.bf16.mxu0 %v3256
    %4550 = vmatpush1.bf16.msra.mxu0 %v3255
    %4551 = vmatprep.subr.bf16.mxu0 %v3264
    %4552 = vmatpush1.bf16.msra.mxu0 %v3263
    %4553 = vmatprep.subr.bf16.mxu0 %v3272
    %4554 = vmatpush1.bf16.msra.mxu0 %v3271
    %4555 = vmatprep.subr.bf16.mxu0 %v3280
    %4556 = vmatpush1.bf16.msra.mxu0 %v3279
    %4557 = vmatprep.subr.bf16.mxu0 %v3288
    %4558 = vmatpush1.bf16.msra.mxu0 %v3287
    %4559 = vmatprep.subr.bf16.mxu0 %v3296
    %4560 = vmatpush1.bf16.msra.mxu0 %v3295
    %4561 = vmatprep.subr.bf16.mxu0 %v3304
    %4562 = vmatpush1.bf16.msra.mxu0 %v3303
    %4563 = vmatprep.subr.bf16.mxu0 %v3312
    %4564 = vmatpush1.bf16.msra.mxu0 %v3311
    %4565 = vmatprep.subr.bf16.mxu0 %v3320
    %4566 = vmatpush1.bf16.msra.mxu0 %v3319
    %4567 = vmatprep.mubr.bf16.mxu0 %v844
    %4568 = vmatmul.mubr.bf16.gmra.mrb[0].mxu0 %v843
    %v4569 = vpop.f32.mrb[0].mxu0
    %v4570 = vadd.f32 %v4529, %v4569
    %v4571 = vpop.f32.mrb[0].mxu0
    %v4572 = vadd.f32 %v4531, %v4571
    %v4573 = vpop.f32.mrb[0].mxu0
    %v4574 = vpop.f32.mrb[0].mxu0
    %4575 = vdwg.mxu0
    %4576 = vmatprep.subr.bf16.mxu0 %v3328
    %4577 = vmatpush1.bf16.msra.mxu0 %v3327
    %4578 = vmatprep.subr.bf16.mxu0 %v3336
    %4579 = vmatpush1.bf16.msra.mxu0 %v3335
    %4580 = vmatprep.subr.bf16.mxu0 %v3344
    %4581 = vmatpush1.bf16.msra.mxu0 %v3343
    %4582 = vmatprep.subr.bf16.mxu0 %v3352
    %4583 = vmatpush1.bf16.msra.mxu0 %v3351
    %4584 = vmatprep.subr.bf16.mxu0 %v3360
    %4585 = vmatpush1.bf16.msra.mxu0 %v3359
    %4586 = vmatprep.subr.bf16.mxu0 %v3368
    %4587 = vmatpush1.bf16.msra.mxu0 %v3367
    %4588 = vmatprep.subr.bf16.mxu0 %v3376
    %4589 = vmatpush1.bf16.msra.mxu0 %v3375
    %4590 = vmatprep.subr.bf16.mxu0 %v3384
    %4591 = vmatpush1.bf16.msra.mxu0 %v3383
    %4592 = vmatprep.subr.bf16.mxu0 %v3392
    %4593 = vmatpush1.bf16.msra.mxu0 %v3391
    %4594 = vmatprep.subr.bf16.mxu0 %v3400
    %4595 = vmatpush1.bf16.msra.mxu0 %v3399
    %4596 = vmatprep.subr.bf16.mxu0 %v3408
    %4597 = vmatpush1.bf16.msra.mxu0 %v3407
    %4598 = vmatprep.subr.bf16.mxu0 %v3416
    %4599 = vmatpush1.bf16.msra.mxu0 %v3415
    %4600 = vmatprep.subr.bf16.mxu0 %v3424
    %4601 = vmatpush1.bf16.msra.mxu0 %v3423
    %4602 = vmatprep.subr.bf16.mxu0 %v3432
    %4603 = vmatpush1.bf16.msra.mxu0 %v3431
    %4604 = vmatprep.subr.bf16.mxu0 %v3440
    %4605 = vmatpush1.bf16.msra.mxu0 %v3439
    %4606 = vmatprep.subr.bf16.mxu0 %v3448
    %4607 = vmatpush1.bf16.msra.mxu0 %v3447
    %4608 = vmatprep.mubr.bf16.mxu0 %v846
    %4609 = vmatmul.mubr.bf16.gmra.mrb[0].mxu0 %v845
    %v4610 = vpop.f32.mrb[0].mxu0
    %v4611 = vadd.f32 %v4570, %v4610
    %v4612 = vpop.f32.mrb[0].mxu0
    %v4613 = vadd.f32 %v4572, %v4612
    %v4614 = vpop.f32.mrb[0].mxu0
    %v4615 = vpop.f32.mrb[0].mxu0
    %4616 = vdwg.mxu0
    %v4617 = vmax.f32 %v4119, 0.0
    %v4618 = vmax.f32 %v4121, 0.0
    %v4619 = vmax.f32 %v4283, 0.0
    %v4620 = vmax.f32 %v4285, 0.0
    %v4621 = vmax.f32 %v4447, 0.0
    %v4622 = vmax.f32 %v4449, 0.0
    %v4623 = vmax.f32 %v4611, 0.0
    %v4624 = vmax.f32 %v4613, 0.0
    %v4625 = vpack.c.bf16 %v4617, %v4617
    %v4626 = vpack.c.bf16 %v4618, %v4618
    %v4627 = vpack.c.bf16 %v4619, %v4619
    %v4628 = vpack.c.bf16 %v4620, %v4620
    %v4629 = vpack.c.bf16 %v4621, %v4621
    %v4630 = vpack.c.bf16 %v4622, %v4622
    %v4631 = vpack.c.bf16 %v4623, %v4623
    %v4632 = vpack.c.bf16 %v4624, %v4624
    %v4633 = vld [vmem:[#allocation21] sm:$0xff]
    %v4634 = vld [vmem:[#allocation21 + $0x8] sm:$0xff]
    %v4635 = vld [vmem:[#allocation21 + $0x10] sm:$0xff]
    %v4636 = vld [vmem:[#allocation21 + $0x18] sm:$0xff]
    %v4637 = vld [vmem:[#allocation21 + $0x20] sm:$0xff]
    %v4638 = vld [vmem:[#allocation21 + $0x28] sm:$0xff]
    %v4639 = vld [vmem:[#allocation21 + $0x30] sm:$0xff]
    %v4640 = vld [vmem:[#allocation21 + $0x38] sm:$0xff]
    %v4641 = vld [vmem:[#allocation21 + $0x40] sm:$0xff]
    %v4642 = vld [vmem:[#allocation21 + $0x48] sm:$0xff]
    %v4643 = vld [vmem:[#allocation21 + $0x50] sm:$0xff]
    %v4644 = vld [vmem:[#allocation21 + $0x58] sm:$0xff]
    %v4645 = vld [vmem:[#allocation21 + $0x60] sm:$0xff]
    %v4646 = vld [vmem:[#allocation21 + $0x68] sm:$0xff]
    %v4647 = vld [vmem:[#allocation21 + $0x70] sm:$0xff]
    %v4648 = vld [vmem:[#allocation21 + $0x78] sm:$0xff]
    %v4649 = vld [vmem:[#allocation21 + $0x80] sm:$0xff]
    %v4650 = vld [vmem:[#allocation21 + $0x88] sm:$0xff]
    %v4651 = vld [vmem:[#allocation21 + $0x90] sm:$0xff]
    %v4652 = vld [vmem:[#allocation21 + $0x98] sm:$0xff]
    %v4653 = vld [vmem:[#allocation21 + $0xa0] sm:$0xff]
    %v4654 = vld [vmem:[#allocation21 + $0xa8] sm:$0xff]
    %v4655 = vld [vmem:[#allocation21 + $0xb0] sm:$0xff]
    %v4656 = vld [vmem:[#allocation21 + $0xb8] sm:$0xff]
    %v4657 = vld [vmem:[#allocation21 + $0xc0] sm:$0xff]
    %v4658 = vld [vmem:[#allocation21 + $0xc8] sm:$0xff]
    %v4659 = vld [vmem:[#allocation21 + $0xd0] sm:$0xff]
    %v4660 = vld [vmem:[#allocation21 + $0xd8] sm:$0xff]
    %v4661 = vld [vmem:[#allocation21 + $0xe0] sm:$0xff]
    %v4662 = vld [vmem:[#allocation21 + $0xe8] sm:$0xff]
    %v4663 = vld [vmem:[#allocation21 + $0xf0] sm:$0xff]
    %v4664 = vld [vmem:[#allocation21 + $0xf8] sm:$0xff]
    %v4665 = vld [vmem:[#allocation21 + $0x100] sm:$0xff]
    %v4666 = vld [vmem:[#allocation21 + $0x108] sm:$0xff]
    %v4667 = vld [vmem:[#allocation21 + $0x110] sm:$0xff]
    %v4668 = vld [vmem:[#allocation21 + $0x118] sm:$0xff]
    %v4669 = vld [vmem:[#allocation21 + $0x120] sm:$0xff]
    %v4670 = vld [vmem:[#allocation21 + $0x128] sm:$0xff]
    %v4671 = vld [vmem:[#allocation21 + $0x130] sm:$0xff]
    %v4672 = vld [vmem:[#allocation21 + $0x138] sm:$0xff]
    %v4673 = vld [vmem:[#allocation21 + $0x140] sm:$0xff]
    %v4674 = vld [vmem:[#allocation21 + $0x148] sm:$0xff]
    %v4675 = vld [vmem:[#allocation21 + $0x150] sm:$0xff]
    %v4676 = vld [vmem:[#allocation21 + $0x158] sm:$0xff]
    %v4677 = vld [vmem:[#allocation21 + $0x160] sm:$0xff]
    %v4678 = vld [vmem:[#allocation21 + $0x168] sm:$0xff]
    %v4679 = vld [vmem:[#allocation21 + $0x170] sm:$0xff]
    %v4680 = vld [vmem:[#allocation21 + $0x178] sm:$0xff]
    %v4681 = vld [vmem:[#allocation21 + $0x180] sm:$0xff]
    %v4682 = vld [vmem:[#allocation21 + $0x188] sm:$0xff]
    %v4683 = vld [vmem:[#allocation21 + $0x190] sm:$0xff]
    %v4684 = vld [vmem:[#allocation21 + $0x198] sm:$0xff]
    %v4685 = vld [vmem:[#allocation21 + $0x1a0] sm:$0xff]
    %v4686 = vld [vmem:[#allocation21 + $0x1a8] sm:$0xff]
    %v4687 = vld [vmem:[#allocation21 + $0x1b0] sm:$0xff]
    %v4688 = vld [vmem:[#allocation21 + $0x1b8] sm:$0xff]
    %v4689 = vld [vmem:[#allocation21 + $0x1c0] sm:$0xff]
    %v4690 = vld [vmem:[#allocation21 + $0x1c8] sm:$0xff]
    %v4691 = vld [vmem:[#allocation21 + $0x1d0] sm:$0xff]
    %v4692 = vld [vmem:[#allocation21 + $0x1d8] sm:$0xff]
    %v4693 = vld [vmem:[#allocation21 + $0x1e0] sm:$0xff]
    %v4694 = vld [vmem:[#allocation21 + $0x1e8] sm:$0xff]
    %v4695 = vld [vmem:[#allocation21 + $0x1f0] sm:$0xff]
    %v4696 = vld [vmem:[#allocation21 + $0x1f8] sm:$0xff]
    %v4697 = vld [vmem:[#allocation21 + $0x200] sm:$0xff]
    %v4698 = vld [vmem:[#allocation21 + $0x208] sm:$0xff]
    %v4699 = vld [vmem:[#allocation21 + $0x210] sm:$0xff]
    %v4700 = vld [vmem:[#allocation21 + $0x218] sm:$0xff]
    %v4701 = vld [vmem:[#allocation21 + $0x220] sm:$0xff]
    %v4702 = vld [vmem:[#allocation21 + $0x228] sm:$0xff]
    %v4703 = vld [vmem:[#allocation21 + $0x230] sm:$0xff]
    %v4704 = vld [vmem:[#allocation21 + $0x238] sm:$0xff]
    %v4705 = vld [vmem:[#allocation21 + $0x240] sm:$0xff]
    %v4706 = vld [vmem:[#allocation21 + $0x248] sm:$0xff]
    %v4707 = vld [vmem:[#allocation21 + $0x250] sm:$0xff]
    %v4708 = vld [vmem:[#allocation21 + $0x258] sm:$0xff]
    %v4709 = vld [vmem:[#allocation21 + $0x260] sm:$0xff]
    %v4710 = vld [vmem:[#allocation21 + $0x268] sm:$0xff]
    %v4711 = vld [vmem:[#allocation21 + $0x270] sm:$0xff]
    %v4712 = vld [vmem:[#allocation21 + $0x278] sm:$0xff]
    %v4713 = vld [vmem:[#allocation21 + $0x280] sm:$0xff]
    %v4714 = vld [vmem:[#allocation21 + $0x288] sm:$0xff]
    %v4715 = vld [vmem:[#allocation21 + $0x290] sm:$0xff]
    %v4716 = vld [vmem:[#allocation21 + $0x298] sm:$0xff]
    %v4717 = vld [vmem:[#allocation21 + $0x2a0] sm:$0xff]
    %v4718 = vld [vmem:[#allocation21 + $0x2a8] sm:$0xff]
    %v4719 = vld [vmem:[#allocation21 + $0x2b0] sm:$0xff]
    %v4720 = vld [vmem:[#allocation21 + $0x2b8] sm:$0xff]
    %v4721 = vld [vmem:[#allocation21 + $0x2c0] sm:$0xff]
    %v4722 = vld [vmem:[#allocation21 + $0x2c8] sm:$0xff]
    %v4723 = vld [vmem:[#allocation21 + $0x2d0] sm:$0xff]
    %v4724 = vld [vmem:[#allocation21 + $0x2d8] sm:$0xff]
    %v4725 = vld [vmem:[#allocation21 + $0x2e0] sm:$0xff]
    %v4726 = vld [vmem:[#allocation21 + $0x2e8] sm:$0xff]
    %v4727 = vld [vmem:[#allocation21 + $0x2f0] sm:$0xff]
    %v4728 = vld [vmem:[#allocation21 + $0x2f8] sm:$0xff]
    %v4729 = vld [vmem:[#allocation21 + $0x300] sm:$0xff]
    %v4730 = vld [vmem:[#allocation21 + $0x308] sm:$0xff]
    %v4731 = vld [vmem:[#allocation21 + $0x310] sm:$0xff]
    %v4732 = vld [vmem:[#allocation21 + $0x318] sm:$0xff]
    %v4733 = vld [vmem:[#allocation21 + $0x320] sm:$0xff]
    %v4734 = vld [vmem:[#allocation21 + $0x328] sm:$0xff]
    %v4735 = vld [vmem:[#allocation21 + $0x330] sm:$0xff]
    %v4736 = vld [vmem:[#allocation21 + $0x338] sm:$0xff]
    %v4737 = vld [vmem:[#allocation21 + $0x340] sm:$0xff]
    %v4738 = vld [vmem:[#allocation21 + $0x348] sm:$0xff]
    %v4739 = vld [vmem:[#allocation21 + $0x350] sm:$0xff]
    %v4740 = vld [vmem:[#allocation21 + $0x358] sm:$0xff]
    %v4741 = vld [vmem:[#allocation21 + $0x360] sm:$0xff]
    %v4742 = vld [vmem:[#allocation21 + $0x368] sm:$0xff]
    %v4743 = vld [vmem:[#allocation21 + $0x370] sm:$0xff]
    %v4744 = vld [vmem:[#allocation21 + $0x378] sm:$0xff]
    %v4745 = vld [vmem:[#allocation21 + $0x380] sm:$0xff]
    %v4746 = vld [vmem:[#allocation21 + $0x388] sm:$0xff]
    %v4747 = vld [vmem:[#allocation21 + $0x390] sm:$0xff]
    %v4748 = vld [vmem:[#allocation21 + $0x398] sm:$0xff]
    %v4749 = vld [vmem:[#allocation21 + $0x3a0] sm:$0xff]
    %v4750 = vld [vmem:[#allocation21 + $0x3a8] sm:$0xff]
    %v4751 = vld [vmem:[#allocation21 + $0x3b0] sm:$0xff]
    %v4752 = vld [vmem:[#allocation21 + $0x3b8] sm:$0xff]
    %v4753 = vld [vmem:[#allocation21 + $0x3c0] sm:$0xff]
    %v4754 = vld [vmem:[#allocation21 + $0x3c8] sm:$0xff]
    %v4755 = vld [vmem:[#allocation21 + $0x3d0] sm:$0xff]
    %v4756 = vld [vmem:[#allocation21 + $0x3d8] sm:$0xff]
    %v4757 = vld [vmem:[#allocation21 + $0x3e0] sm:$0xff]
    %v4758 = vld [vmem:[#allocation21 + $0x3e8] sm:$0xff]
    %v4759 = vld [vmem:[#allocation21 + $0x3f0] sm:$0xff]
    %v4760 = vld [vmem:[#allocation21 + $0x3f8] sm:$0xff]
    %v4761 = vld [vmem:[#allocation21 + $0x400] sm:$0xff]
    %v4762 = vld [vmem:[#allocation21 + $0x408] sm:$0xff]
    %v4763 = vld [vmem:[#allocation21 + $0x410] sm:$0xff]
    %v4764 = vld [vmem:[#allocation21 + $0x418] sm:$0xff]
    %v4765 = vld [vmem:[#allocation21 + $0x420] sm:$0xff]
    %v4766 = vld [vmem:[#allocation21 + $0x428] sm:$0xff]
    %v4767 = vld [vmem:[#allocation21 + $0x430] sm:$0xff]
    %v4768 = vld [vmem:[#allocation21 + $0x438] sm:$0xff]
    %v4769 = vld [vmem:[#allocation21 + $0x440] sm:$0xff]
    %v4770 = vld [vmem:[#allocation21 + $0x448] sm:$0xff]
    %v4771 = vld [vmem:[#allocation21 + $0x450] sm:$0xff]
    %v4772 = vld [vmem:[#allocation21 + $0x458] sm:$0xff]
    %v4773 = vld [vmem:[#allocation21 + $0x460] sm:$0xff]
    %v4774 = vld [vmem:[#allocation21 + $0x468] sm:$0xff]
    %v4775 = vld [vmem:[#allocation21 + $0x470] sm:$0xff]
    %v4776 = vld [vmem:[#allocation21 + $0x478] sm:$0xff]
    %v4777 = vld [vmem:[#allocation21 + $0x480] sm:$0xff]
    %v4778 = vld [vmem:[#allocation21 + $0x488] sm:$0xff]
    %v4779 = vld [vmem:[#allocation21 + $0x490] sm:$0xff]
    %v4780 = vld [vmem:[#allocation21 + $0x498] sm:$0xff]
    %v4781 = vld [vmem:[#allocation21 + $0x4a0] sm:$0xff]
    %v4782 = vld [vmem:[#allocation21 + $0x4a8] sm:$0xff]
    %v4783 = vld [vmem:[#allocation21 + $0x4b0] sm:$0xff]
    %v4784 = vld [vmem:[#allocation21 + $0x4b8] sm:$0xff]
    %v4785 = vld [vmem:[#allocation21 + $0x4c0] sm:$0xff]
    %v4786 = vld [vmem:[#allocation21 + $0x4c8] sm:$0xff]
    %v4787 = vld [vmem:[#allocation21 + $0x4d0] sm:$0xff]
    %v4788 = vld [vmem:[#allocation21 + $0x4d8] sm:$0xff]
    %v4789 = vld [vmem:[#allocation21 + $0x4e0] sm:$0xff]
    %v4790 = vld [vmem:[#allocation21 + $0x4e8] sm:$0xff]
    %v4791 = vld [vmem:[#allocation21 + $0x4f0] sm:$0xff]
    %v4792 = vld [vmem:[#allocation21 + $0x4f8] sm:$0xff]
    %v4793 = vld [vmem:[#allocation21 + $0x500] sm:$0xff]
    %v4794 = vld [vmem:[#allocation21 + $0x508] sm:$0xff]
    %v4795 = vld [vmem:[#allocation21 + $0x510] sm:$0xff]
    %v4796 = vld [vmem:[#allocation21 + $0x518] sm:$0xff]
    %v4797 = vld [vmem:[#allocation21 + $0x520] sm:$0xff]
    %v4798 = vld [vmem:[#allocation21 + $0x528] sm:$0xff]
    %v4799 = vld [vmem:[#allocation21 + $0x530] sm:$0xff]
    %v4800 = vld [vmem:[#allocation21 + $0x538] sm:$0xff]
    %v4801 = vld [vmem:[#allocation21 + $0x540] sm:$0xff]
    %v4802 = vld [vmem:[#allocation21 + $0x548] sm:$0xff]
    %v4803 = vld [vmem:[#allocation21 + $0x550] sm:$0xff]
    %v4804 = vld [vmem:[#allocation21 + $0x558] sm:$0xff]
    %v4805 = vld [vmem:[#allocation21 + $0x560] sm:$0xff]
    %v4806 = vld [vmem:[#allocation21 + $0x568] sm:$0xff]
    %v4807 = vld [vmem:[#allocation21 + $0x570] sm:$0xff]
    %v4808 = vld [vmem:[#allocation21 + $0x578] sm:$0xff]
    %v4809 = vld [vmem:[#allocation21 + $0x580] sm:$0xff]
    %v4810 = vld [vmem:[#allocation21 + $0x588] sm:$0xff]
    %v4811 = vld [vmem:[#allocation21 + $0x590] sm:$0xff]
    %v4812 = vld [vmem:[#allocation21 + $0x598] sm:$0xff]
    %v4813 = vld [vmem:[#allocation21 + $0x5a0] sm:$0xff]
    %v4814 = vld [vmem:[#allocation21 + $0x5a8] sm:$0xff]
    %v4815 = vld [vmem:[#allocation21 + $0x5b0] sm:$0xff]
    %v4816 = vld [vmem:[#allocation21 + $0x5b8] sm:$0xff]
    %v4817 = vld [vmem:[#allocation21 + $0x5c0] sm:$0xff]
    %v4818 = vld [vmem:[#allocation21 + $0x5c8] sm:$0xff]
    %v4819 = vld [vmem:[#allocation21 + $0x5d0] sm:$0xff]
    %v4820 = vld [vmem:[#allocation21 + $0x5d8] sm:$0xff]
    %v4821 = vld [vmem:[#allocation21 + $0x5e0] sm:$0xff]
    %v4822 = vld [vmem:[#allocation21 + $0x5e8] sm:$0xff]
    %v4823 = vld [vmem:[#allocation21 + $0x5f0] sm:$0xff]
    %v4824 = vld [vmem:[#allocation21 + $0x5f8] sm:$0xff]
    %v4825 = vld [vmem:[#allocation21 + $0x600] sm:$0xff]
    %v4826 = vld [vmem:[#allocation21 + $0x608] sm:$0xff]
    %v4827 = vld [vmem:[#allocation21 + $0x610] sm:$0xff]
    %v4828 = vld [vmem:[#allocation21 + $0x618] sm:$0xff]
    %v4829 = vld [vmem:[#allocation21 + $0x620] sm:$0xff]
    %v4830 = vld [vmem:[#allocation21 + $0x628] sm:$0xff]
    %v4831 = vld [vmem:[#allocation21 + $0x630] sm:$0xff]
    %v4832 = vld [vmem:[#allocation21 + $0x638] sm:$0xff]
    %v4833 = vld [vmem:[#allocation21 + $0x640] sm:$0xff]
    %v4834 = vld [vmem:[#allocation21 + $0x648] sm:$0xff]
    %v4835 = vld [vmem:[#allocation21 + $0x650] sm:$0xff]
    %v4836 = vld [vmem:[#allocation21 + $0x658] sm:$0xff]
    %v4837 = vld [vmem:[#allocation21 + $0x660] sm:$0xff]
    %v4838 = vld [vmem:[#allocation21 + $0x668] sm:$0xff]
    %v4839 = vld [vmem:[#allocation21 + $0x670] sm:$0xff]
    %v4840 = vld [vmem:[#allocation21 + $0x678] sm:$0xff]
    %v4841 = vld [vmem:[#allocation21 + $0x680] sm:$0xff]
    %v4842 = vld [vmem:[#allocation21 + $0x688] sm:$0xff]
    %v4843 = vld [vmem:[#allocation21 + $0x690] sm:$0xff]
    %v4844 = vld [vmem:[#allocation21 + $0x698] sm:$0xff]
    %v4845 = vld [vmem:[#allocation21 + $0x6a0] sm:$0xff]
    %v4846 = vld [vmem:[#allocation21 + $0x6a8] sm:$0xff]
    %v4847 = vld [vmem:[#allocation21 + $0x6b0] sm:$0xff]
    %v4848 = vld [vmem:[#allocation21 + $0x6b8] sm:$0xff]
    %v4849 = vld [vmem:[#allocation21 + $0x6c0] sm:$0xff]
    %v4850 = vld [vmem:[#allocation21 + $0x6c8] sm:$0xff]
    %v4851 = vld [vmem:[#allocation21 + $0x6d0] sm:$0xff]
    %v4852 = vld [vmem:[#allocation21 + $0x6d8] sm:$0xff]
    %v4853 = vld [vmem:[#allocation21 + $0x6e0] sm:$0xff]
    %v4854 = vld [vmem:[#allocation21 + $0x6e8] sm:$0xff]
    %v4855 = vld [vmem:[#allocation21 + $0x6f0] sm:$0xff]
    %v4856 = vld [vmem:[#allocation21 + $0x6f8] sm:$0xff]
    %v4857 = vld [vmem:[#allocation21 + $0x700] sm:$0xff]
    %v4858 = vld [vmem:[#allocation21 + $0x708] sm:$0xff]
    %v4859 = vld [vmem:[#allocation21 + $0x710] sm:$0xff]
    %v4860 = vld [vmem:[#allocation21 + $0x718] sm:$0xff]
    %v4861 = vld [vmem:[#allocation21 + $0x720] sm:$0xff]
    %v4862 = vld [vmem:[#allocation21 + $0x728] sm:$0xff]
    %v4863 = vld [vmem:[#allocation21 + $0x730] sm:$0xff]
    %v4864 = vld [vmem:[#allocation21 + $0x738] sm:$0xff]
    %v4865 = vld [vmem:[#allocation21 + $0x740] sm:$0xff]
    %v4866 = vld [vmem:[#allocation21 + $0x748] sm:$0xff]
    %v4867 = vld [vmem:[#allocation21 + $0x750] sm:$0xff]
    %v4868 = vld [vmem:[#allocation21 + $0x758] sm:$0xff]
    %v4869 = vld [vmem:[#allocation21 + $0x760] sm:$0xff]
    %v4870 = vld [vmem:[#allocation21 + $0x768] sm:$0xff]
    %v4871 = vld [vmem:[#allocation21 + $0x770] sm:$0xff]
    %v4872 = vld [vmem:[#allocation21 + $0x778] sm:$0xff]
    %v4873 = vld [vmem:[#allocation21 + $0x780] sm:$0xff]
    %v4874 = vld [vmem:[#allocation21 + $0x788] sm:$0xff]
    %v4875 = vld [vmem:[#allocation21 + $0x790] sm:$0xff]
    %v4876 = vld [vmem:[#allocation21 + $0x798] sm:$0xff]
    %v4877 = vld [vmem:[#allocation21 + $0x7a0] sm:$0xff]
    %v4878 = vld [vmem:[#allocation21 + $0x7a8] sm:$0xff]
    %v4879 = vld [vmem:[#allocation21 + $0x7b0] sm:$0xff]
    %v4880 = vld [vmem:[#allocation21 + $0x7b8] sm:$0xff]
    %v4881 = vld [vmem:[#allocation21 + $0x7c0] sm:$0xff]
    %v4882 = vld [vmem:[#allocation21 + $0x7c8] sm:$0xff]
    %v4883 = vld [vmem:[#allocation21 + $0x7d0] sm:$0xff]
    %v4884 = vld [vmem:[#allocation21 + $0x7d8] sm:$0xff]
    %v4885 = vld [vmem:[#allocation21 + $0x7e0] sm:$0xff]
    %v4886 = vld [vmem:[#allocation21 + $0x7e8] sm:$0xff]
    %v4887 = vld [vmem:[#allocation21 + $0x7f0] sm:$0xff]
    %v4888 = vld [vmem:[#allocation21 + $0x7f8] sm:$0xff]
    %v4889 = vld [vmem:[#allocation21 + $0x800] sm:$0xff]
    %v4890 = vld [vmem:[#allocation21 + $0x808] sm:$0xff]
    %v4891 = vld [vmem:[#allocation21 + $0x810] sm:$0xff]
    %v4892 = vld [vmem:[#allocation21 + $0x818] sm:$0xff]
    %v4893 = vld [vmem:[#allocation21 + $0x820] sm:$0xff]
    %v4894 = vld [vmem:[#allocation21 + $0x828] sm:$0xff]
    %v4895 = vld [vmem:[#allocation21 + $0x830] sm:$0xff]
    %v4896 = vld [vmem:[#allocation21 + $0x838] sm:$0xff]
    %v4897 = vld [vmem:[#allocation21 + $0x840] sm:$0xff]
    %v4898 = vld [vmem:[#allocation21 + $0x848] sm:$0xff]
    %v4899 = vld [vmem:[#allocation21 + $0x850] sm:$0xff]
    %v4900 = vld [vmem:[#allocation21 + $0x858] sm:$0xff]
    %v4901 = vld [vmem:[#allocation21 + $0x860] sm:$0xff]
    %v4902 = vld [vmem:[#allocation21 + $0x868] sm:$0xff]
    %v4903 = vld [vmem:[#allocation21 + $0x870] sm:$0xff]
    %v4904 = vld [vmem:[#allocation21 + $0x878] sm:$0xff]
    %v4905 = vld [vmem:[#allocation21 + $0x880] sm:$0xff]
    %v4906 = vld [vmem:[#allocation21 + $0x888] sm:$0xff]
    %v4907 = vld [vmem:[#allocation21 + $0x890] sm:$0xff]
    %v4908 = vld [vmem:[#allocation21 + $0x898] sm:$0xff]
    %v4909 = vld [vmem:[#allocation21 + $0x8a0] sm:$0xff]
    %v4910 = vld [vmem:[#allocation21 + $0x8a8] sm:$0xff]
    %v4911 = vld [vmem:[#allocation21 + $0x8b0] sm:$0xff]
    %v4912 = vld [vmem:[#allocation21 + $0x8b8] sm:$0xff]
    %v4913 = vld [vmem:[#allocation21 + $0x8c0] sm:$0xff]
    %v4914 = vld [vmem:[#allocation21 + $0x8c8] sm:$0xff]
    %v4915 = vld [vmem:[#allocation21 + $0x8d0] sm:$0xff]
    %v4916 = vld [vmem:[#allocation21 + $0x8d8] sm:$0xff]
    %v4917 = vld [vmem:[#allocation21 + $0x8e0] sm:$0xff]
    %v4918 = vld [vmem:[#allocation21 + $0x8e8] sm:$0xff]
    %v4919 = vld [vmem:[#allocation21 + $0x8f0] sm:$0xff]
    %v4920 = vld [vmem:[#allocation21 + $0x8f8] sm:$0xff]
    %v4921 = vld [vmem:[#allocation21 + $0x900] sm:$0xff]
    %v4922 = vld [vmem:[#allocation21 + $0x908] sm:$0xff]
    %v4923 = vld [vmem:[#allocation21 + $0x910] sm:$0xff]
    %v4924 = vld [vmem:[#allocation21 + $0x918] sm:$0xff]
    %v4925 = vld [vmem:[#allocation21 + $0x920] sm:$0xff]
    %v4926 = vld [vmem:[#allocation21 + $0x928] sm:$0xff]
    %v4927 = vld [vmem:[#allocation21 + $0x930] sm:$0xff]
    %v4928 = vld [vmem:[#allocation21 + $0x938] sm:$0xff]
    %v4929 = vld [vmem:[#allocation21 + $0x940] sm:$0xff]
    %v4930 = vld [vmem:[#allocation21 + $0x948] sm:$0xff]
    %v4931 = vld [vmem:[#allocation21 + $0x950] sm:$0xff]
    %v4932 = vld [vmem:[#allocation21 + $0x958] sm:$0xff]
    %v4933 = vld [vmem:[#allocation21 + $0x960] sm:$0xff]
    %v4934 = vld [vmem:[#allocation21 + $0x968] sm:$0xff]
    %v4935 = vld [vmem:[#allocation21 + $0x970] sm:$0xff]
    %v4936 = vld [vmem:[#allocation21 + $0x978] sm:$0xff]
    %v4937 = vld [vmem:[#allocation21 + $0x980] sm:$0xff]
    %v4938 = vld [vmem:[#allocation21 + $0x988] sm:$0xff]
    %v4939 = vld [vmem:[#allocation21 + $0x990] sm:$0xff]
    %v4940 = vld [vmem:[#allocation21 + $0x998] sm:$0xff]
    %v4941 = vld [vmem:[#allocation21 + $0x9a0] sm:$0xff]
    %v4942 = vld [vmem:[#allocation21 + $0x9a8] sm:$0xff]
    %v4943 = vld [vmem:[#allocation21 + $0x9b0] sm:$0xff]
    %v4944 = vld [vmem:[#allocation21 + $0x9b8] sm:$0xff]
    %v4945 = vld [vmem:[#allocation21 + $0x9c0] sm:$0xff]
    %v4946 = vld [vmem:[#allocation21 + $0x9c8] sm:$0xff]
    %v4947 = vld [vmem:[#allocation21 + $0x9d0] sm:$0xff]
    %v4948 = vld [vmem:[#allocation21 + $0x9d8] sm:$0xff]
    %v4949 = vld [vmem:[#allocation21 + $0x9e0] sm:$0xff]
    %v4950 = vld [vmem:[#allocation21 + $0x9e8] sm:$0xff]
    %v4951 = vld [vmem:[#allocation21 + $0x9f0] sm:$0xff]
    %v4952 = vld [vmem:[#allocation21 + $0x9f8] sm:$0xff]
    %v4953 = vld [vmem:[#allocation21 + $0xa00] sm:$0xff]
    %v4954 = vld [vmem:[#allocation21 + $0xa08] sm:$0xff]
    %v4955 = vld [vmem:[#allocation21 + $0xa10] sm:$0xff]
    %v4956 = vld [vmem:[#allocation21 + $0xa18] sm:$0xff]
    %v4957 = vld [vmem:[#allocation21 + $0xa20] sm:$0xff]
    %v4958 = vld [vmem:[#allocation21 + $0xa28] sm:$0xff]
    %v4959 = vld [vmem:[#allocation21 + $0xa30] sm:$0xff]
    %v4960 = vld [vmem:[#allocation21 + $0xa38] sm:$0xff]
    %v4961 = vld [vmem:[#allocation21 + $0xa40] sm:$0xff]
    %v4962 = vld [vmem:[#allocation21 + $0xa48] sm:$0xff]
    %v4963 = vld [vmem:[#allocation21 + $0xa50] sm:$0xff]
    %v4964 = vld [vmem:[#allocation21 + $0xa58] sm:$0xff]
    %v4965 = vld [vmem:[#allocation21 + $0xa60] sm:$0xff]
    %v4966 = vld [vmem:[#allocation21 + $0xa68] sm:$0xff]
    %v4967 = vld [vmem:[#allocation21 + $0xa70] sm:$0xff]
    %v4968 = vld [vmem:[#allocation21 + $0xa78] sm:$0xff]
    %v4969 = vld [vmem:[#allocation21 + $0xa80] sm:$0xff]
    %v4970 = vld [vmem:[#allocation21 + $0xa88] sm:$0xff]
    %v4971 = vld [vmem:[#allocation21 + $0xa90] sm:$0xff]
    %v4972 = vld [vmem:[#allocation21 + $0xa98] sm:$0xff]
    %v4973 = vld [vmem:[#allocation21 + $0xaa0] sm:$0xff]
    %v4974 = vld [vmem:[#allocation21 + $0xaa8] sm:$0xff]
    %v4975 = vld [vmem:[#allocation21 + $0xab0] sm:$0xff]
    %v4976 = vld [vmem:[#allocation21 + $0xab8] sm:$0xff]
    %v4977 = vld [vmem:[#allocation21 + $0xac0] sm:$0xff]
    %v4978 = vld [vmem:[#allocation21 + $0xac8] sm:$0xff]
    %v4979 = vld [vmem:[#allocation21 + $0xad0] sm:$0xff]
    %v4980 = vld [vmem:[#allocation21 + $0xad8] sm:$0xff]
    %v4981 = vld [vmem:[#allocation21 + $0xae0] sm:$0xff]
    %v4982 = vld [vmem:[#allocation21 + $0xae8] sm:$0xff]
    %v4983 = vld [vmem:[#allocation21 + $0xaf0] sm:$0xff]
    %v4984 = vld [vmem:[#allocation21 + $0xaf8] sm:$0xff]
    %v4985 = vld [vmem:[#allocation21 + $0xb00] sm:$0xff]
    %v4986 = vld [vmem:[#allocation21 + $0xb08] sm:$0xff]
    %v4987 = vld [vmem:[#allocation21 + $0xb10] sm:$0xff]
    %v4988 = vld [vmem:[#allocation21 + $0xb18] sm:$0xff]
    %v4989 = vld [vmem:[#allocation21 + $0xb20] sm:$0xff]
    %v4990 = vld [vmem:[#allocation21 + $0xb28] sm:$0xff]
    %v4991 = vld [vmem:[#allocation21 + $0xb30] sm:$0xff]
    %v4992 = vld [vmem:[#allocation21 + $0xb38] sm:$0xff]
    %v4993 = vld [vmem:[#allocation21 + $0xb40] sm:$0xff]
    %v4994 = vld [vmem:[#allocation21 + $0xb48] sm:$0xff]
    %v4995 = vld [vmem:[#allocation21 + $0xb50] sm:$0xff]
    %v4996 = vld [vmem:[#allocation21 + $0xb58] sm:$0xff]
    %v4997 = vld [vmem:[#allocation21 + $0xb60] sm:$0xff]
    %v4998 = vld [vmem:[#allocation21 + $0xb68] sm:$0xff]
    %v4999 = vld [vmem:[#allocation21 + $0xb70] sm:$0xff]
    %v5000 = vld [vmem:[#allocation21 + $0xb78] sm:$0xff]
    %v5001 = vld [vmem:[#allocation21 + $0xb80] sm:$0xff]
    %v5002 = vld [vmem:[#allocation21 + $0xb88] sm:$0xff]
    %v5003 = vld [vmem:[#allocation21 + $0xb90] sm:$0xff]
    %v5004 = vld [vmem:[#allocation21 + $0xb98] sm:$0xff]
    %v5005 = vld [vmem:[#allocation21 + $0xba0] sm:$0xff]
    %v5006 = vld [vmem:[#allocation21 + $0xba8] sm:$0xff]
    %v5007 = vld [vmem:[#allocation21 + $0xbb0] sm:$0xff]
    %v5008 = vld [vmem:[#allocation21 + $0xbb8] sm:$0xff]
    %v5009 = vld [vmem:[#allocation21 + $0xbc0] sm:$0xff]
    %v5010 = vld [vmem:[#allocation21 + $0xbc8] sm:$0xff]
    %v5011 = vld [vmem:[#allocation21 + $0xbd0] sm:$0xff]
    %v5012 = vld [vmem:[#allocation21 + $0xbd8] sm:$0xff]
    %v5013 = vld [vmem:[#allocation21 + $0xbe0] sm:$0xff]
    %v5014 = vld [vmem:[#allocation21 + $0xbe8] sm:$0xff]
    %v5015 = vld [vmem:[#allocation21 + $0xbf0] sm:$0xff]
    %v5016 = vld [vmem:[#allocation21 + $0xbf8] sm:$0xff]
    %v5017 = vld [vmem:[#allocation21 + $0xc00] sm:$0xff]
    %v5018 = vld [vmem:[#allocation21 + $0xc08] sm:$0xff]
    %v5019 = vld [vmem:[#allocation21 + $0xc10] sm:$0xff]
    %v5020 = vld [vmem:[#allocation21 + $0xc18] sm:$0xff]
    %v5021 = vld [vmem:[#allocation21 + $0xc20] sm:$0xff]
    %v5022 = vld [vmem:[#allocation21 + $0xc28] sm:$0xff]
    %v5023 = vld [vmem:[#allocation21 + $0xc30] sm:$0xff]
    %v5024 = vld [vmem:[#allocation21 + $0xc38] sm:$0xff]
    %v5025 = vld [vmem:[#allocation21 + $0xc40] sm:$0xff]
    %v5026 = vld [vmem:[#allocation21 + $0xc48] sm:$0xff]
    %v5027 = vld [vmem:[#allocation21 + $0xc50] sm:$0xff]
    %v5028 = vld [vmem:[#allocation21 + $0xc58] sm:$0xff]
    %v5029 = vld [vmem:[#allocation21 + $0xc60] sm:$0xff]
    %v5030 = vld [vmem:[#allocation21 + $0xc68] sm:$0xff]
    %v5031 = vld [vmem:[#allocation21 + $0xc70] sm:$0xff]
    %v5032 = vld [vmem:[#allocation21 + $0xc78] sm:$0xff]
    %v5033 = vld [vmem:[#allocation21 + $0xc80] sm:$0xff]
    %v5034 = vld [vmem:[#allocation21 + $0xc88] sm:$0xff]
    %v5035 = vld [vmem:[#allocation21 + $0xc90] sm:$0xff]
    %v5036 = vld [vmem:[#allocation21 + $0xc98] sm:$0xff]
    %v5037 = vld [vmem:[#allocation21 + $0xca0] sm:$0xff]
    %v5038 = vld [vmem:[#allocation21 + $0xca8] sm:$0xff]
    %v5039 = vld [vmem:[#allocation21 + $0xcb0] sm:$0xff]
    %v5040 = vld [vmem:[#allocation21 + $0xcb8] sm:$0xff]
    %v5041 = vld [vmem:[#allocation21 + $0xcc0] sm:$0xff]
    %v5042 = vld [vmem:[#allocation21 + $0xcc8] sm:$0xff]
    %v5043 = vld [vmem:[#allocation21 + $0xcd0] sm:$0xff]
    %v5044 = vld [vmem:[#allocation21 + $0xcd8] sm:$0xff]
    %v5045 = vld [vmem:[#allocation21 + $0xce0] sm:$0xff]
    %v5046 = vld [vmem:[#allocation21 + $0xce8] sm:$0xff]
    %v5047 = vld [vmem:[#allocation21 + $0xcf0] sm:$0xff]
    %v5048 = vld [vmem:[#allocation21 + $0xcf8] sm:$0xff]
    %v5049 = vld [vmem:[#allocation21 + $0xd00] sm:$0xff]
    %v5050 = vld [vmem:[#allocation21 + $0xd08] sm:$0xff]
    %v5051 = vld [vmem:[#allocation21 + $0xd10] sm:$0xff]
    %v5052 = vld [vmem:[#allocation21 + $0xd18] sm:$0xff]
    %v5053 = vld [vmem:[#allocation21 + $0xd20] sm:$0xff]
    %v5054 = vld [vmem:[#allocation21 + $0xd28] sm:$0xff]
    %v5055 = vld [vmem:[#allocation21 + $0xd30] sm:$0xff]
    %v5056 = vld [vmem:[#allocation21 + $0xd38] sm:$0xff]
    %v5057 = vld [vmem:[#allocation21 + $0xd40] sm:$0xff]
    %v5058 = vld [vmem:[#allocation21 + $0xd48] sm:$0xff]
    %v5059 = vld [vmem:[#allocation21 + $0xd50] sm:$0xff]
    %v5060 = vld [vmem:[#allocation21 + $0xd58] sm:$0xff]
    %v5061 = vld [vmem:[#allocation21 + $0xd60] sm:$0xff]
    %v5062 = vld [vmem:[#allocation21 + $0xd68] sm:$0xff]
    %v5063 = vld [vmem:[#allocation21 + $0xd70] sm:$0xff]
    %v5064 = vld [vmem:[#allocation21 + $0xd78] sm:$0xff]
    %v5065 = vld [vmem:[#allocation21 + $0xd80] sm:$0xff]
    %v5066 = vld [vmem:[#allocation21 + $0xd88] sm:$0xff]
    %v5067 = vld [vmem:[#allocation21 + $0xd90] sm:$0xff]
    %v5068 = vld [vmem:[#allocation21 + $0xd98] sm:$0xff]
    %v5069 = vld [vmem:[#allocation21 + $0xda0] sm:$0xff]
    %v5070 = vld [vmem:[#allocation21 + $0xda8] sm:$0xff]
    %v5071 = vld [vmem:[#allocation21 + $0xdb0] sm:$0xff]
    %v5072 = vld [vmem:[#allocation21 + $0xdb8] sm:$0xff]
    %v5073 = vld [vmem:[#allocation21 + $0xdc0] sm:$0xff]
    %v5074 = vld [vmem:[#allocation21 + $0xdc8] sm:$0xff]
    %v5075 = vld [vmem:[#allocation21 + $0xdd0] sm:$0xff]
    %v5076 = vld [vmem:[#allocation21 + $0xdd8] sm:$0xff]
    %v5077 = vld [vmem:[#allocation21 + $0xde0] sm:$0xff]
    %v5078 = vld [vmem:[#allocation21 + $0xde8] sm:$0xff]
    %v5079 = vld [vmem:[#allocation21 + $0xdf0] sm:$0xff]
    %v5080 = vld [vmem:[#allocation21 + $0xdf8] sm:$0xff]
    %v5081 = vld [vmem:[#allocation21 + $0xe00] sm:$0xff]
    %v5082 = vld [vmem:[#allocation21 + $0xe08] sm:$0xff]
    %v5083 = vld [vmem:[#allocation21 + $0xe10] sm:$0xff]
    %v5084 = vld [vmem:[#allocation21 + $0xe18] sm:$0xff]
    %v5085 = vld [vmem:[#allocation21 + $0xe20] sm:$0xff]
    %v5086 = vld [vmem:[#allocation21 + $0xe28] sm:$0xff]
    %v5087 = vld [vmem:[#allocation21 + $0xe30] sm:$0xff]
    %v5088 = vld [vmem:[#allocation21 + $0xe38] sm:$0xff]
    %v5089 = vld [vmem:[#allocation21 + $0xe40] sm:$0xff]
    %v5090 = vld [vmem:[#allocation21 + $0xe48] sm:$0xff]
    %v5091 = vld [vmem:[#allocation21 + $0xe50] sm:$0xff]
    %v5092 = vld [vmem:[#allocation21 + $0xe58] sm:$0xff]
    %v5093 = vld [vmem:[#allocation21 + $0xe60] sm:$0xff]
    %v5094 = vld [vmem:[#allocation21 + $0xe68] sm:$0xff]
    %v5095 = vld [vmem:[#allocation21 + $0xe70] sm:$0xff]
    %v5096 = vld [vmem:[#allocation21 + $0xe78] sm:$0xff]
    %v5097 = vld [vmem:[#allocation21 + $0xe80] sm:$0xff]
    %v5098 = vld [vmem:[#allocation21 + $0xe88] sm:$0xff]
    %v5099 = vld [vmem:[#allocation21 + $0xe90] sm:$0xff]
    %v5100 = vld [vmem:[#allocation21 + $0xe98] sm:$0xff]
    %v5101 = vld [vmem:[#allocation21 + $0xea0] sm:$0xff]
    %v5102 = vld [vmem:[#allocation21 + $0xea8] sm:$0xff]
    %v5103 = vld [vmem:[#allocation21 + $0xeb0] sm:$0xff]
    %v5104 = vld [vmem:[#allocation21 + $0xeb8] sm:$0xff]
    %v5105 = vld [vmem:[#allocation21 + $0xec0] sm:$0xff]
    %v5106 = vld [vmem:[#allocation21 + $0xec8] sm:$0xff]
    %v5107 = vld [vmem:[#allocation21 + $0xed0] sm:$0xff]
    %v5108 = vld [vmem:[#allocation21 + $0xed8] sm:$0xff]
    %v5109 = vld [vmem:[#allocation21 + $0xee0] sm:$0xff]
    %v5110 = vld [vmem:[#allocation21 + $0xee8] sm:$0xff]
    %v5111 = vld [vmem:[#allocation21 + $0xef0] sm:$0xff]
    %v5112 = vld [vmem:[#allocation21 + $0xef8] sm:$0xff]
    %v5113 = vld [vmem:[#allocation21 + $0xf00] sm:$0xff]
    %v5114 = vld [vmem:[#allocation21 + $0xf08] sm:$0xff]
    %v5115 = vld [vmem:[#allocation21 + $0xf10] sm:$0xff]
    %v5116 = vld [vmem:[#allocation21 + $0xf18] sm:$0xff]
    %v5117 = vld [vmem:[#allocation21 + $0xf20] sm:$0xff]
    %v5118 = vld [vmem:[#allocation21 + $0xf28] sm:$0xff]
    %v5119 = vld [vmem:[#allocation21 + $0xf30] sm:$0xff]
    %v5120 = vld [vmem:[#allocation21 + $0xf38] sm:$0xff]
    %v5121 = vld [vmem:[#allocation21 + $0xf40] sm:$0xff]
    %v5122 = vld [vmem:[#allocation21 + $0xf48] sm:$0xff]
    %v5123 = vld [vmem:[#allocation21 + $0xf50] sm:$0xff]
    %v5124 = vld [vmem:[#allocation21 + $0xf58] sm:$0xff]
    %v5125 = vld [vmem:[#allocation21 + $0xf60] sm:$0xff]
    %v5126 = vld [vmem:[#allocation21 + $0xf68] sm:$0xff]
    %v5127 = vld [vmem:[#allocation21 + $0xf70] sm:$0xff]
    %v5128 = vld [vmem:[#allocation21 + $0xf78] sm:$0xff]
    %v5129 = vld [vmem:[#allocation21 + $0xf80] sm:$0xff]
    %v5130 = vld [vmem:[#allocation21 + $0xf88] sm:$0xff]
    %v5131 = vld [vmem:[#allocation21 + $0xf90] sm:$0xff]
    %v5132 = vld [vmem:[#allocation21 + $0xf98] sm:$0xff]
    %v5133 = vld [vmem:[#allocation21 + $0xfa0] sm:$0xff]
    %v5134 = vld [vmem:[#allocation21 + $0xfa8] sm:$0xff]
    %v5135 = vld [vmem:[#allocation21 + $0xfb0] sm:$0xff]
    %v5136 = vld [vmem:[#allocation21 + $0xfb8] sm:$0xff]
    %v5137 = vld [vmem:[#allocation21 + $0xfc0] sm:$0xff]
    %v5138 = vld [vmem:[#allocation21 + $0xfc8] sm:$0xff]
    %v5139 = vld [vmem:[#allocation21 + $0xfd0] sm:$0xff]
    %v5140 = vld [vmem:[#allocation21 + $0xfd8] sm:$0xff]
    %v5141 = vld [vmem:[#allocation21 + $0xfe0] sm:$0xff]
    %v5142 = vld [vmem:[#allocation21 + $0xfe8] sm:$0xff]
    %v5143 = vld [vmem:[#allocation21 + $0xff0] sm:$0xff]
    %v5144 = vld [vmem:[#allocation21 + $0xff8] sm:$0xff]
    %v5145 = vld [vmem:[#allocation23] sm:$0xff]
    %v5147 = vlaneseq
    %v5148 = vshrl.u32 %v5147, 7
    %v5149 = vsub.s32 0, %v5148
    %v5150 = vrot.slane %v5145, %v5149
    %v5151 = vlaneseq
    %v5152 = vshrl.u32 %v5151, 7
    %v5153 = vsub.s32 1, %v5152
    %v5154 = vrot.slane %v5145, %v5153
    %v5155 = vlaneseq
    %v5156 = vshrl.u32 %v5155, 7
    %v5157 = vsub.s32 2, %v5156
    %v5158 = vrot.slane %v5145, %v5157
    %v5159 = vlaneseq
    %v5160 = vshrl.u32 %v5159, 7
    %v5161 = vsub.s32 3, %v5160
    %v5162 = vrot.slane %v5145, %v5161
    %v5163 = vlaneseq
    %v5164 = vshrl.u32 %v5163, 7
    %v5165 = vsub.s32 4, %v5164
    %v5166 = vrot.slane %v5145, %v5165
    %v5167 = vlaneseq
    %v5168 = vshrl.u32 %v5167, 7
    %v5169 = vsub.s32 5, %v5168
    %v5170 = vrot.slane %v5145, %v5169
    %v5171 = vlaneseq
    %v5172 = vshrl.u32 %v5171, 7
    %v5173 = vsub.s32 6, %v5172
    %v5174 = vrot.slane %v5145, %v5173
    %v5175 = vlaneseq
    %v5176 = vshrl.u32 %v5175, 7
    %v5177 = vsub.s32 7, %v5176
    %v5178 = vrot.slane %v5145, %v5177
    %v5699 = vunpack.c.l.b16 %v4633
    %v5700 = vunpack.c.h.b16 %v4633
    %v5701 = vunpack.c.l.b16 %v4634
    %v5702 = vunpack.c.h.b16 %v4634
    %v5703 = vunpack.c.l.b16 %v4635
    %v5704 = vunpack.c.h.b16 %v4635
    %v5705 = vunpack.c.l.b16 %v4636
    %v5706 = vunpack.c.h.b16 %v4636
    %v5707 = vunpack.c.l.b16 %v4637
    %v5708 = vunpack.c.h.b16 %v4637
    %v5709 = vunpack.c.l.b16 %v4638
    %v5710 = vunpack.c.h.b16 %v4638
    %v5711 = vunpack.c.l.b16 %v4639
    %v5712 = vunpack.c.h.b16 %v4639
    %v5713 = vunpack.c.l.b16 %v4640
    %v5714 = vunpack.c.h.b16 %v4640
    %v5715 = vunpack.c.l.b16 %v4641
    %v5716 = vunpack.c.h.b16 %v4641
    %v5717 = vunpack.c.l.b16 %v4642
    %v5718 = vunpack.c.h.b16 %v4642
    %v5719 = vunpack.c.l.b16 %v4643
    %v5720 = vunpack.c.h.b16 %v4643
    %v5721 = vunpack.c.l.b16 %v4644
    %v5722 = vunpack.c.h.b16 %v4644
    %v5723 = vunpack.c.l.b16 %v4645
    %v5724 = vunpack.c.h.b16 %v4645
    %v5725 = vunpack.c.l.b16 %v4646
    %v5726 = vunpack.c.h.b16 %v4646
    %v5727 = vunpack.c.l.b16 %v4647
    %v5728 = vunpack.c.h.b16 %v4647
    %v5729 = vunpack.c.l.b16 %v4648
    %v5730 = vunpack.c.h.b16 %v4648
    %v5731 = vunpack.c.l.b16 %v4649
    %v5732 = vunpack.c.h.b16 %v4649
    %v5733 = vunpack.c.l.b16 %v4650
    %v5734 = vunpack.c.h.b16 %v4650
    %v5735 = vunpack.c.l.b16 %v4651
    %v5736 = vunpack.c.h.b16 %v4651
    %v5737 = vunpack.c.l.b16 %v4652
    %v5738 = vunpack.c.h.b16 %v4652
    %v5739 = vunpack.c.l.b16 %v4653
    %v5740 = vunpack.c.h.b16 %v4653
    %v5741 = vunpack.c.l.b16 %v4654
    %v5742 = vunpack.c.h.b16 %v4654
    %v5743 = vunpack.c.l.b16 %v4655
    %v5744 = vunpack.c.h.b16 %v4655
    %v5745 = vunpack.c.l.b16 %v4656
    %v5746 = vunpack.c.h.b16 %v4656
    %v5747 = vunpack.c.l.b16 %v4657
    %v5748 = vunpack.c.h.b16 %v4657
    %v5749 = vunpack.c.l.b16 %v4658
    %v5750 = vunpack.c.h.b16 %v4658
    %v5751 = vunpack.c.l.b16 %v4659
    %v5752 = vunpack.c.h.b16 %v4659
    %v5753 = vunpack.c.l.b16 %v4660
    %v5754 = vunpack.c.h.b16 %v4660
    %v5755 = vunpack.c.l.b16 %v4661
    %v5756 = vunpack.c.h.b16 %v4661
    %v5757 = vunpack.c.l.b16 %v4662
    %v5758 = vunpack.c.h.b16 %v4662
    %v5759 = vunpack.c.l.b16 %v4663
    %v5760 = vunpack.c.h.b16 %v4663
    %v5761 = vunpack.c.l.b16 %v4664
    %v5762 = vunpack.c.h.b16 %v4664
    %v5763 = vunpack.c.l.b16 %v4665
    %v5764 = vunpack.c.h.b16 %v4665
    %v5765 = vunpack.c.l.b16 %v4666
    %v5766 = vunpack.c.h.b16 %v4666
    %v5767 = vunpack.c.l.b16 %v4667
    %v5768 = vunpack.c.h.b16 %v4667
    %v5769 = vunpack.c.l.b16 %v4668
    %v5770 = vunpack.c.h.b16 %v4668
    %v5771 = vunpack.c.l.b16 %v4669
    %v5772 = vunpack.c.h.b16 %v4669
    %v5773 = vunpack.c.l.b16 %v4670
    %v5774 = vunpack.c.h.b16 %v4670
    %v5775 = vunpack.c.l.b16 %v4671
    %v5776 = vunpack.c.h.b16 %v4671
    %v5777 = vunpack.c.l.b16 %v4672
    %v5778 = vunpack.c.h.b16 %v4672
    %v5779 = vunpack.c.l.b16 %v4673
    %v5780 = vunpack.c.h.b16 %v4673
    %v5781 = vunpack.c.l.b16 %v4674
    %v5782 = vunpack.c.h.b16 %v4674
    %v5783 = vunpack.c.l.b16 %v4675
    %v5784 = vunpack.c.h.b16 %v4675
    %v5785 = vunpack.c.l.b16 %v4676
    %v5786 = vunpack.c.h.b16 %v4676
    %v5787 = vunpack.c.l.b16 %v4677
    %v5788 = vunpack.c.h.b16 %v4677
    %v5789 = vunpack.c.l.b16 %v4678
    %v5790 = vunpack.c.h.b16 %v4678
    %v5791 = vunpack.c.l.b16 %v4679
    %v5792 = vunpack.c.h.b16 %v4679
    %v5793 = vunpack.c.l.b16 %v4680
    %v5794 = vunpack.c.h.b16 %v4680
    %v5795 = vunpack.c.l.b16 %v4681
    %v5796 = vunpack.c.h.b16 %v4681
    %v5797 = vunpack.c.l.b16 %v4682
    %v5798 = vunpack.c.h.b16 %v4682
    %v5799 = vunpack.c.l.b16 %v4683
    %v5800 = vunpack.c.h.b16 %v4683
    %v5801 = vunpack.c.l.b16 %v4684
    %v5802 = vunpack.c.h.b16 %v4684
    %v5803 = vunpack.c.l.b16 %v4685
    %v5804 = vunpack.c.h.b16 %v4685
    %v5805 = vunpack.c.l.b16 %v4686
    %v5806 = vunpack.c.h.b16 %v4686
    %v5807 = vunpack.c.l.b16 %v4687
    %v5808 = vunpack.c.h.b16 %v4687
    %v5809 = vunpack.c.l.b16 %v4688
    %v5810 = vunpack.c.h.b16 %v4688
    %v5811 = vunpack.c.l.b16 %v4689
    %v5812 = vunpack.c.h.b16 %v4689
    %v5813 = vunpack.c.l.b16 %v4690
    %v5814 = vunpack.c.h.b16 %v4690
    %v5815 = vunpack.c.l.b16 %v4691
    %v5816 = vunpack.c.h.b16 %v4691
    %v5817 = vunpack.c.l.b16 %v4692
    %v5818 = vunpack.c.h.b16 %v4692
    %v5819 = vunpack.c.l.b16 %v4693
    %v5820 = vunpack.c.h.b16 %v4693
    %v5821 = vunpack.c.l.b16 %v4694
    %v5822 = vunpack.c.h.b16 %v4694
    %v5823 = vunpack.c.l.b16 %v4695
    %v5824 = vunpack.c.h.b16 %v4695
    %v5825 = vunpack.c.l.b16 %v4696
    %v5826 = vunpack.c.h.b16 %v4696
    %v5827 = vunpack.c.l.b16 %v4697
    %v5828 = vunpack.c.h.b16 %v4697
    %v5829 = vunpack.c.l.b16 %v4698
    %v5830 = vunpack.c.h.b16 %v4698
    %v5831 = vunpack.c.l.b16 %v4699
    %v5832 = vunpack.c.h.b16 %v4699
    %v5833 = vunpack.c.l.b16 %v4700
    %v5834 = vunpack.c.h.b16 %v4700
    %v5835 = vunpack.c.l.b16 %v4701
    %v5836 = vunpack.c.h.b16 %v4701
    %v5837 = vunpack.c.l.b16 %v4702
    %v5838 = vunpack.c.h.b16 %v4702
    %v5839 = vunpack.c.l.b16 %v4703
    %v5840 = vunpack.c.h.b16 %v4703
    %v5841 = vunpack.c.l.b16 %v4704
    %v5842 = vunpack.c.h.b16 %v4704
    %v5843 = vunpack.c.l.b16 %v4705
    %v5844 = vunpack.c.h.b16 %v4705
    %v5845 = vunpack.c.l.b16 %v4706
    %v5846 = vunpack.c.h.b16 %v4706
    %v5847 = vunpack.c.l.b16 %v4707
    %v5848 = vunpack.c.h.b16 %v4707
    %v5849 = vunpack.c.l.b16 %v4708
    %v5850 = vunpack.c.h.b16 %v4708
    %v5851 = vunpack.c.l.b16 %v4709
    %v5852 = vunpack.c.h.b16 %v4709
    %v5853 = vunpack.c.l.b16 %v4710
    %v5854 = vunpack.c.h.b16 %v4710
    %v5855 = vunpack.c.l.b16 %v4711
    %v5856 = vunpack.c.h.b16 %v4711
    %v5857 = vunpack.c.l.b16 %v4712
    %v5858 = vunpack.c.h.b16 %v4712
    %v5859 = vunpack.c.l.b16 %v4713
    %v5860 = vunpack.c.h.b16 %v4713
    %v5861 = vunpack.c.l.b16 %v4714
    %v5862 = vunpack.c.h.b16 %v4714
    %v5863 = vunpack.c.l.b16 %v4715
    %v5864 = vunpack.c.h.b16 %v4715
    %v5865 = vunpack.c.l.b16 %v4716
    %v5866 = vunpack.c.h.b16 %v4716
    %v5867 = vunpack.c.l.b16 %v4717
    %v5868 = vunpack.c.h.b16 %v4717
    %v5869 = vunpack.c.l.b16 %v4718
    %v5870 = vunpack.c.h.b16 %v4718
    %v5871 = vunpack.c.l.b16 %v4719
    %v5872 = vunpack.c.h.b16 %v4719
    %v5873 = vunpack.c.l.b16 %v4720
    %v5874 = vunpack.c.h.b16 %v4720
    %v5875 = vunpack.c.l.b16 %v4721
    %v5876 = vunpack.c.h.b16 %v4721
    %v5877 = vunpack.c.l.b16 %v4722
    %v5878 = vunpack.c.h.b16 %v4722
    %v5879 = vunpack.c.l.b16 %v4723
    %v5880 = vunpack.c.h.b16 %v4723
    %v5881 = vunpack.c.l.b16 %v4724
    %v5882 = vunpack.c.h.b16 %v4724
    %v5883 = vunpack.c.l.b16 %v4725
    %v5884 = vunpack.c.h.b16 %v4725
    %v5885 = vunpack.c.l.b16 %v4726
    %v5886 = vunpack.c.h.b16 %v4726
    %v5887 = vunpack.c.l.b16 %v4727
    %v5888 = vunpack.c.h.b16 %v4727
    %v5889 = vunpack.c.l.b16 %v4728
    %v5890 = vunpack.c.h.b16 %v4728
    %v5891 = vunpack.c.l.b16 %v4729
    %v5892 = vunpack.c.h.b16 %v4729
    %v5893 = vunpack.c.l.b16 %v4730
    %v5894 = vunpack.c.h.b16 %v4730
    %v5895 = vunpack.c.l.b16 %v4731
    %v5896 = vunpack.c.h.b16 %v4731
    %v5897 = vunpack.c.l.b16 %v4732
    %v5898 = vunpack.c.h.b16 %v4732
    %v5899 = vunpack.c.l.b16 %v4733
    %v5900 = vunpack.c.h.b16 %v4733
    %v5901 = vunpack.c.l.b16 %v4734
    %v5902 = vunpack.c.h.b16 %v4734
    %v5903 = vunpack.c.l.b16 %v4735
    %v5904 = vunpack.c.h.b16 %v4735
    %v5905 = vunpack.c.l.b16 %v4736
    %v5906 = vunpack.c.h.b16 %v4736
    %v5907 = vunpack.c.l.b16 %v4737
    %v5908 = vunpack.c.h.b16 %v4737
    %v5909 = vunpack.c.l.b16 %v4738
    %v5910 = vunpack.c.h.b16 %v4738
    %v5911 = vunpack.c.l.b16 %v4739
    %v5912 = vunpack.c.h.b16 %v4739
    %v5913 = vunpack.c.l.b16 %v4740
    %v5914 = vunpack.c.h.b16 %v4740
    %v5915 = vunpack.c.l.b16 %v4741
    %v5916 = vunpack.c.h.b16 %v4741
    %v5917 = vunpack.c.l.b16 %v4742
    %v5918 = vunpack.c.h.b16 %v4742
    %v5919 = vunpack.c.l.b16 %v4743
    %v5920 = vunpack.c.h.b16 %v4743
    %v5921 = vunpack.c.l.b16 %v4744
    %v5922 = vunpack.c.h.b16 %v4744
    %v5923 = vunpack.c.l.b16 %v4745
    %v5924 = vunpack.c.h.b16 %v4745
    %v5925 = vunpack.c.l.b16 %v4746
    %v5926 = vunpack.c.h.b16 %v4746
    %v5927 = vunpack.c.l.b16 %v4747
    %v5928 = vunpack.c.h.b16 %v4747
    %v5929 = vunpack.c.l.b16 %v4748
    %v5930 = vunpack.c.h.b16 %v4748
    %v5931 = vunpack.c.l.b16 %v4749
    %v5932 = vunpack.c.h.b16 %v4749
    %v5933 = vunpack.c.l.b16 %v4750
    %v5934 = vunpack.c.h.b16 %v4750
    %v5935 = vunpack.c.l.b16 %v4751
    %v5936 = vunpack.c.h.b16 %v4751
    %v5937 = vunpack.c.l.b16 %v4752
    %v5938 = vunpack.c.h.b16 %v4752
    %v5939 = vunpack.c.l.b16 %v4753
    %v5940 = vunpack.c.h.b16 %v4753
    %v5941 = vunpack.c.l.b16 %v4754
    %v5942 = vunpack.c.h.b16 %v4754
    %v5943 = vunpack.c.l.b16 %v4755
    %v5944 = vunpack.c.h.b16 %v4755
    %v5945 = vunpack.c.l.b16 %v4756
    %v5946 = vunpack.c.h.b16 %v4756
    %v5947 = vunpack.c.l.b16 %v4757
    %v5948 = vunpack.c.h.b16 %v4757
    %v5949 = vunpack.c.l.b16 %v4758
    %v5950 = vunpack.c.h.b16 %v4758
    %v5951 = vunpack.c.l.b16 %v4759
    %v5952 = vunpack.c.h.b16 %v4759
    %v5953 = vunpack.c.l.b16 %v4760
    %v5954 = vunpack.c.h.b16 %v4760
    %v5955 = vunpack.c.l.b16 %v4761
    %v5956 = vunpack.c.h.b16 %v4761
    %v5957 = vunpack.c.l.b16 %v4762
    %v5958 = vunpack.c.h.b16 %v4762
    %v5959 = vunpack.c.l.b16 %v4763
    %v5960 = vunpack.c.h.b16 %v4763
    %v5961 = vunpack.c.l.b16 %v4764
    %v5962 = vunpack.c.h.b16 %v4764
    %v5963 = vunpack.c.l.b16 %v4765
    %v5964 = vunpack.c.h.b16 %v4765
    %v5965 = vunpack.c.l.b16 %v4766
    %v5966 = vunpack.c.h.b16 %v4766
    %v5967 = vunpack.c.l.b16 %v4767
    %v5968 = vunpack.c.h.b16 %v4767
    %v5969 = vunpack.c.l.b16 %v4768
    %v5970 = vunpack.c.h.b16 %v4768
    %v5971 = vunpack.c.l.b16 %v4769
    %v5972 = vunpack.c.h.b16 %v4769
    %v5973 = vunpack.c.l.b16 %v4770
    %v5974 = vunpack.c.h.b16 %v4770
    %v5975 = vunpack.c.l.b16 %v4771
    %v5976 = vunpack.c.h.b16 %v4771
    %v5977 = vunpack.c.l.b16 %v4772
    %v5978 = vunpack.c.h.b16 %v4772
    %v5979 = vunpack.c.l.b16 %v4773
    %v5980 = vunpack.c.h.b16 %v4773
    %v5981 = vunpack.c.l.b16 %v4774
    %v5982 = vunpack.c.h.b16 %v4774
    %v5983 = vunpack.c.l.b16 %v4775
    %v5984 = vunpack.c.h.b16 %v4775
    %v5985 = vunpack.c.l.b16 %v4776
    %v5986 = vunpack.c.h.b16 %v4776
    %v5987 = vunpack.c.l.b16 %v4777
    %v5988 = vunpack.c.h.b16 %v4777
    %v5989 = vunpack.c.l.b16 %v4778
    %v5990 = vunpack.c.h.b16 %v4778
    %v5991 = vunpack.c.l.b16 %v4779
    %v5992 = vunpack.c.h.b16 %v4779
    %v5993 = vunpack.c.l.b16 %v4780
    %v5994 = vunpack.c.h.b16 %v4780
    %v5995 = vunpack.c.l.b16 %v4781
    %v5996 = vunpack.c.h.b16 %v4781
    %v5997 = vunpack.c.l.b16 %v4782
    %v5998 = vunpack.c.h.b16 %v4782
    %v5999 = vunpack.c.l.b16 %v4783
    %v6000 = vunpack.c.h.b16 %v4783
    %v6001 = vunpack.c.l.b16 %v4784
    %v6002 = vunpack.c.h.b16 %v4784
    %v6003 = vunpack.c.l.b16 %v4785
    %v6004 = vunpack.c.h.b16 %v4785
    %v6005 = vunpack.c.l.b16 %v4786
    %v6006 = vunpack.c.h.b16 %v4786
    %v6007 = vunpack.c.l.b16 %v4787
    %v6008 = vunpack.c.h.b16 %v4787
    %v6009 = vunpack.c.l.b16 %v4788
    %v6010 = vunpack.c.h.b16 %v4788
    %v6011 = vunpack.c.l.b16 %v4789
    %v6012 = vunpack.c.h.b16 %v4789
    %v6013 = vunpack.c.l.b16 %v4790
    %v6014 = vunpack.c.h.b16 %v4790
    %v6015 = vunpack.c.l.b16 %v4791
    %v6016 = vunpack.c.h.b16 %v4791
    %v6017 = vunpack.c.l.b16 %v4792
    %v6018 = vunpack.c.h.b16 %v4792
    %v6019 = vunpack.c.l.b16 %v4793
    %v6020 = vunpack.c.h.b16 %v4793
    %v6021 = vunpack.c.l.b16 %v4794
    %v6022 = vunpack.c.h.b16 %v4794
    %v6023 = vunpack.c.l.b16 %v4795
    %v6024 = vunpack.c.h.b16 %v4795
    %v6025 = vunpack.c.l.b16 %v4796
    %v6026 = vunpack.c.h.b16 %v4796
    %v6027 = vunpack.c.l.b16 %v4797
    %v6028 = vunpack.c.h.b16 %v4797
    %v6029 = vunpack.c.l.b16 %v4798
    %v6030 = vunpack.c.h.b16 %v4798
    %v6031 = vunpack.c.l.b16 %v4799
    %v6032 = vunpack.c.h.b16 %v4799
    %v6033 = vunpack.c.l.b16 %v4800
    %v6034 = vunpack.c.h.b16 %v4800
    %v6035 = vunpack.c.l.b16 %v4801
    %v6036 = vunpack.c.h.b16 %v4801
    %v6037 = vunpack.c.l.b16 %v4802
    %v6038 = vunpack.c.h.b16 %v4802
    %v6039 = vunpack.c.l.b16 %v4803
    %v6040 = vunpack.c.h.b16 %v4803
    %v6041 = vunpack.c.l.b16 %v4804
    %v6042 = vunpack.c.h.b16 %v4804
    %v6043 = vunpack.c.l.b16 %v4805
    %v6044 = vunpack.c.h.b16 %v4805
    %v6045 = vunpack.c.l.b16 %v4806
    %v6046 = vunpack.c.h.b16 %v4806
    %v6047 = vunpack.c.l.b16 %v4807
    %v6048 = vunpack.c.h.b16 %v4807
    %v6049 = vunpack.c.l.b16 %v4808
    %v6050 = vunpack.c.h.b16 %v4808
    %v6051 = vunpack.c.l.b16 %v4809
    %v6052 = vunpack.c.h.b16 %v4809
    %v6053 = vunpack.c.l.b16 %v4810
    %v6054 = vunpack.c.h.b16 %v4810
    %v6055 = vunpack.c.l.b16 %v4811
    %v6056 = vunpack.c.h.b16 %v4811
    %v6057 = vunpack.c.l.b16 %v4812
    %v6058 = vunpack.c.h.b16 %v4812
    %v6059 = vunpack.c.l.b16 %v4813
    %v6060 = vunpack.c.h.b16 %v4813
    %v6061 = vunpack.c.l.b16 %v4814
    %v6062 = vunpack.c.h.b16 %v4814
    %v6063 = vunpack.c.l.b16 %v4815
    %v6064 = vunpack.c.h.b16 %v4815
    %v6065 = vunpack.c.l.b16 %v4816
    %v6066 = vunpack.c.h.b16 %v4816
    %v6067 = vunpack.c.l.b16 %v4817
    %v6068 = vunpack.c.h.b16 %v4817
    %v6069 = vunpack.c.l.b16 %v4818
    %v6070 = vunpack.c.h.b16 %v4818
    %v6071 = vunpack.c.l.b16 %v4819
    %v6072 = vunpack.c.h.b16 %v4819
    %v6073 = vunpack.c.l.b16 %v4820
    %v6074 = vunpack.c.h.b16 %v4820
    %v6075 = vunpack.c.l.b16 %v4821
    %v6076 = vunpack.c.h.b16 %v4821
    %v6077 = vunpack.c.l.b16 %v4822
    %v6078 = vunpack.c.h.b16 %v4822
    %v6079 = vunpack.c.l.b16 %v4823
    %v6080 = vunpack.c.h.b16 %v4823
    %v6081 = vunpack.c.l.b16 %v4824
    %v6082 = vunpack.c.h.b16 %v4824
    %v6083 = vunpack.c.l.b16 %v4825
    %v6084 = vunpack.c.h.b16 %v4825
    %v6085 = vunpack.c.l.b16 %v4826
    %v6086 = vunpack.c.h.b16 %v4826
    %v6087 = vunpack.c.l.b16 %v4827
    %v6088 = vunpack.c.h.b16 %v4827
    %v6089 = vunpack.c.l.b16 %v4828
    %v6090 = vunpack.c.h.b16 %v4828
    %v6091 = vunpack.c.l.b16 %v4829
    %v6092 = vunpack.c.h.b16 %v4829
    %v6093 = vunpack.c.l.b16 %v4830
    %v6094 = vunpack.c.h.b16 %v4830
    %v6095 = vunpack.c.l.b16 %v4831
    %v6096 = vunpack.c.h.b16 %v4831
    %v6097 = vunpack.c.l.b16 %v4832
    %v6098 = vunpack.c.h.b16 %v4832
    %v6099 = vunpack.c.l.b16 %v4833
    %v6100 = vunpack.c.h.b16 %v4833
    %v6101 = vunpack.c.l.b16 %v4834
    %v6102 = vunpack.c.h.b16 %v4834
    %v6103 = vunpack.c.l.b16 %v4835
    %v6104 = vunpack.c.h.b16 %v4835
    %v6105 = vunpack.c.l.b16 %v4836
    %v6106 = vunpack.c.h.b16 %v4836
    %v6107 = vunpack.c.l.b16 %v4837
    %v6108 = vunpack.c.h.b16 %v4837
    %v6109 = vunpack.c.l.b16 %v4838
    %v6110 = vunpack.c.h.b16 %v4838
    %v6111 = vunpack.c.l.b16 %v4839
    %v6112 = vunpack.c.h.b16 %v4839
    %v6113 = vunpack.c.l.b16 %v4840
    %v6114 = vunpack.c.h.b16 %v4840
    %v6115 = vunpack.c.l.b16 %v4841
    %v6116 = vunpack.c.h.b16 %v4841
    %v6117 = vunpack.c.l.b16 %v4842
    %v6118 = vunpack.c.h.b16 %v4842
    %v6119 = vunpack.c.l.b16 %v4843
    %v6120 = vunpack.c.h.b16 %v4843
    %v6121 = vunpack.c.l.b16 %v4844
    %v6122 = vunpack.c.h.b16 %v4844
    %v6123 = vunpack.c.l.b16 %v4845
    %v6124 = vunpack.c.h.b16 %v4845
    %v6125 = vunpack.c.l.b16 %v4846
    %v6126 = vunpack.c.h.b16 %v4846
    %v6127 = vunpack.c.l.b16 %v4847
    %v6128 = vunpack.c.h.b16 %v4847
    %v6129 = vunpack.c.l.b16 %v4848
    %v6130 = vunpack.c.h.b16 %v4848
    %v6131 = vunpack.c.l.b16 %v4849
    %v6132 = vunpack.c.h.b16 %v4849
    %v6133 = vunpack.c.l.b16 %v4850
    %v6134 = vunpack.c.h.b16 %v4850
    %v6135 = vunpack.c.l.b16 %v4851
    %v6136 = vunpack.c.h.b16 %v4851
    %v6137 = vunpack.c.l.b16 %v4852
    %v6138 = vunpack.c.h.b16 %v4852
    %v6139 = vunpack.c.l.b16 %v4853
    %v6140 = vunpack.c.h.b16 %v4853
    %v6141 = vunpack.c.l.b16 %v4854
    %v6142 = vunpack.c.h.b16 %v4854
    %v6143 = vunpack.c.l.b16 %v4855
    %v6144 = vunpack.c.h.b16 %v4855
    %v6145 = vunpack.c.l.b16 %v4856
    %v6146 = vunpack.c.h.b16 %v4856
    %v6147 = vunpack.c.l.b16 %v4857
    %v6148 = vunpack.c.h.b16 %v4857
    %v6149 = vunpack.c.l.b16 %v4858
    %v6150 = vunpack.c.h.b16 %v4858
    %v6151 = vunpack.c.l.b16 %v4859
    %v6152 = vunpack.c.h.b16 %v4859
    %v6153 = vunpack.c.l.b16 %v4860
    %v6154 = vunpack.c.h.b16 %v4860
    %v6155 = vunpack.c.l.b16 %v4861
    %v6156 = vunpack.c.h.b16 %v4861
    %v6157 = vunpack.c.l.b16 %v4862
    %v6158 = vunpack.c.h.b16 %v4862
    %v6159 = vunpack.c.l.b16 %v4863
    %v6160 = vunpack.c.h.b16 %v4863
    %v6161 = vunpack.c.l.b16 %v4864
    %v6162 = vunpack.c.h.b16 %v4864
    %v6163 = vunpack.c.l.b16 %v4865
    %v6164 = vunpack.c.h.b16 %v4865
    %v6165 = vunpack.c.l.b16 %v4866
    %v6166 = vunpack.c.h.b16 %v4866
    %v6167 = vunpack.c.l.b16 %v4867
    %v6168 = vunpack.c.h.b16 %v4867
    %v6169 = vunpack.c.l.b16 %v4868
    %v6170 = vunpack.c.h.b16 %v4868
    %v6171 = vunpack.c.l.b16 %v4869
    %v6172 = vunpack.c.h.b16 %v4869
    %v6173 = vunpack.c.l.b16 %v4870
    %v6174 = vunpack.c.h.b16 %v4870
    %v6175 = vunpack.c.l.b16 %v4871
    %v6176 = vunpack.c.h.b16 %v4871
    %v6177 = vunpack.c.l.b16 %v4872
    %v6178 = vunpack.c.h.b16 %v4872
    %v6179 = vunpack.c.l.b16 %v4873
    %v6180 = vunpack.c.h.b16 %v4873
    %v6181 = vunpack.c.l.b16 %v4874
    %v6182 = vunpack.c.h.b16 %v4874
    %v6183 = vunpack.c.l.b16 %v4875
    %v6184 = vunpack.c.h.b16 %v4875
    %v6185 = vunpack.c.l.b16 %v4876
    %v6186 = vunpack.c.h.b16 %v4876
    %v6187 = vunpack.c.l.b16 %v4877
    %v6188 = vunpack.c.h.b16 %v4877
    %v6189 = vunpack.c.l.b16 %v4878
    %v6190 = vunpack.c.h.b16 %v4878
    %v6191 = vunpack.c.l.b16 %v4879
    %v6192 = vunpack.c.h.b16 %v4879
    %v6193 = vunpack.c.l.b16 %v4880
    %v6194 = vunpack.c.h.b16 %v4880
    %v6195 = vunpack.c.l.b16 %v4881
    %v6196 = vunpack.c.h.b16 %v4881
    %v6197 = vunpack.c.l.b16 %v4882
    %v6198 = vunpack.c.h.b16 %v4882
    %v6199 = vunpack.c.l.b16 %v4883
    %v6200 = vunpack.c.h.b16 %v4883
    %v6201 = vunpack.c.l.b16 %v4884
    %v6202 = vunpack.c.h.b16 %v4884
    %v6203 = vunpack.c.l.b16 %v4885
    %v6204 = vunpack.c.h.b16 %v4885
    %v6205 = vunpack.c.l.b16 %v4886
    %v6206 = vunpack.c.h.b16 %v4886
    %v6207 = vunpack.c.l.b16 %v4887
    %v6208 = vunpack.c.h.b16 %v4887
    %v6209 = vunpack.c.l.b16 %v4888
    %v6210 = vunpack.c.h.b16 %v4888
    %v6211 = vunpack.c.l.b16 %v4889
    %v6212 = vunpack.c.h.b16 %v4889
    %v6213 = vunpack.c.l.b16 %v4890
    %v6214 = vunpack.c.h.b16 %v4890
    %v6215 = vunpack.c.l.b16 %v4891
    %v6216 = vunpack.c.h.b16 %v4891
    %v6217 = vunpack.c.l.b16 %v4892
    %v6218 = vunpack.c.h.b16 %v4892
    %v6219 = vunpack.c.l.b16 %v4893
    %v6220 = vunpack.c.h.b16 %v4893
    %v6221 = vunpack.c.l.b16 %v4894
    %v6222 = vunpack.c.h.b16 %v4894
    %v6223 = vunpack.c.l.b16 %v4895
    %v6224 = vunpack.c.h.b16 %v4895
    %v6225 = vunpack.c.l.b16 %v4896
    %v6226 = vunpack.c.h.b16 %v4896
    %v6227 = vunpack.c.l.b16 %v4897
    %v6228 = vunpack.c.h.b16 %v4897
    %v6229 = vunpack.c.l.b16 %v4898
    %v6230 = vunpack.c.h.b16 %v4898
    %v6231 = vunpack.c.l.b16 %v4899
    %v6232 = vunpack.c.h.b16 %v4899
    %v6233 = vunpack.c.l.b16 %v4900
    %v6234 = vunpack.c.h.b16 %v4900
    %v6235 = vunpack.c.l.b16 %v4901
    %v6236 = vunpack.c.h.b16 %v4901
    %v6237 = vunpack.c.l.b16 %v4902
    %v6238 = vunpack.c.h.b16 %v4902
    %v6239 = vunpack.c.l.b16 %v4903
    %v6240 = vunpack.c.h.b16 %v4903
    %v6241 = vunpack.c.l.b16 %v4904
    %v6242 = vunpack.c.h.b16 %v4904
    %v6243 = vunpack.c.l.b16 %v4905
    %v6244 = vunpack.c.h.b16 %v4905
    %v6245 = vunpack.c.l.b16 %v4906
    %v6246 = vunpack.c.h.b16 %v4906
    %v6247 = vunpack.c.l.b16 %v4907
    %v6248 = vunpack.c.h.b16 %v4907
    %v6249 = vunpack.c.l.b16 %v4908
    %v6250 = vunpack.c.h.b16 %v4908
    %v6251 = vunpack.c.l.b16 %v4909
    %v6252 = vunpack.c.h.b16 %v4909
    %v6253 = vunpack.c.l.b16 %v4910
    %v6254 = vunpack.c.h.b16 %v4910
    %v6255 = vunpack.c.l.b16 %v4911
    %v6256 = vunpack.c.h.b16 %v4911
    %v6257 = vunpack.c.l.b16 %v4912
    %v6258 = vunpack.c.h.b16 %v4912
    %v6259 = vunpack.c.l.b16 %v4913
    %v6260 = vunpack.c.h.b16 %v4913
    %v6261 = vunpack.c.l.b16 %v4914
    %v6262 = vunpack.c.h.b16 %v4914
    %v6263 = vunpack.c.l.b16 %v4915
    %v6264 = vunpack.c.h.b16 %v4915
    %v6265 = vunpack.c.l.b16 %v4916
    %v6266 = vunpack.c.h.b16 %v4916
    %v6267 = vunpack.c.l.b16 %v4917
    %v6268 = vunpack.c.h.b16 %v4917
    %v6269 = vunpack.c.l.b16 %v4918
    %v6270 = vunpack.c.h.b16 %v4918
    %v6271 = vunpack.c.l.b16 %v4919
    %v6272 = vunpack.c.h.b16 %v4919
    %v6273 = vunpack.c.l.b16 %v4920
    %v6274 = vunpack.c.h.b16 %v4920
    %v6275 = vunpack.c.l.b16 %v4921
    %v6276 = vunpack.c.h.b16 %v4921
    %v6277 = vunpack.c.l.b16 %v4922
    %v6278 = vunpack.c.h.b16 %v4922
    %v6279 = vunpack.c.l.b16 %v4923
    %v6280 = vunpack.c.h.b16 %v4923
    %v6281 = vunpack.c.l.b16 %v4924
    %v6282 = vunpack.c.h.b16 %v4924
    %v6283 = vunpack.c.l.b16 %v4925
    %v6284 = vunpack.c.h.b16 %v4925
    %v6285 = vunpack.c.l.b16 %v4926
    %v6286 = vunpack.c.h.b16 %v4926
    %v6287 = vunpack.c.l.b16 %v4927
    %v6288 = vunpack.c.h.b16 %v4927
    %v6289 = vunpack.c.l.b16 %v4928
    %v6290 = vunpack.c.h.b16 %v4928
    %v6291 = vunpack.c.l.b16 %v4929
    %v6292 = vunpack.c.h.b16 %v4929
    %v6293 = vunpack.c.l.b16 %v4930
    %v6294 = vunpack.c.h.b16 %v4930
    %v6295 = vunpack.c.l.b16 %v4931
    %v6296 = vunpack.c.h.b16 %v4931
    %v6297 = vunpack.c.l.b16 %v4932
    %v6298 = vunpack.c.h.b16 %v4932
    %v6299 = vunpack.c.l.b16 %v4933
    %v6300 = vunpack.c.h.b16 %v4933
    %v6301 = vunpack.c.l.b16 %v4934
    %v6302 = vunpack.c.h.b16 %v4934
    %v6303 = vunpack.c.l.b16 %v4935
    %v6304 = vunpack.c.h.b16 %v4935
    %v6305 = vunpack.c.l.b16 %v4936
    %v6306 = vunpack.c.h.b16 %v4936
    %v6307 = vunpack.c.l.b16 %v4937
    %v6308 = vunpack.c.h.b16 %v4937
    %v6309 = vunpack.c.l.b16 %v4938
    %v6310 = vunpack.c.h.b16 %v4938
    %v6311 = vunpack.c.l.b16 %v4939
    %v6312 = vunpack.c.h.b16 %v4939
    %v6313 = vunpack.c.l.b16 %v4940
    %v6314 = vunpack.c.h.b16 %v4940
    %v6315 = vunpack.c.l.b16 %v4941
    %v6316 = vunpack.c.h.b16 %v4941
    %v6317 = vunpack.c.l.b16 %v4942
    %v6318 = vunpack.c.h.b16 %v4942
    %v6319 = vunpack.c.l.b16 %v4943
    %v6320 = vunpack.c.h.b16 %v4943
    %v6321 = vunpack.c.l.b16 %v4944
    %v6322 = vunpack.c.h.b16 %v4944
    %v6323 = vunpack.c.l.b16 %v4945
    %v6324 = vunpack.c.h.b16 %v4945
    %v6325 = vunpack.c.l.b16 %v4946
    %v6326 = vunpack.c.h.b16 %v4946
    %v6327 = vunpack.c.l.b16 %v4947
    %v6328 = vunpack.c.h.b16 %v4947
    %v6329 = vunpack.c.l.b16 %v4948
    %v6330 = vunpack.c.h.b16 %v4948
    %v6331 = vunpack.c.l.b16 %v4949
    %v6332 = vunpack.c.h.b16 %v4949
    %v6333 = vunpack.c.l.b16 %v4950
    %v6334 = vunpack.c.h.b16 %v4950
    %v6335 = vunpack.c.l.b16 %v4951
    %v6336 = vunpack.c.h.b16 %v4951
    %v6337 = vunpack.c.l.b16 %v4952
    %v6338 = vunpack.c.h.b16 %v4952
    %v6339 = vunpack.c.l.b16 %v4953
    %v6340 = vunpack.c.h.b16 %v4953
    %v6341 = vunpack.c.l.b16 %v4954
    %v6342 = vunpack.c.h.b16 %v4954
    %v6343 = vunpack.c.l.b16 %v4955
    %v6344 = vunpack.c.h.b16 %v4955
    %v6345 = vunpack.c.l.b16 %v4956
    %v6346 = vunpack.c.h.b16 %v4956
    %v6347 = vunpack.c.l.b16 %v4957
    %v6348 = vunpack.c.h.b16 %v4957
    %v6349 = vunpack.c.l.b16 %v4958
    %v6350 = vunpack.c.h.b16 %v4958
    %v6351 = vunpack.c.l.b16 %v4959
    %v6352 = vunpack.c.h.b16 %v4959
    %v6353 = vunpack.c.l.b16 %v4960
    %v6354 = vunpack.c.h.b16 %v4960
    %v6355 = vunpack.c.l.b16 %v4961
    %v6356 = vunpack.c.h.b16 %v4961
    %v6357 = vunpack.c.l.b16 %v4962
    %v6358 = vunpack.c.h.b16 %v4962
    %v6359 = vunpack.c.l.b16 %v4963
    %v6360 = vunpack.c.h.b16 %v4963
    %v6361 = vunpack.c.l.b16 %v4964
    %v6362 = vunpack.c.h.b16 %v4964
    %v6363 = vunpack.c.l.b16 %v4965
    %v6364 = vunpack.c.h.b16 %v4965
    %v6365 = vunpack.c.l.b16 %v4966
    %v6366 = vunpack.c.h.b16 %v4966
    %v6367 = vunpack.c.l.b16 %v4967
    %v6368 = vunpack.c.h.b16 %v4967
    %v6369 = vunpack.c.l.b16 %v4968
    %v6370 = vunpack.c.h.b16 %v4968
    %v6371 = vunpack.c.l.b16 %v4969
    %v6372 = vunpack.c.h.b16 %v4969
    %v6373 = vunpack.c.l.b16 %v4970
    %v6374 = vunpack.c.h.b16 %v4970
    %v6375 = vunpack.c.l.b16 %v4971
    %v6376 = vunpack.c.h.b16 %v4971
    %v6377 = vunpack.c.l.b16 %v4972
    %v6378 = vunpack.c.h.b16 %v4972
    %v6379 = vunpack.c.l.b16 %v4973
    %v6380 = vunpack.c.h.b16 %v4973
    %v6381 = vunpack.c.l.b16 %v4974
    %v6382 = vunpack.c.h.b16 %v4974
    %v6383 = vunpack.c.l.b16 %v4975
    %v6384 = vunpack.c.h.b16 %v4975
    %v6385 = vunpack.c.l.b16 %v4976
    %v6386 = vunpack.c.h.b16 %v4976
    %v6387 = vunpack.c.l.b16 %v4977
    %v6388 = vunpack.c.h.b16 %v4977
    %v6389 = vunpack.c.l.b16 %v4978
    %v6390 = vunpack.c.h.b16 %v4978
    %v6391 = vunpack.c.l.b16 %v4979
    %v6392 = vunpack.c.h.b16 %v4979
    %v6393 = vunpack.c.l.b16 %v4980
    %v6394 = vunpack.c.h.b16 %v4980
    %v6395 = vunpack.c.l.b16 %v4981
    %v6396 = vunpack.c.h.b16 %v4981
    %v6397 = vunpack.c.l.b16 %v4982
    %v6398 = vunpack.c.h.b16 %v4982
    %v6399 = vunpack.c.l.b16 %v4983
    %v6400 = vunpack.c.h.b16 %v4983
    %v6401 = vunpack.c.l.b16 %v4984
    %v6402 = vunpack.c.h.b16 %v4984
    %v6403 = vunpack.c.l.b16 %v4985
    %v6404 = vunpack.c.h.b16 %v4985
    %v6405 = vunpack.c.l.b16 %v4986
    %v6406 = vunpack.c.h.b16 %v4986
    %v6407 = vunpack.c.l.b16 %v4987
    %v6408 = vunpack.c.h.b16 %v4987
    %v6409 = vunpack.c.l.b16 %v4988
    %v6410 = vunpack.c.h.b16 %v4988
    %v6411 = vunpack.c.l.b16 %v4989
    %v6412 = vunpack.c.h.b16 %v4989
    %v6413 = vunpack.c.l.b16 %v4990
    %v6414 = vunpack.c.h.b16 %v4990
    %v6415 = vunpack.c.l.b16 %v4991
    %v6416 = vunpack.c.h.b16 %v4991
    %v6417 = vunpack.c.l.b16 %v4992
    %v6418 = vunpack.c.h.b16 %v4992
    %v6419 = vunpack.c.l.b16 %v4993
    %v6420 = vunpack.c.h.b16 %v4993
    %v6421 = vunpack.c.l.b16 %v4994
    %v6422 = vunpack.c.h.b16 %v4994
    %v6423 = vunpack.c.l.b16 %v4995
    %v6424 = vunpack.c.h.b16 %v4995
    %v6425 = vunpack.c.l.b16 %v4996
    %v6426 = vunpack.c.h.b16 %v4996
    %v6427 = vunpack.c.l.b16 %v4997
    %v6428 = vunpack.c.h.b16 %v4997
    %v6429 = vunpack.c.l.b16 %v4998
    %v6430 = vunpack.c.h.b16 %v4998
    %v6431 = vunpack.c.l.b16 %v4999
    %v6432 = vunpack.c.h.b16 %v4999
    %v6433 = vunpack.c.l.b16 %v5000
    %v6434 = vunpack.c.h.b16 %v5000
    %v6435 = vunpack.c.l.b16 %v5001
    %v6436 = vunpack.c.h.b16 %v5001
    %v6437 = vunpack.c.l.b16 %v5002
    %v6438 = vunpack.c.h.b16 %v5002
    %v6439 = vunpack.c.l.b16 %v5003
    %v6440 = vunpack.c.h.b16 %v5003
    %v6441 = vunpack.c.l.b16 %v5004
    %v6442 = vunpack.c.h.b16 %v5004
    %v6443 = vunpack.c.l.b16 %v5005
    %v6444 = vunpack.c.h.b16 %v5005
    %v6445 = vunpack.c.l.b16 %v5006
    %v6446 = vunpack.c.h.b16 %v5006
    %v6447 = vunpack.c.l.b16 %v5007
    %v6448 = vunpack.c.h.b16 %v5007
    %v6449 = vunpack.c.l.b16 %v5008
    %v6450 = vunpack.c.h.b16 %v5008
    %v6451 = vunpack.c.l.b16 %v5009
    %v6452 = vunpack.c.h.b16 %v5009
    %v6453 = vunpack.c.l.b16 %v5010
    %v6454 = vunpack.c.h.b16 %v5010
    %v6455 = vunpack.c.l.b16 %v5011
    %v6456 = vunpack.c.h.b16 %v5011
    %v6457 = vunpack.c.l.b16 %v5012
    %v6458 = vunpack.c.h.b16 %v5012
    %v6459 = vunpack.c.l.b16 %v5013
    %v6460 = vunpack.c.h.b16 %v5013
    %v6461 = vunpack.c.l.b16 %v5014
    %v6462 = vunpack.c.h.b16 %v5014
    %v6463 = vunpack.c.l.b16 %v5015
    %v6464 = vunpack.c.h.b16 %v5015
    %v6465 = vunpack.c.l.b16 %v5016
    %v6466 = vunpack.c.h.b16 %v5016
    %v6467 = vunpack.c.l.b16 %v5017
    %v6468 = vunpack.c.h.b16 %v5017
    %v6469 = vunpack.c.l.b16 %v5018
    %v6470 = vunpack.c.h.b16 %v5018
    %v6471 = vunpack.c.l.b16 %v5019
    %v6472 = vunpack.c.h.b16 %v5019
    %v6473 = vunpack.c.l.b16 %v5020
    %v6474 = vunpack.c.h.b16 %v5020
    %v6475 = vunpack.c.l.b16 %v5021
    %v6476 = vunpack.c.h.b16 %v5021
    %v6477 = vunpack.c.l.b16 %v5022
    %v6478 = vunpack.c.h.b16 %v5022
    %v6479 = vunpack.c.l.b16 %v5023
    %v6480 = vunpack.c.h.b16 %v5023
    %v6481 = vunpack.c.l.b16 %v5024
    %v6482 = vunpack.c.h.b16 %v5024
    %v6483 = vunpack.c.l.b16 %v5025
    %v6484 = vunpack.c.h.b16 %v5025
    %v6485 = vunpack.c.l.b16 %v5026
    %v6486 = vunpack.c.h.b16 %v5026
    %v6487 = vunpack.c.l.b16 %v5027
    %v6488 = vunpack.c.h.b16 %v5027
    %v6489 = vunpack.c.l.b16 %v5028
    %v6490 = vunpack.c.h.b16 %v5028
    %v6491 = vunpack.c.l.b16 %v5029
    %v6492 = vunpack.c.h.b16 %v5029
    %v6493 = vunpack.c.l.b16 %v5030
    %v6494 = vunpack.c.h.b16 %v5030
    %v6495 = vunpack.c.l.b16 %v5031
    %v6496 = vunpack.c.h.b16 %v5031
    %v6497 = vunpack.c.l.b16 %v5032
    %v6498 = vunpack.c.h.b16 %v5032
    %v6499 = vunpack.c.l.b16 %v5033
    %v6500 = vunpack.c.h.b16 %v5033
    %v6501 = vunpack.c.l.b16 %v5034
    %v6502 = vunpack.c.h.b16 %v5034
    %v6503 = vunpack.c.l.b16 %v5035
    %v6504 = vunpack.c.h.b16 %v5035
    %v6505 = vunpack.c.l.b16 %v5036
    %v6506 = vunpack.c.h.b16 %v5036
    %v6507 = vunpack.c.l.b16 %v5037
    %v6508 = vunpack.c.h.b16 %v5037
    %v6509 = vunpack.c.l.b16 %v5038
    %v6510 = vunpack.c.h.b16 %v5038
    %v6511 = vunpack.c.l.b16 %v5039
    %v6512 = vunpack.c.h.b16 %v5039
    %v6513 = vunpack.c.l.b16 %v5040
    %v6514 = vunpack.c.h.b16 %v5040
    %v6515 = vunpack.c.l.b16 %v5041
    %v6516 = vunpack.c.h.b16 %v5041
    %v6517 = vunpack.c.l.b16 %v5042
    %v6518 = vunpack.c.h.b16 %v5042
    %v6519 = vunpack.c.l.b16 %v5043
    %v6520 = vunpack.c.h.b16 %v5043
    %v6521 = vunpack.c.l.b16 %v5044
    %v6522 = vunpack.c.h.b16 %v5044
    %v6523 = vunpack.c.l.b16 %v5045
    %v6524 = vunpack.c.h.b16 %v5045
    %v6525 = vunpack.c.l.b16 %v5046
    %v6526 = vunpack.c.h.b16 %v5046
    %v6527 = vunpack.c.l.b16 %v5047
    %v6528 = vunpack.c.h.b16 %v5047
    %v6529 = vunpack.c.l.b16 %v5048
    %v6530 = vunpack.c.h.b16 %v5048
    %v6531 = vunpack.c.l.b16 %v5049
    %v6532 = vunpack.c.h.b16 %v5049
    %v6533 = vunpack.c.l.b16 %v5050
    %v6534 = vunpack.c.h.b16 %v5050
    %v6535 = vunpack.c.l.b16 %v5051
    %v6536 = vunpack.c.h.b16 %v5051
    %v6537 = vunpack.c.l.b16 %v5052
    %v6538 = vunpack.c.h.b16 %v5052
    %v6539 = vunpack.c.l.b16 %v5053
    %v6540 = vunpack.c.h.b16 %v5053
    %v6541 = vunpack.c.l.b16 %v5054
    %v6542 = vunpack.c.h.b16 %v5054
    %v6543 = vunpack.c.l.b16 %v5055
    %v6544 = vunpack.c.h.b16 %v5055
    %v6545 = vunpack.c.l.b16 %v5056
    %v6546 = vunpack.c.h.b16 %v5056
    %v6547 = vunpack.c.l.b16 %v5057
    %v6548 = vunpack.c.h.b16 %v5057
    %v6549 = vunpack.c.l.b16 %v5058
    %v6550 = vunpack.c.h.b16 %v5058
    %v6551 = vunpack.c.l.b16 %v5059
    %v6552 = vunpack.c.h.b16 %v5059
    %v6553 = vunpack.c.l.b16 %v5060
    %v6554 = vunpack.c.h.b16 %v5060
    %v6555 = vunpack.c.l.b16 %v5061
    %v6556 = vunpack.c.h.b16 %v5061
    %v6557 = vunpack.c.l.b16 %v5062
    %v6558 = vunpack.c.h.b16 %v5062
    %v6559 = vunpack.c.l.b16 %v5063
    %v6560 = vunpack.c.h.b16 %v5063
    %v6561 = vunpack.c.l.b16 %v5064
    %v6562 = vunpack.c.h.b16 %v5064
    %v6563 = vunpack.c.l.b16 %v5065
    %v6564 = vunpack.c.h.b16 %v5065
    %v6565 = vunpack.c.l.b16 %v5066
    %v6566 = vunpack.c.h.b16 %v5066
    %v6567 = vunpack.c.l.b16 %v5067
    %v6568 = vunpack.c.h.b16 %v5067
    %v6569 = vunpack.c.l.b16 %v5068
    %v6570 = vunpack.c.h.b16 %v5068
    %v6571 = vunpack.c.l.b16 %v5069
    %v6572 = vunpack.c.h.b16 %v5069
    %v6573 = vunpack.c.l.b16 %v5070
    %v6574 = vunpack.c.h.b16 %v5070
    %v6575 = vunpack.c.l.b16 %v5071
    %v6576 = vunpack.c.h.b16 %v5071
    %v6577 = vunpack.c.l.b16 %v5072
    %v6578 = vunpack.c.h.b16 %v5072
    %v6579 = vunpack.c.l.b16 %v5073
    %v6580 = vunpack.c.h.b16 %v5073
    %v6581 = vunpack.c.l.b16 %v5074
    %v6582 = vunpack.c.h.b16 %v5074
    %v6583 = vunpack.c.l.b16 %v5075
    %v6584 = vunpack.c.h.b16 %v5075
    %v6585 = vunpack.c.l.b16 %v5076
    %v6586 = vunpack.c.h.b16 %v5076
    %v6587 = vunpack.c.l.b16 %v5077
    %v6588 = vunpack.c.h.b16 %v5077
    %v6589 = vunpack.c.l.b16 %v5078
    %v6590 = vunpack.c.h.b16 %v5078
    %v6591 = vunpack.c.l.b16 %v5079
    %v6592 = vunpack.c.h.b16 %v5079
    %v6593 = vunpack.c.l.b16 %v5080
    %v6594 = vunpack.c.h.b16 %v5080
    %v6595 = vunpack.c.l.b16 %v5081
    %v6596 = vunpack.c.h.b16 %v5081
    %v6597 = vunpack.c.l.b16 %v5082
    %v6598 = vunpack.c.h.b16 %v5082
    %v6599 = vunpack.c.l.b16 %v5083
    %v6600 = vunpack.c.h.b16 %v5083
    %v6601 = vunpack.c.l.b16 %v5084
    %v6602 = vunpack.c.h.b16 %v5084
    %v6603 = vunpack.c.l.b16 %v5085
    %v6604 = vunpack.c.h.b16 %v5085
    %v6605 = vunpack.c.l.b16 %v5086
    %v6606 = vunpack.c.h.b16 %v5086
    %v6607 = vunpack.c.l.b16 %v5087
    %v6608 = vunpack.c.h.b16 %v5087
    %v6609 = vunpack.c.l.b16 %v5088
    %v6610 = vunpack.c.h.b16 %v5088
    %v6611 = vunpack.c.l.b16 %v5089
    %v6612 = vunpack.c.h.b16 %v5089
    %v6613 = vunpack.c.l.b16 %v5090
    %v6614 = vunpack.c.h.b16 %v5090
    %v6615 = vunpack.c.l.b16 %v5091
    %v6616 = vunpack.c.h.b16 %v5091
    %v6617 = vunpack.c.l.b16 %v5092
    %v6618 = vunpack.c.h.b16 %v5092
    %v6619 = vunpack.c.l.b16 %v5093
    %v6620 = vunpack.c.h.b16 %v5093
    %v6621 = vunpack.c.l.b16 %v5094
    %v6622 = vunpack.c.h.b16 %v5094
    %v6623 = vunpack.c.l.b16 %v5095
    %v6624 = vunpack.c.h.b16 %v5095
    %v6625 = vunpack.c.l.b16 %v5096
    %v6626 = vunpack.c.h.b16 %v5096
    %v6627 = vunpack.c.l.b16 %v5097
    %v6628 = vunpack.c.h.b16 %v5097
    %v6629 = vunpack.c.l.b16 %v5098
    %v6630 = vunpack.c.h.b16 %v5098
    %v6631 = vunpack.c.l.b16 %v5099
    %v6632 = vunpack.c.h.b16 %v5099
    %v6633 = vunpack.c.l.b16 %v5100
    %v6634 = vunpack.c.h.b16 %v5100
    %v6635 = vunpack.c.l.b16 %v5101
    %v6636 = vunpack.c.h.b16 %v5101
    %v6637 = vunpack.c.l.b16 %v5102
    %v6638 = vunpack.c.h.b16 %v5102
    %v6639 = vunpack.c.l.b16 %v5103
    %v6640 = vunpack.c.h.b16 %v5103
    %v6641 = vunpack.c.l.b16 %v5104
    %v6642 = vunpack.c.h.b16 %v5104
    %v6643 = vunpack.c.l.b16 %v5105
    %v6644 = vunpack.c.h.b16 %v5105
    %v6645 = vunpack.c.l.b16 %v5106
    %v6646 = vunpack.c.h.b16 %v5106
    %v6647 = vunpack.c.l.b16 %v5107
    %v6648 = vunpack.c.h.b16 %v5107
    %v6649 = vunpack.c.l.b16 %v5108
    %v6650 = vunpack.c.h.b16 %v5108
    %v6651 = vunpack.c.l.b16 %v5109
    %v6652 = vunpack.c.h.b16 %v5109
    %v6653 = vunpack.c.l.b16 %v5110
    %v6654 = vunpack.c.h.b16 %v5110
    %v6655 = vunpack.c.l.b16 %v5111
    %v6656 = vunpack.c.h.b16 %v5111
    %v6657 = vunpack.c.l.b16 %v5112
    %v6658 = vunpack.c.h.b16 %v5112
    %v6659 = vunpack.c.l.b16 %v5113
    %v6660 = vunpack.c.h.b16 %v5113
    %v6661 = vunpack.c.l.b16 %v5114
    %v6662 = vunpack.c.h.b16 %v5114
    %v6663 = vunpack.c.l.b16 %v5115
    %v6664 = vunpack.c.h.b16 %v5115
    %v6665 = vunpack.c.l.b16 %v5116
    %v6666 = vunpack.c.h.b16 %v5116
    %v6667 = vunpack.c.l.b16 %v5117
    %v6668 = vunpack.c.h.b16 %v5117
    %v6669 = vunpack.c.l.b16 %v5118
    %v6670 = vunpack.c.h.b16 %v5118
    %v6671 = vunpack.c.l.b16 %v5119
    %v6672 = vunpack.c.h.b16 %v5119
    %v6673 = vunpack.c.l.b16 %v5120
    %v6674 = vunpack.c.h.b16 %v5120
    %v6675 = vunpack.c.l.b16 %v5121
    %v6676 = vunpack.c.h.b16 %v5121
    %v6677 = vunpack.c.l.b16 %v5122
    %v6678 = vunpack.c.h.b16 %v5122
    %v6679 = vunpack.c.l.b16 %v5123
    %v6680 = vunpack.c.h.b16 %v5123
    %v6681 = vunpack.c.l.b16 %v5124
    %v6682 = vunpack.c.h.b16 %v5124
    %v6683 = vunpack.c.l.b16 %v5125
    %v6684 = vunpack.c.h.b16 %v5125
    %v6685 = vunpack.c.l.b16 %v5126
    %v6686 = vunpack.c.h.b16 %v5126
    %v6687 = vunpack.c.l.b16 %v5127
    %v6688 = vunpack.c.h.b16 %v5127
    %v6689 = vunpack.c.l.b16 %v5128
    %v6690 = vunpack.c.h.b16 %v5128
    %v6691 = vunpack.c.l.b16 %v5129
    %v6692 = vunpack.c.h.b16 %v5129
    %v6693 = vunpack.c.l.b16 %v5130
    %v6694 = vunpack.c.h.b16 %v5130
    %v6695 = vunpack.c.l.b16 %v5131
    %v6696 = vunpack.c.h.b16 %v5131
    %v6697 = vunpack.c.l.b16 %v5132
    %v6698 = vunpack.c.h.b16 %v5132
    %v6699 = vunpack.c.l.b16 %v5133
    %v6700 = vunpack.c.h.b16 %v5133
    %v6701 = vunpack.c.l.b16 %v5134
    %v6702 = vunpack.c.h.b16 %v5134
    %v6703 = vunpack.c.l.b16 %v5135
    %v6704 = vunpack.c.h.b16 %v5135
    %v6705 = vunpack.c.l.b16 %v5136
    %v6706 = vunpack.c.h.b16 %v5136
    %v6707 = vunpack.c.l.b16 %v5137
    %v6708 = vunpack.c.h.b16 %v5137
    %v6709 = vunpack.c.l.b16 %v5138
    %v6710 = vunpack.c.h.b16 %v5138
    %v6711 = vunpack.c.l.b16 %v5139
    %v6712 = vunpack.c.h.b16 %v5139
    %v6713 = vunpack.c.l.b16 %v5140
    %v6714 = vunpack.c.h.b16 %v5140
    %v6715 = vunpack.c.l.b16 %v5141
    %v6716 = vunpack.c.h.b16 %v5141
    %v6717 = vunpack.c.l.b16 %v5142
    %v6718 = vunpack.c.h.b16 %v5142
    %v6719 = vunpack.c.l.b16 %v5143
    %v6720 = vunpack.c.h.b16 %v5143
    %v6721 = vunpack.c.l.b16 %v5144
    %v6722 = vunpack.c.h.b16 %v5144
    %v6723 = vpack.c.b16 %v5707, %v5699
    %v6724 = vpack.c.b16 %v5708, %v5700
    %v6725 = vpack.c.b16 %v5709, %v5701
    %v6726 = vpack.c.b16 %v5710, %v5702
    %v6727 = vpack.c.b16 %v5711, %v5703
    %v6728 = vpack.c.b16 %v5712, %v5704
    %v6729 = vpack.c.b16 %v5713, %v5705
    %v6730 = vpack.c.b16 %v5714, %v5706
    %v6731 = vpack.c.b16 %v5723, %v5715
    %v6732 = vpack.c.b16 %v5724, %v5716
    %v6733 = vpack.c.b16 %v5725, %v5717
    %v6734 = vpack.c.b16 %v5726, %v5718
    %v6735 = vpack.c.b16 %v5727, %v5719
    %v6736 = vpack.c.b16 %v5728, %v5720
    %v6737 = vpack.c.b16 %v5729, %v5721
    %v6738 = vpack.c.b16 %v5730, %v5722
    %v6739 = vpack.c.b16 %v5739, %v5731
    %v6740 = vpack.c.b16 %v5740, %v5732
    %v6741 = vpack.c.b16 %v5741, %v5733
    %v6742 = vpack.c.b16 %v5742, %v5734
    %v6743 = vpack.c.b16 %v5743, %v5735
    %v6744 = vpack.c.b16 %v5744, %v5736
    %v6745 = vpack.c.b16 %v5745, %v5737
    %v6746 = vpack.c.b16 %v5746, %v5738
    %v6747 = vpack.c.b16 %v5755, %v5747
    %v6748 = vpack.c.b16 %v5756, %v5748
    %v6749 = vpack.c.b16 %v5757, %v5749
    %v6750 = vpack.c.b16 %v5758, %v5750
    %v6751 = vpack.c.b16 %v5759, %v5751
    %v6752 = vpack.c.b16 %v5760, %v5752
    %v6753 = vpack.c.b16 %v5761, %v5753
    %v6754 = vpack.c.b16 %v5762, %v5754
    %v6755 = vpack.c.b16 %v5771, %v5763
    %v6756 = vpack.c.b16 %v5772, %v5764
    %v6757 = vpack.c.b16 %v5773, %v5765
    %v6758 = vpack.c.b16 %v5774, %v5766
    %v6759 = vpack.c.b16 %v5775, %v5767
    %v6760 = vpack.c.b16 %v5776, %v5768
    %v6761 = vpack.c.b16 %v5777, %v5769
    %v6762 = vpack.c.b16 %v5778, %v5770
    %v6763 = vpack.c.b16 %v5787, %v5779
    %v6764 = vpack.c.b16 %v5788, %v5780
    %v6765 = vpack.c.b16 %v5789, %v5781
    %v6766 = vpack.c.b16 %v5790, %v5782
    %v6767 = vpack.c.b16 %v5791, %v5783
    %v6768 = vpack.c.b16 %v5792, %v5784
    %v6769 = vpack.c.b16 %v5793, %v5785
    %v6770 = vpack.c.b16 %v5794, %v5786
    %v6771 = vpack.c.b16 %v5803, %v5795
    %v6772 = vpack.c.b16 %v5804, %v5796
    %v6773 = vpack.c.b16 %v5805, %v5797
    %v6774 = vpack.c.b16 %v5806, %v5798
    %v6775 = vpack.c.b16 %v5807, %v5799
    %v6776 = vpack.c.b16 %v5808, %v5800
    %v6777 = vpack.c.b16 %v5809, %v5801
    %v6778 = vpack.c.b16 %v5810, %v5802
    %v6779 = vpack.c.b16 %v5819, %v5811
    %v6780 = vpack.c.b16 %v5820, %v5812
    %v6781 = vpack.c.b16 %v5821, %v5813
    %v6782 = vpack.c.b16 %v5822, %v5814
    %v6783 = vpack.c.b16 %v5823, %v5815
    %v6784 = vpack.c.b16 %v5824, %v5816
    %v6785 = vpack.c.b16 %v5825, %v5817
    %v6786 = vpack.c.b16 %v5826, %v5818
    %v6787 = vpack.c.b16 %v5835, %v5827
    %v6788 = vpack.c.b16 %v5836, %v5828
    %v6789 = vpack.c.b16 %v5837, %v5829
    %v6790 = vpack.c.b16 %v5838, %v5830
    %v6791 = vpack.c.b16 %v5839, %v5831
    %v6792 = vpack.c.b16 %v5840, %v5832
    %v6793 = vpack.c.b16 %v5841, %v5833
    %v6794 = vpack.c.b16 %v5842, %v5834
    %v6795 = vpack.c.b16 %v5851, %v5843
    %v6796 = vpack.c.b16 %v5852, %v5844
    %v6797 = vpack.c.b16 %v5853, %v5845
    %v6798 = vpack.c.b16 %v5854, %v5846
    %v6799 = vpack.c.b16 %v5855, %v5847
    %v6800 = vpack.c.b16 %v5856, %v5848
    %v6801 = vpack.c.b16 %v5857, %v5849
    %v6802 = vpack.c.b16 %v5858, %v5850
    %v6803 = vpack.c.b16 %v5867, %v5859
    %v6804 = vpack.c.b16 %v5868, %v5860
    %v6805 = vpack.c.b16 %v5869, %v5861
    %v6806 = vpack.c.b16 %v5870, %v5862
    %v6807 = vpack.c.b16 %v5871, %v5863
    %v6808 = vpack.c.b16 %v5872, %v5864
    %v6809 = vpack.c.b16 %v5873, %v5865
    %v6810 = vpack.c.b16 %v5874, %v5866
    %v6811 = vpack.c.b16 %v5883, %v5875
    %v6812 = vpack.c.b16 %v5884, %v5876
    %v6813 = vpack.c.b16 %v5885, %v5877
    %v6814 = vpack.c.b16 %v5886, %v5878
    %v6815 = vpack.c.b16 %v5887, %v5879
    %v6816 = vpack.c.b16 %v5888, %v5880
    %v6817 = vpack.c.b16 %v5889, %v5881
    %v6818 = vpack.c.b16 %v5890, %v5882
    %v6819 = vpack.c.b16 %v5899, %v5891
    %v6820 = vpack.c.b16 %v5900, %v5892
    %v6821 = vpack.c.b16 %v5901, %v5893
    %v6822 = vpack.c.b16 %v5902, %v5894
    %v6823 = vpack.c.b16 %v5903, %v5895
    %v6824 = vpack.c.b16 %v5904, %v5896
    %v6825 = vpack.c.b16 %v5905, %v5897
    %v6826 = vpack.c.b16 %v5906, %v5898
    %v6827 = vpack.c.b16 %v5915, %v5907
    %v6828 = vpack.c.b16 %v5916, %v5908
    %v6829 = vpack.c.b16 %v5917, %v5909
    %v6830 = vpack.c.b16 %v5918, %v5910
    %v6831 = vpack.c.b16 %v5919, %v5911
    %v6832 = vpack.c.b16 %v5920, %v5912
    %v6833 = vpack.c.b16 %v5921, %v5913
    %v6834 = vpack.c.b16 %v5922, %v5914
    %v6835 = vpack.c.b16 %v5931, %v5923
    %v6836 = vpack.c.b16 %v5932, %v5924
    %v6837 = vpack.c.b16 %v5933, %v5925
    %v6838 = vpack.c.b16 %v5934, %v5926
    %v6839 = vpack.c.b16 %v5935, %v5927
    %v6840 = vpack.c.b16 %v5936, %v5928
    %v6841 = vpack.c.b16 %v5937, %v5929
    %v6842 = vpack.c.b16 %v5938, %v5930
    %v6843 = vpack.c.b16 %v5947, %v5939
    %v6844 = vpack.c.b16 %v5948, %v5940
    %v6845 = vpack.c.b16 %v5949, %v5941
    %v6846 = vpack.c.b16 %v5950, %v5942
    %v6847 = vpack.c.b16 %v5951, %v5943
    %v6848 = vpack.c.b16 %v5952, %v5944
    %v6849 = vpack.c.b16 %v5953, %v5945
    %v6850 = vpack.c.b16 %v5954, %v5946
    %v6851 = vpack.c.b16 %v5963, %v5955
    %v6852 = vpack.c.b16 %v5964, %v5956
    %v6853 = vpack.c.b16 %v5965, %v5957
    %v6854 = vpack.c.b16 %v5966, %v5958
    %v6855 = vpack.c.b16 %v5967, %v5959
    %v6856 = vpack.c.b16 %v5968, %v5960
    %v6857 = vpack.c.b16 %v5969, %v5961
    %v6858 = vpack.c.b16 %v5970, %v5962
    %v6859 = vpack.c.b16 %v5979, %v5971
    %v6860 = vpack.c.b16 %v5980, %v5972
    %v6861 = vpack.c.b16 %v5981, %v5973
    %v6862 = vpack.c.b16 %v5982, %v5974
    %v6863 = vpack.c.b16 %v5983, %v5975
    %v6864 = vpack.c.b16 %v5984, %v5976
    %v6865 = vpack.c.b16 %v5985, %v5977
    %v6866 = vpack.c.b16 %v5986, %v5978
    %v6867 = vpack.c.b16 %v5995, %v5987
    %v6868 = vpack.c.b16 %v5996, %v5988
    %v6869 = vpack.c.b16 %v5997, %v5989
    %v6870 = vpack.c.b16 %v5998, %v5990
    %v6871 = vpack.c.b16 %v5999, %v5991
    %v6872 = vpack.c.b16 %v6000, %v5992
    %v6873 = vpack.c.b16 %v6001, %v5993
    %v6874 = vpack.c.b16 %v6002, %v5994
    %v6875 = vpack.c.b16 %v6011, %v6003
    %v6876 = vpack.c.b16 %v6012, %v6004
    %v6877 = vpack.c.b16 %v6013, %v6005
    %v6878 = vpack.c.b16 %v6014, %v6006
    %v6879 = vpack.c.b16 %v6015, %v6007
    %v6880 = vpack.c.b16 %v6016, %v6008
    %v6881 = vpack.c.b16 %v6017, %v6009
    %v6882 = vpack.c.b16 %v6018, %v6010
    %v6883 = vpack.c.b16 %v6027, %v6019
    %v6884 = vpack.c.b16 %v6028, %v6020
    %v6885 = vpack.c.b16 %v6029, %v6021
    %v6886 = vpack.c.b16 %v6030, %v6022
    %v6887 = vpack.c.b16 %v6031, %v6023
    %v6888 = vpack.c.b16 %v6032, %v6024
    %v6889 = vpack.c.b16 %v6033, %v6025
    %v6890 = vpack.c.b16 %v6034, %v6026
    %v6891 = vpack.c.b16 %v6043, %v6035
    %v6892 = vpack.c.b16 %v6044, %v6036
    %v6893 = vpack.c.b16 %v6045, %v6037
    %v6894 = vpack.c.b16 %v6046, %v6038
    %v6895 = vpack.c.b16 %v6047, %v6039
    %v6896 = vpack.c.b16 %v6048, %v6040
    %v6897 = vpack.c.b16 %v6049, %v6041
    %v6898 = vpack.c.b16 %v6050, %v6042
    %v6899 = vpack.c.b16 %v6059, %v6051
    %v6900 = vpack.c.b16 %v6060, %v6052
    %v6901 = vpack.c.b16 %v6061, %v6053
    %v6902 = vpack.c.b16 %v6062, %v6054
    %v6903 = vpack.c.b16 %v6063, %v6055
    %v6904 = vpack.c.b16 %v6064, %v6056
    %v6905 = vpack.c.b16 %v6065, %v6057
    %v6906 = vpack.c.b16 %v6066, %v6058
    %v6907 = vpack.c.b16 %v6075, %v6067
    %v6908 = vpack.c.b16 %v6076, %v6068
    %v6909 = vpack.c.b16 %v6077, %v6069
    %v6910 = vpack.c.b16 %v6078, %v6070
    %v6911 = vpack.c.b16 %v6079, %v6071
    %v6912 = vpack.c.b16 %v6080, %v6072
    %v6913 = vpack.c.b16 %v6081, %v6073
    %v6914 = vpack.c.b16 %v6082, %v6074
    %v6915 = vpack.c.b16 %v6091, %v6083
    %v6916 = vpack.c.b16 %v6092, %v6084
    %v6917 = vpack.c.b16 %v6093, %v6085
    %v6918 = vpack.c.b16 %v6094, %v6086
    %v6919 = vpack.c.b16 %v6095, %v6087
    %v6920 = vpack.c.b16 %v6096, %v6088
    %v6921 = vpack.c.b16 %v6097, %v6089
    %v6922 = vpack.c.b16 %v6098, %v6090
    %v6923 = vpack.c.b16 %v6107, %v6099
    %v6924 = vpack.c.b16 %v6108, %v6100
    %v6925 = vpack.c.b16 %v6109, %v6101
    %v6926 = vpack.c.b16 %v6110, %v6102
    %v6927 = vpack.c.b16 %v6111, %v6103
    %v6928 = vpack.c.b16 %v6112, %v6104
    %v6929 = vpack.c.b16 %v6113, %v6105
    %v6930 = vpack.c.b16 %v6114, %v6106
    %v6931 = vpack.c.b16 %v6123, %v6115
    %v6932 = vpack.c.b16 %v6124, %v6116
    %v6933 = vpack.c.b16 %v6125, %v6117
    %v6934 = vpack.c.b16 %v6126, %v6118
    %v6935 = vpack.c.b16 %v6127, %v6119
    %v6936 = vpack.c.b16 %v6128, %v6120
    %v6937 = vpack.c.b16 %v6129, %v6121
    %v6938 = vpack.c.b16 %v6130, %v6122
    %v6939 = vpack.c.b16 %v6139, %v6131
    %v6940 = vpack.c.b16 %v6140, %v6132
    %v6941 = vpack.c.b16 %v6141, %v6133
    %v6942 = vpack.c.b16 %v6142, %v6134
    %v6943 = vpack.c.b16 %v6143, %v6135
    %v6944 = vpack.c.b16 %v6144, %v6136
    %v6945 = vpack.c.b16 %v6145, %v6137
    %v6946 = vpack.c.b16 %v6146, %v6138
    %v6947 = vpack.c.b16 %v6155, %v6147
    %v6948 = vpack.c.b16 %v6156, %v6148
    %v6949 = vpack.c.b16 %v6157, %v6149
    %v6950 = vpack.c.b16 %v6158, %v6150
    %v6951 = vpack.c.b16 %v6159, %v6151
    %v6952 = vpack.c.b16 %v6160, %v6152
    %v6953 = vpack.c.b16 %v6161, %v6153
    %v6954 = vpack.c.b16 %v6162, %v6154
    %v6955 = vpack.c.b16 %v6171, %v6163
    %v6956 = vpack.c.b16 %v6172, %v6164
    %v6957 = vpack.c.b16 %v6173, %v6165
    %v6958 = vpack.c.b16 %v6174, %v6166
    %v6959 = vpack.c.b16 %v6175, %v6167
    %v6960 = vpack.c.b16 %v6176, %v6168
    %v6961 = vpack.c.b16 %v6177, %v6169
    %v6962 = vpack.c.b16 %v6178, %v6170
    %v6963 = vpack.c.b16 %v6187, %v6179
    %v6964 = vpack.c.b16 %v6188, %v6180
    %v6965 = vpack.c.b16 %v6189, %v6181
    %v6966 = vpack.c.b16 %v6190, %v6182
    %v6967 = vpack.c.b16 %v6191, %v6183
    %v6968 = vpack.c.b16 %v6192, %v6184
    %v6969 = vpack.c.b16 %v6193, %v6185
    %v6970 = vpack.c.b16 %v6194, %v6186
    %v6971 = vpack.c.b16 %v6203, %v6195
    %v6972 = vpack.c.b16 %v6204, %v6196
    %v6973 = vpack.c.b16 %v6205, %v6197
    %v6974 = vpack.c.b16 %v6206, %v6198
    %v6975 = vpack.c.b16 %v6207, %v6199
    %v6976 = vpack.c.b16 %v6208, %v6200
    %v6977 = vpack.c.b16 %v6209, %v6201
    %v6978 = vpack.c.b16 %v6210, %v6202
    %v6979 = vpack.c.b16 %v6219, %v6211
    %v6980 = vpack.c.b16 %v6220, %v6212
    %v6981 = vpack.c.b16 %v6221, %v6213
    %v6982 = vpack.c.b16 %v6222, %v6214
    %v6983 = vpack.c.b16 %v6223, %v6215
    %v6984 = vpack.c.b16 %v6224, %v6216
    %v6985 = vpack.c.b16 %v6225, %v6217
    %v6986 = vpack.c.b16 %v6226, %v6218
    %v6987 = vpack.c.b16 %v6235, %v6227
    %v6988 = vpack.c.b16 %v6236, %v6228
    %v6989 = vpack.c.b16 %v6237, %v6229
    %v6990 = vpack.c.b16 %v6238, %v6230
    %v6991 = vpack.c.b16 %v6239, %v6231
    %v6992 = vpack.c.b16 %v6240, %v6232
    %v6993 = vpack.c.b16 %v6241, %v6233
    %v6994 = vpack.c.b16 %v6242, %v6234
    %v6995 = vpack.c.b16 %v6251, %v6243
    %v6996 = vpack.c.b16 %v6252, %v6244
    %v6997 = vpack.c.b16 %v6253, %v6245
    %v6998 = vpack.c.b16 %v6254, %v6246
    %v6999 = vpack.c.b16 %v6255, %v6247
    %v7000 = vpack.c.b16 %v6256, %v6248
    %v7001 = vpack.c.b16 %v6257, %v6249
    %v7002 = vpack.c.b16 %v6258, %v6250
    %v7003 = vpack.c.b16 %v6267, %v6259
    %v7004 = vpack.c.b16 %v6268, %v6260
    %v7005 = vpack.c.b16 %v6269, %v6261
    %v7006 = vpack.c.b16 %v6270, %v6262
    %v7007 = vpack.c.b16 %v6271, %v6263
    %v7008 = vpack.c.b16 %v6272, %v6264
    %v7009 = vpack.c.b16 %v6273, %v6265
    %v7010 = vpack.c.b16 %v6274, %v6266
    %v7011 = vpack.c.b16 %v6283, %v6275
    %v7012 = vpack.c.b16 %v6284, %v6276
    %v7013 = vpack.c.b16 %v6285, %v6277
    %v7014 = vpack.c.b16 %v6286, %v6278
    %v7015 = vpack.c.b16 %v6287, %v6279
    %v7016 = vpack.c.b16 %v6288, %v6280
    %v7017 = vpack.c.b16 %v6289, %v6281
    %v7018 = vpack.c.b16 %v6290, %v6282
    %v7019 = vpack.c.b16 %v6299, %v6291
    %v7020 = vpack.c.b16 %v6300, %v6292
    %v7021 = vpack.c.b16 %v6301, %v6293
    %v7022 = vpack.c.b16 %v6302, %v6294
    %v7023 = vpack.c.b16 %v6303, %v6295
    %v7024 = vpack.c.b16 %v6304, %v6296
    %v7025 = vpack.c.b16 %v6305, %v6297
    %v7026 = vpack.c.b16 %v6306, %v6298
    %v7027 = vpack.c.b16 %v6315, %v6307
    %v7028 = vpack.c.b16 %v6316, %v6308
    %v7029 = vpack.c.b16 %v6317, %v6309
    %v7030 = vpack.c.b16 %v6318, %v6310
    %v7031 = vpack.c.b16 %v6319, %v6311
    %v7032 = vpack.c.b16 %v6320, %v6312
    %v7033 = vpack.c.b16 %v6321, %v6313
    %v7034 = vpack.c.b16 %v6322, %v6314
    %v7035 = vpack.c.b16 %v6331, %v6323
    %v7036 = vpack.c.b16 %v6332, %v6324
    %v7037 = vpack.c.b16 %v6333, %v6325
    %v7038 = vpack.c.b16 %v6334, %v6326
    %v7039 = vpack.c.b16 %v6335, %v6327
    %v7040 = vpack.c.b16 %v6336, %v6328
    %v7041 = vpack.c.b16 %v6337, %v6329
    %v7042 = vpack.c.b16 %v6338, %v6330
    %v7043 = vpack.c.b16 %v6347, %v6339
    %v7044 = vpack.c.b16 %v6348, %v6340
    %v7045 = vpack.c.b16 %v6349, %v6341
    %v7046 = vpack.c.b16 %v6350, %v6342
    %v7047 = vpack.c.b16 %v6351, %v6343
    %v7048 = vpack.c.b16 %v6352, %v6344
    %v7049 = vpack.c.b16 %v6353, %v6345
    %v7050 = vpack.c.b16 %v6354, %v6346
    %v7051 = vpack.c.b16 %v6363, %v6355
    %v7052 = vpack.c.b16 %v6364, %v6356
    %v7053 = vpack.c.b16 %v6365, %v6357
    %v7054 = vpack.c.b16 %v6366, %v6358
    %v7055 = vpack.c.b16 %v6367, %v6359
    %v7056 = vpack.c.b16 %v6368, %v6360
    %v7057 = vpack.c.b16 %v6369, %v6361
    %v7058 = vpack.c.b16 %v6370, %v6362
    %v7059 = vpack.c.b16 %v6379, %v6371
    %v7060 = vpack.c.b16 %v6380, %v6372
    %v7061 = vpack.c.b16 %v6381, %v6373
    %v7062 = vpack.c.b16 %v6382, %v6374
    %v7063 = vpack.c.b16 %v6383, %v6375
    %v7064 = vpack.c.b16 %v6384, %v6376
    %v7065 = vpack.c.b16 %v6385, %v6377
    %v7066 = vpack.c.b16 %v6386, %v6378
    %v7067 = vpack.c.b16 %v6395, %v6387
    %v7068 = vpack.c.b16 %v6396, %v6388
    %v7069 = vpack.c.b16 %v6397, %v6389
    %v7070 = vpack.c.b16 %v6398, %v6390
    %v7071 = vpack.c.b16 %v6399, %v6391
    %v7072 = vpack.c.b16 %v6400, %v6392
    %v7073 = vpack.c.b16 %v6401, %v6393
    %v7074 = vpack.c.b16 %v6402, %v6394
    %v7075 = vpack.c.b16 %v6411, %v6403
    %v7076 = vpack.c.b16 %v6412, %v6404
    %v7077 = vpack.c.b16 %v6413, %v6405
    %v7078 = vpack.c.b16 %v6414, %v6406
    %v7079 = vpack.c.b16 %v6415, %v6407
    %v7080 = vpack.c.b16 %v6416, %v6408
    %v7081 = vpack.c.b16 %v6417, %v6409
    %v7082 = vpack.c.b16 %v6418, %v6410
    %v7083 = vpack.c.b16 %v6427, %v6419
    %v7084 = vpack.c.b16 %v6428, %v6420
    %v7085 = vpack.c.b16 %v6429, %v6421
    %v7086 = vpack.c.b16 %v6430, %v6422
    %v7087 = vpack.c.b16 %v6431, %v6423
    %v7088 = vpack.c.b16 %v6432, %v6424
    %v7089 = vpack.c.b16 %v6433, %v6425
    %v7090 = vpack.c.b16 %v6434, %v6426
    %v7091 = vpack.c.b16 %v6443, %v6435
    %v7092 = vpack.c.b16 %v6444, %v6436
    %v7093 = vpack.c.b16 %v6445, %v6437
    %v7094 = vpack.c.b16 %v6446, %v6438
    %v7095 = vpack.c.b16 %v6447, %v6439
    %v7096 = vpack.c.b16 %v6448, %v6440
    %v7097 = vpack.c.b16 %v6449, %v6441
    %v7098 = vpack.c.b16 %v6450, %v6442
    %v7099 = vpack.c.b16 %v6459, %v6451
    %v7100 = vpack.c.b16 %v6460, %v6452
    %v7101 = vpack.c.b16 %v6461, %v6453
    %v7102 = vpack.c.b16 %v6462, %v6454
    %v7103 = vpack.c.b16 %v6463, %v6455
    %v7104 = vpack.c.b16 %v6464, %v6456
    %v7105 = vpack.c.b16 %v6465, %v6457
    %v7106 = vpack.c.b16 %v6466, %v6458
    %v7107 = vpack.c.b16 %v6475, %v6467
    %v7108 = vpack.c.b16 %v6476, %v6468
    %v7109 = vpack.c.b16 %v6477, %v6469
    %v7110 = vpack.c.b16 %v6478, %v6470
    %v7111 = vpack.c.b16 %v6479, %v6471
    %v7112 = vpack.c.b16 %v6480, %v6472
    %v7113 = vpack.c.b16 %v6481, %v6473
    %v7114 = vpack.c.b16 %v6482, %v6474
    %v7115 = vpack.c.b16 %v6491, %v6483
    %v7116 = vpack.c.b16 %v6492, %v6484
    %v7117 = vpack.c.b16 %v6493, %v6485
    %v7118 = vpack.c.b16 %v6494, %v6486
    %v7119 = vpack.c.b16 %v6495, %v6487
    %v7120 = vpack.c.b16 %v6496, %v6488
    %v7121 = vpack.c.b16 %v6497, %v6489
    %v7122 = vpack.c.b16 %v6498, %v6490
    %v7123 = vpack.c.b16 %v6507, %v6499
    %v7124 = vpack.c.b16 %v6508, %v6500
    %v7125 = vpack.c.b16 %v6509, %v6501
    %v7126 = vpack.c.b16 %v6510, %v6502
    %v7127 = vpack.c.b16 %v6511, %v6503
    %v7128 = vpack.c.b16 %v6512, %v6504
    %v7129 = vpack.c.b16 %v6513, %v6505
    %v7130 = vpack.c.b16 %v6514, %v6506
    %v7131 = vpack.c.b16 %v6523, %v6515
    %v7132 = vpack.c.b16 %v6524, %v6516
    %v7133 = vpack.c.b16 %v6525, %v6517
    %v7134 = vpack.c.b16 %v6526, %v6518
    %v7135 = vpack.c.b16 %v6527, %v6519
    %v7136 = vpack.c.b16 %v6528, %v6520
    %v7137 = vpack.c.b16 %v6529, %v6521
    %v7138 = vpack.c.b16 %v6530, %v6522
    %v7139 = vpack.c.b16 %v6539, %v6531
    %v7140 = vpack.c.b16 %v6540, %v6532
    %v7141 = vpack.c.b16 %v6541, %v6533
    %v7142 = vpack.c.b16 %v6542, %v6534
    %v7143 = vpack.c.b16 %v6543, %v6535
    %v7144 = vpack.c.b16 %v6544, %v6536
    %v7145 = vpack.c.b16 %v6545, %v6537
    %v7146 = vpack.c.b16 %v6546, %v6538
    %v7147 = vpack.c.b16 %v6555, %v6547
    %v7148 = vpack.c.b16 %v6556, %v6548
    %v7149 = vpack.c.b16 %v6557, %v6549
    %v7150 = vpack.c.b16 %v6558, %v6550
    %v7151 = vpack.c.b16 %v6559, %v6551
    %v7152 = vpack.c.b16 %v6560, %v6552
    %v7153 = vpack.c.b16 %v6561, %v6553
    %v7154 = vpack.c.b16 %v6562, %v6554
    %v7155 = vpack.c.b16 %v6571, %v6563
    %v7156 = vpack.c.b16 %v6572, %v6564
    %v7157 = vpack.c.b16 %v6573, %v6565
    %v7158 = vpack.c.b16 %v6574, %v6566
    %v7159 = vpack.c.b16 %v6575, %v6567
    %v7160 = vpack.c.b16 %v6576, %v6568
    %v7161 = vpack.c.b16 %v6577, %v6569
    %v7162 = vpack.c.b16 %v6578, %v6570
    %v7163 = vpack.c.b16 %v6587, %v6579
    %v7164 = vpack.c.b16 %v6588, %v6580
    %v7165 = vpack.c.b16 %v6589, %v6581
    %v7166 = vpack.c.b16 %v6590, %v6582
    %v7167 = vpack.c.b16 %v6591, %v6583
    %v7168 = vpack.c.b16 %v6592, %v6584
    %v7169 = vpack.c.b16 %v6593, %v6585
    %v7170 = vpack.c.b16 %v6594, %v6586
    %v7171 = vpack.c.b16 %v6603, %v6595
    %v7172 = vpack.c.b16 %v6604, %v6596
    %v7173 = vpack.c.b16 %v6605, %v6597
    %v7174 = vpack.c.b16 %v6606, %v6598
    %v7175 = vpack.c.b16 %v6607, %v6599
    %v7176 = vpack.c.b16 %v6608, %v6600
    %v7177 = vpack.c.b16 %v6609, %v6601
    %v7178 = vpack.c.b16 %v6610, %v6602
    %v7179 = vpack.c.b16 %v6619, %v6611
    %v7180 = vpack.c.b16 %v6620, %v6612
    %v7181 = vpack.c.b16 %v6621, %v6613
    %v7182 = vpack.c.b16 %v6622, %v6614
    %v7183 = vpack.c.b16 %v6623, %v6615
    %v7184 = vpack.c.b16 %v6624, %v6616
    %v7185 = vpack.c.b16 %v6625, %v6617
    %v7186 = vpack.c.b16 %v6626, %v6618
    %v7187 = vpack.c.b16 %v6635, %v6627
    %v7188 = vpack.c.b16 %v6636, %v6628
    %v7189 = vpack.c.b16 %v6637, %v6629
    %v7190 = vpack.c.b16 %v6638, %v6630
    %v7191 = vpack.c.b16 %v6639, %v6631
    %v7192 = vpack.c.b16 %v6640, %v6632
    %v7193 = vpack.c.b16 %v6641, %v6633
    %v7194 = vpack.c.b16 %v6642, %v6634
    %v7195 = vpack.c.b16 %v6651, %v6643
    %v7196 = vpack.c.b16 %v6652, %v6644
    %v7197 = vpack.c.b16 %v6653, %v6645
    %v7198 = vpack.c.b16 %v6654, %v6646
    %v7199 = vpack.c.b16 %v6655, %v6647
    %v7200 = vpack.c.b16 %v6656, %v6648
    %v7201 = vpack.c.b16 %v6657, %v6649
    %v7202 = vpack.c.b16 %v6658, %v6650
    %v7203 = vpack.c.b16 %v6667, %v6659
    %v7204 = vpack.c.b16 %v6668, %v6660
    %v7205 = vpack.c.b16 %v6669, %v6661
    %v7206 = vpack.c.b16 %v6670, %v6662
    %v7207 = vpack.c.b16 %v6671, %v6663
    %v7208 = vpack.c.b16 %v6672, %v6664
    %v7209 = vpack.c.b16 %v6673, %v6665
    %v7210 = vpack.c.b16 %v6674, %v6666
    %v7211 = vpack.c.b16 %v6683, %v6675
    %v7212 = vpack.c.b16 %v6684, %v6676
    %v7213 = vpack.c.b16 %v6685, %v6677
    %v7214 = vpack.c.b16 %v6686, %v6678
    %v7215 = vpack.c.b16 %v6687, %v6679
    %v7216 = vpack.c.b16 %v6688, %v6680
    %v7217 = vpack.c.b16 %v6689, %v6681
    %v7218 = vpack.c.b16 %v6690, %v6682
    %v7219 = vpack.c.b16 %v6699, %v6691
    %v7220 = vpack.c.b16 %v6700, %v6692
    %v7221 = vpack.c.b16 %v6701, %v6693
    %v7222 = vpack.c.b16 %v6702, %v6694
    %v7223 = vpack.c.b16 %v6703, %v6695
    %v7224 = vpack.c.b16 %v6704, %v6696
    %v7225 = vpack.c.b16 %v6705, %v6697
    %v7226 = vpack.c.b16 %v6706, %v6698
    %v7227 = vpack.c.b16 %v6715, %v6707
    %v7228 = vpack.c.b16 %v6716, %v6708
    %v7229 = vpack.c.b16 %v6717, %v6709
    %v7230 = vpack.c.b16 %v6718, %v6710
    %v7231 = vpack.c.b16 %v6719, %v6711
    %v7232 = vpack.c.b16 %v6720, %v6712
    %v7233 = vpack.c.b16 %v6721, %v6713
    %v7234 = vpack.c.b16 %v6722, %v6714
    %7747 = vmatprep.subr.bf16.mxu0 %v6724
    %7748 = vmatpush1.bf16.msra.mxu0 %v6723
    %7749 = vmatprep.subr.bf16.mxu0 %v6732
    %7750 = vmatpush1.bf16.msra.mxu0 %v6731
    %7751 = vmatprep.subr.bf16.mxu0 %v6740
    %7752 = vmatpush1.bf16.msra.mxu0 %v6739
    %7753 = vmatprep.subr.bf16.mxu0 %v6748
    %7754 = vmatpush1.bf16.msra.mxu0 %v6747
    %7755 = vmatprep.subr.bf16.mxu0 %v6756
    %7756 = vmatpush1.bf16.msra.mxu0 %v6755
    %7757 = vmatprep.subr.bf16.mxu0 %v6764
    %7758 = vmatpush1.bf16.msra.mxu0 %v6763
    %7759 = vmatprep.subr.bf16.mxu0 %v6772
    %7760 = vmatpush1.bf16.msra.mxu0 %v6771
    %7761 = vmatprep.subr.bf16.mxu0 %v6780
    %7762 = vmatpush1.bf16.msra.mxu0 %v6779
    %7763 = vmatprep.subr.bf16.mxu0 %v6788
    %7764 = vmatpush1.bf16.msra.mxu0 %v6787
    %7765 = vmatprep.subr.bf16.mxu0 %v6796
    %7766 = vmatpush1.bf16.msra.mxu0 %v6795
    %7767 = vmatprep.subr.bf16.mxu0 %v6804
    %7768 = vmatpush1.bf16.msra.mxu0 %v6803
    %7769 = vmatprep.subr.bf16.mxu0 %v6812
    %7770 = vmatpush1.bf16.msra.mxu0 %v6811
    %7771 = vmatprep.subr.bf16.mxu0 %v6820
    %7772 = vmatpush1.bf16.msra.mxu0 %v6819
    %7773 = vmatprep.subr.bf16.mxu0 %v6828
    %7774 = vmatpush1.bf16.msra.mxu0 %v6827
    %7775 = vmatprep.subr.bf16.mxu0 %v6836
    %7776 = vmatpush1.bf16.msra.mxu0 %v6835
    %7777 = vmatprep.subr.bf16.mxu0 %v6844
    %7778 = vmatpush1.bf16.msra.mxu0 %v6843
    %7779 = vmatprep.mubr.bf16.mxu0 %v4626
    %7780 = vmatmul.mubr.bf16.gmra.mrb[0].mxu0 %v4625
    %v7781 = vpop.f32.mrb[0].mxu0
    %v7782 = vadd.f32 %v5150, %v7781
    %v7783 = vpop.f32.mrb[0].mxu0
    %v7784 = vadd.f32 %v5154, %v7783
    %v7785 = vpop.f32.mrb[0].mxu0
    %v7786 = vpop.f32.mrb[0].mxu0
    %7787 = vdwg.mxu0
    %7788 = vmatprep.subr.bf16.mxu0 %v6852
    %7789 = vmatpush1.bf16.msra.mxu0 %v6851
    %7790 = vmatprep.subr.bf16.mxu0 %v6860
    %7791 = vmatpush1.bf16.msra.mxu0 %v6859
    %7792 = vmatprep.subr.bf16.mxu0 %v6868
    %7793 = vmatpush1.bf16.msra.mxu0 %v6867
    %7794 = vmatprep.subr.bf16.mxu0 %v6876
    %7795 = vmatpush1.bf16.msra.mxu0 %v6875
    %7796 = vmatprep.subr.bf16.mxu0 %v6884
    %7797 = vmatpush1.bf16.msra.mxu0 %v6883
    %7798 = vmatprep.subr.bf16.mxu0 %v6892
    %7799 = vmatpush1.bf16.msra.mxu0 %v6891
    %7800 = vmatprep.subr.bf16.mxu0 %v6900
    %7801 = vmatpush1.bf16.msra.mxu0 %v6899
    %7802 = vmatprep.subr.bf16.mxu0 %v6908
    %7803 = vmatpush1.bf16.msra.mxu0 %v6907
    %7804 = vmatprep.subr.bf16.mxu0 %v6916
    %7805 = vmatpush1.bf16.msra.mxu0 %v6915
    %7806 = vmatprep.subr.bf16.mxu0 %v6924
    %7807 = vmatpush1.bf16.msra.mxu0 %v6923
    %7808 = vmatprep.subr.bf16.mxu0 %v6932
    %7809 = vmatpush1.bf16.msra.mxu0 %v6931
    %7810 = vmatprep.subr.bf16.mxu0 %v6940
    %7811 = vmatpush1.bf16.msra.mxu0 %v6939
    %7812 = vmatprep.subr.bf16.mxu0 %v6948
    %7813 = vmatpush1.bf16.msra.mxu0 %v6947
    %7814 = vmatprep.subr.bf16.mxu0 %v6956
    %7815 = vmatpush1.bf16.msra.mxu0 %v6955
    %7816 = vmatprep.subr.bf16.mxu0 %v6964
    %7817 = vmatpush1.bf16.msra.mxu0 %v6963
    %7818 = vmatprep.subr.bf16.mxu0 %v6972
    %7819 = vmatpush1.bf16.msra.mxu0 %v6971
    %7820 = vmatprep.mubr.bf16.mxu0 %v4628
    %7821 = vmatmul.mubr.bf16.gmra.mrb[0].mxu0 %v4627
    %v7822 = vpop.f32.mrb[0].mxu0
    %v7823 = vadd.f32 %v7782, %v7822
    %v7824 = vpop.f32.mrb[0].mxu0
    %v7825 = vadd.f32 %v7784, %v7824
    %v7826 = vpop.f32.mrb[0].mxu0
    %v7827 = vpop.f32.mrb[0].mxu0
    %7828 = vdwg.mxu0
    %7829 = vmatprep.subr.bf16.mxu0 %v6980
    %7830 = vmatpush1.bf16.msra.mxu0 %v6979
    %7831 = vmatprep.subr.bf16.mxu0 %v6988
    %7832 = vmatpush1.bf16.msra.mxu0 %v6987
    %7833 = vmatprep.subr.bf16.mxu0 %v6996
    %7834 = vmatpush1.bf16.msra.mxu0 %v6995
    %7835 = vmatprep.subr.bf16.mxu0 %v7004
    %7836 = vmatpush1.bf16.msra.mxu0 %v7003
    %7837 = vmatprep.subr.bf16.mxu0 %v7012
    %7838 = vmatpush1.bf16.msra.mxu0 %v7011
    %7839 = vmatprep.subr.bf16.mxu0 %v7020
    %7840 = vmatpush1.bf16.msra.mxu0 %v7019
    %7841 = vmatprep.subr.bf16.mxu0 %v7028
    %7842 = vmatpush1.bf16.msra.mxu0 %v7027
    %7843 = vmatprep.subr.bf16.mxu0 %v7036
    %7844 = vmatpush1.bf16.msra.mxu0 %v7035
    %7845 = vmatprep.subr.bf16.mxu0 %v7044
    %7846 = vmatpush1.bf16.msra.mxu0 %v7043
    %7847 = vmatprep.subr.bf16.mxu0 %v7052
    %7848 = vmatpush1.bf16.msra.mxu0 %v7051
    %7849 = vmatprep.subr.bf16.mxu0 %v7060
    %7850 = vmatpush1.bf16.msra.mxu0 %v7059
    %7851 = vmatprep.subr.bf16.mxu0 %v7068
    %7852 = vmatpush1.bf16.msra.mxu0 %v7067
    %7853 = vmatprep.subr.bf16.mxu0 %v7076
    %7854 = vmatpush1.bf16.msra.mxu0 %v7075
    %7855 = vmatprep.subr.bf16.mxu0 %v7084
    %7856 = vmatpush1.bf16.msra.mxu0 %v7083
    %7857 = vmatprep.subr.bf16.mxu0 %v7092
    %7858 = vmatpush1.bf16.msra.mxu0 %v7091
    %7859 = vmatprep.subr.bf16.mxu0 %v7100
    %7860 = vmatpush1.bf16.msra.mxu0 %v7099
    %7861 = vmatprep.mubr.bf16.mxu0 %v4630
    %7862 = vmatmul.mubr.bf16.gmra.mrb[0].mxu0 %v4629
    %v7863 = vpop.f32.mrb[0].mxu0
    %v7864 = vadd.f32 %v7823, %v7863
    %v7865 = vpop.f32.mrb[0].mxu0
    %v7866 = vadd.f32 %v7825, %v7865
    %v7867 = vpop.f32.mrb[0].mxu0
    %v7868 = vpop.f32.mrb[0].mxu0
    %7869 = vdwg.mxu0
    %7870 = vmatprep.subr.bf16.mxu0 %v7108
    %7871 = vmatpush1.bf16.msra.mxu0 %v7107
    %7872 = vmatprep.subr.bf16.mxu0 %v7116
    %7873 = vmatpush1.bf16.msra.mxu0 %v7115
    %7874 = vmatprep.subr.bf16.mxu0 %v7124
    %7875 = vmatpush1.bf16.msra.mxu0 %v7123
    %7876 = vmatprep.subr.bf16.mxu0 %v7132
    %7877 = vmatpush1.bf16.msra.mxu0 %v7131
    %7878 = vmatprep.subr.bf16.mxu0 %v7140
    %7879 = vmatpush1.bf16.msra.mxu0 %v7139
    %7880 = vmatprep.subr.bf16.mxu0 %v7148
    %7881 = vmatpush1.bf16.msra.mxu0 %v7147
    %7882 = vmatprep.subr.bf16.mxu0 %v7156
    %7883 = vmatpush1.bf16.msra.mxu0 %v7155
    %7884 = vmatprep.subr.bf16.mxu0 %v7164
    %7885 = vmatpush1.bf16.msra.mxu0 %v7163
    %7886 = vmatprep.subr.bf16.mxu0 %v7172
    %7887 = vmatpush1.bf16.msra.mxu0 %v7171
    %7888 = vmatprep.subr.bf16.mxu0 %v7180
    %7889 = vmatpush1.bf16.msra.mxu0 %v7179
    %7890 = vmatprep.subr.bf16.mxu0 %v7188
    %7891 = vmatpush1.bf16.msra.mxu0 %v7187
    %7892 = vmatprep.subr.bf16.mxu0 %v7196
    %7893 = vmatpush1.bf16.msra.mxu0 %v7195
    %7894 = vmatprep.subr.bf16.mxu0 %v7204
    %7895 = vmatpush1.bf16.msra.mxu0 %v7203
    %7896 = vmatprep.subr.bf16.mxu0 %v7212
    %7897 = vmatpush1.bf16.msra.mxu0 %v7211
    %7898 = vmatprep.subr.bf16.mxu0 %v7220
    %7899 = vmatpush1.bf16.msra.mxu0 %v7219
    %7900 = vmatprep.subr.bf16.mxu0 %v7228
    %7901 = vmatpush1.bf16.msra.mxu0 %v7227
    %7902 = vmatprep.mubr.bf16.mxu0 %v4632
    %7903 = vmatmul.mubr.bf16.gmra.mrb[0].mxu0 %v4631
    %v7904 = vpop.f32.mrb[0].mxu0
    %v7905 = vadd.f32 %v7864, %v7904
    %v7906 = vpop.f32.mrb[0].mxu0
    %v7907 = vadd.f32 %v7866, %v7906
    %v7908 = vpop.f32.mrb[0].mxu0
    %v7909 = vpop.f32.mrb[0].mxu0
    %7910 = vdwg.mxu0
    %7911 = vmatprep.subr.bf16.mxu0 %v6726
    %7912 = vmatpush1.bf16.msra.mxu0 %v6725
    %7913 = vmatprep.subr.bf16.mxu0 %v6734
    %7914 = vmatpush1.bf16.msra.mxu0 %v6733
    %7915 = vmatprep.subr.bf16.mxu0 %v6742
    %7916 = vmatpush1.bf16.msra.mxu0 %v6741
    %7917 = vmatprep.subr.bf16.mxu0 %v6750
    %7918 = vmatpush1.bf16.msra.mxu0 %v6749
    %7919 = vmatprep.subr.bf16.mxu0 %v6758
    %7920 = vmatpush1.bf16.msra.mxu0 %v6757
    %7921 = vmatprep.subr.bf16.mxu0 %v6766
    %7922 = vmatpush1.bf16.msra.mxu0 %v6765
    %7923 = vmatprep.subr.bf16.mxu0 %v6774
    %7924 = vmatpush1.bf16.msra.mxu0 %v6773
    %7925 = vmatprep.subr.bf16.mxu0 %v6782
    %7926 = vmatpush1.bf16.msra.mxu0 %v6781
    %7927 = vmatprep.subr.bf16.mxu0 %v6790
    %7928 = vmatpush1.bf16.msra.mxu0 %v6789
    %7929 = vmatprep.subr.bf16.mxu0 %v6798
    %7930 = vmatpush1.bf16.msra.mxu0 %v6797
    %7931 = vmatprep.subr.bf16.mxu0 %v6806
    %7932 = vmatpush1.bf16.msra.mxu0 %v6805
    %7933 = vmatprep.subr.bf16.mxu0 %v6814
    %7934 = vmatpush1.bf16.msra.mxu0 %v6813
    %7935 = vmatprep.subr.bf16.mxu0 %v6822
    %7936 = vmatpush1.bf16.msra.mxu0 %v6821
    %7937 = vmatprep.subr.bf16.mxu0 %v6830
    %7938 = vmatpush1.bf16.msra.mxu0 %v6829
    %7939 = vmatprep.subr.bf16.mxu0 %v6838
    %7940 = vmatpush1.bf16.msra.mxu0 %v6837
    %7941 = vmatprep.subr.bf16.mxu0 %v6846
    %7942 = vmatpush1.bf16.msra.mxu0 %v6845
    %7943 = vmatprep.mubr.bf16.mxu0 %v4626
    %7944 = vmatmul.mubr.bf16.gmra.mrb[0].mxu0 %v4625
    %v7945 = vpop.f32.mrb[0].mxu0
    %v7946 = vadd.f32 %v5158, %v7945
    %v7947 = vpop.f32.mrb[0].mxu0
    %v7948 = vadd.f32 %v5162, %v7947
    %v7949 = vpop.f32.mrb[0].mxu0
    %v7950 = vpop.f32.mrb[0].mxu0
    %7951 = vdwg.mxu0
    %7952 = vmatprep.subr.bf16.mxu0 %v6854
    %7953 = vmatpush1.bf16.msra.mxu0 %v6853
    %7954 = vmatprep.subr.bf16.mxu0 %v6862
    %7955 = vmatpush1.bf16.msra.mxu0 %v6861
    %7956 = vmatprep.subr.bf16.mxu0 %v6870
    %7957 = vmatpush1.bf16.msra.mxu0 %v6869
    %7958 = vmatprep.subr.bf16.mxu0 %v6878
    %7959 = vmatpush1.bf16.msra.mxu0 %v6877
    %7960 = vmatprep.subr.bf16.mxu0 %v6886
    %7961 = vmatpush1.bf16.msra.mxu0 %v6885
    %7962 = vmatprep.subr.bf16.mxu0 %v6894
    %7963 = vmatpush1.bf16.msra.mxu0 %v6893
    %7964 = vmatprep.subr.bf16.mxu0 %v6902
    %7965 = vmatpush1.bf16.msra.mxu0 %v6901
    %7966 = vmatprep.subr.bf16.mxu0 %v6910
    %7967 = vmatpush1.bf16.msra.mxu0 %v6909
    %7968 = vmatprep.subr.bf16.mxu0 %v6918
    %7969 = vmatpush1.bf16.msra.mxu0 %v6917
    %7970 = vmatprep.subr.bf16.mxu0 %v6926
    %7971 = vmatpush1.bf16.msra.mxu0 %v6925
    %7972 = vmatprep.subr.bf16.mxu0 %v6934
    %7973 = vmatpush1.bf16.msra.mxu0 %v6933
    %7974 = vmatprep.subr.bf16.mxu0 %v6942
    %7975 = vmatpush1.bf16.msra.mxu0 %v6941
    %7976 = vmatprep.subr.bf16.mxu0 %v6950
    %7977 = vmatpush1.bf16.msra.mxu0 %v6949
    %7978 = vmatprep.subr.bf16.mxu0 %v6958
    %7979 = vmatpush1.bf16.msra.mxu0 %v6957
    %7980 = vmatprep.subr.bf16.mxu0 %v6966
    %7981 = vmatpush1.bf16.msra.mxu0 %v6965
    %7982 = vmatprep.subr.bf16.mxu0 %v6974
    %7983 = vmatpush1.bf16.msra.mxu0 %v6973
    %7984 = vmatprep.mubr.bf16.mxu0 %v4628
    %7985 = vmatmul.mubr.bf16.gmra.mrb[0].mxu0 %v4627
    %v7986 = vpop.f32.mrb[0].mxu0
    %v7987 = vadd.f32 %v7946, %v7986
    %v7988 = vpop.f32.mrb[0].mxu0
    %v7989 = vadd.f32 %v7948, %v7988
    %v7990 = vpop.f32.mrb[0].mxu0
    %v7991 = vpop.f32.mrb[0].mxu0
    %7992 = vdwg.mxu0
    %7993 = vmatprep.subr.bf16.mxu0 %v6982
    %7994 = vmatpush1.bf16.msra.mxu0 %v6981
    %7995 = vmatprep.subr.bf16.mxu0 %v6990
    %7996 = vmatpush1.bf16.msra.mxu0 %v6989
    %7997 = vmatprep.subr.bf16.mxu0 %v6998
    %7998 = vmatpush1.bf16.msra.mxu0 %v6997
    %7999 = vmatprep.subr.bf16.mxu0 %v7006
    %8000 = vmatpush1.bf16.msra.mxu0 %v7005
    %8001 = vmatprep.subr.bf16.mxu0 %v7014
    %8002 = vmatpush1.bf16.msra.mxu0 %v7013
    %8003 = vmatprep.subr.bf16.mxu0 %v7022
    %8004 = vmatpush1.bf16.msra.mxu0 %v7021
    %8005 = vmatprep.subr.bf16.mxu0 %v7030
    %8006 = vmatpush1.bf16.msra.mxu0 %v7029
    %8007 = vmatprep.subr.bf16.mxu0 %v7038
    %8008 = vmatpush1.bf16.msra.mxu0 %v7037
    %8009 = vmatprep.subr.bf16.mxu0 %v7046
    %8010 = vmatpush1.bf16.msra.mxu0 %v7045
    %8011 = vmatprep.subr.bf16.mxu0 %v7054
    %8012 = vmatpush1.bf16.msra.mxu0 %v7053
    %8013 = vmatprep.subr.bf16.mxu0 %v7062
    %8014 = vmatpush1.bf16.msra.mxu0 %v7061
    %8015 = vmatprep.subr.bf16.mxu0 %v7070
    %8016 = vmatpush1.bf16.msra.mxu0 %v7069
    %8017 = vmatprep.subr.bf16.mxu0 %v7078
    %8018 = vmatpush1.bf16.msra.mxu0 %v7077
    %8019 = vmatprep.subr.bf16.mxu0 %v7086
    %8020 = vmatpush1.bf16.msra.mxu0 %v7085
    %8021 = vmatprep.subr.bf16.mxu0 %v7094
    %8022 = vmatpush1.bf16.msra.mxu0 %v7093
    %8023 = vmatprep.subr.bf16.mxu0 %v7102
    %8024 = vmatpush1.bf16.msra.mxu0 %v7101
    %8025 = vmatprep.mubr.bf16.mxu0 %v4630
    %8026 = vmatmul.mubr.bf16.gmra.mrb[0].mxu0 %v4629
    %v8027 = vpop.f32.mrb[0].mxu0
    %v8028 = vadd.f32 %v7987, %v8027
    %v8029 = vpop.f32.mrb[0].mxu0
    %v8030 = vadd.f32 %v7989, %v8029
    %v8031 = vpop.f32.mrb[0].mxu0
    %v8032 = vpop.f32.mrb[0].mxu0
    %8033 = vdwg.mxu0
    %8034 = vmatprep.subr.bf16.mxu0 %v7110
    %8035 = vmatpush1.bf16.msra.mxu0 %v7109
    %8036 = vmatprep.subr.bf16.mxu0 %v7118
    %8037 = vmatpush1.bf16.msra.mxu0 %v7117
    %8038 = vmatprep.subr.bf16.mxu0 %v7126
    %8039 = vmatpush1.bf16.msra.mxu0 %v7125
    %8040 = vmatprep.subr.bf16.mxu0 %v7134
    %8041 = vmatpush1.bf16.msra.mxu0 %v7133
    %8042 = vmatprep.subr.bf16.mxu0 %v7142
    %8043 = vmatpush1.bf16.msra.mxu0 %v7141
    %8044 = vmatprep.subr.bf16.mxu0 %v7150
    %8045 = vmatpush1.bf16.msra.mxu0 %v7149
    %8046 = vmatprep.subr.bf16.mxu0 %v7158
    %8047 = vmatpush1.bf16.msra.mxu0 %v7157
    %8048 = vmatprep.subr.bf16.mxu0 %v7166
    %8049 = vmatpush1.bf16.msra.mxu0 %v7165
    %8050 = vmatprep.subr.bf16.mxu0 %v7174
    %8051 = vmatpush1.bf16.msra.mxu0 %v7173
    %8052 = vmatprep.subr.bf16.mxu0 %v7182
    %8053 = vmatpush1.bf16.msra.mxu0 %v7181
    %8054 = vmatprep.subr.bf16.mxu0 %v7190
    %8055 = vmatpush1.bf16.msra.mxu0 %v7189
    %8056 = vmatprep.subr.bf16.mxu0 %v7198
    %8057 = vmatpush1.bf16.msra.mxu0 %v7197
    %8058 = vmatprep.subr.bf16.mxu0 %v7206
    %8059 = vmatpush1.bf16.msra.mxu0 %v7205
    %8060 = vmatprep.subr.bf16.mxu0 %v7214
    %8061 = vmatpush1.bf16.msra.mxu0 %v7213
    %8062 = vmatprep.subr.bf16.mxu0 %v7222
    %8063 = vmatpush1.bf16.msra.mxu0 %v7221
    %8064 = vmatprep.subr.bf16.mxu0 %v7230
    %8065 = vmatpush1.bf16.msra.mxu0 %v7229
    %8066 = vmatprep.mubr.bf16.mxu0 %v4632
    %8067 = vmatmul.mubr.bf16.gmra.mrb[0].mxu0 %v4631
    %v8068 = vpop.f32.mrb[0].mxu0
    %v8069 = vadd.f32 %v8028, %v8068
    %v8070 = vpop.f32.mrb[0].mxu0
    %v8071 = vadd.f32 %v8030, %v8070
    %v8072 = vpop.f32.mrb[0].mxu0
    %v8073 = vpop.f32.mrb[0].mxu0
    %8074 = vdwg.mxu0
    %8075 = vmatprep.subr.bf16.mxu0 %v6728
    %8076 = vmatpush1.bf16.msra.mxu0 %v6727
    %8077 = vmatprep.subr.bf16.mxu0 %v6736
    %8078 = vmatpush1.bf16.msra.mxu0 %v6735
    %8079 = vmatprep.subr.bf16.mxu0 %v6744
    %8080 = vmatpush1.bf16.msra.mxu0 %v6743
    %8081 = vmatprep.subr.bf16.mxu0 %v6752
    %8082 = vmatpush1.bf16.msra.mxu0 %v6751
    %8083 = vmatprep.subr.bf16.mxu0 %v6760
    %8084 = vmatpush1.bf16.msra.mxu0 %v6759
    %8085 = vmatprep.subr.bf16.mxu0 %v6768
    %8086 = vmatpush1.bf16.msra.mxu0 %v6767
    %8087 = vmatprep.subr.bf16.mxu0 %v6776
    %8088 = vmatpush1.bf16.msra.mxu0 %v6775
    %8089 = vmatprep.subr.bf16.mxu0 %v6784
    %8090 = vmatpush1.bf16.msra.mxu0 %v6783
    %8091 = vmatprep.subr.bf16.mxu0 %v6792
    %8092 = vmatpush1.bf16.msra.mxu0 %v6791
    %8093 = vmatprep.subr.bf16.mxu0 %v6800
    %8094 = vmatpush1.bf16.msra.mxu0 %v6799
    %8095 = vmatprep.subr.bf16.mxu0 %v6808
    %8096 = vmatpush1.bf16.msra.mxu0 %v6807
    %8097 = vmatprep.subr.bf16.mxu0 %v6816
    %8098 = vmatpush1.bf16.msra.mxu0 %v6815
    %8099 = vmatprep.subr.bf16.mxu0 %v6824
    %8100 = vmatpush1.bf16.msra.mxu0 %v6823
    %8101 = vmatprep.subr.bf16.mxu0 %v6832
    %8102 = vmatpush1.bf16.msra.mxu0 %v6831
    %8103 = vmatprep.subr.bf16.mxu0 %v6840
    %8104 = vmatpush1.bf16.msra.mxu0 %v6839
    %8105 = vmatprep.subr.bf16.mxu0 %v6848
    %8106 = vmatpush1.bf16.msra.mxu0 %v6847
    %8107 = vmatprep.mubr.bf16.mxu0 %v4626
    %8108 = vmatmul.mubr.bf16.gmra.mrb[0].mxu0 %v4625
    %v8109 = vpop.f32.mrb[0].mxu0
    %v8110 = vadd.f32 %v5166, %v8109
    %v8111 = vpop.f32.mrb[0].mxu0
    %v8112 = vadd.f32 %v5170, %v8111
    %v8113 = vpop.f32.mrb[0].mxu0
    %v8114 = vpop.f32.mrb[0].mxu0
    %8115 = vdwg.mxu0
    %8116 = vmatprep.subr.bf16.mxu0 %v6856
    %8117 = vmatpush1.bf16.msra.mxu0 %v6855
    %8118 = vmatprep.subr.bf16.mxu0 %v6864
    %8119 = vmatpush1.bf16.msra.mxu0 %v6863
    %8120 = vmatprep.subr.bf16.mxu0 %v6872
    %8121 = vmatpush1.bf16.msra.mxu0 %v6871
    %8122 = vmatprep.subr.bf16.mxu0 %v6880
    %8123 = vmatpush1.bf16.msra.mxu0 %v6879
    %8124 = vmatprep.subr.bf16.mxu0 %v6888
    %8125 = vmatpush1.bf16.msra.mxu0 %v6887
    %8126 = vmatprep.subr.bf16.mxu0 %v6896
    %8127 = vmatpush1.bf16.msra.mxu0 %v6895
    %8128 = vmatprep.subr.bf16.mxu0 %v6904
    %8129 = vmatpush1.bf16.msra.mxu0 %v6903
    %8130 = vmatprep.subr.bf16.mxu0 %v6912
    %8131 = vmatpush1.bf16.msra.mxu0 %v6911
    %8132 = vmatprep.subr.bf16.mxu0 %v6920
    %8133 = vmatpush1.bf16.msra.mxu0 %v6919
    %8134 = vmatprep.subr.bf16.mxu0 %v6928
    %8135 = vmatpush1.bf16.msra.mxu0 %v6927
    %8136 = vmatprep.subr.bf16.mxu0 %v6936
    %8137 = vmatpush1.bf16.msra.mxu0 %v6935
    %8138 = vmatprep.subr.bf16.mxu0 %v6944
    %8139 = vmatpush1.bf16.msra.mxu0 %v6943
    %8140 = vmatprep.subr.bf16.mxu0 %v6952
    %8141 = vmatpush1.bf16.msra.mxu0 %v6951
    %8142 = vmatprep.subr.bf16.mxu0 %v6960
    %8143 = vmatpush1.bf16.msra.mxu0 %v6959
    %8144 = vmatprep.subr.bf16.mxu0 %v6968
    %8145 = vmatpush1.bf16.msra.mxu0 %v6967
    %8146 = vmatprep.subr.bf16.mxu0 %v6976
    %8147 = vmatpush1.bf16.msra.mxu0 %v6975
    %8148 = vmatprep.mubr.bf16.mxu0 %v4628
    %8149 = vmatmul.mubr.bf16.gmra.mrb[0].mxu0 %v4627
    %v8150 = vpop.f32.mrb[0].mxu0
    %v8151 = vadd.f32 %v8110, %v8150
    %v8152 = vpop.f32.mrb[0].mxu0
    %v8153 = vadd.f32 %v8112, %v8152
    %v8154 = vpop.f32.mrb[0].mxu0
    %v8155 = vpop.f32.mrb[0].mxu0
    %8156 = vdwg.mxu0
    %8157 = vmatprep.subr.bf16.mxu0 %v6984
    %8158 = vmatpush1.bf16.msra.mxu0 %v6983
    %8159 = vmatprep.subr.bf16.mxu0 %v6992
    %8160 = vmatpush1.bf16.msra.mxu0 %v6991
    %8161 = vmatprep.subr.bf16.mxu0 %v7000
    %8162 = vmatpush1.bf16.msra.mxu0 %v6999
    %8163 = vmatprep.subr.bf16.mxu0 %v7008
    %8164 = vmatpush1.bf16.msra.mxu0 %v7007
    %8165 = vmatprep.subr.bf16.mxu0 %v7016
    %8166 = vmatpush1.bf16.msra.mxu0 %v7015
    %8167 = vmatprep.subr.bf16.mxu0 %v7024
    %8168 = vmatpush1.bf16.msra.mxu0 %v7023
    %8169 = vmatprep.subr.bf16.mxu0 %v7032
    %8170 = vmatpush1.bf16.msra.mxu0 %v7031
    %8171 = vmatprep.subr.bf16.mxu0 %v7040
    %8172 = vmatpush1.bf16.msra.mxu0 %v7039
    %8173 = vmatprep.subr.bf16.mxu0 %v7048
    %8174 = vmatpush1.bf16.msra.mxu0 %v7047
    %8175 = vmatprep.subr.bf16.mxu0 %v7056
    %8176 = vmatpush1.bf16.msra.mxu0 %v7055
    %8177 = vmatprep.subr.bf16.mxu0 %v7064
    %8178 = vmatpush1.bf16.msra.mxu0 %v7063
    %8179 = vmatprep.subr.bf16.mxu0 %v7072
    %8180 = vmatpush1.bf16.msra.mxu0 %v7071
    %8181 = vmatprep.subr.bf16.mxu0 %v7080
    %8182 = vmatpush1.bf16.msra.mxu0 %v7079
    %8183 = vmatprep.subr.bf16.mxu0 %v7088
    %8184 = vmatpush1.bf16.msra.mxu0 %v7087
    %8185 = vmatprep.subr.bf16.mxu0 %v7096
    %8186 = vmatpush1.bf16.msra.mxu0 %v7095
    %8187 = vmatprep.subr.bf16.mxu0 %v7104
    %8188 = vmatpush1.bf16.msra.mxu0 %v7103
    %8189 = vmatprep.mubr.bf16.mxu0 %v4630
    %8190 = vmatmul.mubr.bf16.gmra.mrb[0].mxu0 %v4629
    %v8191 = vpop.f32.mrb[0].mxu0
    %v8192 = vadd.f32 %v8151, %v8191
    %v8193 = vpop.f32.mrb[0].mxu0
    %v8194 = vadd.f32 %v8153, %v8193
    %v8195 = vpop.f32.mrb[0].mxu0
    %v8196 = vpop.f32.mrb[0].mxu0
    %8197 = vdwg.mxu0
    %8198 = vmatprep.subr.bf16.mxu0 %v7112
    %8199 = vmatpush1.bf16.msra.mxu0 %v7111
    %8200 = vmatprep.subr.bf16.mxu0 %v7120
    %8201 = vmatpush1.bf16.msra.mxu0 %v7119
    %8202 = vmatprep.subr.bf16.mxu0 %v7128
    %8203 = vmatpush1.bf16.msra.mxu0 %v7127
    %8204 = vmatprep.subr.bf16.mxu0 %v7136
    %8205 = vmatpush1.bf16.msra.mxu0 %v7135
    %8206 = vmatprep.subr.bf16.mxu0 %v7144
    %8207 = vmatpush1.bf16.msra.mxu0 %v7143
    %8208 = vmatprep.subr.bf16.mxu0 %v7152
    %8209 = vmatpush1.bf16.msra.mxu0 %v7151
    %8210 = vmatprep.subr.bf16.mxu0 %v7160
    %8211 = vmatpush1.bf16.msra.mxu0 %v7159
    %8212 = vmatprep.subr.bf16.mxu0 %v7168
    %8213 = vmatpush1.bf16.msra.mxu0 %v7167
    %8214 = vmatprep.subr.bf16.mxu0 %v7176
    %8215 = vmatpush1.bf16.msra.mxu0 %v7175
    %8216 = vmatprep.subr.bf16.mxu0 %v7184
    %8217 = vmatpush1.bf16.msra.mxu0 %v7183
    %8218 = vmatprep.subr.bf16.mxu0 %v7192
    %8219 = vmatpush1.bf16.msra.mxu0 %v7191
    %8220 = vmatprep.subr.bf16.mxu0 %v7200
    %8221 = vmatpush1.bf16.msra.mxu0 %v7199
    %8222 = vmatprep.subr.bf16.mxu0 %v7208
    %8223 = vmatpush1.bf16.msra.mxu0 %v7207
    %8224 = vmatprep.subr.bf16.mxu0 %v7216
    %8225 = vmatpush1.bf16.msra.mxu0 %v7215
    %8226 = vmatprep.subr.bf16.mxu0 %v7224
    %8227 = vmatpush1.bf16.msra.mxu0 %v7223
    %8228 = vmatprep.subr.bf16.mxu0 %v7232
    %8229 = vmatpush1.bf16.msra.mxu0 %v7231
    %8230 = vmatprep.mubr.bf16.mxu0 %v4632
    %8231 = vmatmul.mubr.bf16.gmra.mrb[0].mxu0 %v4631
    %v8232 = vpop.f32.mrb[0].mxu0
    %v8233 = vadd.f32 %v8192, %v8232
    %v8234 = vpop.f32.mrb[0].mxu0
    %v8235 = vadd.f32 %v8194, %v8234
    %v8236 = vpop.f32.mrb[0].mxu0
    %v8237 = vpop.f32.mrb[0].mxu0
    %8238 = vdwg.mxu0
    %8239 = vmatprep.subr.bf16.mxu0 %v6730
    %8240 = vmatpush1.bf16.msra.mxu0 %v6729
    %8241 = vmatprep.subr.bf16.mxu0 %v6738
    %8242 = vmatpush1.bf16.msra.mxu0 %v6737
    %8243 = vmatprep.subr.bf16.mxu0 %v6746
    %8244 = vmatpush1.bf16.msra.mxu0 %v6745
    %8245 = vmatprep.subr.bf16.mxu0 %v6754
    %8246 = vmatpush1.bf16.msra.mxu0 %v6753
    %8247 = vmatprep.subr.bf16.mxu0 %v6762
    %8248 = vmatpush1.bf16.msra.mxu0 %v6761
    %8249 = vmatprep.subr.bf16.mxu0 %v6770
    %8250 = vmatpush1.bf16.msra.mxu0 %v6769
    %8251 = vmatprep.subr.bf16.mxu0 %v6778
    %8252 = vmatpush1.bf16.msra.mxu0 %v6777
    %8253 = vmatprep.subr.bf16.mxu0 %v6786
    %8254 = vmatpush1.bf16.msra.mxu0 %v6785
    %8255 = vmatprep.subr.bf16.mxu0 %v6794
    %8256 = vmatpush1.bf16.msra.mxu0 %v6793
    %8257 = vmatprep.subr.bf16.mxu0 %v6802
    %8258 = vmatpush1.bf16.msra.mxu0 %v6801
    %8259 = vmatprep.subr.bf16.mxu0 %v6810
    %8260 = vmatpush1.bf16.msra.mxu0 %v6809
    %8261 = vmatprep.subr.bf16.mxu0 %v6818
    %8262 = vmatpush1.bf16.msra.mxu0 %v6817
    %8263 = vmatprep.subr.bf16.mxu0 %v6826
    %8264 = vmatpush1.bf16.msra.mxu0 %v6825
    %8265 = vmatprep.subr.bf16.mxu0 %v6834
    %8266 = vmatpush1.bf16.msra.mxu0 %v6833
    %8267 = vmatprep.subr.bf16.mxu0 %v6842
    %8268 = vmatpush1.bf16.msra.mxu0 %v6841
    %8269 = vmatprep.subr.bf16.mxu0 %v6850
    %8270 = vmatpush1.bf16.msra.mxu0 %v6849
    %8271 = vmatprep.mubr.bf16.mxu0 %v4626
    %8272 = vmatmul.mubr.bf16.gmra.mrb[0].mxu0 %v4625
    %v8273 = vpop.f32.mrb[0].mxu0
    %v8274 = vadd.f32 %v5174, %v8273
    %v8275 = vpop.f32.mrb[0].mxu0
    %v8276 = vadd.f32 %v5178, %v8275
    %v8277 = vpop.f32.mrb[0].mxu0
    %v8278 = vpop.f32.mrb[0].mxu0
    %8279 = vdwg.mxu0
    %8280 = vmatprep.subr.bf16.mxu0 %v6858
    %8281 = vmatpush1.bf16.msra.mxu0 %v6857
    %8282 = vmatprep.subr.bf16.mxu0 %v6866
    %8283 = vmatpush1.bf16.msra.mxu0 %v6865
    %8284 = vmatprep.subr.bf16.mxu0 %v6874
    %8285 = vmatpush1.bf16.msra.mxu0 %v6873
    %8286 = vmatprep.subr.bf16.mxu0 %v6882
    %8287 = vmatpush1.bf16.msra.mxu0 %v6881
    %8288 = vmatprep.subr.bf16.mxu0 %v6890
    %8289 = vmatpush1.bf16.msra.mxu0 %v6889
    %8290 = vmatprep.subr.bf16.mxu0 %v6898
    %8291 = vmatpush1.bf16.msra.mxu0 %v6897
    %8292 = vmatprep.subr.bf16.mxu0 %v6906
    %8293 = vmatpush1.bf16.msra.mxu0 %v6905
    %8294 = vmatprep.subr.bf16.mxu0 %v6914
    %8295 = vmatpush1.bf16.msra.mxu0 %v6913
    %8296 = vmatprep.subr.bf16.mxu0 %v6922
    %8297 = vmatpush1.bf16.msra.mxu0 %v6921
    %8298 = vmatprep.subr.bf16.mxu0 %v6930
    %8299 = vmatpush1.bf16.msra.mxu0 %v6929
    %8300 = vmatprep.subr.bf16.mxu0 %v6938
    %8301 = vmatpush1.bf16.msra.mxu0 %v6937
    %8302 = vmatprep.subr.bf16.mxu0 %v6946
    %8303 = vmatpush1.bf16.msra.mxu0 %v6945
    %8304 = vmatprep.subr.bf16.mxu0 %v6954
    %8305 = vmatpush1.bf16.msra.mxu0 %v6953
    %8306 = vmatprep.subr.bf16.mxu0 %v6962
    %8307 = vmatpush1.bf16.msra.mxu0 %v6961
    %8308 = vmatprep.subr.bf16.mxu0 %v6970
    %8309 = vmatpush1.bf16.msra.mxu0 %v6969
    %8310 = vmatprep.subr.bf16.mxu0 %v6978
    %8311 = vmatpush1.bf16.msra.mxu0 %v6977
    %8312 = vmatprep.mubr.bf16.mxu0 %v4628
    %8313 = vmatmul.mubr.bf16.gmra.mrb[0].mxu0 %v4627
    %v8314 = vpop.f32.mrb[0].mxu0
    %v8315 = vadd.f32 %v8274, %v8314
    %v8316 = vpop.f32.mrb[0].mxu0
    %v8317 = vadd.f32 %v8276, %v8316
    %v8318 = vpop.f32.mrb[0].mxu0
    %v8319 = vpop.f32.mrb[0].mxu0
    %8320 = vdwg.mxu0
    %8321 = vmatprep.subr.bf16.mxu0 %v6986
    %8322 = vmatpush1.bf16.msra.mxu0 %v6985
    %8323 = vmatprep.subr.bf16.mxu0 %v6994
    %8324 = vmatpush1.bf16.msra.mxu0 %v6993
    %8325 = vmatprep.subr.bf16.mxu0 %v7002
    %8326 = vmatpush1.bf16.msra.mxu0 %v7001
    %8327 = vmatprep.subr.bf16.mxu0 %v7010
    %8328 = vmatpush1.bf16.msra.mxu0 %v7009
    %8329 = vmatprep.subr.bf16.mxu0 %v7018
    %8330 = vmatpush1.bf16.msra.mxu0 %v7017
    %8331 = vmatprep.subr.bf16.mxu0 %v7026
    %8332 = vmatpush1.bf16.msra.mxu0 %v7025
    %8333 = vmatprep.subr.bf16.mxu0 %v7034
    %8334 = vmatpush1.bf16.msra.mxu0 %v7033
    %8335 = vmatprep.subr.bf16.mxu0 %v7042
    %8336 = vmatpush1.bf16.msra.mxu0 %v7041
    %8337 = vmatprep.subr.bf16.mxu0 %v7050
    %8338 = vmatpush1.bf16.msra.mxu0 %v7049
    %8339 = vmatprep.subr.bf16.mxu0 %v7058
    %8340 = vmatpush1.bf16.msra.mxu0 %v7057
    %8341 = vmatprep.subr.bf16.mxu0 %v7066
    %8342 = vmatpush1.bf16.msra.mxu0 %v7065
    %8343 = vmatprep.subr.bf16.mxu0 %v7074
    %8344 = vmatpush1.bf16.msra.mxu0 %v7073
    %8345 = vmatprep.subr.bf16.mxu0 %v7082
    %8346 = vmatpush1.bf16.msra.mxu0 %v7081
    %8347 = vmatprep.subr.bf16.mxu0 %v7090
    %8348 = vmatpush1.bf16.msra.mxu0 %v7089
    %8349 = vmatprep.subr.bf16.mxu0 %v7098
    %8350 = vmatpush1.bf16.msra.mxu0 %v7097
    %8351 = vmatprep.subr.bf16.mxu0 %v7106
    %8352 = vmatpush1.bf16.msra.mxu0 %v7105
    %8353 = vmatprep.mubr.bf16.mxu0 %v4630
    %8354 = vmatmul.mubr.bf16.gmra.mrb[0].mxu0 %v4629
    %v8355 = vpop.f32.mrb[0].mxu0
    %v8356 = vadd.f32 %v8315, %v8355
    %v8357 = vpop.f32.mrb[0].mxu0
    %v8358 = vadd.f32 %v8317, %v8357
    %v8359 = vpop.f32.mrb[0].mxu0
    %v8360 = vpop.f32.mrb[0].mxu0
    %8361 = vdwg.mxu0
    %8362 = vmatprep.subr.bf16.mxu0 %v7114
    %8363 = vmatpush1.bf16.msra.mxu0 %v7113
    %8364 = vmatprep.subr.bf16.mxu0 %v7122
    %8365 = vmatpush1.bf16.msra.mxu0 %v7121
    %8366 = vmatprep.subr.bf16.mxu0 %v7130
    %8367 = vmatpush1.bf16.msra.mxu0 %v7129
    %8368 = vmatprep.subr.bf16.mxu0 %v7138
    %8369 = vmatpush1.bf16.msra.mxu0 %v7137
    %8370 = vmatprep.subr.bf16.mxu0 %v7146
    %8371 = vmatpush1.bf16.msra.mxu0 %v7145
    %8372 = vmatprep.subr.bf16.mxu0 %v7154
    %8373 = vmatpush1.bf16.msra.mxu0 %v7153
    %8374 = vmatprep.subr.bf16.mxu0 %v7162
    %8375 = vmatpush1.bf16.msra.mxu0 %v7161
    %8376 = vmatprep.subr.bf16.mxu0 %v7170
    %8377 = vmatpush1.bf16.msra.mxu0 %v7169
    %8378 = vmatprep.subr.bf16.mxu0 %v7178
    %8379 = vmatpush1.bf16.msra.mxu0 %v7177
    %8380 = vmatprep.subr.bf16.mxu0 %v7186
    %8381 = vmatpush1.bf16.msra.mxu0 %v7185
    %8382 = vmatprep.subr.bf16.mxu0 %v7194
    %8383 = vmatpush1.bf16.msra.mxu0 %v7193
    %8384 = vmatprep.subr.bf16.mxu0 %v7202
    %8385 = vmatpush1.bf16.msra.mxu0 %v7201
    %8386 = vmatprep.subr.bf16.mxu0 %v7210
    %8387 = vmatpush1.bf16.msra.mxu0 %v7209
    %8388 = vmatprep.subr.bf16.mxu0 %v7218
    %8389 = vmatpush1.bf16.msra.mxu0 %v7217
    %8390 = vmatprep.subr.bf16.mxu0 %v7226
    %8391 = vmatpush1.bf16.msra.mxu0 %v7225
    %8392 = vmatprep.subr.bf16.mxu0 %v7234
    %8393 = vmatpush1.bf16.msra.mxu0 %v7233
    %8394 = vmatprep.mubr.bf16.mxu0 %v4632
    %8395 = vmatmul.mubr.bf16.gmra.mrb[0].mxu0 %v4631
    %v8396 = vpop.f32.mrb[0].mxu0
    %v8397 = vadd.f32 %v8356, %v8396
    %v8398 = vpop.f32.mrb[0].mxu0
    %v8399 = vadd.f32 %v8358, %v8398
    %v8400 = vpop.f32.mrb[0].mxu0
    %v8401 = vpop.f32.mrb[0].mxu0
    %8402 = vdwg.mxu0
    %v8403 = vmax.f32 %v7905, 0.0
    %v8404 = vmax.f32 %v7907, 0.0
    %v8405 = vmax.f32 %v8069, 0.0
    %v8406 = vmax.f32 %v8071, 0.0
    %v8407 = vmax.f32 %v8233, 0.0
    %v8408 = vmax.f32 %v8235, 0.0
    %v8409 = vmax.f32 %v8397, 0.0
    %v8410 = vmax.f32 %v8399, 0.0
    %v8411 = vpack.c.bf16 %v8403, %v8403
    %v8412 = vpack.c.bf16 %v8404, %v8404
    %v8413 = vpack.c.bf16 %v8405, %v8405
    %v8414 = vpack.c.bf16 %v8406, %v8406
    %v8415 = vpack.c.bf16 %v8407, %v8407
    %v8416 = vpack.c.bf16 %v8408, %v8408
    %v8417 = vpack.c.bf16 %v8409, %v8409
    %v8418 = vpack.c.bf16 %v8410, %v8410
    %v8419 = vld [vmem:[#allocation24] sm:$0xf]
    %v8420 = vld [vmem:[#allocation24 + $0x4] sm:$0xf]
    %v8421 = vld [vmem:[#allocation24 + $0x8] sm:$0xf]
    %v8422 = vld [vmem:[#allocation24 + $0xc] sm:$0xf]
    %v8423 = vld [vmem:[#allocation24 + $0x10] sm:$0xf]
    %v8424 = vld [vmem:[#allocation24 + $0x14] sm:$0xf]
    %v8425 = vld [vmem:[#allocation24 + $0x18] sm:$0xf]
    %v8426 = vld [vmem:[#allocation24 + $0x1c] sm:$0xf]
    %v8427 = vld [vmem:[#allocation24 + $0x20] sm:$0xf]
    %v8428 = vld [vmem:[#allocation24 + $0x24] sm:$0xf]
    %v8429 = vld [vmem:[#allocation24 + $0x28] sm:$0xf]
    %v8430 = vld [vmem:[#allocation24 + $0x2c] sm:$0xf]
    %v8431 = vld [vmem:[#allocation24 + $0x30] sm:$0xf]
    %v8432 = vld [vmem:[#allocation24 + $0x34] sm:$0xf]
    %v8433 = vld [vmem:[#allocation24 + $0x38] sm:$0xf]
    %v8434 = vld [vmem:[#allocation24 + $0x3c] sm:$0xf]
    %v8435 = vld [vmem:[#allocation24 + $0x40] sm:$0xf]
    %v8436 = vld [vmem:[#allocation24 + $0x44] sm:$0xf]
    %v8437 = vld [vmem:[#allocation24 + $0x48] sm:$0xf]
    %v8438 = vld [vmem:[#allocation24 + $0x4c] sm:$0xf]
    %v8439 = vld [vmem:[#allocation24 + $0x50] sm:$0xf]
    %v8440 = vld [vmem:[#allocation24 + $0x54] sm:$0xf]
    %v8441 = vld [vmem:[#allocation24 + $0x58] sm:$0xf]
    %v8442 = vld [vmem:[#allocation24 + $0x5c] sm:$0xf]
    %v8443 = vld [vmem:[#allocation24 + $0x60] sm:$0xf]
    %v8444 = vld [vmem:[#allocation24 + $0x64] sm:$0xf]
    %v8445 = vld [vmem:[#allocation24 + $0x68] sm:$0xf]
    %v8446 = vld [vmem:[#allocation24 + $0x6c] sm:$0xf]
    %v8447 = vld [vmem:[#allocation24 + $0x70] sm:$0xf]
    %v8448 = vld [vmem:[#allocation24 + $0x74] sm:$0xf]
    %v8449 = vld [vmem:[#allocation24 + $0x78] sm:$0xf]
    %v8450 = vld [vmem:[#allocation24 + $0x7c] sm:$0xf]
    %v8451 = vld [vmem:[#allocation24 + $0x80] sm:$0xf]
    %v8452 = vld [vmem:[#allocation24 + $0x84] sm:$0xf]
    %v8453 = vld [vmem:[#allocation24 + $0x88] sm:$0xf]
    %v8454 = vld [vmem:[#allocation24 + $0x8c] sm:$0xf]
    %v8455 = vld [vmem:[#allocation24 + $0x90] sm:$0xf]
    %v8456 = vld [vmem:[#allocation24 + $0x94] sm:$0xf]
    %v8457 = vld [vmem:[#allocation24 + $0x98] sm:$0xf]
    %v8458 = vld [vmem:[#allocation24 + $0x9c] sm:$0xf]
    %v8459 = vld [vmem:[#allocation24 + $0xa0] sm:$0xf]
    %v8460 = vld [vmem:[#allocation24 + $0xa4] sm:$0xf]
    %v8461 = vld [vmem:[#allocation24 + $0xa8] sm:$0xf]
    %v8462 = vld [vmem:[#allocation24 + $0xac] sm:$0xf]
    %v8463 = vld [vmem:[#allocation24 + $0xb0] sm:$0xf]
    %v8464 = vld [vmem:[#allocation24 + $0xb4] sm:$0xf]
    %v8465 = vld [vmem:[#allocation24 + $0xb8] sm:$0xf]
    %v8466 = vld [vmem:[#allocation24 + $0xbc] sm:$0xf]
    %v8467 = vld [vmem:[#allocation24 + $0xc0] sm:$0xf]
    %v8468 = vld [vmem:[#allocation24 + $0xc4] sm:$0xf]
    %v8469 = vld [vmem:[#allocation24 + $0xc8] sm:$0xf]
    %v8470 = vld [vmem:[#allocation24 + $0xcc] sm:$0xf]
    %v8471 = vld [vmem:[#allocation24 + $0xd0] sm:$0xf]
    %v8472 = vld [vmem:[#allocation24 + $0xd4] sm:$0xf]
    %v8473 = vld [vmem:[#allocation24 + $0xd8] sm:$0xf]
    %v8474 = vld [vmem:[#allocation24 + $0xdc] sm:$0xf]
    %v8475 = vld [vmem:[#allocation24 + $0xe0] sm:$0xf]
    %v8476 = vld [vmem:[#allocation24 + $0xe4] sm:$0xf]
    %v8477 = vld [vmem:[#allocation24 + $0xe8] sm:$0xf]
    %v8478 = vld [vmem:[#allocation24 + $0xec] sm:$0xf]
    %v8479 = vld [vmem:[#allocation24 + $0xf0] sm:$0xf]
    %v8480 = vld [vmem:[#allocation24 + $0xf4] sm:$0xf]
    %v8481 = vld [vmem:[#allocation24 + $0xf8] sm:$0xf]
    %v8482 = vld [vmem:[#allocation24 + $0xfc] sm:$0xf]
    %v8483 = vld [vmem:[#allocation24 + $0x100] sm:$0xf]
    %v8484 = vld [vmem:[#allocation24 + $0x104] sm:$0xf]
    %v8485 = vld [vmem:[#allocation24 + $0x108] sm:$0xf]
    %v8486 = vld [vmem:[#allocation24 + $0x10c] sm:$0xf]
    %v8487 = vld [vmem:[#allocation24 + $0x110] sm:$0xf]
    %v8488 = vld [vmem:[#allocation24 + $0x114] sm:$0xf]
    %v8489 = vld [vmem:[#allocation24 + $0x118] sm:$0xf]
    %v8490 = vld [vmem:[#allocation24 + $0x11c] sm:$0xf]
    %v8491 = vld [vmem:[#allocation24 + $0x120] sm:$0xf]
    %v8492 = vld [vmem:[#allocation24 + $0x124] sm:$0xf]
    %v8493 = vld [vmem:[#allocation24 + $0x128] sm:$0xf]
    %v8494 = vld [vmem:[#allocation24 + $0x12c] sm:$0xf]
    %v8495 = vld [vmem:[#allocation24 + $0x130] sm:$0xf]
    %v8496 = vld [vmem:[#allocation24 + $0x134] sm:$0xf]
    %v8497 = vld [vmem:[#allocation24 + $0x138] sm:$0xf]
    %v8498 = vld [vmem:[#allocation24 + $0x13c] sm:$0xf]
    %v8499 = vld [vmem:[#allocation24 + $0x140] sm:$0xf]
    %v8500 = vld [vmem:[#allocation24 + $0x144] sm:$0xf]
    %v8501 = vld [vmem:[#allocation24 + $0x148] sm:$0xf]
    %v8502 = vld [vmem:[#allocation24 + $0x14c] sm:$0xf]
    %v8503 = vld [vmem:[#allocation24 + $0x150] sm:$0xf]
    %v8504 = vld [vmem:[#allocation24 + $0x154] sm:$0xf]
    %v8505 = vld [vmem:[#allocation24 + $0x158] sm:$0xf]
    %v8506 = vld [vmem:[#allocation24 + $0x15c] sm:$0xf]
    %v8507 = vld [vmem:[#allocation24 + $0x160] sm:$0xf]
    %v8508 = vld [vmem:[#allocation24 + $0x164] sm:$0xf]
    %v8509 = vld [vmem:[#allocation24 + $0x168] sm:$0xf]
    %v8510 = vld [vmem:[#allocation24 + $0x16c] sm:$0xf]
    %v8511 = vld [vmem:[#allocation24 + $0x170] sm:$0xf]
    %v8512 = vld [vmem:[#allocation24 + $0x174] sm:$0xf]
    %v8513 = vld [vmem:[#allocation24 + $0x178] sm:$0xf]
    %v8514 = vld [vmem:[#allocation24 + $0x17c] sm:$0xf]
    %v8515 = vld [vmem:[#allocation24 + $0x180] sm:$0xf]
    %v8516 = vld [vmem:[#allocation24 + $0x184] sm:$0xf]
    %v8517 = vld [vmem:[#allocation24 + $0x188] sm:$0xf]
    %v8518 = vld [vmem:[#allocation24 + $0x18c] sm:$0xf]
    %v8519 = vld [vmem:[#allocation24 + $0x190] sm:$0xf]
    %v8520 = vld [vmem:[#allocation24 + $0x194] sm:$0xf]
    %v8521 = vld [vmem:[#allocation24 + $0x198] sm:$0xf]
    %v8522 = vld [vmem:[#allocation24 + $0x19c] sm:$0xf]
    %v8523 = vld [vmem:[#allocation24 + $0x1a0] sm:$0xf]
    %v8524 = vld [vmem:[#allocation24 + $0x1a4] sm:$0xf]
    %v8525 = vld [vmem:[#allocation24 + $0x1a8] sm:$0xf]
    %v8526 = vld [vmem:[#allocation24 + $0x1ac] sm:$0xf]
    %v8527 = vld [vmem:[#allocation24 + $0x1b0] sm:$0xf]
    %v8528 = vld [vmem:[#allocation24 + $0x1b4] sm:$0xf]
    %v8529 = vld [vmem:[#allocation24 + $0x1b8] sm:$0xf]
    %v8530 = vld [vmem:[#allocation24 + $0x1bc] sm:$0xf]
    %v8531 = vld [vmem:[#allocation24 + $0x1c0] sm:$0xf]
    %v8532 = vld [vmem:[#allocation24 + $0x1c4] sm:$0xf]
    %v8533 = vld [vmem:[#allocation24 + $0x1c8] sm:$0xf]
    %v8534 = vld [vmem:[#allocation24 + $0x1cc] sm:$0xf]
    %v8535 = vld [vmem:[#allocation24 + $0x1d0] sm:$0xf]
    %v8536 = vld [vmem:[#allocation24 + $0x1d4] sm:$0xf]
    %v8537 = vld [vmem:[#allocation24 + $0x1d8] sm:$0xf]
    %v8538 = vld [vmem:[#allocation24 + $0x1dc] sm:$0xf]
    %v8539 = vld [vmem:[#allocation24 + $0x1e0] sm:$0xf]
    %v8540 = vld [vmem:[#allocation24 + $0x1e4] sm:$0xf]
    %v8541 = vld [vmem:[#allocation24 + $0x1e8] sm:$0xf]
    %v8542 = vld [vmem:[#allocation24 + $0x1ec] sm:$0xf]
    %v8543 = vld [vmem:[#allocation24 + $0x1f0] sm:$0xf]
    %v8544 = vld [vmem:[#allocation24 + $0x1f4] sm:$0xf]
    %v8545 = vld [vmem:[#allocation24 + $0x1f8] sm:$0xf]
    %v8546 = vld [vmem:[#allocation24 + $0x1fc] sm:$0xf]
    %v8547 = vld [vmem:[#allocation26] sm:$0x1]
    %v8549 = vlaneseq
    %v8550 = vshrl.u32 %v8549, 7
    %v8551 = vsub.s32 0, %v8550
    %v8552 = vrot.slane %v8547, %v8551
    %v8682 = vunpack.c.l.b16 %v8419
    %v8683 = vunpack.c.l.b16 %v8420
    %v8684 = vunpack.c.l.b16 %v8421
    %v8685 = vunpack.c.l.b16 %v8422
    %v8686 = vunpack.c.l.b16 %v8423
    %v8687 = vunpack.c.l.b16 %v8424
    %v8688 = vunpack.c.l.b16 %v8425
    %v8689 = vunpack.c.l.b16 %v8426
    %v8690 = vunpack.c.l.b16 %v8427
    %v8691 = vunpack.c.l.b16 %v8428
    %v8692 = vunpack.c.l.b16 %v8429
    %v8693 = vunpack.c.l.b16 %v8430
    %v8694 = vunpack.c.l.b16 %v8431
    %v8695 = vunpack.c.l.b16 %v8432
    %v8696 = vunpack.c.l.b16 %v8433
    %v8697 = vunpack.c.l.b16 %v8434
    %v8698 = vunpack.c.l.b16 %v8435
    %v8699 = vunpack.c.l.b16 %v8436
    %v8700 = vunpack.c.l.b16 %v8437
    %v8701 = vunpack.c.l.b16 %v8438
    %v8702 = vunpack.c.l.b16 %v8439
    %v8703 = vunpack.c.l.b16 %v8440
    %v8704 = vunpack.c.l.b16 %v8441
    %v8705 = vunpack.c.l.b16 %v8442
    %v8706 = vunpack.c.l.b16 %v8443
    %v8707 = vunpack.c.l.b16 %v8444
    %v8708 = vunpack.c.l.b16 %v8445
    %v8709 = vunpack.c.l.b16 %v8446
    %v8710 = vunpack.c.l.b16 %v8447
    %v8711 = vunpack.c.l.b16 %v8448
    %v8712 = vunpack.c.l.b16 %v8449
    %v8713 = vunpack.c.l.b16 %v8450
    %v8714 = vunpack.c.l.b16 %v8451
    %v8715 = vunpack.c.l.b16 %v8452
    %v8716 = vunpack.c.l.b16 %v8453
    %v8717 = vunpack.c.l.b16 %v8454
    %v8718 = vunpack.c.l.b16 %v8455
    %v8719 = vunpack.c.l.b16 %v8456
    %v8720 = vunpack.c.l.b16 %v8457
    %v8721 = vunpack.c.l.b16 %v8458
    %v8722 = vunpack.c.l.b16 %v8459
    %v8723 = vunpack.c.l.b16 %v8460
    %v8724 = vunpack.c.l.b16 %v8461
    %v8725 = vunpack.c.l.b16 %v8462
    %v8726 = vunpack.c.l.b16 %v8463
    %v8727 = vunpack.c.l.b16 %v8464
    %v8728 = vunpack.c.l.b16 %v8465
    %v8729 = vunpack.c.l.b16 %v8466
    %v8730 = vunpack.c.l.b16 %v8467
    %v8731 = vunpack.c.l.b16 %v8468
    %v8732 = vunpack.c.l.b16 %v8469
    %v8733 = vunpack.c.l.b16 %v8470
    %v8734 = vunpack.c.l.b16 %v8471
    %v8735 = vunpack.c.l.b16 %v8472
    %v8736 = vunpack.c.l.b16 %v8473
    %v8737 = vunpack.c.l.b16 %v8474
    %v8738 = vunpack.c.l.b16 %v8475
    %v8739 = vunpack.c.l.b16 %v8476
    %v8740 = vunpack.c.l.b16 %v8477
    %v8741 = vunpack.c.l.b16 %v8478
    %v8742 = vunpack.c.l.b16 %v8479
    %v8743 = vunpack.c.l.b16 %v8480
    %v8744 = vunpack.c.l.b16 %v8481
    %v8745 = vunpack.c.l.b16 %v8482
    %v8746 = vunpack.c.l.b16 %v8483
    %v8747 = vunpack.c.l.b16 %v8484
    %v8748 = vunpack.c.l.b16 %v8485
    %v8749 = vunpack.c.l.b16 %v8486
    %v8750 = vunpack.c.l.b16 %v8487
    %v8751 = vunpack.c.l.b16 %v8488
    %v8752 = vunpack.c.l.b16 %v8489
    %v8753 = vunpack.c.l.b16 %v8490
    %v8754 = vunpack.c.l.b16 %v8491
    %v8755 = vunpack.c.l.b16 %v8492
    %v8756 = vunpack.c.l.b16 %v8493
    %v8757 = vunpack.c.l.b16 %v8494
    %v8758 = vunpack.c.l.b16 %v8495
    %v8759 = vunpack.c.l.b16 %v8496
    %v8760 = vunpack.c.l.b16 %v8497
    %v8761 = vunpack.c.l.b16 %v8498
    %v8762 = vunpack.c.l.b16 %v8499
    %v8763 = vunpack.c.l.b16 %v8500
    %v8764 = vunpack.c.l.b16 %v8501
    %v8765 = vunpack.c.l.b16 %v8502
    %v8766 = vunpack.c.l.b16 %v8503
    %v8767 = vunpack.c.l.b16 %v8504
    %v8768 = vunpack.c.l.b16 %v8505
    %v8769 = vunpack.c.l.b16 %v8506
    %v8770 = vunpack.c.l.b16 %v8507
    %v8771 = vunpack.c.l.b16 %v8508
    %v8772 = vunpack.c.l.b16 %v8509
    %v8773 = vunpack.c.l.b16 %v8510
    %v8774 = vunpack.c.l.b16 %v8511
    %v8775 = vunpack.c.l.b16 %v8512
    %v8776 = vunpack.c.l.b16 %v8513
    %v8777 = vunpack.c.l.b16 %v8514
    %v8778 = vunpack.c.l.b16 %v8515
    %v8779 = vunpack.c.l.b16 %v8516
    %v8780 = vunpack.c.l.b16 %v8517
    %v8781 = vunpack.c.l.b16 %v8518
    %v8782 = vunpack.c.l.b16 %v8519
    %v8783 = vunpack.c.l.b16 %v8520
    %v8784 = vunpack.c.l.b16 %v8521
    %v8785 = vunpack.c.l.b16 %v8522
    %v8786 = vunpack.c.l.b16 %v8523
    %v8787 = vunpack.c.l.b16 %v8524
    %v8788 = vunpack.c.l.b16 %v8525
    %v8789 = vunpack.c.l.b16 %v8526
    %v8790 = vunpack.c.l.b16 %v8527
    %v8791 = vunpack.c.l.b16 %v8528
    %v8792 = vunpack.c.l.b16 %v8529
    %v8793 = vunpack.c.l.b16 %v8530
    %v8794 = vunpack.c.l.b16 %v8531
    %v8795 = vunpack.c.l.b16 %v8532
    %v8796 = vunpack.c.l.b16 %v8533
    %v8797 = vunpack.c.l.b16 %v8534
    %v8798 = vunpack.c.l.b16 %v8535
    %v8799 = vunpack.c.l.b16 %v8536
    %v8800 = vunpack.c.l.b16 %v8537
    %v8801 = vunpack.c.l.b16 %v8538
    %v8802 = vunpack.c.l.b16 %v8539
    %v8803 = vunpack.c.l.b16 %v8540
    %v8804 = vunpack.c.l.b16 %v8541
    %v8805 = vunpack.c.l.b16 %v8542
    %v8806 = vunpack.c.l.b16 %v8543
    %v8807 = vunpack.c.l.b16 %v8544
    %v8808 = vunpack.c.l.b16 %v8545
    %v8809 = vunpack.c.l.b16 %v8546
    %v8810 = vpack.c.b16 %v8683, %v8682
    %v8811 = vpack.c.b16 %v8685, %v8684
    %v8812 = vpack.c.b16 %v8687, %v8686
    %v8813 = vpack.c.b16 %v8689, %v8688
    %v8814 = vpack.c.b16 %v8691, %v8690
    %v8815 = vpack.c.b16 %v8693, %v8692
    %v8816 = vpack.c.b16 %v8695, %v8694
    %v8817 = vpack.c.b16 %v8697, %v8696
    %v8818 = vpack.c.b16 %v8699, %v8698
    %v8819 = vpack.c.b16 %v8701, %v8700
    %v8820 = vpack.c.b16 %v8703, %v8702
    %v8821 = vpack.c.b16 %v8705, %v8704
    %v8822 = vpack.c.b16 %v8707, %v8706
    %v8823 = vpack.c.b16 %v8709, %v8708
    %v8824 = vpack.c.b16 %v8711, %v8710
    %v8825 = vpack.c.b16 %v8713, %v8712
    %v8826 = vpack.c.b16 %v8715, %v8714
    %v8827 = vpack.c.b16 %v8717, %v8716
    %v8828 = vpack.c.b16 %v8719, %v8718
    %v8829 = vpack.c.b16 %v8721, %v8720
    %v8830 = vpack.c.b16 %v8723, %v8722
    %v8831 = vpack.c.b16 %v8725, %v8724
    %v8832 = vpack.c.b16 %v8727, %v8726
    %v8833 = vpack.c.b16 %v8729, %v8728
    %v8834 = vpack.c.b16 %v8731, %v8730
    %v8835 = vpack.c.b16 %v8733, %v8732
    %v8836 = vpack.c.b16 %v8735, %v8734
    %v8837 = vpack.c.b16 %v8737, %v8736
    %v8838 = vpack.c.b16 %v8739, %v8738
    %v8839 = vpack.c.b16 %v8741, %v8740
    %v8840 = vpack.c.b16 %v8743, %v8742
    %v8841 = vpack.c.b16 %v8745, %v8744
    %v8842 = vpack.c.b16 %v8747, %v8746
    %v8843 = vpack.c.b16 %v8749, %v8748
    %v8844 = vpack.c.b16 %v8751, %v8750
    %v8845 = vpack.c.b16 %v8753, %v8752
    %v8846 = vpack.c.b16 %v8755, %v8754
    %v8847 = vpack.c.b16 %v8757, %v8756
    %v8848 = vpack.c.b16 %v8759, %v8758
    %v8849 = vpack.c.b16 %v8761, %v8760
    %v8850 = vpack.c.b16 %v8763, %v8762
    %v8851 = vpack.c.b16 %v8765, %v8764
    %v8852 = vpack.c.b16 %v8767, %v8766
    %v8853 = vpack.c.b16 %v8769, %v8768
    %v8854 = vpack.c.b16 %v8771, %v8770
    %v8855 = vpack.c.b16 %v8773, %v8772
    %v8856 = vpack.c.b16 %v8775, %v8774
    %v8857 = vpack.c.b16 %v8777, %v8776
    %v8858 = vpack.c.b16 %v8779, %v8778
    %v8859 = vpack.c.b16 %v8781, %v8780
    %v8860 = vpack.c.b16 %v8783, %v8782
    %v8861 = vpack.c.b16 %v8785, %v8784
    %v8862 = vpack.c.b16 %v8787, %v8786
    %v8863 = vpack.c.b16 %v8789, %v8788
    %v8864 = vpack.c.b16 %v8791, %v8790
    %v8865 = vpack.c.b16 %v8793, %v8792
    %v8866 = vpack.c.b16 %v8795, %v8794
    %v8867 = vpack.c.b16 %v8797, %v8796
    %v8868 = vpack.c.b16 %v8799, %v8798
    %v8869 = vpack.c.b16 %v8801, %v8800
    %v8870 = vpack.c.b16 %v8803, %v8802
    %v8871 = vpack.c.b16 %v8805, %v8804
    %v8872 = vpack.c.b16 %v8807, %v8806
    %v8873 = vpack.c.b16 %v8809, %v8808
    %8938 = vmatprep.subr.bf16.mxu0 0
    %8939 = vmatpush1.bf16.msra.mxu0 %v8810
    %8940 = vmatprep.subr.bf16.mxu0 0
    %8941 = vmatpush1.bf16.msra.mxu0 %v8811
    %8942 = vmatprep.subr.bf16.mxu0 0
    %8943 = vmatpush1.bf16.msra.mxu0 %v8812
    %8944 = vmatprep.subr.bf16.mxu0 0
    %8945 = vmatpush1.bf16.msra.mxu0 %v8813
    %8946 = vmatprep.subr.bf16.mxu0 0
    %8947 = vmatpush1.bf16.msra.mxu0 %v8814
    %8948 = vmatprep.subr.bf16.mxu0 0
    %8949 = vmatpush1.bf16.msra.mxu0 %v8815
    %8950 = vmatprep.subr.bf16.mxu0 0
    %8951 = vmatpush1.bf16.msra.mxu0 %v8816
    %8952 = vmatprep.subr.bf16.mxu0 0
    %8953 = vmatpush1.bf16.msra.mxu0 %v8817
    %8954 = vmatprep.subr.bf16.mxu0 0
    %8955 = vmatpush1.bf16.msra.mxu0 %v8818
    %8956 = vmatprep.subr.bf16.mxu0 0
    %8957 = vmatpush1.bf16.msra.mxu0 %v8819
    %8958 = vmatprep.subr.bf16.mxu0 0
    %8959 = vmatpush1.bf16.msra.mxu0 %v8820
    %8960 = vmatprep.subr.bf16.mxu0 0
    %8961 = vmatpush1.bf16.msra.mxu0 %v8821
    %8962 = vmatprep.subr.bf16.mxu0 0
    %8963 = vmatpush1.bf16.msra.mxu0 %v8822
    %8964 = vmatprep.subr.bf16.mxu0 0
    %8965 = vmatpush1.bf16.msra.mxu0 %v8823
    %8966 = vmatprep.subr.bf16.mxu0 0
    %8967 = vmatpush1.bf16.msra.mxu0 %v8824
    %8968 = vmatprep.subr.bf16.mxu0 0
    %8969 = vmatpush1.bf16.msra.mxu0 %v8825
    %8970 = vmatprep.mubr.bf16.mxu0 %v8412
    %8971 = vmatmul.mubr.bf16.gmra.mrb[0].mxu0 %v8411
    %v8972 = vpop.f32.mrb[0].mxu0
    %v8973 = vadd.f32 %v8552, %v8972
    %v8974 = vpop.f32.mrb[0].mxu0
    %v8975 = vpop.f32.mrb[0].mxu0
    %v8976 = vpop.f32.mrb[0].mxu0
    %8977 = vdwg.mxu0
    %8978 = vmatprep.subr.bf16.mxu0 0
    %8979 = vmatpush1.bf16.msra.mxu0 %v8826
    %8980 = vmatprep.subr.bf16.mxu0 0
    %8981 = vmatpush1.bf16.msra.mxu0 %v8827
    %8982 = vmatprep.subr.bf16.mxu0 0
    %8983 = vmatpush1.bf16.msra.mxu0 %v8828
    %8984 = vmatprep.subr.bf16.mxu0 0
    %8985 = vmatpush1.bf16.msra.mxu0 %v8829
    %8986 = vmatprep.subr.bf16.mxu0 0
    %8987 = vmatpush1.bf16.msra.mxu0 %v8830
    %8988 = vmatprep.subr.bf16.mxu0 0
    %8989 = vmatpush1.bf16.msra.mxu0 %v8831
    %8990 = vmatprep.subr.bf16.mxu0 0
    %8991 = vmatpush1.bf16.msra.mxu0 %v8832
    %8992 = vmatprep.subr.bf16.mxu0 0
    %8993 = vmatpush1.bf16.msra.mxu0 %v8833
    %8994 = vmatprep.subr.bf16.mxu0 0
    %8995 = vmatpush1.bf16.msra.mxu0 %v8834
    %8996 = vmatprep.subr.bf16.mxu0 0
    %8997 = vmatpush1.bf16.msra.mxu0 %v8835
    %8998 = vmatprep.subr.bf16.mxu0 0
    %8999 = vmatpush1.bf16.msra.mxu0 %v8836
    %9000 = vmatprep.subr.bf16.mxu0 0
    %9001 = vmatpush1.bf16.msra.mxu0 %v8837
    %9002 = vmatprep.subr.bf16.mxu0 0
    %9003 = vmatpush1.bf16.msra.mxu0 %v8838
    %9004 = vmatprep.subr.bf16.mxu0 0
    %9005 = vmatpush1.bf16.msra.mxu0 %v8839
    %9006 = vmatprep.subr.bf16.mxu0 0
    %9007 = vmatpush1.bf16.msra.mxu0 %v8840
    %9008 = vmatprep.subr.bf16.mxu0 0
    %9009 = vmatpush1.bf16.msra.mxu0 %v8841
    %9010 = vmatprep.mubr.bf16.mxu0 %v8414
    %9011 = vmatmul.mubr.bf16.gmra.mrb[0].mxu0 %v8413
    %v9012 = vpop.f32.mrb[0].mxu0
    %v9013 = vadd.f32 %v8973, %v9012
    %v9014 = vpop.f32.mrb[0].mxu0
    %v9015 = vpop.f32.mrb[0].mxu0
    %v9016 = vpop.f32.mrb[0].mxu0
    %9017 = vdwg.mxu0
    %9018 = vmatprep.subr.bf16.mxu0 0
    %9019 = vmatpush1.bf16.msra.mxu0 %v8842
    %9020 = vmatprep.subr.bf16.mxu0 0
    %9021 = vmatpush1.bf16.msra.mxu0 %v8843
    %9022 = vmatprep.subr.bf16.mxu0 0
    %9023 = vmatpush1.bf16.msra.mxu0 %v8844
    %9024 = vmatprep.subr.bf16.mxu0 0
    %9025 = vmatpush1.bf16.msra.mxu0 %v8845
    %9026 = vmatprep.subr.bf16.mxu0 0
    %9027 = vmatpush1.bf16.msra.mxu0 %v8846
    %9028 = vmatprep.subr.bf16.mxu0 0
    %9029 = vmatpush1.bf16.msra.mxu0 %v8847
    %9030 = vmatprep.subr.bf16.mxu0 0
    %9031 = vmatpush1.bf16.msra.mxu0 %v8848
    %9032 = vmatprep.subr.bf16.mxu0 0
    %9033 = vmatpush1.bf16.msra.mxu0 %v8849
    %9034 = vmatprep.subr.bf16.mxu0 0
    %9035 = vmatpush1.bf16.msra.mxu0 %v8850
    %9036 = vmatprep.subr.bf16.mxu0 0
    %9037 = vmatpush1.bf16.msra.mxu0 %v8851
    %9038 = vmatprep.subr.bf16.mxu0 0
    %9039 = vmatpush1.bf16.msra.mxu0 %v8852
    %9040 = vmatprep.subr.bf16.mxu0 0
    %9041 = vmatpush1.bf16.msra.mxu0 %v8853
    %9042 = vmatprep.subr.bf16.mxu0 0
    %9043 = vmatpush1.bf16.msra.mxu0 %v8854
    %9044 = vmatprep.subr.bf16.mxu0 0
    %9045 = vmatpush1.bf16.msra.mxu0 %v8855
    %9046 = vmatprep.subr.bf16.mxu0 0
    %9047 = vmatpush1.bf16.msra.mxu0 %v8856
    %9048 = vmatprep.subr.bf16.mxu0 0
    %9049 = vmatpush1.bf16.msra.mxu0 %v8857
    %9050 = vmatprep.mubr.bf16.mxu0 %v8416
    %9051 = vmatmul.mubr.bf16.gmra.mrb[0].mxu0 %v8415
    %v9052 = vpop.f32.mrb[0].mxu0
    %v9053 = vadd.f32 %v9013, %v9052
    %v9054 = vpop.f32.mrb[0].mxu0
    %v9055 = vpop.f32.mrb[0].mxu0
    %v9056 = vpop.f32.mrb[0].mxu0
    %9057 = vdwg.mxu0
    %9058 = vmatprep.subr.bf16.mxu0 0
    %9059 = vmatpush1.bf16.msra.mxu0 %v8858
    %9060 = vmatprep.subr.bf16.mxu0 0
    %9061 = vmatpush1.bf16.msra.mxu0 %v8859
    %9062 = vmatprep.subr.bf16.mxu0 0
    %9063 = vmatpush1.bf16.msra.mxu0 %v8860
    %9064 = vmatprep.subr.bf16.mxu0 0
    %9065 = vmatpush1.bf16.msra.mxu0 %v8861
    %9066 = vmatprep.subr.bf16.mxu0 0
    %9067 = vmatpush1.bf16.msra.mxu0 %v8862
    %9068 = vmatprep.subr.bf16.mxu0 0
    %9069 = vmatpush1.bf16.msra.mxu0 %v8863
    %9070 = vmatprep.subr.bf16.mxu0 0
    %9071 = vmatpush1.bf16.msra.mxu0 %v8864
    %9072 = vmatprep.subr.bf16.mxu0 0
    %9073 = vmatpush1.bf16.msra.mxu0 %v8865
    %9074 = vmatprep.subr.bf16.mxu0 0
    %9075 = vmatpush1.bf16.msra.mxu0 %v8866
    %9076 = vmatprep.subr.bf16.mxu0 0
    %9077 = vmatpush1.bf16.msra.mxu0 %v8867
    %9078 = vmatprep.subr.bf16.mxu0 0
    %9079 = vmatpush1.bf16.msra.mxu0 %v8868
    %9080 = vmatprep.subr.bf16.mxu0 0
    %9081 = vmatpush1.bf16.msra.mxu0 %v8869
    %9082 = vmatprep.subr.bf16.mxu0 0
    %9083 = vmatpush1.bf16.msra.mxu0 %v8870
    %9084 = vmatprep.subr.bf16.mxu0 0
    %9085 = vmatpush1.bf16.msra.mxu0 %v8871
    %9086 = vmatprep.subr.bf16.mxu0 0
    %9087 = vmatpush1.bf16.msra.mxu0 %v8872
    %9088 = vmatprep.subr.bf16.mxu0 0
    %9089 = vmatpush1.bf16.msra.mxu0 %v8873
    %9090 = vmatprep.mubr.bf16.mxu0 %v8418
    %9091 = vmatmul.mubr.bf16.gmra.mrb[0].mxu0 %v8417
    %v9092 = vpop.f32.mrb[0].mxu0
    %v9093 = vadd.f32 %v9053, %v9092
    %v9094 = vpop.f32.mrb[0].mxu0
    %v9095 = vpop.f32.mrb[0].mxu0
    %v9096 = vpop.f32.mrb[0].mxu0
    %9097 = vdwg.mxu0
    %9098 = vst [vmem:[#allocation27] sm:$0xff] %v9093
    // Predicated region
    $region122: #{tpu_custom_call.1} parent=1 // pred_check
      _
    $region123: #{tpu_custom_call.1} parent=1 // pred_check_branch
      %9100 = sbr.rel (0) target = $region125
    $region124: #{tpu_custom_call.1} parent=1 // pred_region
      %s9102 = ssub.s32 128, 128
      %9103 = vsyncadd [#allocation4], %s9102
      %s9105 = sshll.u32 [#allocation27], 4
      %s9106 = int_to_ptr.vmem [resolvable:$true] %s9105
      %9108 = dma.vmem_to_hbm [thread:$0]  %s9106, 128, %s15, [#allocation4]
    $region125: #{tpu_custom_call.1} parent=1 // pred_fallthru
      _
    // Predicated region
    $region126: #{tpu_custom_call.1} parent=1 // pred_check
      _
    $region127: #{tpu_custom_call.1} parent=1 // pred_check_branch
      %9110 = sbr.rel (0) target = $region129
    $region128: #{tpu_custom_call.1} parent=1 // pred_region
      %9111 = dma.done [#allocation4], 128
    $region129: #{tpu_custom_call.1} parent=1 // pred_fallthru
      _
    %9112 = vsyncpa [#allocation3], 1
    %9113 = vsyncpa [#allocation7], 1
    %9114 = vsyncpa [#allocation16], 1
    %9115 = vsyncpa [#allocation19], 1
    %9116 = vsyncpa [#allocation22], 1
    %9117 = vsyncpa [#allocation25], 1
    %9118 = vsyncpa [#allocation4], 1
    %9119 = vsyncpa [#allocation5], 1
    %9120 = vsyncpa [#allocation11], 1
    %9121 = vsyncpa [#allocation14], 1

</llo_original>
